<compile_context>
chip_gen: v7x
topology: tpu7x:2x2x1
jax: 0.10.0
libtpu: 0.0.40
codegen_flags: <defaults>
</compile_context>

<pallas_src>
import functools

import jax
import jax.numpy as jnp
from jax.experimental import pallas as pl
from jax.experimental.pallas import tpu as pltpu

KSIZE = 10       # Conv1d kernel_size used by the module
CIN1_PAD = 128   # K * n_sensors (=30) padded to one lane group for conv1
C12_PAD = 128    # conv1/conv2 out-channels padded 100 -> 128
C34_PAD = 256    # conv3/conv4 out-channels padded 160 -> 256
NC_PAD = 128     # fc out-features padded n_classes -> 128
TAIL = 16        # zeroed tail rows so k-shifted matmul reads stay in-bounds


def _round8(n):
    return (n + 7) // 8 * 8


# --------------------------- fused forward kernel -------------------------- #
def _cnn_fused_kernel(x_ref, w1_ref, b1_ref, w2_ref, b2_ref, w3_ref, b3_ref,
                      w4_ref, b4_ref, wfc_ref, bfc_ref, o_ref,
                      a1_ref, a2_ref, pool_ref, a3_ref, a4_ref, feat_ref,
                      *, Bt, K, S_A, S_B, Lp, L4, out_rows, n_classes):
    """One grid step = Bt batches; all activations live in VMEM scratch.

    Activations are 2-D (Bt*S, C_pad) with batch-major rows and a per-layer
    uniform, 8-aligned per-batch row stride S, so every conv is K accumulating
    MXU dots over whole-buffer, lane-dense operands (no im2col slab).
    """
    f32 = jnp.float32
    bf16 = jnp.bfloat16
    nA = Bt * S_A
    nB = Bt * S_B

    def conv_relu(src_ref, dst_ref, rows, w_ref_, b_ref_, mask_valid=None):
        """dst[0:rows] = relu(sum_k src[k:k+rows] @ w_k + b)  (K MXU dots)."""
        cin = src_ref.shape[-1]
        acc = None
        for k in range(K):
            part = jnp.dot(src_ref[k:k + rows, :],
                           w_ref_[k * cin:(k + 1) * cin, :],
                           preferred_element_type=f32)
            acc = part if acc is None else acc + part
        y = jnp.maximum(acc + b_ref_[...], 0.0)
        if mask_valid is not None:
            y = jnp.where(mask_valid, y, 0.0)
        dst_ref[0:rows, :] = y.astype(dst_ref.dtype)

    # Zero the 16-row tails once per step: k-shifted operand reads beyond the
    # last batch's rows then see exact zeros (never uninitialized VMEM).
    a1_ref[nA:nA + TAIL, :] = jnp.zeros((TAIL, a1_ref.shape[-1]), bf16)
    pool_ref[nB:nB + TAIL, :] = jnp.zeros((TAIL, pool_ref.shape[-1]), bf16)
    a3_ref[nB:nB + TAIL, :] = jnp.zeros((TAIL, a3_ref.shape[-1]), bf16)

    # ---- conv1 + ReLU (layer-1 im2col prepared host-side -> single dot) ----
    a1_ref[0:nA, :] = jnp.maximum(
        jnp.dot(x_ref[...], w1_ref[...], preferred_element_type=f32)
        + b1_ref[...], 0.0).astype(bf16)

    # ---- conv2 + ReLU : K accumulating dots on the shared stride S_A ----
    conv_relu(a1_ref, a2_ref, nA, w2_ref, b2_ref)

    # ---- MaxPool1d(3), floor mode (Bt small; aligned per-batch starts) ----
    c2 = a2_ref.shape[-1]
    for b in range(Bt):
        blk = a2_ref[b * S_A:b * S_A + 3 * Lp, :].astype(f32)
        pool_ref[b * S_B:b * S_B + Lp, :] = jnp.max(
            blk.reshape(Lp, 3, c2), axis=1).astype(bf16)
        if S_B > Lp:  # (not hit for these sizes) keep pad rows defined
            pool_ref[b * S_B + Lp:(b + 1) * S_B, :] = jnp.zeros(
                (S_B - Lp, c2), bf16)

    # ---- conv3 + ReLU, conv4 + ReLU (conv4 pad rows masked to zero) ----
    conv_relu(pool_ref, a3_ref, nB, w3_ref, b3_ref)
    row = jax.lax.broadcasted_iota(jnp.int32, (nB, C34_PAD), 0)
    conv_relu(a3_ref, a4_ref, nB, w4_ref, b4_ref,
              mask_valid=(row % S_B) < L4)

    # ---- AdaptiveAvgPool1d(1); Dropout == identity in eval mode ----
    pooled = jnp.sum(a4_ref[...].reshape(Bt, S_B, C34_PAD), axis=1) * (1.0 / L4)
    feat_ref[...] = jnp.zeros((out_rows, C34_PAD), f32)
    feat_ref[0:Bt, :] = pooled

    # ---- FC + log_softmax over the real classes only ----
    logits = jnp.dot(feat_ref[...].astype(bf16), wfc_ref[...],
                     preferred_element_type=f32) + bfc_ref[...]
    lane = jax.lax.broadcasted_iota(jnp.int32, logits.shape, 1)
    logits = jnp.where(lane < n_classes, logits, -1e30)   # mask pad classes
    m = jnp.max(logits, axis=-1, keepdims=True)
    s = logits - m
    o_ref[...] = s - jnp.log(jnp.sum(jnp.exp(s), axis=-1, keepdims=True))


# ------------------------------ host wrapper ------------------------------- #
def cnn_forward(params, x, *, time_periods, n_sensors, n_classes, batch_tile=2):
    B = x.shape[0]
    K = KSIZE
    L0 = time_periods
    L1 = L0 - K + 1
    L2 = L1 - K + 1
    Lp = L2 // 3
    L3 = Lp - K + 1
    L4 = L3 - K + 1
    assert L4 >= 1, "time_periods too small for this architecture"
    assert K * n_sensors <= CIN1_PAD

    S_A = _round8(L1)            # per-batch row stride for x_col / a1 / a2
    S_B = _round8(Lp)            # per-batch row stride for pool / a3 / a4
    Bt = max(1, min(batch_tile, B))
    while B % Bt:
        Bt -= 1
    n_steps = B // Bt
    out_rows = max(8, _round8(Bt))

    # NCL -> NLC; layer-1 im2col + zero padding, host side (layout plumbing).
    x_nlc = jnp.transpose(x.reshape(B, n_sensors, L0), (0, 2, 1))
    x_col = jnp.concatenate([x_nlc[:, k:k + L1, :] for k in range(K)], axis=-1)
    x_col = jnp.pad(x_col, ((0, 0), (0, S_A - L1),
                            (0, CIN1_PAD - K * n_sensors)))
    x_col = x_col.reshape(B * S_A, CIN1_PAD).astype(jnp.bfloat16)

    kernel = functools.partial(
        _cnn_fused_kernel, Bt=Bt, K=K, S_A=S_A, S_B=S_B, Lp=Lp, L4=L4,
        out_rows=out_rows, n_classes=n_classes)

    weights = (params["w1"], params["b1"], params["w2"], params["b2"],
               params["w3"], params["b3"], params["w4"], params["b4"],
               params["wfc"], params["bfc"])

    in_specs = [pl.BlockSpec((Bt * S_A, CIN1_PAD), lambda i: (i, 0))]
    # Constant index_maps: weights/biases are DMA'd once, never re-fetched.
    in_specs += [pl.BlockSpec(w.shape, lambda i: (0, 0)) for w in weights]

    out = pl.pallas_call(
        kernel,
        out_shape=jax.ShapeDtypeStruct((n_steps * out_rows, NC_PAD),
                                       jnp.float32),
        grid=(n_steps,),
        in_specs=in_specs,
        out_specs=pl.BlockSpec((out_rows, NC_PAD), lambda i: (i, 0)),
        scratch_shapes=[
            pltpu.VMEM((Bt * S_A + TAIL, C12_PAD), jnp.bfloat16),   # a1
            pltpu.VMEM((Bt * S_A, C12_PAD), jnp.bfloat16),          # a2
            pltpu.VMEM((Bt * S_B + TAIL, C12_PAD), jnp.bfloat16),   # maxpool
            pltpu.VMEM((Bt * S_B + TAIL, C34_PAD), jnp.bfloat16),   # a3
            pltpu.VMEM((Bt * S_B, C34_PAD), jnp.float32),           # a4
            pltpu.VMEM((out_rows, C34_PAD), jnp.float32),           # features
        ],
        compiler_params=pltpu.CompilerParams(
            dimension_semantics=("parallel",),
            vmem_limit_bytes=48 * 1024 * 1024),
    )(x_col, *weights)

    out = out.reshape(n_steps, out_rows, NC_PAD)[:, :Bt, :]
    return out.reshape(B, NC_PAD)[:, :n_classes]


# ------------------------------ parameters --------------------------------- #
def _pack_conv(key_w, key_b, cin, cout, cin_pad, cout_pad):
    """Conv weight stored bf16 as (K*cin_pad, cout_pad), k-major / cin-minor
    rows, zero-padded on both channel dims (padding is mathematically inert).
    Bias stays f32 (added after the f32 accumulation)."""
    w = 0.05 * jax.random.normal(key_w, (KSIZE, cin, cout), jnp.float32)
    b = 0.05 * jax.random.normal(key_b, (cout,), jnp.float32)
    wp = jnp.zeros((KSIZE, cin_pad, cout_pad), jnp.float32)
    wp = wp.at[:, :cin, :cout].set(w)
    bp = jnp.zeros((1, cout_pad), jnp.float32).at[0, :cout].set(b)
    return wp.reshape(KSIZE * cin_pad, cout_pad).astype(jnp.bfloat16), bp


def init_params(key, n_sensors, n_classes):
    ks = jax.random.split(key, 10)
    # conv1: rows are k-major / sensor-minor (matches host-side im2col), padded
    # from K*n_sensors to CIN1_PAD.
    w1 = 0.05 * jax.random.normal(ks[0], (KSIZE, n_sensors, 100), jnp.float32)
    b1 = 0.05 * jax.random.normal(ks[1], (100,), jnp.float32)
    w1p = jnp.zeros((CIN1_PAD, C12_PAD), jnp.float32)
    w1p = w1p.at[:KSIZE * n_sensors, :100].set(
        w1.reshape(KSIZE * n_sensors, 100))
    b1p = jnp.zeros((1, C12_PAD), jnp.float32).at[0, :100].set(b1)

    w2, b2 = _pack_conv(ks[2], ks[3], 100, 100, C12_PAD, C12_PAD)
    w3, b3 = _pack_conv(ks[4], ks[5], 100, 160, C12_PAD, C34_PAD)
    w4, b4 = _pack_conv(ks[6], ks[7], 160, 160, C34_PAD, C34_PAD)

    wfc = 0.05 * jax.random.normal(ks[8], (160, n_classes), jnp.float32)
    bfc = 0.05 * jax.random.normal(ks[9], (n_classes,), jnp.float32)
    wfcp = jnp.zeros((C34_PAD, NC_PAD), jnp.float32).at[:160, :n_classes].set(wfc)
    bfcp = jnp.zeros((1, NC_PAD), jnp.float32).at[0, :n_classes].set(bfc)

    return {"w1": w1p.astype(jnp.bfloat16), "b1": b1p,
            "w2": w2, "b2": b2, "w3": w3, "b3": b3, "w4": w4, "b4": b4,
            "wfc": wfcp.astype(jnp.bfloat16), "bfc": bfcp}


# --------------------------- plain-JAX reference --------------------------- #
def reference_forward(params, x, *, time_periods, n_sensors, n_classes):
    """Mirrors the kernel numerics (bf16 matmul operands, f32 accumulation)."""
    B, K = x.shape[0], KSIZE
    f32, bf16 = jnp.float32, jnp.bfloat16

    def unpack(wp, bp, cin, cout, cin_pad):
        w = wp.reshape(K, cin_pad, -1)[:, :cin, :cout]     # bf16
        return w, bp[0, :cout]                             # f32 bias

    w1 = params["w1"][:K * n_sensors, :100].reshape(K, n_sensors, 100)
    b1 = params["b1"][0, :100]
    w2, b2 = unpack(params["w2"], params["b2"], 100, 100, C12_PAD)
    w3, b3 = unpack(params["w3"], params["b3"], 100, 160, C12_PAD)
    w4, b4 = unpack(params["w4"], params["b4"], 160, 160, C34_PAD)
    wfc = params["wfc"][:160, :n_classes]
    bfc = params["bfc"][0, :n_classes]

    def conv(a, w, b):              # a: (B, L, Cin) bf16, w: (K, Cin, Cout) bf16
        L_out = a.shape[1] - K + 1
        acc = sum(jnp.einsum("blc,co->blo", a[:, k:k + L_out, :], w[k],
                             preferred_element_type=f32) for k in range(K))
        return jnp.maximum(acc + b, 0.0)

    a = jnp.transpose(x.reshape(B, n_sensors, time_periods), (0, 2, 1)).astype(bf16)
    a = conv(a, w1, b1).astype(bf16)
    a = conv(a, w2, b2).astype(bf16)
    Lp = a.shape[1] // 3
    a = jnp.max(a[:, :3 * Lp, :].reshape(B, Lp, 3, a.shape[-1]), axis=2)
    a = conv(a, w3, b3).astype(bf16)
    a4 = conv(a, w4, b4)                               # f32, like the kernel
    L4 = a4.shape[1]
    feat = jnp.sum(a4, axis=1) * (1.0 / L4)            # avgpool(1); dropout=id
    logits = jnp.dot(feat.astype(bf16), wfc, preferred_element_type=f32) + bfc
    return jax.nn.log_softmax(logits, axis=-1)


# ---------------------------------- main ------------------------------------ #
if __name__ == "__main__":
    batch, n_sensors, time_periods, n_classes = 4, 3, 90, 6
    key = jax.random.PRNGKey(0)
    kx, kp = jax.random.split(key)
    x = jax.random.normal(kx, (batch, n_sensors * time_periods), jnp.float32)
    params = init_params(kp, n_sensors, n_classes)

    fwd = jax.jit(functools.partial(cnn_forward, time_periods=time_periods,
                                    n_sensors=n_sensors, n_classes=n_classes))
    out = jax.block_until_ready(fwd(params, x))

    assert out.shape == (batch, n_classes)
    assert bool(jnp.all(jnp.isfinite(out)))
    # log_softmax rows must sum to ~1 in probability space
    assert jnp.allclose(jnp.sum(jnp.exp(out), axis=-1), 1.0, atol=1e-3)
    # cross-check the fused kernel against a numerics-mirrored JAX reference
    ref = reference_forward(params, x, time_periods=time_periods,
                            n_sensors=n_sensors, n_classes=n_classes)
    assert jnp.allclose(out, ref, atol=2e-3, rtol=2e-3), (out, ref)
    print("KERNEL_OK")
</pallas_src>

<mosaic_0001>
module attributes {stable_mosaic.version = 11 : i64} {
  func.func @_cnn_fused_kernel(%arg0: i32, %arg1: memref<176x128xbf16, #tpu.memory_space<vmem>>, %arg2: memref<128x128xbf16, #tpu.memory_space<vmem>>, %arg3: memref<1x128xf32, #tpu.memory_space<vmem>>, %arg4: memref<1280x128xbf16, #tpu.memory_space<vmem>>, %arg5: memref<1x128xf32, #tpu.memory_space<vmem>>, %arg6: memref<1280x256xbf16, #tpu.memory_space<vmem>>, %arg7: memref<1x256xf32, #tpu.memory_space<vmem>>, %arg8: memref<2560x256xbf16, #tpu.memory_space<vmem>>, %arg9: memref<1x256xf32, #tpu.memory_space<vmem>>, %arg10: memref<256x128xbf16, #tpu.memory_space<vmem>>, %arg11: memref<1x128xf32, #tpu.memory_space<vmem>>, %arg12: memref<8x128xf32, #tpu.memory_space<vmem>>, %arg13: memref<192x128xbf16, #tpu.memory_space<vmem>>, %arg14: memref<176x128xbf16, #tpu.memory_space<vmem>>, %arg15: memref<64x128xbf16, #tpu.memory_space<vmem>>, %arg16: memref<64x256xbf16, #tpu.memory_space<vmem>>, %arg17: memref<48x256xf32, #tpu.memory_space<vmem>>, %arg18: memref<8x256xf32, #tpu.memory_space<vmem>>) attributes {dimension_semantics = [#tpu.dimension_semantics<parallel>], iteration_bounds = array<i64: 2>, scalar_prefetch = 0 : i64, scratch_operands = 6 : i64, tpu.core_type = #tpu.core_type<tc>, window_params = [{transform_indices = @transform_0, window_bounds = array<i64: 176, 128>}, {pipeline_mode = #tpu.pipeline_mode<synchronous>, transform_indices = @transform_1, window_bounds = array<i64: 128, 128>}, {pipeline_mode = #tpu.pipeline_mode<synchronous>, transform_indices = @transform_2, window_bounds = array<i64: 1, 128>}, {pipeline_mode = #tpu.pipeline_mode<synchronous>, transform_indices = @transform_3, window_bounds = array<i64: 1280, 128>}, {pipeline_mode = #tpu.pipeline_mode<synchronous>, transform_indices = @transform_4, window_bounds = array<i64: 1, 128>}, {pipeline_mode = #tpu.pipeline_mode<synchronous>, transform_indices = @transform_5, window_bounds = array<i64: 1280, 256>}, {pipeline_mode = #tpu.pipeline_mode<synchronous>, transform_indices = @transform_6, window_bounds = array<i64: 1, 256>}, {pipeline_mode = #tpu.pipeline_mode<synchronous>, transform_indices = @transform_7, window_bounds = array<i64: 2560, 256>}, {pipeline_mode = #tpu.pipeline_mode<synchronous>, transform_indices = @transform_8, window_bounds = array<i64: 1, 256>}, {pipeline_mode = #tpu.pipeline_mode<synchronous>, transform_indices = @transform_9, window_bounds = array<i64: 256, 128>}, {pipeline_mode = #tpu.pipeline_mode<synchronous>, transform_indices = @transform_10, window_bounds = array<i64: 1, 128>}, {transform_indices = @transform_11, window_bounds = array<i64: 8, 128>}]} {
    %cst = arith.constant 0.000000e+00 : bf16
    %0 = vector.broadcast %cst : bf16 to vector<16x128xbf16>
    %c176 = arith.constant 176 : index
    %c0 = arith.constant 0 : index
    %1 = vector.load %arg13[%c176, %c0] : memref<192x128xbf16, #tpu.memory_space<vmem>>, vector<16x128xbf16>
    tpu.vector_store %arg13[%c176, %c0], %0 {strides = array<i32>} : memref<192x128xbf16, #tpu.memory_space<vmem>>, vector<16x128xbf16>,
    %cst_0 = arith.constant 0.000000e+00 : bf16
    %2 = vector.broadcast %cst_0 : bf16 to vector<16x128xbf16>
    %c48 = arith.constant 48 : index
    %c0_1 = arith.constant 0 : index
    %3 = vector.load %arg15[%c48, %c0_1] : memref<64x128xbf16, #tpu.memory_space<vmem>>, vector<16x128xbf16>
    tpu.vector_store %arg15[%c48, %c0_1], %2 {strides = array<i32>} : memref<64x128xbf16, #tpu.memory_space<vmem>>, vector<16x128xbf16>,
    %cst_2 = arith.constant 0.000000e+00 : bf16
    %4 = vector.broadcast %cst_2 : bf16 to vector<16x256xbf16>
    %c48_3 = arith.constant 48 : index
    %c0_4 = arith.constant 0 : index
    %5 = vector.load %arg16[%c48_3, %c0_4] : memref<64x256xbf16, #tpu.memory_space<vmem>>, vector<16x256xbf16>
    tpu.vector_store %arg16[%c48_3, %c0_4], %4 {strides = array<i32>} : memref<64x256xbf16, #tpu.memory_space<vmem>>, vector<16x256xbf16>,
    %c0_5 = arith.constant 0 : index
    %c0_6 = arith.constant 0 : index
    %6 = vector.load %arg1[%c0_5, %c0_6] : memref<176x128xbf16, #tpu.memory_space<vmem>>, vector<176x128xbf16>
    %c0_7 = arith.constant 0 : index
    %c0_8 = arith.constant 0 : index
    %7 = vector.load %arg2[%c0_7, %c0_8] : memref<128x128xbf16, #tpu.memory_space<vmem>>, vector<128x128xbf16>
    %cst_9 = arith.constant dense<0.000000e+00> : vector<176x128xf32>
    %8 = tpu.matmul %6, %7, %cst_9 {dimension_numbers = #tpu.dot_dimension_numbers<[1], [0], [0], [1], [0, 0, 1, 1], [], []>} : vector<176x128xbf16>, vector<128x128xbf16>, vector<176x128xf32> -> vector<176x128xf32>
    %c0_10 = arith.constant 0 : index
    %c0_11 = arith.constant 0 : index
    %9 = vector.load %arg3[%c0_10, %c0_11] : memref<1x128xf32, #tpu.memory_space<vmem>>, vector<1x128xf32>
    %10 = vector.broadcast %9 : vector<1x128xf32> to vector<176x128xf32>
    %11 = arith.addf %8, %10 : vector<176x128xf32>
    %cst_12 = arith.constant 0.000000e+00 : f32
    %12 = vector.broadcast %cst_12 : f32 to vector<176x128xf32>
    %13 = arith.maximumf %11, %12 : vector<176x128xf32>
    %14 = arith.truncf %13 : vector<176x128xf32> to vector<176x128xbf16>
    %c0_13 = arith.constant 0 : index
    %c0_14 = arith.constant 0 : index
    %15 = vector.load %arg13[%c0_13, %c0_14] : memref<192x128xbf16, #tpu.memory_space<vmem>>, vector<176x128xbf16>
    tpu.vector_store %arg13[%c0_13, %c0_14], %14 {strides = array<i32>} : memref<192x128xbf16, #tpu.memory_space<vmem>>, vector<176x128xbf16>,
    %c0_15 = arith.constant 0 : index
    %c0_16 = arith.constant 0 : index
    %16 = vector.load %arg13[%c0_15, %c0_16] : memref<192x128xbf16, #tpu.memory_space<vmem>>, vector<176x128xbf16>
    %c0_17 = arith.constant 0 : index
    %c0_18 = arith.constant 0 : index
    %17 = vector.load %arg4[%c0_17, %c0_18] : memref<1280x128xbf16, #tpu.memory_space<vmem>>, vector<128x128xbf16>
    %cst_19 = arith.constant dense<0.000000e+00> : vector<176x128xf32>
    %18 = tpu.matmul %16, %17, %cst_19 {dimension_numbers = #tpu.dot_dimension_numbers<[1], [0], [0], [1], [0, 0, 1, 1], [], []>} : vector<176x128xbf16>, vector<128x128xbf16>, vector<176x128xf32> -> vector<176x128xf32>
    %c1 = arith.constant 1 : index
    %c0_20 = arith.constant 0 : index
    %19 = vector.load %arg13[%c1, %c0_20] : memref<192x128xbf16, #tpu.memory_space<vmem>>, vector<176x128xbf16>
    %c128 = arith.constant 128 : index
    %c0_21 = arith.constant 0 : index
    %20 = vector.load %arg4[%c128, %c0_21] : memref<1280x128xbf16, #tpu.memory_space<vmem>>, vector<128x128xbf16>
    %cst_22 = arith.constant dense<0.000000e+00> : vector<176x128xf32>
    %21 = tpu.matmul %19, %20, %cst_22 {dimension_numbers = #tpu.dot_dimension_numbers<[1], [0], [0], [1], [0, 0, 1, 1], [], []>} : vector<176x128xbf16>, vector<128x128xbf16>, vector<176x128xf32> -> vector<176x128xf32>
    %22 = arith.addf %18, %21 : vector<176x128xf32>
    %c2 = arith.constant 2 : index
    %c0_23 = arith.constant 0 : index
    %23 = vector.load %arg13[%c2, %c0_23] : memref<192x128xbf16, #tpu.memory_space<vmem>>, vector<176x128xbf16>
    %c256 = arith.constant 256 : index
    %c0_24 = arith.constant 0 : index
    %24 = vector.load %arg4[%c256, %c0_24] : memref<1280x128xbf16, #tpu.memory_space<vmem>>, vector<128x128xbf16>
    %cst_25 = arith.constant dense<0.000000e+00> : vector<176x128xf32>
    %25 = tpu.matmul %23, %24, %cst_25 {dimension_numbers = #tpu.dot_dimension_numbers<[1], [0], [0], [1], [0, 0, 1, 1], [], []>} : vector<176x128xbf16>, vector<128x128xbf16>, vector<176x128xf32> -> vector<176x128xf32>
    %26 = arith.addf %22, %25 : vector<176x128xf32>
    %c3 = arith.constant 3 : index
    %c0_26 = arith.constant 0 : index
    %27 = vector.load %arg13[%c3, %c0_26] : memref<192x128xbf16, #tpu.memory_space<vmem>>, vector<176x128xbf16>
    %c384 = arith.constant 384 : index
    %c0_27 = arith.constant 0 : index
    %28 = vector.load %arg4[%c384, %c0_27] : memref<1280x128xbf16, #tpu.memory_space<vmem>>, vector<128x128xbf16>
    %cst_28 = arith.constant dense<0.000000e+00> : vector<176x128xf32>
    %29 = tpu.matmul %27, %28, %cst_28 {dimension_numbers = #tpu.dot_dimension_numbers<[1], [0], [0], [1], [0, 0, 1, 1], [], []>} : vector<176x128xbf16>, vector<128x128xbf16>, vector<176x128xf32> -> vector<176x128xf32>
    %30 = arith.addf %26, %29 : vector<176x128xf32>
    %c4 = arith.constant 4 : index
    %c0_29 = arith.constant 0 : index
    %31 = vector.load %arg13[%c4, %c0_29] : memref<192x128xbf16, #tpu.memory_space<vmem>>, vector<176x128xbf16>
    %c512 = arith.constant 512 : index
    %c0_30 = arith.constant 0 : index
    %32 = vector.load %arg4[%c512, %c0_30] : memref<1280x128xbf16, #tpu.memory_space<vmem>>, vector<128x128xbf16>
    %cst_31 = arith.constant dense<0.000000e+00> : vector<176x128xf32>
    %33 = tpu.matmul %31, %32, %cst_31 {dimension_numbers = #tpu.dot_dimension_numbers<[1], [0], [0], [1], [0, 0, 1, 1], [], []>} : vector<176x128xbf16>, vector<128x128xbf16>, vector<176x128xf32> -> vector<176x128xf32>
    %34 = arith.addf %30, %33 : vector<176x128xf32>
    %c5 = arith.constant 5 : index
    %c0_32 = arith.constant 0 : index
    %35 = vector.load %arg13[%c5, %c0_32] : memref<192x128xbf16, #tpu.memory_space<vmem>>, vector<176x128xbf16>
    %c640 = arith.constant 640 : index
    %c0_33 = arith.constant 0 : index
    %36 = vector.load %arg4[%c640, %c0_33] : memref<1280x128xbf16, #tpu.memory_space<vmem>>, vector<128x128xbf16>
    %cst_34 = arith.constant dense<0.000000e+00> : vector<176x128xf32>
    %37 = tpu.matmul %35, %36, %cst_34 {dimension_numbers = #tpu.dot_dimension_numbers<[1], [0], [0], [1], [0, 0, 1, 1], [], []>} : vector<176x128xbf16>, vector<128x128xbf16>, vector<176x128xf32> -> vector<176x128xf32>
    %38 = arith.addf %34, %37 : vector<176x128xf32>
    %c6 = arith.constant 6 : index
    %c0_35 = arith.constant 0 : index
    %39 = vector.load %arg13[%c6, %c0_35] : memref<192x128xbf16, #tpu.memory_space<vmem>>, vector<176x128xbf16>
    %c768 = arith.constant 768 : index
    %c0_36 = arith.constant 0 : index
    %40 = vector.load %arg4[%c768, %c0_36] : memref<1280x128xbf16, #tpu.memory_space<vmem>>, vector<128x128xbf16>
    %cst_37 = arith.constant dense<0.000000e+00> : vector<176x128xf32>
    %41 = tpu.matmul %39, %40, %cst_37 {dimension_numbers = #tpu.dot_dimension_numbers<[1], [0], [0], [1], [0, 0, 1, 1], [], []>} : vector<176x128xbf16>, vector<128x128xbf16>, vector<176x128xf32> -> vector<176x128xf32>
    %42 = arith.addf %38, %41 : vector<176x128xf32>
    %c7 = arith.constant 7 : index
    %c0_38 = arith.constant 0 : index
    %43 = vector.load %arg13[%c7, %c0_38] : memref<192x128xbf16, #tpu.memory_space<vmem>>, vector<176x128xbf16>
    %c896 = arith.constant 896 : index
    %c0_39 = arith.constant 0 : index
    %44 = vector.load %arg4[%c896, %c0_39] : memref<1280x128xbf16, #tpu.memory_space<vmem>>, vector<128x128xbf16>
    %cst_40 = arith.constant dense<0.000000e+00> : vector<176x128xf32>
    %45 = tpu.matmul %43, %44, %cst_40 {dimension_numbers = #tpu.dot_dimension_numbers<[1], [0], [0], [1], [0, 0, 1, 1], [], []>} : vector<176x128xbf16>, vector<128x128xbf16>, vector<176x128xf32> -> vector<176x128xf32>
    %46 = arith.addf %42, %45 : vector<176x128xf32>
    %c8 = arith.constant 8 : index
    %c0_41 = arith.constant 0 : index
    %47 = vector.load %arg13[%c8, %c0_41] : memref<192x128xbf16, #tpu.memory_space<vmem>>, vector<176x128xbf16>
    %c1024 = arith.constant 1024 : index
    %c0_42 = arith.constant 0 : index
    %48 = vector.load %arg4[%c1024, %c0_42] : memref<1280x128xbf16, #tpu.memory_space<vmem>>, vector<128x128xbf16>
    %cst_43 = arith.constant dense<0.000000e+00> : vector<176x128xf32>
    %49 = tpu.matmul %47, %48, %cst_43 {dimension_numbers = #tpu.dot_dimension_numbers<[1], [0], [0], [1], [0, 0, 1, 1], [], []>} : vector<176x128xbf16>, vector<128x128xbf16>, vector<176x128xf32> -> vector<176x128xf32>
    %50 = arith.addf %46, %49 : vector<176x128xf32>
    %c9 = arith.constant 9 : index
    %c0_44 = arith.constant 0 : index
    %51 = vector.load %arg13[%c9, %c0_44] : memref<192x128xbf16, #tpu.memory_space<vmem>>, vector<176x128xbf16>
    %c1152 = arith.constant 1152 : index
    %c0_45 = arith.constant 0 : index
    %52 = vector.load %arg4[%c1152, %c0_45] : memref<1280x128xbf16, #tpu.memory_space<vmem>>, vector<128x128xbf16>
    %cst_46 = arith.constant dense<0.000000e+00> : vector<176x128xf32>
    %53 = tpu.matmul %51, %52, %cst_46 {dimension_numbers = #tpu.dot_dimension_numbers<[1], [0], [0], [1], [0, 0, 1, 1], [], []>} : vector<176x128xbf16>, vector<128x128xbf16>, vector<176x128xf32> -> vector<176x128xf32>
    %54 = arith.addf %50, %53 : vector<176x128xf32>
    %c0_47 = arith.constant 0 : index
    %c0_48 = arith.constant 0 : index
    %55 = vector.load %arg5[%c0_47, %c0_48] : memref<1x128xf32, #tpu.memory_space<vmem>>, vector<1x128xf32>
    %56 = vector.broadcast %55 : vector<1x128xf32> to vector<176x128xf32>
    %57 = arith.addf %54, %56 : vector<176x128xf32>
    %cst_49 = arith.constant 0.000000e+00 : f32
    %58 = vector.broadcast %cst_49 : f32 to vector<176x128xf32>
    %59 = arith.maximumf %57, %58 : vector<176x128xf32>
    %60 = arith.truncf %59 : vector<176x128xf32> to vector<176x128xbf16>
    %c0_50 = arith.constant 0 : index
    %c0_51 = arith.constant 0 : index
    %61 = vector.load %arg14[%c0_50, %c0_51] : memref<176x128xbf16, #tpu.memory_space<vmem>>, vector<176x128xbf16>
    tpu.vector_store %arg14[%c0_50, %c0_51], %60 {strides = array<i32>} : memref<176x128xbf16, #tpu.memory_space<vmem>>, vector<176x128xbf16>,
    %c0_52 = arith.constant 0 : index
    %c0_53 = arith.constant 0 : index
    %62 = vector.load %arg14[%c0_52, %c0_53] : memref<176x128xbf16, #tpu.memory_space<vmem>>, vector<72x128xbf16>
    %63 = arith.extf %62 : vector<72x128xbf16> to vector<72x128xf32>
    %64 = vector.shape_cast %63 : vector<72x128xf32> to vector<24x3x128xf32>
    %cst_54 = arith.constant dense<0xFF800000> : vector<24x128xf32>
    %65 = vector.multi_reduction <maximumf>, %64, %cst_54 [1] : vector<24x3x128xf32> to vector<24x128xf32>
    %66 = arith.truncf %65 : vector<24x128xf32> to vector<24x128xbf16>
    %c0_55 = arith.constant 0 : index
    %c0_56 = arith.constant 0 : index
    %67 = vector.load %arg15[%c0_55, %c0_56] : memref<64x128xbf16, #tpu.memory_space<vmem>>, vector<24x128xbf16>
    tpu.vector_store %arg15[%c0_55, %c0_56], %66 {strides = array<i32>} : memref<64x128xbf16, #tpu.memory_space<vmem>>, vector<24x128xbf16>,
    %c88 = arith.constant 88 : index
    %c0_57 = arith.constant 0 : index
    %68 = vector.load %arg14[%c88, %c0_57] : memref<176x128xbf16, #tpu.memory_space<vmem>>, vector<72x128xbf16>
    %69 = arith.extf %68 : vector<72x128xbf16> to vector<72x128xf32>
    %70 = vector.shape_cast %69 : vector<72x128xf32> to vector<24x3x128xf32>
    %cst_58 = arith.constant dense<0xFF800000> : vector<24x128xf32>
    %71 = vector.multi_reduction <maximumf>, %70, %cst_58 [1] : vector<24x3x128xf32> to vector<24x128xf32>
    %72 = arith.truncf %71 : vector<24x128xf32> to vector<24x128xbf16>
    %c24 = arith.constant 24 : index
    %c0_59 = arith.constant 0 : index
    %73 = vector.load %arg15[%c24, %c0_59] : memref<64x128xbf16, #tpu.memory_space<vmem>>, vector<24x128xbf16>
    tpu.vector_store %arg15[%c24, %c0_59], %72 {strides = array<i32>} : memref<64x128xbf16, #tpu.memory_space<vmem>>, vector<24x128xbf16>,
    %c0_60 = arith.constant 0 : index
    %c0_61 = arith.constant 0 : index
    %74 = vector.load %arg15[%c0_60, %c0_61] : memref<64x128xbf16, #tpu.memory_space<vmem>>, vector<48x128xbf16>
    %c0_62 = arith.constant 0 : index
    %c0_63 = arith.constant 0 : index
    %75 = vector.load %arg6[%c0_62, %c0_63] : memref<1280x256xbf16, #tpu.memory_space<vmem>>, vector<128x256xbf16>
    %cst_64 = arith.constant dense<0.000000e+00> : vector<48x256xf32>
    %76 = tpu.matmul %74, %75, %cst_64 {dimension_numbers = #tpu.dot_dimension_numbers<[1], [0], [0], [1], [0, 0, 1, 1], [], []>} : vector<48x128xbf16>, vector<128x256xbf16>, vector<48x256xf32> -> vector<48x256xf32>
    %c1_65 = arith.constant 1 : index
    %c0_66 = arith.constant 0 : index
    %77 = vector.load %arg15[%c1_65, %c0_66] : memref<64x128xbf16, #tpu.memory_space<vmem>>, vector<48x128xbf16>
    %c128_67 = arith.constant 128 : index
    %c0_68 = arith.constant 0 : index
    %78 = vector.load %arg6[%c128_67, %c0_68] : memref<1280x256xbf16, #tpu.memory_space<vmem>>, vector<128x256xbf16>
    %cst_69 = arith.constant dense<0.000000e+00> : vector<48x256xf32>
    %79 = tpu.matmul %77, %78, %cst_69 {dimension_numbers = #tpu.dot_dimension_numbers<[1], [0], [0], [1], [0, 0, 1, 1], [], []>} : vector<48x128xbf16>, vector<128x256xbf16>, vector<48x256xf32> -> vector<48x256xf32>
    %80 = arith.addf %76, %79 : vector<48x256xf32>
    %c2_70 = arith.constant 2 : index
    %c0_71 = arith.constant 0 : index
    %81 = vector.load %arg15[%c2_70, %c0_71] : memref<64x128xbf16, #tpu.memory_space<vmem>>, vector<48x128xbf16>
    %c256_72 = arith.constant 256 : index
    %c0_73 = arith.constant 0 : index
    %82 = vector.load %arg6[%c256_72, %c0_73] : memref<1280x256xbf16, #tpu.memory_space<vmem>>, vector<128x256xbf16>
    %cst_74 = arith.constant dense<0.000000e+00> : vector<48x256xf32>
    %83 = tpu.matmul %81, %82, %cst_74 {dimension_numbers = #tpu.dot_dimension_numbers<[1], [0], [0], [1], [0, 0, 1, 1], [], []>} : vector<48x128xbf16>, vector<128x256xbf16>, vector<48x256xf32> -> vector<48x256xf32>
    %84 = arith.addf %80, %83 : vector<48x256xf32>
    %c3_75 = arith.constant 3 : index
    %c0_76 = arith.constant 0 : index
    %85 = vector.load %arg15[%c3_75, %c0_76] : memref<64x128xbf16, #tpu.memory_space<vmem>>, vector<48x128xbf16>
    %c384_77 = arith.constant 384 : index
    %c0_78 = arith.constant 0 : index
    %86 = vector.load %arg6[%c384_77, %c0_78] : memref<1280x256xbf16, #tpu.memory_space<vmem>>, vector<128x256xbf16>
    %cst_79 = arith.constant dense<0.000000e+00> : vector<48x256xf32>
    %87 = tpu.matmul %85, %86, %cst_79 {dimension_numbers = #tpu.dot_dimension_numbers<[1], [0], [0], [1], [0, 0, 1, 1], [], []>} : vector<48x128xbf16>, vector<128x256xbf16>, vector<48x256xf32> -> vector<48x256xf32>
    %88 = arith.addf %84, %87 : vector<48x256xf32>
    %c4_80 = arith.constant 4 : index
    %c0_81 = arith.constant 0 : index
    %89 = vector.load %arg15[%c4_80, %c0_81] : memref<64x128xbf16, #tpu.memory_space<vmem>>, vector<48x128xbf16>
    %c512_82 = arith.constant 512 : index
    %c0_83 = arith.constant 0 : index
    %90 = vector.load %arg6[%c512_82, %c0_83] : memref<1280x256xbf16, #tpu.memory_space<vmem>>, vector<128x256xbf16>
    %cst_84 = arith.constant dense<0.000000e+00> : vector<48x256xf32>
    %91 = tpu.matmul %89, %90, %cst_84 {dimension_numbers = #tpu.dot_dimension_numbers<[1], [0], [0], [1], [0, 0, 1, 1], [], []>} : vector<48x128xbf16>, vector<128x256xbf16>, vector<48x256xf32> -> vector<48x256xf32>
    %92 = arith.addf %88, %91 : vector<48x256xf32>
    %c5_85 = arith.constant 5 : index
    %c0_86 = arith.constant 0 : index
    %93 = vector.load %arg15[%c5_85, %c0_86] : memref<64x128xbf16, #tpu.memory_space<vmem>>, vector<48x128xbf16>
    %c640_87 = arith.constant 640 : index
    %c0_88 = arith.constant 0 : index
    %94 = vector.load %arg6[%c640_87, %c0_88] : memref<1280x256xbf16, #tpu.memory_space<vmem>>, vector<128x256xbf16>
    %cst_89 = arith.constant dense<0.000000e+00> : vector<48x256xf32>
    %95 = tpu.matmul %93, %94, %cst_89 {dimension_numbers = #tpu.dot_dimension_numbers<[1], [0], [0], [1], [0, 0, 1, 1], [], []>} : vector<48x128xbf16>, vector<128x256xbf16>, vector<48x256xf32> -> vector<48x256xf32>
    %96 = arith.addf %92, %95 : vector<48x256xf32>
    %c6_90 = arith.constant 6 : index
    %c0_91 = arith.constant 0 : index
    %97 = vector.load %arg15[%c6_90, %c0_91] : memref<64x128xbf16, #tpu.memory_space<vmem>>, vector<48x128xbf16>
    %c768_92 = arith.constant 768 : index
    %c0_93 = arith.constant 0 : index
    %98 = vector.load %arg6[%c768_92, %c0_93] : memref<1280x256xbf16, #tpu.memory_space<vmem>>, vector<128x256xbf16>
    %cst_94 = arith.constant dense<0.000000e+00> : vector<48x256xf32>
    %99 = tpu.matmul %97, %98, %cst_94 {dimension_numbers = #tpu.dot_dimension_numbers<[1], [0], [0], [1], [0, 0, 1, 1], [], []>} : vector<48x128xbf16>, vector<128x256xbf16>, vector<48x256xf32> -> vector<48x256xf32>
    %100 = arith.addf %96, %99 : vector<48x256xf32>
    %c7_95 = arith.constant 7 : index
    %c0_96 = arith.constant 0 : index
    %101 = vector.load %arg15[%c7_95, %c0_96] : memref<64x128xbf16, #tpu.memory_space<vmem>>, vector<48x128xbf16>
    %c896_97 = arith.constant 896 : index
    %c0_98 = arith.constant 0 : index
    %102 = vector.load %arg6[%c896_97, %c0_98] : memref<1280x256xbf16, #tpu.memory_space<vmem>>, vector<128x256xbf16>
    %cst_99 = arith.constant dense<0.000000e+00> : vector<48x256xf32>
    %103 = tpu.matmul %101, %102, %cst_99 {dimension_numbers = #tpu.dot_dimension_numbers<[1], [0], [0], [1], [0, 0, 1, 1], [], []>} : vector<48x128xbf16>, vector<128x256xbf16>, vector<48x256xf32> -> vector<48x256xf32>
    %104 = arith.addf %100, %103 : vector<48x256xf32>
    %c8_100 = arith.constant 8 : index
    %c0_101 = arith.constant 0 : index
    %105 = vector.load %arg15[%c8_100, %c0_101] : memref<64x128xbf16, #tpu.memory_space<vmem>>, vector<48x128xbf16>
    %c1024_102 = arith.constant 1024 : index
    %c0_103 = arith.constant 0 : index
    %106 = vector.load %arg6[%c1024_102, %c0_103] : memref<1280x256xbf16, #tpu.memory_space<vmem>>, vector<128x256xbf16>
    %cst_104 = arith.constant dense<0.000000e+00> : vector<48x256xf32>
    %107 = tpu.matmul %105, %106, %cst_104 {dimension_numbers = #tpu.dot_dimension_numbers<[1], [0], [0], [1], [0, 0, 1, 1], [], []>} : vector<48x128xbf16>, vector<128x256xbf16>, vector<48x256xf32> -> vector<48x256xf32>
    %108 = arith.addf %104, %107 : vector<48x256xf32>
    %c9_105 = arith.constant 9 : index
    %c0_106 = arith.constant 0 : index
    %109 = vector.load %arg15[%c9_105, %c0_106] : memref<64x128xbf16, #tpu.memory_space<vmem>>, vector<48x128xbf16>
    %c1152_107 = arith.constant 1152 : index
    %c0_108 = arith.constant 0 : index
    %110 = vector.load %arg6[%c1152_107, %c0_108] : memref<1280x256xbf16, #tpu.memory_space<vmem>>, vector<128x256xbf16>
    %cst_109 = arith.constant dense<0.000000e+00> : vector<48x256xf32>
    %111 = tpu.matmul %109, %110, %cst_109 {dimension_numbers = #tpu.dot_dimension_numbers<[1], [0], [0], [1], [0, 0, 1, 1], [], []>} : vector<48x128xbf16>, vector<128x256xbf16>, vector<48x256xf32> -> vector<48x256xf32>
    %112 = arith.addf %108, %111 : vector<48x256xf32>
    %c0_110 = arith.constant 0 : index
    %c0_111 = arith.constant 0 : index
    %113 = vector.load %arg7[%c0_110, %c0_111] : memref<1x256xf32, #tpu.memory_space<vmem>>, vector<1x256xf32>
    %114 = vector.broadcast %113 : vector<1x256xf32> to vector<48x256xf32>
    %115 = arith.addf %112, %114 : vector<48x256xf32>
    %cst_112 = arith.constant 0.000000e+00 : f32
    %116 = vector.broadcast %cst_112 : f32 to vector<48x256xf32>
    %117 = arith.maximumf %115, %116 : vector<48x256xf32>
    %118 = arith.truncf %117 : vector<48x256xf32> to vector<48x256xbf16>
    %c0_113 = arith.constant 0 : index
    %c0_114 = arith.constant 0 : index
    %119 = vector.load %arg16[%c0_113, %c0_114] : memref<64x256xbf16, #tpu.memory_space<vmem>>, vector<48x256xbf16>
    tpu.vector_store %arg16[%c0_113, %c0_114], %118 {strides = array<i32>} : memref<64x256xbf16, #tpu.memory_space<vmem>>, vector<48x256xbf16>,
    %120 = tpu.iota {dimensions = array<i32: 0>} : vector<48x256xi32>
    %c24_i32 = arith.constant 24 : i32
    %c0_i32 = arith.constant 0 : i32
    %121 = arith.cmpi eq, %c24_i32, %c0_i32 : i32
    %c1_i32 = arith.constant 1 : i32
    %122 = arith.select %121, %c1_i32, %c24_i32 : i32
    %123 = vector.broadcast %122 : i32 to vector<48x256xi32>
    %124 = arith.remsi %120, %123 : vector<48x256xi32>
    %c0_i32_115 = arith.constant 0 : i32
    %125 = vector.broadcast %c0_i32_115 : i32 to vector<48x256xi32>
    %126 = arith.cmpi ne, %124, %125 : vector<48x256xi32>
    %c0_i32_116 = arith.constant 0 : i32
    %127 = vector.broadcast %c0_i32_116 : i32 to vector<48x256xi32>
    %128 = arith.cmpi slt, %124, %127 : vector<48x256xi32>
    %c0_i32_117 = arith.constant 0 : i32
    %129 = arith.cmpi slt, %122, %c0_i32_117 : i32
    %130 = vector.broadcast %129 : i1 to vector<48x256xi1>
    %131 = vector.broadcast %130 : vector<48x256xi1> to vector<48x256xi1>
    %132 = arith.xori %128, %131 : vector<48x256xi1>
    %133 = arith.andi %132, %126 : vector<48x256xi1>
    %134 = vector.broadcast %122 : i32 to vector<48x256xi32>
    %135 = arith.addi %124, %134 : vector<48x256xi32>
    %136 = arith.select %133, %135, %124 : vector<48x256xi1>, vector<48x256xi32>
    %c6_i32 = arith.constant 6 : i32
    %137 = vector.broadcast %c6_i32 : i32 to vector<48x256xi32>
    %138 = arith.cmpi slt, %136, %137 : vector<48x256xi32>
    %c0_118 = arith.constant 0 : index
    %c0_119 = arith.constant 0 : index
    %139 = vector.load %arg16[%c0_118, %c0_119] : memref<64x256xbf16, #tpu.memory_space<vmem>>, vector<48x256xbf16>
    %c0_120 = arith.constant 0 : index
    %c0_121 = arith.constant 0 : index
    %140 = vector.load %arg8[%c0_120, %c0_121] : memref<2560x256xbf16, #tpu.memory_space<vmem>>, vector<256x256xbf16>
    %cst_122 = arith.constant dense<0.000000e+00> : vector<48x256xf32>
    %141 = tpu.matmul %139, %140, %cst_122 {dimension_numbers = #tpu.dot_dimension_numbers<[1], [0], [0], [1], [0, 0, 1, 1], [], []>} : vector<48x256xbf16>, vector<256x256xbf16>, vector<48x256xf32> -> vector<48x256xf32>
    %c1_123 = arith.constant 1 : index
    %c0_124 = arith.constant 0 : index
    %142 = vector.load %arg16[%c1_123, %c0_124] : memref<64x256xbf16, #tpu.memory_space<vmem>>, vector<48x256xbf16>
    %c256_125 = arith.constant 256 : index
    %c0_126 = arith.constant 0 : index
    %143 = vector.load %arg8[%c256_125, %c0_126] : memref<2560x256xbf16, #tpu.memory_space<vmem>>, vector<256x256xbf16>
    %cst_127 = arith.constant dense<0.000000e+00> : vector<48x256xf32>
    %144 = tpu.matmul %142, %143, %cst_127 {dimension_numbers = #tpu.dot_dimension_numbers<[1], [0], [0], [1], [0, 0, 1, 1], [], []>} : vector<48x256xbf16>, vector<256x256xbf16>, vector<48x256xf32> -> vector<48x256xf32>
    %145 = arith.addf %141, %144 : vector<48x256xf32>
    %c2_128 = arith.constant 2 : index
    %c0_129 = arith.constant 0 : index
    %146 = vector.load %arg16[%c2_128, %c0_129] : memref<64x256xbf16, #tpu.memory_space<vmem>>, vector<48x256xbf16>
    %c512_130 = arith.constant 512 : index
    %c0_131 = arith.constant 0 : index
    %147 = vector.load %arg8[%c512_130, %c0_131] : memref<2560x256xbf16, #tpu.memory_space<vmem>>, vector<256x256xbf16>
    %cst_132 = arith.constant dense<0.000000e+00> : vector<48x256xf32>
    %148 = tpu.matmul %146, %147, %cst_132 {dimension_numbers = #tpu.dot_dimension_numbers<[1], [0], [0], [1], [0, 0, 1, 1], [], []>} : vector<48x256xbf16>, vector<256x256xbf16>, vector<48x256xf32> -> vector<48x256xf32>
    %149 = arith.addf %145, %148 : vector<48x256xf32>
    %c3_133 = arith.constant 3 : index
    %c0_134 = arith.constant 0 : index
    %150 = vector.load %arg16[%c3_133, %c0_134] : memref<64x256xbf16, #tpu.memory_space<vmem>>, vector<48x256xbf16>
    %c768_135 = arith.constant 768 : index
    %c0_136 = arith.constant 0 : index
    %151 = vector.load %arg8[%c768_135, %c0_136] : memref<2560x256xbf16, #tpu.memory_space<vmem>>, vector<256x256xbf16>
    %cst_137 = arith.constant dense<0.000000e+00> : vector<48x256xf32>
    %152 = tpu.matmul %150, %151, %cst_137 {dimension_numbers = #tpu.dot_dimension_numbers<[1], [0], [0], [1], [0, 0, 1, 1], [], []>} : vector<48x256xbf16>, vector<256x256xbf16>, vector<48x256xf32> -> vector<48x256xf32>
    %153 = arith.addf %149, %152 : vector<48x256xf32>
    %c4_138 = arith.constant 4 : index
    %c0_139 = arith.constant 0 : index
    %154 = vector.load %arg16[%c4_138, %c0_139] : memref<64x256xbf16, #tpu.memory_space<vmem>>, vector<48x256xbf16>
    %c1024_140 = arith.constant 1024 : index
    %c0_141 = arith.constant 0 : index
    %155 = vector.load %arg8[%c1024_140, %c0_141] : memref<2560x256xbf16, #tpu.memory_space<vmem>>, vector<256x256xbf16>
    %cst_142 = arith.constant dense<0.000000e+00> : vector<48x256xf32>
    %156 = tpu.matmul %154, %155, %cst_142 {dimension_numbers = #tpu.dot_dimension_numbers<[1], [0], [0], [1], [0, 0, 1, 1], [], []>} : vector<48x256xbf16>, vector<256x256xbf16>, vector<48x256xf32> -> vector<48x256xf32>
    %157 = arith.addf %153, %156 : vector<48x256xf32>
    %c5_143 = arith.constant 5 : index
    %c0_144 = arith.constant 0 : index
    %158 = vector.load %arg16[%c5_143, %c0_144] : memref<64x256xbf16, #tpu.memory_space<vmem>>, vector<48x256xbf16>
    %c1280 = arith.constant 1280 : index
    %c0_145 = arith.constant 0 : index
    %159 = vector.load %arg8[%c1280, %c0_145] : memref<2560x256xbf16, #tpu.memory_space<vmem>>, vector<256x256xbf16>
    %cst_146 = arith.constant dense<0.000000e+00> : vector<48x256xf32>
    %160 = tpu.matmul %158, %159, %cst_146 {dimension_numbers = #tpu.dot_dimension_numbers<[1], [0], [0], [1], [0, 0, 1, 1], [], []>} : vector<48x256xbf16>, vector<256x256xbf16>, vector<48x256xf32> -> vector<48x256xf32>
    %161 = arith.addf %157, %160 : vector<48x256xf32>
    %c6_147 = arith.constant 6 : index
    %c0_148 = arith.constant 0 : index
    %162 = vector.load %arg16[%c6_147, %c0_148] : memref<64x256xbf16, #tpu.memory_space<vmem>>, vector<48x256xbf16>
    %c1536 = arith.constant 1536 : index
    %c0_149 = arith.constant 0 : index
    %163 = vector.load %arg8[%c1536, %c0_149] : memref<2560x256xbf16, #tpu.memory_space<vmem>>, vector<256x256xbf16>
    %cst_150 = arith.constant dense<0.000000e+00> : vector<48x256xf32>
    %164 = tpu.matmul %162, %163, %cst_150 {dimension_numbers = #tpu.dot_dimension_numbers<[1], [0], [0], [1], [0, 0, 1, 1], [], []>} : vector<48x256xbf16>, vector<256x256xbf16>, vector<48x256xf32> -> vector<48x256xf32>
    %165 = arith.addf %161, %164 : vector<48x256xf32>
    %c7_151 = arith.constant 7 : index
    %c0_152 = arith.constant 0 : index
    %166 = vector.load %arg16[%c7_151, %c0_152] : memref<64x256xbf16, #tpu.memory_space<vmem>>, vector<48x256xbf16>
    %c1792 = arith.constant 1792 : index
    %c0_153 = arith.constant 0 : index
    %167 = vector.load %arg8[%c1792, %c0_153] : memref<2560x256xbf16, #tpu.memory_space<vmem>>, vector<256x256xbf16>
    %cst_154 = arith.constant dense<0.000000e+00> : vector<48x256xf32>
    %168 = tpu.matmul %166, %167, %cst_154 {dimension_numbers = #tpu.dot_dimension_numbers<[1], [0], [0], [1], [0, 0, 1, 1], [], []>} : vector<48x256xbf16>, vector<256x256xbf16>, vector<48x256xf32> -> vector<48x256xf32>
    %169 = arith.addf %165, %168 : vector<48x256xf32>
    %c8_155 = arith.constant 8 : index
    %c0_156 = arith.constant 0 : index
    %170 = vector.load %arg16[%c8_155, %c0_156] : memref<64x256xbf16, #tpu.memory_space<vmem>>, vector<48x256xbf16>
    %c2048 = arith.constant 2048 : index
    %c0_157 = arith.constant 0 : index
    %171 = vector.load %arg8[%c2048, %c0_157] : memref<2560x256xbf16, #tpu.memory_space<vmem>>, vector<256x256xbf16>
    %cst_158 = arith.constant dense<0.000000e+00> : vector<48x256xf32>
    %172 = tpu.matmul %170, %171, %cst_158 {dimension_numbers = #tpu.dot_dimension_numbers<[1], [0], [0], [1], [0, 0, 1, 1], [], []>} : vector<48x256xbf16>, vector<256x256xbf16>, vector<48x256xf32> -> vector<48x256xf32>
    %173 = arith.addf %169, %172 : vector<48x256xf32>
    %c9_159 = arith.constant 9 : index
    %c0_160 = arith.constant 0 : index
    %174 = vector.load %arg16[%c9_159, %c0_160] : memref<64x256xbf16, #tpu.memory_space<vmem>>, vector<48x256xbf16>
    %c2304 = arith.constant 2304 : index
    %c0_161 = arith.constant 0 : index
    %175 = vector.load %arg8[%c2304, %c0_161] : memref<2560x256xbf16, #tpu.memory_space<vmem>>, vector<256x256xbf16>
    %cst_162 = arith.constant dense<0.000000e+00> : vector<48x256xf32>
    %176 = tpu.matmul %174, %175, %cst_162 {dimension_numbers = #tpu.dot_dimension_numbers<[1], [0], [0], [1], [0, 0, 1, 1], [], []>} : vector<48x256xbf16>, vector<256x256xbf16>, vector<48x256xf32> -> vector<48x256xf32>
    %177 = arith.addf %173, %176 : vector<48x256xf32>
    %c0_163 = arith.constant 0 : index
    %c0_164 = arith.constant 0 : index
    %178 = vector.load %arg9[%c0_163, %c0_164] : memref<1x256xf32, #tpu.memory_space<vmem>>, vector<1x256xf32>
    %179 = vector.broadcast %178 : vector<1x256xf32> to vector<48x256xf32>
    %180 = arith.addf %177, %179 : vector<48x256xf32>
    %cst_165 = arith.constant 0.000000e+00 : f32
    %181 = vector.broadcast %cst_165 : f32 to vector<48x256xf32>
    %182 = arith.maximumf %180, %181 : vector<48x256xf32>
    %cst_166 = arith.constant 0.000000e+00 : f32
    %183 = vector.broadcast %cst_166 : f32 to vector<48x256xf32>
    %184 = arith.select %138, %182, %183 : vector<48x256xi1>, vector<48x256xf32>
    %c0_167 = arith.constant 0 : index
    %c0_168 = arith.constant 0 : index
    %185 = vector.load %arg17[%c0_167, %c0_168] : memref<48x256xf32, #tpu.memory_space<vmem>>, vector<48x256xf32>
    tpu.vector_store %arg17[%c0_167, %c0_168], %184 {strides = array<i32>} : memref<48x256xf32, #tpu.memory_space<vmem>>, vector<48x256xf32>,
    %c0_169 = arith.constant 0 : index
    %c0_170 = arith.constant 0 : index
    %186 = vector.load %arg17[%c0_169, %c0_170] : memref<48x256xf32, #tpu.memory_space<vmem>>, vector<48x256xf32>
    %187 = vector.shape_cast %186 : vector<48x256xf32> to vector<2x24x256xf32>
    %cst_171 = arith.constant dense<0.000000e+00> : vector<2x256xf32>
    %188 = vector.multi_reduction <add>, %187, %cst_171 [1] : vector<2x24x256xf32> to vector<2x256xf32>
    %cst_172 = arith.constant 0.166666672 : f32
    %189 = vector.broadcast %cst_172 : f32 to vector<2x256xf32>
    %190 = arith.mulf %188, %189 : vector<2x256xf32>
    %cst_173 = arith.constant 0.000000e+00 : f32
    %191 = vector.broadcast %cst_173 : f32 to vector<8x256xf32>
    %c0_174 = arith.constant 0 : index
    %c0_175 = arith.constant 0 : index
    %192 = vector.load %arg18[%c0_174, %c0_175] : memref<8x256xf32, #tpu.memory_space<vmem>>, vector<8x256xf32>
    tpu.vector_store %arg18[%c0_174, %c0_175], %191 {strides = array<i32>} : memref<8x256xf32, #tpu.memory_space<vmem>>, vector<8x256xf32>,
    %c0_176 = arith.constant 0 : index
    %c0_177 = arith.constant 0 : index
    %193 = vector.load %arg18[%c0_176, %c0_177] : memref<8x256xf32, #tpu.memory_space<vmem>>, vector<2x256xf32>
    tpu.vector_store %arg18[%c0_176, %c0_177], %190 {strides = array<i32>} : memref<8x256xf32, #tpu.memory_space<vmem>>, vector<2x256xf32>,
    %c0_178 = arith.constant 0 : index
    %c0_179 = arith.constant 0 : index
    %194 = vector.load %arg18[%c0_178, %c0_179] : memref<8x256xf32, #tpu.memory_space<vmem>>, vector<8x256xf32>
    %195 = arith.truncf %194 : vector<8x256xf32> to vector<8x256xbf16>
    %c0_180 = arith.constant 0 : index
    %c0_181 = arith.constant 0 : index
    %196 = vector.load %arg10[%c0_180, %c0_181] : memref<256x128xbf16, #tpu.memory_space<vmem>>, vector<256x128xbf16>
    %cst_182 = arith.constant dense<0.000000e+00> : vector<8x128xf32>
    %197 = tpu.matmul %195, %196, %cst_182 {dimension_numbers = #tpu.dot_dimension_numbers<[1], [0], [0], [1], [0, 0, 1, 1], [], []>} : vector<8x256xbf16>, vector<256x128xbf16>, vector<8x128xf32> -> vector<8x128xf32>
    %c0_183 = arith.constant 0 : index
    %c0_184 = arith.constant 0 : index
    %198 = vector.load %arg11[%c0_183, %c0_184] : memref<1x128xf32, #tpu.memory_space<vmem>>, vector<1x128xf32>
    %199 = vector.broadcast %198 : vector<1x128xf32> to vector<8x128xf32>
    %200 = arith.addf %197, %199 : vector<8x128xf32>
    %201 = tpu.iota {dimensions = array<i32: 1>} : vector<8x128xi32>
    %c6_i32_185 = arith.constant 6 : i32
    %202 = vector.broadcast %c6_i32_185 : i32 to vector<8x128xi32>
    %203 = arith.cmpi slt, %201, %202 : vector<8x128xi32>
    %cst_186 = arith.constant -1.000000e+30 : f32
    %204 = vector.broadcast %cst_186 : f32 to vector<8x128xf32>
    %205 = arith.select %203, %200, %204 : vector<8x128xi1>, vector<8x128xf32>
    %cst_187 = arith.constant dense<0xFF800000> : vector<8xf32>
    %206 = vector.multi_reduction <maximumf>, %205, %cst_187 [1] : vector<8x128xf32> to vector<8xf32>
    %207 = vector.shape_cast %206 : vector<8xf32> to vector<8x1xf32>
    %208 = vector.broadcast %207 : vector<8x1xf32> to vector<8x128xf32>
    %209 = arith.subf %205, %208 : vector<8x128xf32>
    %210 = math.exp %209 : vector<8x128xf32>
    %cst_188 = arith.constant dense<0.000000e+00> : vector<8xf32>
    %211 = vector.multi_reduction <add>, %210, %cst_188 [1] : vector<8x128xf32> to vector<8xf32>
    %212 = vector.shape_cast %211 : vector<8xf32> to vector<8x1xf32>
    %213 = math.log %212 : vector<8x1xf32>
    %214 = vector.broadcast %213 : vector<8x1xf32> to vector<8x128xf32>
    %215 = arith.subf %209, %214 : vector<8x128xf32>
    %c0_189 = arith.constant 0 : index
    %c0_190 = arith.constant 0 : index
    %216 = vector.load %arg12[%c0_189, %c0_190] : memref<8x128xf32, #tpu.memory_space<vmem>>, vector<8x128xf32>
    tpu.vector_store %arg12[%c0_189, %c0_190], %215 {strides = array<i32>} : memref<8x128xf32, #tpu.memory_space<vmem>>, vector<8x128xf32>,
    return
  }
  func.func @transform_0(%arg0: i32) -> (i32, i32) {
    %c0_i32 = arith.constant 0 : i32
    %c0_i32_0 = arith.constant 0 : i32
    return %arg0, %c0_i32 : i32, i32
  }
  func.func @transform_1(%arg0: i32) -> (i32, i32) {
    %c0_i32 = arith.constant 0 : i32
    %c0_i32_0 = arith.constant 0 : i32
    %c0_i32_1 = arith.constant 0 : i32
    return %c0_i32, %c0_i32_0 : i32, i32
  }
  func.func @transform_2(%arg0: i32) -> (i32, i32) {
    %c0_i32 = arith.constant 0 : i32
    %c0_i32_0 = arith.constant 0 : i32
    %c0_i32_1 = arith.constant 0 : i32
    return %c0_i32, %c0_i32_0 : i32, i32
  }
  func.func @transform_3(%arg0: i32) -> (i32, i32) {
    %c0_i32 = arith.constant 0 : i32
    %c0_i32_0 = arith.constant 0 : i32
    %c0_i32_1 = arith.constant 0 : i32
    return %c0_i32, %c0_i32_0 : i32, i32
  }
  func.func @transform_4(%arg0: i32) -> (i32, i32) {
    %c0_i32 = arith.constant 0 : i32
    %c0_i32_0 = arith.constant 0 : i32
    %c0_i32_1 = arith.constant 0 : i32
    return %c0_i32, %c0_i32_0 : i32, i32
  }
  func.func @transform_5(%arg0: i32) -> (i32, i32) {
    %c0_i32 = arith.constant 0 : i32
    %c0_i32_0 = arith.constant 0 : i32
    %c0_i32_1 = arith.constant 0 : i32
    return %c0_i32, %c0_i32_0 : i32, i32
  }
  func.func @transform_6(%arg0: i32) -> (i32, i32) {
    %c0_i32 = arith.constant 0 : i32
    %c0_i32_0 = arith.constant 0 : i32
    %c0_i32_1 = arith.constant 0 : i32
    return %c0_i32, %c0_i32_0 : i32, i32
  }
  func.func @transform_7(%arg0: i32) -> (i32, i32) {
    %c0_i32 = arith.constant 0 : i32
    %c0_i32_0 = arith.constant 0 : i32
    %c0_i32_1 = arith.constant 0 : i32
    return %c0_i32, %c0_i32_0 : i32, i32
  }
  func.func @transform_8(%arg0: i32) -> (i32, i32) {
    %c0_i32 = arith.constant 0 : i32
    %c0_i32_0 = arith.constant 0 : i32
    %c0_i32_1 = arith.constant 0 : i32
    return %c0_i32, %c0_i32_0 : i32, i32
  }
  func.func @transform_9(%arg0: i32) -> (i32, i32) {
    %c0_i32 = arith.constant 0 : i32
    %c0_i32_0 = arith.constant 0 : i32
    %c0_i32_1 = arith.constant 0 : i32
    return %c0_i32, %c0_i32_0 : i32, i32
  }
  func.func @transform_10(%arg0: i32) -> (i32, i32) {
    %c0_i32 = arith.constant 0 : i32
    %c0_i32_0 = arith.constant 0 : i32
    %c0_i32_1 = arith.constant 0 : i32
    return %c0_i32, %c0_i32_0 : i32, i32
  }
  func.func @transform_11(%arg0: i32) -> (i32, i32) {
    %c0_i32 = arith.constant 0 : i32
    %c0_i32_0 = arith.constant 0 : i32
    return %arg0, %c0_i32 : i32, i32
  }
}

</mosaic_0001>

<llo_original>
// kernel: cnn_forward.1
$region0: #{cnn_forward.1}
  #allocation0 [shape = 'u32[]', space=smem, size = 0x4, offset = 0x4, fixed_abs, tag = 'smem constant byte address 0x4 - core index']
  #allocation1 [shape = 'u32[144,128]{1,0:T(1,128)}', space=vmem, size = 0x12000, scoped, tag = 'internal scratch']
  #allocation2 [shape = 'bf16[192,128]{1,0:T(16,128)(2,1)}', space=vmem, size = 0xc000, scoped, tag = 'scratch operand']
  #allocation3 [shape = 'bf16[176,128]{1,0:T(16,128)(2,1)}', space=vmem, size = 0xb000, scoped, tag = 'scratch operand']
  #allocation4 [shape = 'bf16[64,128]{1,0:T(16,128)(2,1)}', space=vmem, size = 0x4000, scoped, tag = 'scratch operand']
  #allocation5 [shape = 'bf16[64,256]{1,0:T(16,128)(2,1)}', space=vmem, size = 0x8000, scoped, tag = 'scratch operand']
  #allocation6 [shape = 'f32[48,256]{1,0:T(8,128)}', space=vmem, size = 0xc000, scoped, tag = 'scratch operand']
  #allocation7 [shape = 'f32[8,256]{1,0:T(8,128)}', space=vmem, size = 0x2000, scoped, tag = 'scratch operand']
  %s0 = inlined_call_operand.vmem [shape: bf16[352,128], index: 0, kind: input, shape index: {}]
  %s1 = inlined_call_operand.hbm [shape: bf16[128,128], index: 1, kind: input, shape index: {}]
  %s2 = inlined_call_operand.hbm [shape: f32[1,128], index: 2, kind: input, shape index: {}]
  %s3 = inlined_call_operand.hbm [shape: bf16[1280,128], index: 3, kind: input, shape index: {}]
  %s4 = inlined_call_operand.hbm [shape: f32[1,128], index: 4, kind: input, shape index: {}]
  %s5 = inlined_call_operand.hbm [shape: bf16[1280,256], index: 5, kind: input, shape index: {}]
  %s6 = inlined_call_operand.hbm [shape: f32[1,256], index: 6, kind: input, shape index: {}]
  %s7 = inlined_call_operand.hbm [shape: bf16[2560,256], index: 7, kind: input, shape index: {}]
  %s8 = inlined_call_operand.hbm [shape: f32[1,256], index: 8, kind: input, shape index: {}]
  %s9 = inlined_call_operand.hbm [shape: bf16[256,128], index: 9, kind: input, shape index: {}]
  %s10 = inlined_call_operand.hbm [shape: f32[1,128], index: 10, kind: input, shape index: {}]
  %s11 = inlined_call_operand.vmem [shape: f32[16,128], index: 11, kind: output, shape index: {}]
  %s12 = sld [smem:[#allocation0]]
  $region117: #{cnn_forward.1} parent=0
    _
  %s14 = ssub.s32 1, %s12
  %s15 = scalar_select 0, %s14, %s12
  $region1: #{cnn_forward.1} parent=0
    #allocation8 [shape = 'u8[32768]{0}', space=vmem, size = 0x8000, scoped, tag = 'input window, operand 1, single buffered']
    #allocation9 [shape = 's32[2]{0}', space=sflag, size = 0x8, scoped, tag = 'scoped memory for cnn_forward.1']
    #allocation10 [shape = 'u8[512]{0}', space=vmem, size = 0x400, scoped, tag = 'input window, operand 2, single buffered']
    #allocation11 [shape = 's32[1]{0}', space=sflag, size = 0x4, scoped, tag = 'scoped memory for cnn_forward.1']
    #allocation12 [shape = 'u8[327680]{0}', space=vmem, size = 0x50000, scoped, tag = 'input window, operand 3, single buffered']
    #allocation13 [shape = 'u8[512]{0}', space=vmem, size = 0x400, scoped, tag = 'input window, operand 4, single buffered']
    #allocation14 [shape = 's32[1]{0}', space=sflag, size = 0x4, scoped, tag = 'scoped memory for cnn_forward.1']
    #allocation15 [shape = 'u8[655360]{0}', space=vmem, size = 0xa0000, scoped, tag = 'input window, operand 5, single buffered']
    #allocation16 [shape = 'u8[1024]{0}', space=vmem, size = 0x400, scoped, tag = 'input window, operand 6, single buffered']
    #allocation17 [shape = 's32[1]{0}', space=sflag, size = 0x4, scoped, tag = 'scoped memory for cnn_forward.1']
    #allocation18 [shape = 'u8[1310720]{0}', space=vmem, size = 0x140000, scoped, tag = 'input window, operand 7, single buffered']
    #allocation19 [shape = 'u8[1024]{0}', space=vmem, size = 0x400, scoped, tag = 'input window, operand 8, single buffered']
    #allocation20 [shape = 's32[1]{0}', space=sflag, size = 0x4, scoped, tag = 'scoped memory for cnn_forward.1']
    #allocation21 [shape = 'u8[65536]{0}', space=vmem, size = 0x10000, scoped, tag = 'input window, operand 9, single buffered']
    #allocation22 [shape = 'u8[512]{0}', space=vmem, size = 0x400, scoped, tag = 'input window, operand 10, single buffered']
    #allocation23 [shape = 's32[1]{0}', space=sflag, size = 0x4, scoped, tag = 'scoped memory for cnn_forward.1']
    %16 = vsyncpa [#allocation9], 0
    %17 = vsyncpa [#allocation11], 0
    %18 = vsyncpa [#allocation14], 0
    %19 = vsyncpa [#allocation17], 0
    %20 = vsyncpa [#allocation20], 0
    %21 = vsyncpa [#allocation23], 0
    loop: start=0, step=1, limit=4
    $region2: #{cnn_forward.1} parent=1 // loop_pre_header
      _
    $region3: #{cnn_forward.1} parent=1 // loop_header
      %s23 = sphi 0, %s27
      %p24 = scmp.ge.s32.totalorder %s23, 4
      %s33 = sphi 0, %s35
      %s36 = sphi 0, %s33
      %s37 = sphi 0, %s36
      %s53 = sphi 0, %s37
      %s57 = sphi 0, %s57
      %s59 = sphi 0, %s57
      %s60 = sphi 0, %s59
      %s74 = sphi 0, %s60
      %s78 = sphi 0, %s78
      %s80 = sphi 0, %s78
      %s81 = sphi 0, %s80
      %s95 = sphi 0, %s81
      %s99 = sphi 0, %s99
      %s101 = sphi 0, %s99
      %s102 = sphi 0, %s101
      %s116 = sphi 0, %s102
      %s120 = sphi 0, %s120
      %s122 = sphi 0, %s120
      %s123 = sphi 0, %s122
      %s137 = sphi 0, %s123
      %s141 = sphi 0, %s141
      %s143 = sphi 0, %s141
      %s144 = sphi 0, %s143
      %s158 = sphi 0, %s144
      %s162 = sphi 0, %s162
      %s164 = sphi 0, %s162
      %s165 = sphi 0, %s164
      %s179 = sphi 0, %s165
      %s183 = sphi 0, %s183
      %s185 = sphi 0, %s183
      %s186 = sphi 0, %s185
      %s200 = sphi 0, %s186
      %s204 = sphi 0, %s204
      %s206 = sphi 0, %s204
      %s207 = sphi 0, %s206
      %s221 = sphi 0, %s207
      %s225 = sphi 0, %s225
      %s227 = sphi 0, %s225
      %s228 = sphi 0, %s227
      %s242 = sphi 0, %s228
      %s246 = sphi 0, %s246
      %s248 = sphi 0, %s246
      %s249 = sphi 0, %s248
      %s263 = sphi 0, %s249
      %s269 = sphi 0, %s271
      %s272 = sphi 0, %s269
      %s273 = sphi 0, %s272
      %s289 = sphi 0, %s273
    $region4: #{cnn_forward.1} parent=1 // loop_header_branch
      %26 = sbr.rel (%p24) target = $region8
    $region5: #{cnn_forward.1} parent=1 // loop_body
      %s28 = ssub.s32 %s23, 1
      %s29 = ssub.s32 %s23, 2
      %s30 = sadd.s32 %s23, 1
      %s31 = ssub.s32 %s23, %s30
      %p32 = scmp.eq.s32.totalorder %s31, 0
      %s34 = sadd.s32 %s33, 1
      %s35 = scalar_select %p32, %s33, %s34
      %p38 = pneg %p32
      %p39 = scmp.eq.s32.totalorder %s23, 1
      %p40 = por %p38, %p39
      %p41 = scmp.ne.s32.totalorder %s33, %s36
      %p42 = scmp.eq.s32.totalorder %s23, 0
      %p43 = por %p41, %p42
      %p44 = scmp.ne.s32.totalorder %s33, %s36
      %p45 = scmp.eq.s32.totalorder %s28, 1
      %p46 = por %p44, %p45
      %p47 = scmp.ne.s32.totalorder %s36, %s37
      %p48 = scmp.eq.s32.totalorder %s28, 0
      %p49 = por %p47, %p48
      %p50 = scmp.ne.s32.totalorder %s36, %s37
      %p51 = scmp.eq.s32.totalorder %s29, 1
      %p52 = por %p50, %p51
      %p54 = scmp.ne.s32.totalorder %s37, %s53
      %p55 = scmp.eq.s32.totalorder %s29, 0
      %p56 = por %p54, %p55
      %s58 = sadd.s32 %s57, 1
      %p61 = scmp.eq.s32.totalorder %s23, 1
      %p62 = scmp.ne.s32.totalorder %s57, %s59
      %p63 = scmp.eq.s32.totalorder %s23, 0
      %p64 = por %p62, %p63
      %p65 = scmp.ne.s32.totalorder %s57, %s59
      %p66 = scmp.eq.s32.totalorder %s28, 1
      %p67 = por %p65, %p66
      %p68 = scmp.ne.s32.totalorder %s59, %s60
      %p69 = scmp.eq.s32.totalorder %s28, 0
      %p70 = por %p68, %p69
      %p71 = scmp.ne.s32.totalorder %s59, %s60
      %p72 = scmp.eq.s32.totalorder %s29, 1
      %p73 = por %p71, %p72
      %p75 = scmp.ne.s32.totalorder %s60, %s74
      %p76 = scmp.eq.s32.totalorder %s29, 0
      %p77 = por %p75, %p76
      %s79 = sadd.s32 %s78, 1
      %p82 = scmp.eq.s32.totalorder %s23, 1
      %p83 = scmp.ne.s32.totalorder %s78, %s80
      %p84 = scmp.eq.s32.totalorder %s23, 0
      %p85 = por %p83, %p84
      %p86 = scmp.ne.s32.totalorder %s78, %s80
      %p87 = scmp.eq.s32.totalorder %s28, 1
      %p88 = por %p86, %p87
      %p89 = scmp.ne.s32.totalorder %s80, %s81
      %p90 = scmp.eq.s32.totalorder %s28, 0
      %p91 = por %p89, %p90
      %p92 = scmp.ne.s32.totalorder %s80, %s81
      %p93 = scmp.eq.s32.totalorder %s29, 1
      %p94 = por %p92, %p93
      %p96 = scmp.ne.s32.totalorder %s81, %s95
      %p97 = scmp.eq.s32.totalorder %s29, 0
      %p98 = por %p96, %p97
      %s100 = sadd.s32 %s99, 1
      %p103 = scmp.eq.s32.totalorder %s23, 1
      %p104 = scmp.ne.s32.totalorder %s99, %s101
      %p105 = scmp.eq.s32.totalorder %s23, 0
      %p106 = por %p104, %p105
      %p107 = scmp.ne.s32.totalorder %s99, %s101
      %p108 = scmp.eq.s32.totalorder %s28, 1
      %p109 = por %p107, %p108
      %p110 = scmp.ne.s32.totalorder %s101, %s102
      %p111 = scmp.eq.s32.totalorder %s28, 0
      %p112 = por %p110, %p111
      %p113 = scmp.ne.s32.totalorder %s101, %s102
      %p114 = scmp.eq.s32.totalorder %s29, 1
      %p115 = por %p113, %p114
      %p117 = scmp.ne.s32.totalorder %s102, %s116
      %p118 = scmp.eq.s32.totalorder %s29, 0
      %p119 = por %p117, %p118
      %s121 = sadd.s32 %s120, 1
      %p124 = scmp.eq.s32.totalorder %s23, 1
      %p125 = scmp.ne.s32.totalorder %s120, %s122
      %p126 = scmp.eq.s32.totalorder %s23, 0
      %p127 = por %p125, %p126
      %p128 = scmp.ne.s32.totalorder %s120, %s122
      %p129 = scmp.eq.s32.totalorder %s28, 1
      %p130 = por %p128, %p129
      %p131 = scmp.ne.s32.totalorder %s122, %s123
      %p132 = scmp.eq.s32.totalorder %s28, 0
      %p133 = por %p131, %p132
      %p134 = scmp.ne.s32.totalorder %s122, %s123
      %p135 = scmp.eq.s32.totalorder %s29, 1
      %p136 = por %p134, %p135
      %p138 = scmp.ne.s32.totalorder %s123, %s137
      %p139 = scmp.eq.s32.totalorder %s29, 0
      %p140 = por %p138, %p139
      %s142 = sadd.s32 %s141, 1
      %p145 = scmp.eq.s32.totalorder %s23, 1
      %p146 = scmp.ne.s32.totalorder %s141, %s143
      %p147 = scmp.eq.s32.totalorder %s23, 0
      %p148 = por %p146, %p147
      %p149 = scmp.ne.s32.totalorder %s141, %s143
      %p150 = scmp.eq.s32.totalorder %s28, 1
      %p151 = por %p149, %p150
      %p152 = scmp.ne.s32.totalorder %s143, %s144
      %p153 = scmp.eq.s32.totalorder %s28, 0
      %p154 = por %p152, %p153
      %p155 = scmp.ne.s32.totalorder %s143, %s144
      %p156 = scmp.eq.s32.totalorder %s29, 1
      %p157 = por %p155, %p156
      %p159 = scmp.ne.s32.totalorder %s144, %s158
      %p160 = scmp.eq.s32.totalorder %s29, 0
      %p161 = por %p159, %p160
      %s163 = sadd.s32 %s162, 1
      %p166 = scmp.eq.s32.totalorder %s23, 1
      %p167 = scmp.ne.s32.totalorder %s162, %s164
      %p168 = scmp.eq.s32.totalorder %s23, 0
      %p169 = por %p167, %p168
      %p170 = scmp.ne.s32.totalorder %s162, %s164
      %p171 = scmp.eq.s32.totalorder %s28, 1
      %p172 = por %p170, %p171
      %p173 = scmp.ne.s32.totalorder %s164, %s165
      %p174 = scmp.eq.s32.totalorder %s28, 0
      %p175 = por %p173, %p174
      %p176 = scmp.ne.s32.totalorder %s164, %s165
      %p177 = scmp.eq.s32.totalorder %s29, 1
      %p178 = por %p176, %p177
      %p180 = scmp.ne.s32.totalorder %s165, %s179
      %p181 = scmp.eq.s32.totalorder %s29, 0
      %p182 = por %p180, %p181
      %s184 = sadd.s32 %s183, 1
      %p187 = scmp.eq.s32.totalorder %s23, 1
      %p188 = scmp.ne.s32.totalorder %s183, %s185
      %p189 = scmp.eq.s32.totalorder %s23, 0
      %p190 = por %p188, %p189
      %p191 = scmp.ne.s32.totalorder %s183, %s185
      %p192 = scmp.eq.s32.totalorder %s28, 1
      %p193 = por %p191, %p192
      %p194 = scmp.ne.s32.totalorder %s185, %s186
      %p195 = scmp.eq.s32.totalorder %s28, 0
      %p196 = por %p194, %p195
      %p197 = scmp.ne.s32.totalorder %s185, %s186
      %p198 = scmp.eq.s32.totalorder %s29, 1
      %p199 = por %p197, %p198
      %p201 = scmp.ne.s32.totalorder %s186, %s200
      %p202 = scmp.eq.s32.totalorder %s29, 0
      %p203 = por %p201, %p202
      %s205 = sadd.s32 %s204, 1
      %p208 = scmp.eq.s32.totalorder %s23, 1
      %p209 = scmp.ne.s32.totalorder %s204, %s206
      %p210 = scmp.eq.s32.totalorder %s23, 0
      %p211 = por %p209, %p210
      %p212 = scmp.ne.s32.totalorder %s204, %s206
      %p213 = scmp.eq.s32.totalorder %s28, 1
      %p214 = por %p212, %p213
      %p215 = scmp.ne.s32.totalorder %s206, %s207
      %p216 = scmp.eq.s32.totalorder %s28, 0
      %p217 = por %p215, %p216
      %p218 = scmp.ne.s32.totalorder %s206, %s207
      %p219 = scmp.eq.s32.totalorder %s29, 1
      %p220 = por %p218, %p219
      %p222 = scmp.ne.s32.totalorder %s207, %s221
      %p223 = scmp.eq.s32.totalorder %s29, 0
      %p224 = por %p222, %p223
      %s226 = sadd.s32 %s225, 1
      %p229 = scmp.eq.s32.totalorder %s23, 1
      %p230 = scmp.ne.s32.totalorder %s225, %s227
      %p231 = scmp.eq.s32.totalorder %s23, 0
      %p232 = por %p230, %p231
      %p233 = scmp.ne.s32.totalorder %s225, %s227
      %p234 = scmp.eq.s32.totalorder %s28, 1
      %p235 = por %p233, %p234
      %p236 = scmp.ne.s32.totalorder %s227, %s228
      %p237 = scmp.eq.s32.totalorder %s28, 0
      %p238 = por %p236, %p237
      %p239 = scmp.ne.s32.totalorder %s227, %s228
      %p240 = scmp.eq.s32.totalorder %s29, 1
      %p241 = por %p239, %p240
      %p243 = scmp.ne.s32.totalorder %s228, %s242
      %p244 = scmp.eq.s32.totalorder %s29, 0
      %p245 = por %p243, %p244
      %s247 = sadd.s32 %s246, 1
      %p250 = scmp.eq.s32.totalorder %s23, 1
      %p251 = scmp.ne.s32.totalorder %s246, %s248
      %p252 = scmp.eq.s32.totalorder %s23, 0
      %p253 = por %p251, %p252
      %p254 = scmp.ne.s32.totalorder %s246, %s248
      %p255 = scmp.eq.s32.totalorder %s28, 1
      %p256 = por %p254, %p255
      %p257 = scmp.ne.s32.totalorder %s248, %s249
      %p258 = scmp.eq.s32.totalorder %s28, 0
      %p259 = por %p257, %p258
      %p260 = scmp.ne.s32.totalorder %s248, %s249
      %p261 = scmp.eq.s32.totalorder %s29, 1
      %p262 = por %p260, %p261
      %p264 = scmp.ne.s32.totalorder %s249, %s263
      %p265 = scmp.eq.s32.totalorder %s29, 0
      %p266 = por %p264, %p265
      %s267 = ssub.s32 %s23, %s30
      %p268 = scmp.eq.s32.totalorder %s267, 0
      %s270 = sadd.s32 %s269, 1
      %s271 = scalar_select %p268, %s269, %s270
      %p274 = pneg %p268
      %p275 = scmp.eq.s32.totalorder %s23, 1
      %p276 = por %p274, %p275
      %p277 = scmp.ne.s32.totalorder %s269, %s272
      %p278 = scmp.eq.s32.totalorder %s23, 0
      %p279 = por %p277, %p278
      %p280 = scmp.ne.s32.totalorder %s269, %s272
      %p281 = scmp.eq.s32.totalorder %s28, 1
      %p282 = por %p280, %p281
      %p283 = scmp.ne.s32.totalorder %s272, %s273
      %p284 = scmp.eq.s32.totalorder %s28, 0
      %p285 = por %p283, %p284
      %p286 = scmp.ne.s32.totalorder %s272, %s273
      %p287 = scmp.eq.s32.totalorder %s29, 1
      %p288 = por %p286, %p287
      %p290 = scmp.ne.s32.totalorder %s273, %s289
      %p291 = scmp.eq.s32.totalorder %s29, 0
      %p292 = por %p290, %p291
      %p293 = scmp.le.s32.totalorder 1, %s23
      %p294 = scmp.lt.s32.totalorder %s23, 3
      %p295 = pnand %p293, %p294
      %p296 = pneg %p295
      // Predicated region
      $region9: #{cnn_forward.1} parent=5 // pred_check
        _
      $region10: #{cnn_forward.1} parent=5 // pred_check_branch
        %298 = sbr.rel (%p295) target = $region12
      $region11: #{cnn_forward.1} parent=5 // pred_region
        %s299 = ssub.s32 %s23, 1
        // Predicated region
        $region13: #{cnn_forward.1} parent=11 // pred_check
          %p300 = pneg %p70
        $region14: #{cnn_forward.1} parent=11 // pred_check_branch
          %302 = sbr.rel (%p300) target = $region16
        $region15: #{cnn_forward.1} parent=11 // pred_region
          %s304 = ssub.s32 1024, 1024
          %305 = vsyncadd [#allocation9], %s304
          %s306 = sshll.u32 [#allocation8], 4
          %s307 = int_to_ptr.vmem [resolvable:$true] %s306
          %312 = dma.hbm_to_vmem [thread:$0]  %s1, 1024, %s307, [#allocation9], 64, 64, 4
        $region16: #{cnn_forward.1} parent=11 // pred_fallthru
          _
        // Predicated region
        $region17: #{cnn_forward.1} parent=11 // pred_check
          %p313 = pneg %p91
        $region18: #{cnn_forward.1} parent=11 // pred_check_branch
          %315 = sbr.rel (%p313) target = $region20
        $region19: #{cnn_forward.1} parent=11 // pred_region
          %s317 = ssub.s32 16, 16
          %318 = vsyncadd [#allocation11], %s317
          %s320 = sshll.u32 [#allocation10], 4
          %s321 = int_to_ptr.vmem [resolvable:$true] %s320
          %323 = dma.hbm_to_vmem [thread:$0]  %s2, 16, %s321, [#allocation11]
        $region20: #{cnn_forward.1} parent=11 // pred_fallthru
          _
        // Predicated region
        $region21: #{cnn_forward.1} parent=11 // pred_check
          %p324 = pneg %p112
        $region22: #{cnn_forward.1} parent=11 // pred_check_branch
          %326 = sbr.rel (%p324) target = $region24
        $region23: #{cnn_forward.1} parent=11 // pred_region
          %s328 = ssub.s32 10240, 10240
          %329 = vsyncadd [#allocation11], %s328
          %s330 = sshll.u32 [#allocation12], 4
          %s331 = int_to_ptr.vmem [resolvable:$true] %s330
          %336 = dma.hbm_to_vmem [thread:$0]  %s3, 10240, %s331, [#allocation11], 64, 64, 4
        $region24: #{cnn_forward.1} parent=11 // pred_fallthru
          _
        // Predicated region
        $region25: #{cnn_forward.1} parent=11 // pred_check
          %p337 = pneg %p133
        $region26: #{cnn_forward.1} parent=11 // pred_check_branch
          %339 = sbr.rel (%p337) target = $region28
        $region27: #{cnn_forward.1} parent=11 // pred_region
          %s341 = ssub.s32 16, 16
          %342 = vsyncadd [#allocation14], %s341
          %s344 = sshll.u32 [#allocation13], 4
          %s345 = int_to_ptr.vmem [resolvable:$true] %s344
          %347 = dma.hbm_to_vmem [thread:$0]  %s4, 16, %s345, [#allocation14]
        $region28: #{cnn_forward.1} parent=11 // pred_fallthru
          _
        // Predicated region
        $region29: #{cnn_forward.1} parent=11 // pred_check
          %p348 = pneg %p154
        $region30: #{cnn_forward.1} parent=11 // pred_check_branch
          %350 = sbr.rel (%p348) target = $region32
        $region31: #{cnn_forward.1} parent=11 // pred_region
          %s352 = ssub.s32 20480, 20480
          %353 = vsyncadd [#allocation14], %s352
          %s354 = sshll.u32 [#allocation15], 4
          %s355 = int_to_ptr.vmem [resolvable:$true] %s354
          %360 = dma.hbm_to_vmem [thread:$0]  %s5, 20480, %s355, [#allocation14], 128, 128, 8
        $region32: #{cnn_forward.1} parent=11 // pred_fallthru
          _
        // Predicated region
        $region33: #{cnn_forward.1} parent=11 // pred_check
          %p361 = pneg %p175
        $region34: #{cnn_forward.1} parent=11 // pred_check_branch
          %363 = sbr.rel (%p361) target = $region36
        $region35: #{cnn_forward.1} parent=11 // pred_region
          %s365 = ssub.s32 32, 32
          %366 = vsyncadd [#allocation17], %s365
          %s368 = sshll.u32 [#allocation16], 4
          %s369 = int_to_ptr.vmem [resolvable:$true] %s368
          %371 = dma.hbm_to_vmem [thread:$0]  %s6, 32, %s369, [#allocation17]
        $region36: #{cnn_forward.1} parent=11 // pred_fallthru
          _
        // Predicated region
        $region37: #{cnn_forward.1} parent=11 // pred_check
          %p372 = pneg %p196
        $region38: #{cnn_forward.1} parent=11 // pred_check_branch
          %374 = sbr.rel (%p372) target = $region40
        $region39: #{cnn_forward.1} parent=11 // pred_region
          %s376 = ssub.s32 40960, 40960
          %377 = vsyncadd [#allocation17], %s376
          %s378 = sshll.u32 [#allocation18], 4
          %s379 = int_to_ptr.vmem [resolvable:$true] %s378
          %384 = dma.hbm_to_vmem [thread:$0]  %s7, 40960, %s379, [#allocation17], 128, 128, 8
        $region40: #{cnn_forward.1} parent=11 // pred_fallthru
          _
        // Predicated region
        $region41: #{cnn_forward.1} parent=11 // pred_check
          %p385 = pneg %p217
        $region42: #{cnn_forward.1} parent=11 // pred_check_branch
          %387 = sbr.rel (%p385) target = $region44
        $region43: #{cnn_forward.1} parent=11 // pred_region
          %s389 = ssub.s32 32, 32
          %390 = vsyncadd [#allocation20], %s389
          %s392 = sshll.u32 [#allocation19], 4
          %s393 = int_to_ptr.vmem [resolvable:$true] %s392
          %395 = dma.hbm_to_vmem [thread:$0]  %s8, 32, %s393, [#allocation20]
        $region44: #{cnn_forward.1} parent=11 // pred_fallthru
          _
        // Predicated region
        $region45: #{cnn_forward.1} parent=11 // pred_check
          %p396 = pneg %p238
        $region46: #{cnn_forward.1} parent=11 // pred_check_branch
          %398 = sbr.rel (%p396) target = $region48
        $region47: #{cnn_forward.1} parent=11 // pred_region
          %s400 = ssub.s32 2048, 2048
          %401 = vsyncadd [#allocation20], %s400
          %s402 = sshll.u32 [#allocation21], 4
          %s403 = int_to_ptr.vmem [resolvable:$true] %s402
          %408 = dma.hbm_to_vmem [thread:$0]  %s9, 2048, %s403, [#allocation20], 64, 64, 4
        $region48: #{cnn_forward.1} parent=11 // pred_fallthru
          _
        // Predicated region
        $region49: #{cnn_forward.1} parent=11 // pred_check
          %p409 = pneg %p259
        $region50: #{cnn_forward.1} parent=11 // pred_check_branch
          %411 = sbr.rel (%p409) target = $region52
        $region51: #{cnn_forward.1} parent=11 // pred_region
          %s413 = ssub.s32 16, 16
          %414 = vsyncadd [#allocation23], %s413
          %s416 = sshll.u32 [#allocation22], 4
          %s417 = int_to_ptr.vmem [resolvable:$true] %s416
          %419 = dma.hbm_to_vmem [thread:$0]  %s10, 16, %s417, [#allocation23]
        $region52: #{cnn_forward.1} parent=11 // pred_fallthru
          _
      $region12: #{cnn_forward.1} parent=5 // pred_fallthru
        _
      %p420 = scmp.lt.s32.totalorder %s23, 2
      // Predicated region
      $region53: #{cnn_forward.1} parent=5 // pred_check
        %p421 = pneg %p420
      $region54: #{cnn_forward.1} parent=5 // pred_check_branch
        %423 = sbr.rel (%p421) target = $region56
      $region55: #{cnn_forward.1} parent=5 // pred_region
        // Predicated region
        $region57: #{cnn_forward.1} parent=55 // pred_check
          %p424 = pneg %p43
        $region58: #{cnn_forward.1} parent=55 // pred_check_branch
          %426 = sbr.rel (%p424) target = $region60
        $region59: #{cnn_forward.1} parent=55 // pred_region
          %s427 = smul.u32 22, %s23
          %p428 = scmp.lt.s32.totalorder %s427, 43
          %s429 = scalar_select %p428, %s427, 43
          %s430 = smul.addr %s429, 4
          %s431 = scalar_lea.vmem %s0, %s430
          %s432 = smul.u32 22, %s23
        $region60: #{cnn_forward.1} parent=55 // pred_fallthru
          _
      $region56: #{cnn_forward.1} parent=5 // pred_fallthru
        _
      %p433 = scmp.le.s32.totalorder 1, %s23
      %p434 = scmp.lt.s32.totalorder %s23, 3
      %p435 = pnand %p433, %p434
      %p436 = pneg %p435
      // Predicated region
      $region61: #{cnn_forward.1} parent=5 // pred_check
        _
      $region62: #{cnn_forward.1} parent=5 // pred_check_branch
        %438 = sbr.rel (%p435) target = $region64
      $region63: #{cnn_forward.1} parent=5 // pred_region
        %s439 = ssub.s32 %s23, 1
        // Predicated region
        $region65: #{cnn_forward.1} parent=63 // pred_check
          %p440 = pneg %p70
        $region66: #{cnn_forward.1} parent=63 // pred_check_branch
          %442 = sbr.rel (%p440) target = $region68
        $region67: #{cnn_forward.1} parent=63 // pred_region
          %443 = dma.done [#allocation9], 1024
        $region68: #{cnn_forward.1} parent=63 // pred_fallthru
          _
        // Predicated region
        $region69: #{cnn_forward.1} parent=63 // pred_check
          %p444 = pneg %p91
        $region70: #{cnn_forward.1} parent=63 // pred_check_branch
          %446 = sbr.rel (%p444) target = $region72
        $region71: #{cnn_forward.1} parent=63 // pred_region
          %447 = dma.done [#allocation11], 16
        $region72: #{cnn_forward.1} parent=63 // pred_fallthru
          _
        // Predicated region
        $region73: #{cnn_forward.1} parent=63 // pred_check
          %p448 = pneg %p112
        $region74: #{cnn_forward.1} parent=63 // pred_check_branch
          %450 = sbr.rel (%p448) target = $region76
        $region75: #{cnn_forward.1} parent=63 // pred_region
          %451 = dma.done [#allocation11], 10240
        $region76: #{cnn_forward.1} parent=63 // pred_fallthru
          _
        // Predicated region
        $region77: #{cnn_forward.1} parent=63 // pred_check
          %p452 = pneg %p133
        $region78: #{cnn_forward.1} parent=63 // pred_check_branch
          %454 = sbr.rel (%p452) target = $region80
        $region79: #{cnn_forward.1} parent=63 // pred_region
          %455 = dma.done [#allocation14], 16
        $region80: #{cnn_forward.1} parent=63 // pred_fallthru
          _
        // Predicated region
        $region81: #{cnn_forward.1} parent=63 // pred_check
          %p456 = pneg %p154
        $region82: #{cnn_forward.1} parent=63 // pred_check_branch
          %458 = sbr.rel (%p456) target = $region84
        $region83: #{cnn_forward.1} parent=63 // pred_region
          %459 = dma.done [#allocation14], 20480
        $region84: #{cnn_forward.1} parent=63 // pred_fallthru
          _
        // Predicated region
        $region85: #{cnn_forward.1} parent=63 // pred_check
          %p460 = pneg %p175
        $region86: #{cnn_forward.1} parent=63 // pred_check_branch
          %462 = sbr.rel (%p460) target = $region88
        $region87: #{cnn_forward.1} parent=63 // pred_region
          %463 = dma.done [#allocation17], 32
        $region88: #{cnn_forward.1} parent=63 // pred_fallthru
          _
        // Predicated region
        $region89: #{cnn_forward.1} parent=63 // pred_check
          %p464 = pneg %p196
        $region90: #{cnn_forward.1} parent=63 // pred_check_branch
          %466 = sbr.rel (%p464) target = $region92
        $region91: #{cnn_forward.1} parent=63 // pred_region
          %467 = dma.done [#allocation17], 40960
        $region92: #{cnn_forward.1} parent=63 // pred_fallthru
          _
        // Predicated region
        $region93: #{cnn_forward.1} parent=63 // pred_check
          %p468 = pneg %p217
        $region94: #{cnn_forward.1} parent=63 // pred_check_branch
          %470 = sbr.rel (%p468) target = $region96
        $region95: #{cnn_forward.1} parent=63 // pred_region
          %471 = dma.done [#allocation20], 32
        $region96: #{cnn_forward.1} parent=63 // pred_fallthru
          _
        // Predicated region
        $region97: #{cnn_forward.1} parent=63 // pred_check
          %p472 = pneg %p238
        $region98: #{cnn_forward.1} parent=63 // pred_check_branch
          %474 = sbr.rel (%p472) target = $region100
        $region99: #{cnn_forward.1} parent=63 // pred_region
          %475 = dma.done [#allocation20], 2048
        $region100: #{cnn_forward.1} parent=63 // pred_fallthru
          _
        // Predicated region
        $region101: #{cnn_forward.1} parent=63 // pred_check
          %p476 = pneg %p259
        $region102: #{cnn_forward.1} parent=63 // pred_check_branch
          %478 = sbr.rel (%p476) target = $region104
        $region103: #{cnn_forward.1} parent=63 // pred_region
          %479 = dma.done [#allocation23], 16
        $region104: #{cnn_forward.1} parent=63 // pred_fallthru
          _
        %s480 = smul.u32 22, %s28
        %p481 = scmp.lt.s32.totalorder %s480, 43
        %s482 = scalar_select %p481, %s480, 43
        %s483 = smul.addr %s482, 4
        %s484 = scalar_lea.vmem %s0, %s483
        %p485 = pneg %p49
        %p486 = pneg %p46
        %p487 = pneg %p70
        %p488 = pneg %p67
        %p489 = pneg %p91
        %p490 = pneg %p88
        %p491 = pneg %p112
        %p492 = pneg %p109
        %p493 = pneg %p133
        %p494 = pneg %p130
        %p495 = pneg %p154
        %p496 = pneg %p151
        %p497 = pneg %p175
        %p498 = pneg %p172
        %p499 = pneg %p196
        %p500 = pneg %p193
        %p501 = pneg %p217
        %p502 = pneg %p214
        %p503 = pneg %p238
        %p504 = pneg %p235
        %p505 = pneg %p259
        %p506 = pneg %p256
        %p507 = pneg %p285
        %p508 = pneg %p282
        %p509 = scmp.lt.s32.totalorder %s28, 1
        %s510 = scalar_select %p509, %s28, 1
        %s511 = smul.addr %s510, 8
        %s512 = scalar_lea.vmem %s11, %s511
        %s513 = smul.u32 22, %s28
        %p514 = scmp.lt.s32.totalorder %s513, 43
        %s515 = scalar_select %p514, %s513, 43
        %s516 = smul.addr %s515, 4
        %s517 = scalar_lea.vmem %s0, %s516
        %s518 = smul.u32 22, %s28
        %p519 = scmp.lt.s32.totalorder %s28, 1
        %s520 = scalar_select %p519, %s28, 1
        %s521 = smul.addr %s520, 8
        %s522 = scalar_lea.vmem %s11, %s521
        %524 = vst [vmem:[#allocation2 + $0x58] sm:$0xff] 0
        %525 = vst [vmem:[#allocation4 + $0x18] sm:$0xff] 0
        %526 = vst [vmem:[#allocation5 + $0x30] sm:$0xff] 0
        %527 = vst [vmem:[#allocation5 + $0x38] sm:$0xff] 0
        %v528 = vld [vmem:[%s517] sm:$0xf]
        %v529 = vld [vmem:[%s517 + $0x4] sm:$0xf]
        %v530 = vld [vmem:[%s517 + $0x8] sm:$0xf]
        %v531 = vld [vmem:[%s517 + $0xc] sm:$0xf]
        %v532 = vld [vmem:[%s517 + $0x10] sm:$0xf]
        %v533 = vld [vmem:[%s517 + $0x14] sm:$0xf]
        %v534 = vld [vmem:[%s517 + $0x18] sm:$0xf]
        %v535 = vld [vmem:[%s517 + $0x1c] sm:$0xf]
        %v536 = vld [vmem:[%s517 + $0x20] sm:$0xf]
        %v537 = vld [vmem:[%s517 + $0x24] sm:$0xf]
        %v538 = vld [vmem:[%s517 + $0x28] sm:$0xf]
        %v539 = vld [vmem:[%s517 + $0x2c] sm:$0xf]
        %v540 = vld [vmem:[%s517 + $0x30] sm:$0xf]
        %v541 = vld [vmem:[%s517 + $0x34] sm:$0xf]
        %v542 = vld [vmem:[%s517 + $0x38] sm:$0xf]
        %v543 = vld [vmem:[%s517 + $0x3c] sm:$0xf]
        %v544 = vld [vmem:[%s517 + $0x40] sm:$0xf]
        %v545 = vld [vmem:[%s517 + $0x44] sm:$0xf]
        %v546 = vld [vmem:[%s517 + $0x48] sm:$0xf]
        %v547 = vld [vmem:[%s517 + $0x4c] sm:$0xf]
        %v548 = vld [vmem:[%s517 + $0x50] sm:$0xf]
        %v549 = vld [vmem:[%s517 + $0x54] sm:$0xf]
        %v550 = vld [vmem:[#allocation8] sm:$0xf]
        %v551 = vld [vmem:[#allocation8 + $0x4] sm:$0xf]
        %v552 = vld [vmem:[#allocation8 + $0x8] sm:$0xf]
        %v553 = vld [vmem:[#allocation8 + $0xc] sm:$0xf]
        %v554 = vld [vmem:[#allocation8 + $0x10] sm:$0xf]
        %v555 = vld [vmem:[#allocation8 + $0x14] sm:$0xf]
        %v556 = vld [vmem:[#allocation8 + $0x18] sm:$0xf]
        %v557 = vld [vmem:[#allocation8 + $0x1c] sm:$0xf]
        %v558 = vld [vmem:[#allocation8 + $0x20] sm:$0xf]
        %v559 = vld [vmem:[#allocation8 + $0x24] sm:$0xf]
        %v560 = vld [vmem:[#allocation8 + $0x28] sm:$0xf]
        %v561 = vld [vmem:[#allocation8 + $0x2c] sm:$0xf]
        %v562 = vld [vmem:[#allocation8 + $0x30] sm:$0xf]
        %v563 = vld [vmem:[#allocation8 + $0x34] sm:$0xf]
        %v564 = vld [vmem:[#allocation8 + $0x38] sm:$0xf]
        %v565 = vld [vmem:[#allocation8 + $0x3c] sm:$0xf]
        %v566 = vld [vmem:[#allocation10] sm:$0x1]
        %v568 = vlaneseq
        %v569 = vshrl.u32 %v568, 7
        %v570 = vsub.s32 0, %v569
        %v571 = vrot.slane %v566, %v570
        %v595 = vunpack.c.l.b16 %v528
        %v596 = vunpack.c.l.b16 %v529
        %v597 = vunpack.c.l.b16 %v530
        %v598 = vunpack.c.l.b16 %v531
        %v599 = vunpack.c.l.b16 %v532
        %v600 = vunpack.c.l.b16 %v533
        %v601 = vunpack.c.l.b16 %v534
        %v602 = vunpack.c.l.b16 %v535
        %v603 = vunpack.c.l.b16 %v536
        %v604 = vunpack.c.l.b16 %v537
        %v605 = vunpack.c.l.b16 %v538
        %v606 = vunpack.c.l.b16 %v539
        %v607 = vunpack.c.l.b16 %v540
        %v608 = vunpack.c.l.b16 %v541
        %v609 = vunpack.c.l.b16 %v542
        %v610 = vunpack.c.l.b16 %v543
        %v611 = vunpack.c.l.b16 %v544
        %v612 = vunpack.c.l.b16 %v545
        %v613 = vunpack.c.l.b16 %v546
        %v614 = vunpack.c.l.b16 %v547
        %v615 = vunpack.c.l.b16 %v548
        %v616 = vunpack.c.l.b16 %v549
        %v617 = vpack.c.b16 %v596, %v595
        %v618 = vpack.c.b16 %v598, %v597
        %v619 = vpack.c.b16 %v600, %v599
        %v620 = vpack.c.b16 %v602, %v601
        %v621 = vpack.c.b16 %v604, %v603
        %v622 = vpack.c.b16 %v606, %v605
        %v623 = vpack.c.b16 %v608, %v607
        %v624 = vpack.c.b16 %v610, %v609
        %v625 = vpack.c.b16 %v612, %v611
        %v626 = vpack.c.b16 %v614, %v613
        %v627 = vpack.c.b16 %v616, %v615
        %v655 = vunpack.c.l.b16 %v550
        %v656 = vunpack.c.l.b16 %v551
        %v657 = vunpack.c.l.b16 %v552
        %v658 = vunpack.c.l.b16 %v553
        %v659 = vunpack.c.l.b16 %v554
        %v660 = vunpack.c.l.b16 %v555
        %v661 = vunpack.c.l.b16 %v556
        %v662 = vunpack.c.l.b16 %v557
        %v663 = vunpack.c.l.b16 %v558
        %v664 = vunpack.c.l.b16 %v559
        %v665 = vunpack.c.l.b16 %v560
        %v666 = vunpack.c.l.b16 %v561
        %v667 = vunpack.c.l.b16 %v562
        %v668 = vunpack.c.l.b16 %v563
        %v669 = vunpack.c.l.b16 %v564
        %v670 = vunpack.c.l.b16 %v565
        %v671 = vpack.c.b16 %v656, %v655
        %v672 = vpack.c.b16 %v658, %v657
        %v673 = vpack.c.b16 %v660, %v659
        %v674 = vpack.c.b16 %v662, %v661
        %v675 = vpack.c.b16 %v664, %v663
        %v676 = vpack.c.b16 %v666, %v665
        %v677 = vpack.c.b16 %v668, %v667
        %v678 = vpack.c.b16 %v670, %v669
        %687 = vmatprep.subr.bf16.mxu0 0
        %688 = vmatpush1.bf16.msra.mxu0 %v671
        %689 = vmatprep.subr.bf16.mxu0 0
        %690 = vmatpush1.bf16.msra.mxu0 %v672
        %691 = vmatprep.subr.bf16.mxu0 0
        %692 = vmatpush1.bf16.msra.mxu0 %v673
        %693 = vmatprep.subr.bf16.mxu0 0
        %694 = vmatpush1.bf16.msra.mxu0 %v674
        %695 = vmatprep.subr.bf16.mxu0 0
        %696 = vmatpush1.bf16.msra.mxu0 %v675
        %697 = vmatprep.subr.bf16.mxu0 0
        %698 = vmatpush1.bf16.msra.mxu0 %v676
        %699 = vmatprep.subr.bf16.mxu0 0
        %700 = vmatpush1.bf16.msra.mxu0 %v677
        %701 = vmatprep.subr.bf16.mxu0 0
        %702 = vmatpush1.bf16.msra.mxu0 %v678
        %703 = vmatprep.subr.bf16.mxu0 0
        %704 = vmatpush1.bf16.msra.mxu0 0
        %705 = vmatprep.subr.bf16.mxu0 0
        %706 = vmatpush1.bf16.msra.mxu0 0
        %707 = vmatprep.subr.bf16.mxu0 0
        %708 = vmatpush1.bf16.msra.mxu0 0
        %709 = vmatprep.subr.bf16.mxu0 0
        %710 = vmatpush1.bf16.msra.mxu0 0
        %711 = vmatprep.subr.bf16.mxu0 0
        %712 = vmatpush1.bf16.msra.mxu0 0
        %713 = vmatprep.subr.bf16.mxu0 0
        %714 = vmatpush1.bf16.msra.mxu0 0
        %715 = vmatprep.subr.bf16.mxu0 0
        %716 = vmatpush1.bf16.msra.mxu0 0
        %717 = vmatprep.subr.bf16.mxu0 0
        %718 = vmatpush1.bf16.msra.mxu0 0
        %719 = vmatprep.mubr.bf16.mxu0 0
        %720 = vmatmul.mubr.bf16.gmra.mrb[0].mxu0 %v617
        %v721 = vpop.f32.mrb[0].mxu0
        %v722 = vadd.f32 %v571, %v721
        %v723 = vpop.f32.mrb[0].mxu0
        %v724 = vpop.f32.mrb[0].mxu0
        %v725 = vadd.f32 %v571, %v724
        %v726 = vpop.f32.mrb[0].mxu0
        %727 = vmatprep.mubr.bf16.mxu0 0
        %728 = vmatmul.mubr.bf16.gmra.mrb[0].mxu0 %v618
        %v729 = vpop.f32.mrb[0].mxu0
        %v730 = vadd.f32 %v571, %v729
        %v731 = vpop.f32.mrb[0].mxu0
        %v732 = vpop.f32.mrb[0].mxu0
        %v733 = vadd.f32 %v571, %v732
        %v734 = vpop.f32.mrb[0].mxu0
        %735 = vmatprep.mubr.bf16.mxu0 0
        %736 = vmatmul.mubr.bf16.gmra.mrb[0].mxu0 %v619
        %v737 = vpop.f32.mrb[0].mxu0
        %v738 = vadd.f32 %v571, %v737
        %v739 = vpop.f32.mrb[0].mxu0
        %v740 = vpop.f32.mrb[0].mxu0
        %v741 = vadd.f32 %v571, %v740
        %v742 = vpop.f32.mrb[0].mxu0
        %743 = vmatprep.mubr.bf16.mxu0 0
        %744 = vmatmul.mubr.bf16.gmra.mrb[0].mxu0 %v620
        %v745 = vpop.f32.mrb[0].mxu0
        %v746 = vadd.f32 %v571, %v745
        %v747 = vpop.f32.mrb[0].mxu0
        %v748 = vpop.f32.mrb[0].mxu0
        %v749 = vadd.f32 %v571, %v748
        %v750 = vpop.f32.mrb[0].mxu0
        %751 = vmatprep.mubr.bf16.mxu0 0
        %752 = vmatmul.mubr.bf16.gmra.mrb[0].mxu0 %v621
        %v753 = vpop.f32.mrb[0].mxu0
        %v754 = vadd.f32 %v571, %v753
        %v755 = vpop.f32.mrb[0].mxu0
        %v756 = vpop.f32.mrb[0].mxu0
        %v757 = vadd.f32 %v571, %v756
        %v758 = vpop.f32.mrb[0].mxu0
        %759 = vmatprep.mubr.bf16.mxu0 0
        %760 = vmatmul.mubr.bf16.gmra.mrb[0].mxu0 %v622
        %v761 = vpop.f32.mrb[0].mxu0
        %v762 = vadd.f32 %v571, %v761
        %v763 = vpop.f32.mrb[0].mxu0
        %v764 = vpop.f32.mrb[0].mxu0
        %v765 = vadd.f32 %v571, %v764
        %v766 = vpop.f32.mrb[0].mxu0
        %767 = vmatprep.mubr.bf16.mxu0 0
        %768 = vmatmul.mubr.bf16.gmra.mrb[0].mxu0 %v623
        %v769 = vpop.f32.mrb[0].mxu0
        %v770 = vadd.f32 %v571, %v769
        %v771 = vpop.f32.mrb[0].mxu0
        %v772 = vpop.f32.mrb[0].mxu0
        %v773 = vadd.f32 %v571, %v772
        %v774 = vpop.f32.mrb[0].mxu0
        %775 = vmatprep.mubr.bf16.mxu0 0
        %776 = vmatmul.mubr.bf16.gmra.mrb[0].mxu0 %v624
        %v777 = vpop.f32.mrb[0].mxu0
        %v778 = vadd.f32 %v571, %v777
        %v779 = vpop.f32.mrb[0].mxu0
        %v780 = vpop.f32.mrb[0].mxu0
        %v781 = vadd.f32 %v571, %v780
        %v782 = vpop.f32.mrb[0].mxu0
        %783 = vmatprep.mubr.bf16.mxu0 0
        %784 = vmatmul.mubr.bf16.gmra.mrb[0].mxu0 %v625
        %v785 = vpop.f32.mrb[0].mxu0
        %v786 = vadd.f32 %v571, %v785
        %v787 = vpop.f32.mrb[0].mxu0
        %v788 = vpop.f32.mrb[0].mxu0
        %v789 = vadd.f32 %v571, %v788
        %v790 = vpop.f32.mrb[0].mxu0
        %791 = vmatprep.mubr.bf16.mxu0 0
        %792 = vmatmul.mubr.bf16.gmra.mrb[0].mxu0 %v626
        %v793 = vpop.f32.mrb[0].mxu0
        %v794 = vadd.f32 %v571, %v793
        %v795 = vpop.f32.mrb[0].mxu0
        %v796 = vpop.f32.mrb[0].mxu0
        %v797 = vadd.f32 %v571, %v796
        %v798 = vpop.f32.mrb[0].mxu0
        %799 = vmatprep.mubr.bf16.mxu0 0
        %800 = vmatmul.mubr.bf16.gmra.mrb[0].mxu0 %v627
        %v801 = vpop.f32.mrb[0].mxu0
        %v802 = vadd.f32 %v571, %v801
        %v803 = vpop.f32.mrb[0].mxu0
        %v804 = vpop.f32.mrb[0].mxu0
        %v805 = vadd.f32 %v571, %v804
        %v806 = vpop.f32.mrb[0].mxu0
        %807 = vdwg.mxu0
        %v808 = vmax.f32 %v722, 0.0
        %v809 = vmax.f32 %v725, 0.0
        %v810 = vmax.f32 %v730, 0.0
        %v811 = vmax.f32 %v733, 0.0
        %v812 = vmax.f32 %v738, 0.0
        %v813 = vmax.f32 %v741, 0.0
        %v814 = vmax.f32 %v746, 0.0
        %v815 = vmax.f32 %v749, 0.0
        %v816 = vmax.f32 %v754, 0.0
        %v817 = vmax.f32 %v757, 0.0
        %v818 = vmax.f32 %v762, 0.0
        %v819 = vmax.f32 %v765, 0.0
        %v820 = vmax.f32 %v770, 0.0
        %v821 = vmax.f32 %v773, 0.0
        %v822 = vmax.f32 %v778, 0.0
        %v823 = vmax.f32 %v781, 0.0
        %v824 = vmax.f32 %v786, 0.0
        %v825 = vmax.f32 %v789, 0.0
        %v826 = vmax.f32 %v794, 0.0
        %v827 = vmax.f32 %v797, 0.0
        %v828 = vmax.f32 %v802, 0.0
        %v829 = vmax.f32 %v805, 0.0
        %v830 = vpack.c.bf16 %v809, %v808
        %v831 = vpack.c.bf16 %v811, %v810
        %v832 = vpack.c.bf16 %v813, %v812
        %v833 = vpack.c.bf16 %v815, %v814
        %v834 = vpack.c.bf16 %v817, %v816
        %v835 = vpack.c.bf16 %v819, %v818
        %v836 = vpack.c.bf16 %v821, %v820
        %v837 = vpack.c.bf16 %v823, %v822
        %v838 = vpack.c.bf16 %v825, %v824
        %v839 = vpack.c.bf16 %v827, %v826
        %v840 = vpack.c.bf16 %v829, %v828
        %841 = vst [vmem:[#allocation2] sm:$0xff] %v830
        %842 = vst [vmem:[#allocation2 + $0x8] sm:$0xff] %v831
        %843 = vst [vmem:[#allocation2 + $0x10] sm:$0xff] %v832
        %844 = vst [vmem:[#allocation2 + $0x18] sm:$0xff] %v833
        %845 = vst [vmem:[#allocation2 + $0x20] sm:$0xff] %v834
        %846 = vst [vmem:[#allocation2 + $0x28] sm:$0xff] %v835
        %847 = vst [vmem:[#allocation2 + $0x30] sm:$0xff] %v836
        %848 = vst [vmem:[#allocation2 + $0x38] sm:$0xff] %v837
        %849 = vst [vmem:[#allocation2 + $0x40] sm:$0xff] %v838
        %850 = vst [vmem:[#allocation2 + $0x48] sm:$0xff] %v839
        %851 = vst [vmem:[#allocation2 + $0x50] sm:$0xff] %v840
        %v852 = vld [vmem:[#allocation2] sm:$0xff]
        %v853 = vld [vmem:[#allocation2 + $0x8] sm:$0xff]
        %v854 = vld [vmem:[#allocation2 + $0x10] sm:$0xff]
        %v855 = vld [vmem:[#allocation2 + $0x18] sm:$0xff]
        %v856 = vld [vmem:[#allocation2 + $0x20] sm:$0xff]
        %v857 = vld [vmem:[#allocation2 + $0x28] sm:$0xff]
        %v858 = vld [vmem:[#allocation2 + $0x30] sm:$0xff]
        %v859 = vld [vmem:[#allocation2 + $0x38] sm:$0xff]
        %v860 = vld [vmem:[#allocation2 + $0x40] sm:$0xff]
        %v861 = vld [vmem:[#allocation2 + $0x48] sm:$0xff]
        %v862 = vld [vmem:[#allocation2 + $0x50] sm:$0xff]
        %v863 = vld [vmem:[#allocation12] sm:$0xf]
        %v864 = vld [vmem:[#allocation12 + $0x4] sm:$0xf]
        %v865 = vld [vmem:[#allocation12 + $0x8] sm:$0xf]
        %v866 = vld [vmem:[#allocation12 + $0xc] sm:$0xf]
        %v867 = vld [vmem:[#allocation12 + $0x10] sm:$0xf]
        %v868 = vld [vmem:[#allocation12 + $0x14] sm:$0xf]
        %v869 = vld [vmem:[#allocation12 + $0x18] sm:$0xf]
        %v870 = vld [vmem:[#allocation12 + $0x1c] sm:$0xf]
        %v871 = vld [vmem:[#allocation12 + $0x20] sm:$0xf]
        %v872 = vld [vmem:[#allocation12 + $0x24] sm:$0xf]
        %v873 = vld [vmem:[#allocation12 + $0x28] sm:$0xf]
        %v874 = vld [vmem:[#allocation12 + $0x2c] sm:$0xf]
        %v875 = vld [vmem:[#allocation12 + $0x30] sm:$0xf]
        %v876 = vld [vmem:[#allocation12 + $0x34] sm:$0xf]
        %v877 = vld [vmem:[#allocation12 + $0x38] sm:$0xf]
        %v878 = vld [vmem:[#allocation12 + $0x3c] sm:$0xf]
        %v879 = vld [vmem:[#allocation2] sm:$0xff]
        %v880 = vld [vmem:[#allocation2 + $0x8] sm:$0xff]
        %v881 = vld [vmem:[#allocation2 + $0x10] sm:$0xff]
        %v882 = vld [vmem:[#allocation2 + $0x18] sm:$0xff]
        %v883 = vld [vmem:[#allocation2 + $0x20] sm:$0xff]
        %v884 = vld [vmem:[#allocation2 + $0x28] sm:$0xff]
        %v885 = vld [vmem:[#allocation2 + $0x30] sm:$0xff]
        %v886 = vld [vmem:[#allocation2 + $0x38] sm:$0xff]
        %v887 = vld [vmem:[#allocation2 + $0x40] sm:$0xff]
        %v888 = vld [vmem:[#allocation2 + $0x48] sm:$0xff]
        %v889 = vld [vmem:[#allocation2 + $0x50] sm:$0xff]
        %v890 = vld [vmem:[#allocation2 + $0x58] sm:$0x1]
        %v891 = vld [vmem:[#allocation12 + $0x40] sm:$0xf]
        %v892 = vld [vmem:[#allocation12 + $0x44] sm:$0xf]
        %v893 = vld [vmem:[#allocation12 + $0x48] sm:$0xf]
        %v894 = vld [vmem:[#allocation12 + $0x4c] sm:$0xf]
        %v895 = vld [vmem:[#allocation12 + $0x50] sm:$0xf]
        %v896 = vld [vmem:[#allocation12 + $0x54] sm:$0xf]
        %v897 = vld [vmem:[#allocation12 + $0x58] sm:$0xf]
        %v898 = vld [vmem:[#allocation12 + $0x5c] sm:$0xf]
        %v899 = vld [vmem:[#allocation12 + $0x60] sm:$0xf]
        %v900 = vld [vmem:[#allocation12 + $0x64] sm:$0xf]
        %v901 = vld [vmem:[#allocation12 + $0x68] sm:$0xf]
        %v902 = vld [vmem:[#allocation12 + $0x6c] sm:$0xf]
        %v903 = vld [vmem:[#allocation12 + $0x70] sm:$0xf]
        %v904 = vld [vmem:[#allocation12 + $0x74] sm:$0xf]
        %v905 = vld [vmem:[#allocation12 + $0x78] sm:$0xf]
        %v906 = vld [vmem:[#allocation12 + $0x7c] sm:$0xf]
        %vm907 = vsmask.f32 7424
        %v909 = vshrl.u32 %v879, 16
        %v911 = vshll.u32 %v879, 16
        %v913 = vrot.slane %v911, 1
        %v914 = vor.u32 %v909, %v913
        %v916 = vshll.u32 %v880, 16
        %v918 = vrot.slane %v916, 1
        %v919 = vsel %vm907, %v914, %v918
        %v920 = vshrl.u32 %v880, 16
        %v922 = vor.u32 %v920, %v918
        %v924 = vshll.u32 %v881, 16
        %v926 = vrot.slane %v924, 1
        %v927 = vsel %vm907, %v922, %v926
        %v928 = vshrl.u32 %v881, 16
        %v930 = vor.u32 %v928, %v926
        %v932 = vshll.u32 %v882, 16
        %v934 = vrot.slane %v932, 1
        %v935 = vsel %vm907, %v930, %v934
        %v936 = vshrl.u32 %v882, 16
        %v938 = vor.u32 %v936, %v934
        %v940 = vshll.u32 %v883, 16
        %v942 = vrot.slane %v940, 1
        %v943 = vsel %vm907, %v938, %v942
        %v944 = vshrl.u32 %v883, 16
        %v946 = vor.u32 %v944, %v942
        %v948 = vshll.u32 %v884, 16
        %v950 = vrot.slane %v948, 1
        %v951 = vsel %vm907, %v946, %v950
        %v952 = vshrl.u32 %v884, 16
        %v954 = vor.u32 %v952, %v950
        %v956 = vshll.u32 %v885, 16
        %v958 = vrot.slane %v956, 1
        %v959 = vsel %vm907, %v954, %v958
        %v960 = vshrl.u32 %v885, 16
        %v962 = vor.u32 %v960, %v958
        %v964 = vshll.u32 %v886, 16
        %v966 = vrot.slane %v964, 1
        %v967 = vsel %vm907, %v962, %v966
        %v968 = vshrl.u32 %v886, 16
        %v970 = vor.u32 %v968, %v966
        %v972 = vshll.u32 %v887, 16
        %v974 = vrot.slane %v972, 1
        %v975 = vsel %vm907, %v970, %v974
        %v976 = vshrl.u32 %v887, 16
        %v978 = vor.u32 %v976, %v974
        %v980 = vshll.u32 %v888, 16
        %v982 = vrot.slane %v980, 1
        %v983 = vsel %vm907, %v978, %v982
        %v984 = vshrl.u32 %v888, 16
        %v986 = vor.u32 %v984, %v982
        %v988 = vshll.u32 %v889, 16
        %v990 = vrot.slane %v988, 1
        %v991 = vsel %vm907, %v986, %v990
        %v992 = vshrl.u32 %v889, 16
        %v994 = vor.u32 %v992, %v990
        %v996 = vshll.u32 %v890, 16
        %v998 = vrot.slane %v996, 1
        %v999 = vsel %vm907, %v994, %v998
        %v1027 = vunpack.c.l.b16 %v891
        %v1028 = vunpack.c.l.b16 %v892
        %v1029 = vunpack.c.l.b16 %v893
        %v1030 = vunpack.c.l.b16 %v894
        %v1031 = vunpack.c.l.b16 %v895
        %v1032 = vunpack.c.l.b16 %v896
        %v1033 = vunpack.c.l.b16 %v897
        %v1034 = vunpack.c.l.b16 %v898
        %v1035 = vunpack.c.l.b16 %v899
        %v1036 = vunpack.c.l.b16 %v900
        %v1037 = vunpack.c.l.b16 %v901
        %v1038 = vunpack.c.l.b16 %v902
        %v1039 = vunpack.c.l.b16 %v903
        %v1040 = vunpack.c.l.b16 %v904
        %v1041 = vunpack.c.l.b16 %v905
        %v1042 = vunpack.c.l.b16 %v906
        %v1043 = vpack.c.b16 %v1028, %v1027
        %v1044 = vpack.c.b16 %v1030, %v1029
        %v1045 = vpack.c.b16 %v1032, %v1031
        %v1046 = vpack.c.b16 %v1034, %v1033
        %v1047 = vpack.c.b16 %v1036, %v1035
        %v1048 = vpack.c.b16 %v1038, %v1037
        %v1049 = vpack.c.b16 %v1040, %v1039
        %v1050 = vpack.c.b16 %v1042, %v1041
        %1059 = vmatprep.subr.bf16.mxu0 0
        %1060 = vmatpush1.bf16.msra.mxu0 %v1043
        %1061 = vmatprep.subr.bf16.mxu0 0
        %1062 = vmatpush1.bf16.msra.mxu0 %v1044
        %1063 = vmatprep.subr.bf16.mxu0 0
        %1064 = vmatpush1.bf16.msra.mxu0 %v1045
        %1065 = vmatprep.subr.bf16.mxu0 0
        %1066 = vmatpush1.bf16.msra.mxu0 %v1046
        %1067 = vmatprep.subr.bf16.mxu0 0
        %1068 = vmatpush1.bf16.msra.mxu0 %v1047
        %1069 = vmatprep.subr.bf16.mxu0 0
        %1070 = vmatpush1.bf16.msra.mxu0 %v1048
        %1071 = vmatprep.subr.bf16.mxu0 0
        %1072 = vmatpush1.bf16.msra.mxu0 %v1049
        %1073 = vmatprep.subr.bf16.mxu0 0
        %1074 = vmatpush1.bf16.msra.mxu0 %v1050
        %1075 = vmatprep.subr.bf16.mxu0 0
        %1076 = vmatpush1.bf16.msra.mxu0 0
        %1077 = vmatprep.subr.bf16.mxu0 0
        %1078 = vmatpush1.bf16.msra.mxu0 0
        %1079 = vmatprep.subr.bf16.mxu0 0
        %1080 = vmatpush1.bf16.msra.mxu0 0
        %1081 = vmatprep.subr.bf16.mxu0 0
        %1082 = vmatpush1.bf16.msra.mxu0 0
        %1083 = vmatprep.subr.bf16.mxu0 0
        %1084 = vmatpush1.bf16.msra.mxu0 0
        %1085 = vmatprep.subr.bf16.mxu0 0
        %1086 = vmatpush1.bf16.msra.mxu0 0
        %1087 = vmatprep.subr.bf16.mxu0 0
        %1088 = vmatpush1.bf16.msra.mxu0 0
        %1089 = vmatprep.subr.bf16.mxu0 0
        %1090 = vmatpush1.bf16.msra.mxu0 0
        %1091 = vmatprep.mubr.bf16.mxu0 0
        %1092 = vmatmul.mubr.bf16.gmra.mrb[0].mxu0 %v919
        %v1093 = vpop.f32.mrb[0].mxu0
        %v1094 = vadd.f32 0.0, %v1093
        %v1095 = vpop.f32.mrb[0].mxu0
        %v1096 = vpop.f32.mrb[0].mxu0
        %v1097 = vadd.f32 0.0, %v1096
        %v1098 = vpop.f32.mrb[0].mxu0
        %1099 = vmatprep.mubr.bf16.mxu0 0
        %1100 = vmatmul.mubr.bf16.gmra.mrb[0].mxu0 %v927
        %v1101 = vpop.f32.mrb[0].mxu0
        %v1102 = vadd.f32 0.0, %v1101
        %v1103 = vpop.f32.mrb[0].mxu0
        %v1104 = vpop.f32.mrb[0].mxu0
        %v1105 = vadd.f32 0.0, %v1104
        %v1106 = vpop.f32.mrb[0].mxu0
        %1107 = vmatprep.mubr.bf16.mxu0 0
        %1108 = vmatmul.mubr.bf16.gmra.mrb[0].mxu0 %v935
        %v1109 = vpop.f32.mrb[0].mxu0
        %v1110 = vadd.f32 0.0, %v1109
        %v1111 = vpop.f32.mrb[0].mxu0
        %v1112 = vpop.f32.mrb[0].mxu0
        %v1113 = vadd.f32 0.0, %v1112
        %v1114 = vpop.f32.mrb[0].mxu0
        %1115 = vmatprep.mubr.bf16.mxu0 0
        %1116 = vmatmul.mubr.bf16.gmra.mrb[0].mxu0 %v943
        %v1117 = vpop.f32.mrb[0].mxu0
        %v1118 = vadd.f32 0.0, %v1117
        %v1119 = vpop.f32.mrb[0].mxu0
        %v1120 = vpop.f32.mrb[0].mxu0
        %v1121 = vadd.f32 0.0, %v1120
        %v1122 = vpop.f32.mrb[0].mxu0
        %1123 = vmatprep.mubr.bf16.mxu0 0
        %1124 = vmatmul.mubr.bf16.gmra.mrb[0].mxu0 %v951
        %v1125 = vpop.f32.mrb[0].mxu0
        %v1126 = vadd.f32 0.0, %v1125
        %v1127 = vpop.f32.mrb[0].mxu0
        %v1128 = vpop.f32.mrb[0].mxu0
        %v1129 = vadd.f32 0.0, %v1128
        %v1130 = vpop.f32.mrb[0].mxu0
        %1131 = vmatprep.mubr.bf16.mxu0 0
        %1132 = vmatmul.mubr.bf16.gmra.mrb[0].mxu0 %v959
        %v1133 = vpop.f32.mrb[0].mxu0
        %v1134 = vadd.f32 0.0, %v1133
        %v1135 = vpop.f32.mrb[0].mxu0
        %v1136 = vpop.f32.mrb[0].mxu0
        %v1137 = vadd.f32 0.0, %v1136
        %v1138 = vpop.f32.mrb[0].mxu0
        %1139 = vmatprep.mubr.bf16.mxu0 0
        %1140 = vmatmul.mubr.bf16.gmra.mrb[0].mxu0 %v967
        %v1141 = vpop.f32.mrb[0].mxu0
        %v1142 = vadd.f32 0.0, %v1141
        %v1143 = vpop.f32.mrb[0].mxu0
        %v1144 = vpop.f32.mrb[0].mxu0
        %v1145 = vadd.f32 0.0, %v1144
        %v1146 = vpop.f32.mrb[0].mxu0
        %1147 = vmatprep.mubr.bf16.mxu0 0
        %1148 = vmatmul.mubr.bf16.gmra.mrb[0].mxu0 %v975
        %v1149 = vpop.f32.mrb[0].mxu0
        %v1150 = vadd.f32 0.0, %v1149
        %v1151 = vpop.f32.mrb[0].mxu0
        %v1152 = vpop.f32.mrb[0].mxu0
        %v1153 = vadd.f32 0.0, %v1152
        %v1154 = vpop.f32.mrb[0].mxu0
        %1155 = vmatprep.mubr.bf16.mxu0 0
        %1156 = vmatmul.mubr.bf16.gmra.mrb[0].mxu0 %v983
        %v1157 = vpop.f32.mrb[0].mxu0
        %v1158 = vadd.f32 0.0, %v1157
        %v1159 = vpop.f32.mrb[0].mxu0
        %v1160 = vpop.f32.mrb[0].mxu0
        %v1161 = vadd.f32 0.0, %v1160
        %v1162 = vpop.f32.mrb[0].mxu0
        %1163 = vmatprep.mubr.bf16.mxu0 0
        %1164 = vmatmul.mubr.bf16.gmra.mrb[0].mxu0 %v991
        %v1165 = vpop.f32.mrb[0].mxu0
        %v1166 = vadd.f32 0.0, %v1165
        %v1167 = vpop.f32.mrb[0].mxu0
        %v1168 = vpop.f32.mrb[0].mxu0
        %v1169 = vadd.f32 0.0, %v1168
        %v1170 = vpop.f32.mrb[0].mxu0
        %1171 = vmatprep.mubr.bf16.mxu0 0
        %1172 = vmatmul.mubr.bf16.gmra.mrb[0].mxu0 %v999
        %v1173 = vpop.f32.mrb[0].mxu0
        %v1174 = vadd.f32 0.0, %v1173
        %v1175 = vpop.f32.mrb[0].mxu0
        %v1176 = vpop.f32.mrb[0].mxu0
        %v1177 = vadd.f32 0.0, %v1176
        %v1178 = vpop.f32.mrb[0].mxu0
        %1179 = vdwg.mxu0
        %v1196 = vunpack.c.l.b16 %v863
        %v1197 = vunpack.c.l.b16 %v864
        %v1198 = vunpack.c.l.b16 %v865
        %v1199 = vunpack.c.l.b16 %v866
        %v1200 = vunpack.c.l.b16 %v867
        %v1201 = vunpack.c.l.b16 %v868
        %v1202 = vunpack.c.l.b16 %v869
        %v1203 = vunpack.c.l.b16 %v870
        %v1204 = vunpack.c.l.b16 %v871
        %v1205 = vunpack.c.l.b16 %v872
        %v1206 = vunpack.c.l.b16 %v873
        %v1207 = vunpack.c.l.b16 %v874
        %v1208 = vunpack.c.l.b16 %v875
        %v1209 = vunpack.c.l.b16 %v876
        %v1210 = vunpack.c.l.b16 %v877
        %v1211 = vunpack.c.l.b16 %v878
        %v1212 = vpack.c.b16 %v1197, %v1196
        %v1213 = vpack.c.b16 %v1199, %v1198
        %v1214 = vpack.c.b16 %v1201, %v1200
        %v1215 = vpack.c.b16 %v1203, %v1202
        %v1216 = vpack.c.b16 %v1205, %v1204
        %v1217 = vpack.c.b16 %v1207, %v1206
        %v1218 = vpack.c.b16 %v1209, %v1208
        %v1219 = vpack.c.b16 %v1211, %v1210
        %1228 = vmatprep.subr.bf16.mxu0 0
        %1229 = vmatpush1.bf16.msra.mxu0 %v1212
        %1230 = vmatprep.subr.bf16.mxu0 0
        %1231 = vmatpush1.bf16.msra.mxu0 %v1213
        %1232 = vmatprep.subr.bf16.mxu0 0
        %1233 = vmatpush1.bf16.msra.mxu0 %v1214
        %1234 = vmatprep.subr.bf16.mxu0 0
        %1235 = vmatpush1.bf16.msra.mxu0 %v1215
        %1236 = vmatprep.subr.bf16.mxu0 0
        %1237 = vmatpush1.bf16.msra.mxu0 %v1216
        %1238 = vmatprep.subr.bf16.mxu0 0
        %1239 = vmatpush1.bf16.msra.mxu0 %v1217
        %1240 = vmatprep.subr.bf16.mxu0 0
        %1241 = vmatpush1.bf16.msra.mxu0 %v1218
        %1242 = vmatprep.subr.bf16.mxu0 0
        %1243 = vmatpush1.bf16.msra.mxu0 %v1219
        %1244 = vmatprep.subr.bf16.mxu0 0
        %1245 = vmatpush1.bf16.msra.mxu0 0
        %1246 = vmatprep.subr.bf16.mxu0 0
        %1247 = vmatpush1.bf16.msra.mxu0 0
        %1248 = vmatprep.subr.bf16.mxu0 0
        %1249 = vmatpush1.bf16.msra.mxu0 0
        %1250 = vmatprep.subr.bf16.mxu0 0
        %1251 = vmatpush1.bf16.msra.mxu0 0
        %1252 = vmatprep.subr.bf16.mxu0 0
        %1253 = vmatpush1.bf16.msra.mxu0 0
        %1254 = vmatprep.subr.bf16.mxu0 0
        %1255 = vmatpush1.bf16.msra.mxu0 0
        %1256 = vmatprep.subr.bf16.mxu0 0
        %1257 = vmatpush1.bf16.msra.mxu0 0
        %1258 = vmatprep.subr.bf16.mxu0 0
        %1259 = vmatpush1.bf16.msra.mxu0 0
        %1260 = vmatprep.mubr.bf16.mxu0 0
        %1261 = vmatmul.mubr.bf16.gmra.mrb[0].mxu0 %v852
        %v1262 = vpop.f32.mrb[0].mxu0
        %v1263 = vadd.f32 %v1094, %v1262
        %v1264 = vpop.f32.mrb[0].mxu0
        %v1265 = vpop.f32.mrb[0].mxu0
        %v1266 = vadd.f32 %v1097, %v1265
        %v1267 = vpop.f32.mrb[0].mxu0
        %1268 = vmatprep.mubr.bf16.mxu0 0
        %1269 = vmatmul.mubr.bf16.gmra.mrb[0].mxu0 %v853
        %v1270 = vpop.f32.mrb[0].mxu0
        %v1271 = vadd.f32 %v1102, %v1270
        %v1272 = vpop.f32.mrb[0].mxu0
        %v1273 = vpop.f32.mrb[0].mxu0
        %v1274 = vadd.f32 %v1105, %v1273
        %v1275 = vpop.f32.mrb[0].mxu0
        %1276 = vmatprep.mubr.bf16.mxu0 0
        %1277 = vmatmul.mubr.bf16.gmra.mrb[0].mxu0 %v854
        %v1278 = vpop.f32.mrb[0].mxu0
        %v1279 = vadd.f32 %v1110, %v1278
        %v1280 = vpop.f32.mrb[0].mxu0
        %v1281 = vpop.f32.mrb[0].mxu0
        %v1282 = vadd.f32 %v1113, %v1281
        %v1283 = vpop.f32.mrb[0].mxu0
        %1284 = vmatprep.mubr.bf16.mxu0 0
        %1285 = vmatmul.mubr.bf16.gmra.mrb[0].mxu0 %v855
        %v1286 = vpop.f32.mrb[0].mxu0
        %v1287 = vadd.f32 %v1118, %v1286
        %v1288 = vpop.f32.mrb[0].mxu0
        %v1289 = vpop.f32.mrb[0].mxu0
        %v1290 = vadd.f32 %v1121, %v1289
        %v1291 = vpop.f32.mrb[0].mxu0
        %1292 = vmatprep.mubr.bf16.mxu0 0
        %1293 = vmatmul.mubr.bf16.gmra.mrb[0].mxu0 %v856
        %v1294 = vpop.f32.mrb[0].mxu0
        %v1295 = vadd.f32 %v1126, %v1294
        %v1296 = vpop.f32.mrb[0].mxu0
        %v1297 = vpop.f32.mrb[0].mxu0
        %v1298 = vadd.f32 %v1129, %v1297
        %v1299 = vpop.f32.mrb[0].mxu0
        %1300 = vmatprep.mubr.bf16.mxu0 0
        %1301 = vmatmul.mubr.bf16.gmra.mrb[0].mxu0 %v857
        %v1302 = vpop.f32.mrb[0].mxu0
        %v1303 = vadd.f32 %v1134, %v1302
        %v1304 = vpop.f32.mrb[0].mxu0
        %v1305 = vpop.f32.mrb[0].mxu0
        %v1306 = vadd.f32 %v1137, %v1305
        %v1307 = vpop.f32.mrb[0].mxu0
        %1308 = vmatprep.mubr.bf16.mxu0 0
        %1309 = vmatmul.mubr.bf16.gmra.mrb[0].mxu0 %v858
        %v1310 = vpop.f32.mrb[0].mxu0
        %v1311 = vadd.f32 %v1142, %v1310
        %v1312 = vpop.f32.mrb[0].mxu0
        %v1313 = vpop.f32.mrb[0].mxu0
        %v1314 = vadd.f32 %v1145, %v1313
        %v1315 = vpop.f32.mrb[0].mxu0
        %1316 = vmatprep.mubr.bf16.mxu0 0
        %1317 = vmatmul.mubr.bf16.gmra.mrb[0].mxu0 %v859
        %v1318 = vpop.f32.mrb[0].mxu0
        %v1319 = vadd.f32 %v1150, %v1318
        %v1320 = vpop.f32.mrb[0].mxu0
        %v1321 = vpop.f32.mrb[0].mxu0
        %v1322 = vadd.f32 %v1153, %v1321
        %v1323 = vpop.f32.mrb[0].mxu0
        %1324 = vmatprep.mubr.bf16.mxu0 0
        %1325 = vmatmul.mubr.bf16.gmra.mrb[0].mxu0 %v860
        %v1326 = vpop.f32.mrb[0].mxu0
        %v1327 = vadd.f32 %v1158, %v1326
        %v1328 = vpop.f32.mrb[0].mxu0
        %v1329 = vpop.f32.mrb[0].mxu0
        %v1330 = vadd.f32 %v1161, %v1329
        %v1331 = vpop.f32.mrb[0].mxu0
        %1332 = vmatprep.mubr.bf16.mxu0 0
        %1333 = vmatmul.mubr.bf16.gmra.mrb[0].mxu0 %v861
        %v1334 = vpop.f32.mrb[0].mxu0
        %v1335 = vadd.f32 %v1166, %v1334
        %v1336 = vpop.f32.mrb[0].mxu0
        %v1337 = vpop.f32.mrb[0].mxu0
        %v1338 = vadd.f32 %v1169, %v1337
        %v1339 = vpop.f32.mrb[0].mxu0
        %1340 = vmatprep.mubr.bf16.mxu0 0
        %1341 = vmatmul.mubr.bf16.gmra.mrb[0].mxu0 %v862
        %v1342 = vpop.f32.mrb[0].mxu0
        %v1343 = vadd.f32 %v1174, %v1342
        %v1344 = vpop.f32.mrb[0].mxu0
        %v1345 = vpop.f32.mrb[0].mxu0
        %v1346 = vadd.f32 %v1177, %v1345
        %v1347 = vpop.f32.mrb[0].mxu0
        %1348 = vdwg.mxu0
        %v1349 = vld [vmem:[#allocation2] sm:$0xfe]
        %v1350 = vld [vmem:[#allocation12 + $0x80] sm:$0xf]
        %v1351 = vld [vmem:[#allocation12 + $0x84] sm:$0xf]
        %v1352 = vld [vmem:[#allocation12 + $0x88] sm:$0xf]
        %v1353 = vld [vmem:[#allocation12 + $0x8c] sm:$0xf]
        %v1354 = vld [vmem:[#allocation12 + $0x90] sm:$0xf]
        %v1355 = vld [vmem:[#allocation12 + $0x94] sm:$0xf]
        %v1356 = vld [vmem:[#allocation12 + $0x98] sm:$0xf]
        %v1357 = vld [vmem:[#allocation12 + $0x9c] sm:$0xf]
        %v1358 = vld [vmem:[#allocation12 + $0xa0] sm:$0xf]
        %v1359 = vld [vmem:[#allocation12 + $0xa4] sm:$0xf]
        %v1360 = vld [vmem:[#allocation12 + $0xa8] sm:$0xf]
        %v1361 = vld [vmem:[#allocation12 + $0xac] sm:$0xf]
        %v1362 = vld [vmem:[#allocation12 + $0xb0] sm:$0xf]
        %v1363 = vld [vmem:[#allocation12 + $0xb4] sm:$0xf]
        %v1364 = vld [vmem:[#allocation12 + $0xb8] sm:$0xf]
        %v1365 = vld [vmem:[#allocation12 + $0xbc] sm:$0xf]
        %vm1378 = vcmask 1046528
        %v1379 = vrot.slane %v1349, 1
        %v1380 = vrot.slane %v880, 1
        %v1381 = vsel %vm1378, %v1379, %v1380
        %v1382 = vrot.slane %v881, 1
        %v1383 = vsel %vm1378, %v1380, %v1382
        %v1384 = vrot.slane %v882, 1
        %v1385 = vsel %vm1378, %v1382, %v1384
        %v1386 = vrot.slane %v883, 1
        %v1387 = vsel %vm1378, %v1384, %v1386
        %v1388 = vrot.slane %v884, 1
        %v1389 = vsel %vm1378, %v1386, %v1388
        %v1390 = vrot.slane %v885, 1
        %v1391 = vsel %vm1378, %v1388, %v1390
        %v1392 = vrot.slane %v886, 1
        %v1393 = vsel %vm1378, %v1390, %v1392
        %v1394 = vrot.slane %v887, 1
        %v1395 = vsel %vm1378, %v1392, %v1394
        %v1396 = vrot.slane %v888, 1
        %v1397 = vsel %vm1378, %v1394, %v1396
        %v1398 = vrot.slane %v889, 1
        %v1399 = vsel %vm1378, %v1396, %v1398
        %v1400 = vrot.slane %v890, 1
        %v1401 = vsel %vm1378, %v1398, %v1400
        %v1429 = vunpack.c.l.b16 %v1350
        %v1430 = vunpack.c.l.b16 %v1351
        %v1431 = vunpack.c.l.b16 %v1352
        %v1432 = vunpack.c.l.b16 %v1353
        %v1433 = vunpack.c.l.b16 %v1354
        %v1434 = vunpack.c.l.b16 %v1355
        %v1435 = vunpack.c.l.b16 %v1356
        %v1436 = vunpack.c.l.b16 %v1357
        %v1437 = vunpack.c.l.b16 %v1358
        %v1438 = vunpack.c.l.b16 %v1359
        %v1439 = vunpack.c.l.b16 %v1360
        %v1440 = vunpack.c.l.b16 %v1361
        %v1441 = vunpack.c.l.b16 %v1362
        %v1442 = vunpack.c.l.b16 %v1363
        %v1443 = vunpack.c.l.b16 %v1364
        %v1444 = vunpack.c.l.b16 %v1365
        %v1445 = vpack.c.b16 %v1430, %v1429
        %v1446 = vpack.c.b16 %v1432, %v1431
        %v1447 = vpack.c.b16 %v1434, %v1433
        %v1448 = vpack.c.b16 %v1436, %v1435
        %v1449 = vpack.c.b16 %v1438, %v1437
        %v1450 = vpack.c.b16 %v1440, %v1439
        %v1451 = vpack.c.b16 %v1442, %v1441
        %v1452 = vpack.c.b16 %v1444, %v1443
        %1461 = vmatprep.subr.bf16.mxu0 0
        %1462 = vmatpush1.bf16.msra.mxu0 %v1445
        %1463 = vmatprep.subr.bf16.mxu0 0
        %1464 = vmatpush1.bf16.msra.mxu0 %v1446
        %1465 = vmatprep.subr.bf16.mxu0 0
        %1466 = vmatpush1.bf16.msra.mxu0 %v1447
        %1467 = vmatprep.subr.bf16.mxu0 0
        %1468 = vmatpush1.bf16.msra.mxu0 %v1448
        %1469 = vmatprep.subr.bf16.mxu0 0
        %1470 = vmatpush1.bf16.msra.mxu0 %v1449
        %1471 = vmatprep.subr.bf16.mxu0 0
        %1472 = vmatpush1.bf16.msra.mxu0 %v1450
        %1473 = vmatprep.subr.bf16.mxu0 0
        %1474 = vmatpush1.bf16.msra.mxu0 %v1451
        %1475 = vmatprep.subr.bf16.mxu0 0
        %1476 = vmatpush1.bf16.msra.mxu0 %v1452
        %1477 = vmatprep.subr.bf16.mxu0 0
        %1478 = vmatpush1.bf16.msra.mxu0 0
        %1479 = vmatprep.subr.bf16.mxu0 0
        %1480 = vmatpush1.bf16.msra.mxu0 0
        %1481 = vmatprep.subr.bf16.mxu0 0
        %1482 = vmatpush1.bf16.msra.mxu0 0
        %1483 = vmatprep.subr.bf16.mxu0 0
        %1484 = vmatpush1.bf16.msra.mxu0 0
        %1485 = vmatprep.subr.bf16.mxu0 0
        %1486 = vmatpush1.bf16.msra.mxu0 0
        %1487 = vmatprep.subr.bf16.mxu0 0
        %1488 = vmatpush1.bf16.msra.mxu0 0
        %1489 = vmatprep.subr.bf16.mxu0 0
        %1490 = vmatpush1.bf16.msra.mxu0 0
        %1491 = vmatprep.subr.bf16.mxu0 0
        %1492 = vmatpush1.bf16.msra.mxu0 0
        %1493 = vmatprep.mubr.bf16.mxu0 0
        %1494 = vmatmul.mubr.bf16.gmra.mrb[0].mxu0 %v1381
        %v1495 = vpop.f32.mrb[0].mxu0
        %v1496 = vadd.f32 0.0, %v1495
        %v1497 = vpop.f32.mrb[0].mxu0
        %v1498 = vpop.f32.mrb[0].mxu0
        %v1499 = vadd.f32 0.0, %v1498
        %v1500 = vpop.f32.mrb[0].mxu0
        %1501 = vmatprep.mubr.bf16.mxu0 0
        %1502 = vmatmul.mubr.bf16.gmra.mrb[0].mxu0 %v1383
        %v1503 = vpop.f32.mrb[0].mxu0
        %v1504 = vadd.f32 0.0, %v1503
        %v1505 = vpop.f32.mrb[0].mxu0
        %v1506 = vpop.f32.mrb[0].mxu0
        %v1507 = vadd.f32 0.0, %v1506
        %v1508 = vpop.f32.mrb[0].mxu0
        %1509 = vmatprep.mubr.bf16.mxu0 0
        %1510 = vmatmul.mubr.bf16.gmra.mrb[0].mxu0 %v1385
        %v1511 = vpop.f32.mrb[0].mxu0
        %v1512 = vadd.f32 0.0, %v1511
        %v1513 = vpop.f32.mrb[0].mxu0
        %v1514 = vpop.f32.mrb[0].mxu0
        %v1515 = vadd.f32 0.0, %v1514
        %v1516 = vpop.f32.mrb[0].mxu0
        %1517 = vmatprep.mubr.bf16.mxu0 0
        %1518 = vmatmul.mubr.bf16.gmra.mrb[0].mxu0 %v1387
        %v1519 = vpop.f32.mrb[0].mxu0
        %v1520 = vadd.f32 0.0, %v1519
        %v1521 = vpop.f32.mrb[0].mxu0
        %v1522 = vpop.f32.mrb[0].mxu0
        %v1523 = vadd.f32 0.0, %v1522
        %v1524 = vpop.f32.mrb[0].mxu0
        %1525 = vmatprep.mubr.bf16.mxu0 0
        %1526 = vmatmul.mubr.bf16.gmra.mrb[0].mxu0 %v1389
        %v1527 = vpop.f32.mrb[0].mxu0
        %v1528 = vadd.f32 0.0, %v1527
        %v1529 = vpop.f32.mrb[0].mxu0
        %v1530 = vpop.f32.mrb[0].mxu0
        %v1531 = vadd.f32 0.0, %v1530
        %v1532 = vpop.f32.mrb[0].mxu0
        %1533 = vmatprep.mubr.bf16.mxu0 0
        %1534 = vmatmul.mubr.bf16.gmra.mrb[0].mxu0 %v1391
        %v1535 = vpop.f32.mrb[0].mxu0
        %v1536 = vadd.f32 0.0, %v1535
        %v1537 = vpop.f32.mrb[0].mxu0
        %v1538 = vpop.f32.mrb[0].mxu0
        %v1539 = vadd.f32 0.0, %v1538
        %v1540 = vpop.f32.mrb[0].mxu0
        %1541 = vmatprep.mubr.bf16.mxu0 0
        %1542 = vmatmul.mubr.bf16.gmra.mrb[0].mxu0 %v1393
        %v1543 = vpop.f32.mrb[0].mxu0
        %v1544 = vadd.f32 0.0, %v1543
        %v1545 = vpop.f32.mrb[0].mxu0
        %v1546 = vpop.f32.mrb[0].mxu0
        %v1547 = vadd.f32 0.0, %v1546
        %v1548 = vpop.f32.mrb[0].mxu0
        %1549 = vmatprep.mubr.bf16.mxu0 0
        %1550 = vmatmul.mubr.bf16.gmra.mrb[0].mxu0 %v1395
        %v1551 = vpop.f32.mrb[0].mxu0
        %v1552 = vadd.f32 0.0, %v1551
        %v1553 = vpop.f32.mrb[0].mxu0
        %v1554 = vpop.f32.mrb[0].mxu0
        %v1555 = vadd.f32 0.0, %v1554
        %v1556 = vpop.f32.mrb[0].mxu0
        %1557 = vmatprep.mubr.bf16.mxu0 0
        %1558 = vmatmul.mubr.bf16.gmra.mrb[0].mxu0 %v1397
        %v1559 = vpop.f32.mrb[0].mxu0
        %v1560 = vadd.f32 0.0, %v1559
        %v1561 = vpop.f32.mrb[0].mxu0
        %v1562 = vpop.f32.mrb[0].mxu0
        %v1563 = vadd.f32 0.0, %v1562
        %v1564 = vpop.f32.mrb[0].mxu0
        %1565 = vmatprep.mubr.bf16.mxu0 0
        %1566 = vmatmul.mubr.bf16.gmra.mrb[0].mxu0 %v1399
        %v1567 = vpop.f32.mrb[0].mxu0
        %v1568 = vadd.f32 0.0, %v1567
        %v1569 = vpop.f32.mrb[0].mxu0
        %v1570 = vpop.f32.mrb[0].mxu0
        %v1571 = vadd.f32 0.0, %v1570
        %v1572 = vpop.f32.mrb[0].mxu0
        %1573 = vmatprep.mubr.bf16.mxu0 0
        %1574 = vmatmul.mubr.bf16.gmra.mrb[0].mxu0 %v1401
        %v1575 = vpop.f32.mrb[0].mxu0
        %v1576 = vadd.f32 0.0, %v1575
        %v1577 = vpop.f32.mrb[0].mxu0
        %v1578 = vpop.f32.mrb[0].mxu0
        %v1579 = vadd.f32 0.0, %v1578
        %v1580 = vpop.f32.mrb[0].mxu0
        %1581 = vdwg.mxu0
        %v1582 = vadd.f32 %v1263, %v1496
        %v1583 = vadd.f32 %v1266, %v1499
        %v1584 = vadd.f32 %v1271, %v1504
        %v1585 = vadd.f32 %v1274, %v1507
        %v1586 = vadd.f32 %v1279, %v1512
        %v1587 = vadd.f32 %v1282, %v1515
        %v1588 = vadd.f32 %v1287, %v1520
        %v1589 = vadd.f32 %v1290, %v1523
        %v1590 = vadd.f32 %v1295, %v1528
        %v1591 = vadd.f32 %v1298, %v1531
        %v1592 = vadd.f32 %v1303, %v1536
        %v1593 = vadd.f32 %v1306, %v1539
        %v1594 = vadd.f32 %v1311, %v1544
        %v1595 = vadd.f32 %v1314, %v1547
        %v1596 = vadd.f32 %v1319, %v1552
        %v1597 = vadd.f32 %v1322, %v1555
        %v1598 = vadd.f32 %v1327, %v1560
        %v1599 = vadd.f32 %v1330, %v1563
        %v1600 = vadd.f32 %v1335, %v1568
        %v1601 = vadd.f32 %v1338, %v1571
        %v1602 = vadd.f32 %v1343, %v1576
        %v1603 = vadd.f32 %v1346, %v1579
        %v1604 = vld [vmem:[#allocation2 + $0x58] sm:$0x3]
        %v1605 = vld [vmem:[#allocation12 + $0xc0] sm:$0xf]
        %v1606 = vld [vmem:[#allocation12 + $0xc4] sm:$0xf]
        %v1607 = vld [vmem:[#allocation12 + $0xc8] sm:$0xf]
        %v1608 = vld [vmem:[#allocation12 + $0xcc] sm:$0xf]
        %v1609 = vld [vmem:[#allocation12 + $0xd0] sm:$0xf]
        %v1610 = vld [vmem:[#allocation12 + $0xd4] sm:$0xf]
        %v1611 = vld [vmem:[#allocation12 + $0xd8] sm:$0xf]
        %v1612 = vld [vmem:[#allocation12 + $0xdc] sm:$0xf]
        %v1613 = vld [vmem:[#allocation12 + $0xe0] sm:$0xf]
        %v1614 = vld [vmem:[#allocation12 + $0xe4] sm:$0xf]
        %v1615 = vld [vmem:[#allocation12 + $0xe8] sm:$0xf]
        %v1616 = vld [vmem:[#allocation12 + $0xec] sm:$0xf]
        %v1617 = vld [vmem:[#allocation12 + $0xf0] sm:$0xf]
        %v1618 = vld [vmem:[#allocation12 + $0xf4] sm:$0xf]
        %v1619 = vld [vmem:[#allocation12 + $0xf8] sm:$0xf]
        %v1620 = vld [vmem:[#allocation12 + $0xfc] sm:$0xf]
        %vm1621 = vsmask.f32 6400
        %v1623 = vshrl.u32 %v1349, 16
        %v1625 = vrot.slane %v1623, 1
        %v1626 = vshll.u32 %v1349, 16
        %v1628 = vrot.slane %v1626, 2
        %v1629 = vor.u32 %v1625, %v1628
        %v1630 = vrot.slane %v920, 1
        %v1631 = vrot.slane %v916, 2
        %v1632 = vor.u32 %v1630, %v1631
        %v1633 = vsel %vm1621, %v1629, %v1632
        %v1634 = vrot.slane %v928, 1
        %v1635 = vrot.slane %v924, 2
        %v1636 = vor.u32 %v1634, %v1635
        %v1637 = vsel %vm1621, %v1632, %v1636
        %v1638 = vrot.slane %v936, 1
        %v1639 = vrot.slane %v932, 2
        %v1640 = vor.u32 %v1638, %v1639
        %v1641 = vsel %vm1621, %v1636, %v1640
        %v1642 = vrot.slane %v944, 1
        %v1643 = vrot.slane %v940, 2
        %v1644 = vor.u32 %v1642, %v1643
        %v1645 = vsel %vm1621, %v1640, %v1644
        %v1646 = vrot.slane %v952, 1
        %v1647 = vrot.slane %v948, 2
        %v1648 = vor.u32 %v1646, %v1647
        %v1649 = vsel %vm1621, %v1644, %v1648
        %v1650 = vrot.slane %v960, 1
        %v1651 = vrot.slane %v956, 2
        %v1652 = vor.u32 %v1650, %v1651
        %v1653 = vsel %vm1621, %v1648, %v1652
        %v1654 = vrot.slane %v968, 1
        %v1655 = vrot.slane %v964, 2
        %v1656 = vor.u32 %v1654, %v1655
        %v1657 = vsel %vm1621, %v1652, %v1656
        %v1658 = vrot.slane %v976, 1
        %v1659 = vrot.slane %v972, 2
        %v1660 = vor.u32 %v1658, %v1659
        %v1661 = vsel %vm1621, %v1656, %v1660
        %v1662 = vrot.slane %v984, 1
        %v1663 = vrot.slane %v980, 2
        %v1664 = vor.u32 %v1662, %v1663
        %v1665 = vsel %vm1621, %v1660, %v1664
        %v1666 = vrot.slane %v992, 1
        %v1667 = vrot.slane %v988, 2
        %v1668 = vor.u32 %v1666, %v1667
        %v1669 = vsel %vm1621, %v1664, %v1668
        %v1671 = vshrl.u32 %v1604, 16
        %v1673 = vrot.slane %v1671, 1
        %v1674 = vshll.u32 %v1604, 16
        %v1676 = vrot.slane %v1674, 2
        %v1677 = vor.u32 %v1673, %v1676
        %v1678 = vsel %vm1621, %v1668, %v1677
        %v1706 = vunpack.c.l.b16 %v1605
        %v1707 = vunpack.c.l.b16 %v1606
        %v1708 = vunpack.c.l.b16 %v1607
        %v1709 = vunpack.c.l.b16 %v1608
        %v1710 = vunpack.c.l.b16 %v1609
        %v1711 = vunpack.c.l.b16 %v1610
        %v1712 = vunpack.c.l.b16 %v1611
        %v1713 = vunpack.c.l.b16 %v1612
        %v1714 = vunpack.c.l.b16 %v1613
        %v1715 = vunpack.c.l.b16 %v1614
        %v1716 = vunpack.c.l.b16 %v1615
        %v1717 = vunpack.c.l.b16 %v1616
        %v1718 = vunpack.c.l.b16 %v1617
        %v1719 = vunpack.c.l.b16 %v1618
        %v1720 = vunpack.c.l.b16 %v1619
        %v1721 = vunpack.c.l.b16 %v1620
        %v1722 = vpack.c.b16 %v1707, %v1706
        %v1723 = vpack.c.b16 %v1709, %v1708
        %v1724 = vpack.c.b16 %v1711, %v1710
        %v1725 = vpack.c.b16 %v1713, %v1712
        %v1726 = vpack.c.b16 %v1715, %v1714
        %v1727 = vpack.c.b16 %v1717, %v1716
        %v1728 = vpack.c.b16 %v1719, %v1718
        %v1729 = vpack.c.b16 %v1721, %v1720
        %1738 = vmatprep.subr.bf16.mxu0 0
        %1739 = vmatpush1.bf16.msra.mxu0 %v1722
        %1740 = vmatprep.subr.bf16.mxu0 0
        %1741 = vmatpush1.bf16.msra.mxu0 %v1723
        %1742 = vmatprep.subr.bf16.mxu0 0
        %1743 = vmatpush1.bf16.msra.mxu0 %v1724
        %1744 = vmatprep.subr.bf16.mxu0 0
        %1745 = vmatpush1.bf16.msra.mxu0 %v1725
        %1746 = vmatprep.subr.bf16.mxu0 0
        %1747 = vmatpush1.bf16.msra.mxu0 %v1726
        %1748 = vmatprep.subr.bf16.mxu0 0
        %1749 = vmatpush1.bf16.msra.mxu0 %v1727
        %1750 = vmatprep.subr.bf16.mxu0 0
        %1751 = vmatpush1.bf16.msra.mxu0 %v1728
        %1752 = vmatprep.subr.bf16.mxu0 0
        %1753 = vmatpush1.bf16.msra.mxu0 %v1729
        %1754 = vmatprep.subr.bf16.mxu0 0
        %1755 = vmatpush1.bf16.msra.mxu0 0
        %1756 = vmatprep.subr.bf16.mxu0 0
        %1757 = vmatpush1.bf16.msra.mxu0 0
        %1758 = vmatprep.subr.bf16.mxu0 0
        %1759 = vmatpush1.bf16.msra.mxu0 0
        %1760 = vmatprep.subr.bf16.mxu0 0
        %1761 = vmatpush1.bf16.msra.mxu0 0
        %1762 = vmatprep.subr.bf16.mxu0 0
        %1763 = vmatpush1.bf16.msra.mxu0 0
        %1764 = vmatprep.subr.bf16.mxu0 0
        %1765 = vmatpush1.bf16.msra.mxu0 0
        %1766 = vmatprep.subr.bf16.mxu0 0
        %1767 = vmatpush1.bf16.msra.mxu0 0
        %1768 = vmatprep.subr.bf16.mxu0 0
        %1769 = vmatpush1.bf16.msra.mxu0 0
        %1770 = vmatprep.mubr.bf16.mxu0 0
        %1771 = vmatmul.mubr.bf16.gmra.mrb[0].mxu0 %v1633
        %v1772 = vpop.f32.mrb[0].mxu0
        %v1773 = vadd.f32 0.0, %v1772
        %v1774 = vpop.f32.mrb[0].mxu0
        %v1775 = vpop.f32.mrb[0].mxu0
        %v1776 = vadd.f32 0.0, %v1775
        %v1777 = vpop.f32.mrb[0].mxu0
        %1778 = vmatprep.mubr.bf16.mxu0 0
        %1779 = vmatmul.mubr.bf16.gmra.mrb[0].mxu0 %v1637
        %v1780 = vpop.f32.mrb[0].mxu0
        %v1781 = vadd.f32 0.0, %v1780
        %v1782 = vpop.f32.mrb[0].mxu0
        %v1783 = vpop.f32.mrb[0].mxu0
        %v1784 = vadd.f32 0.0, %v1783
        %v1785 = vpop.f32.mrb[0].mxu0
        %1786 = vmatprep.mubr.bf16.mxu0 0
        %1787 = vmatmul.mubr.bf16.gmra.mrb[0].mxu0 %v1641
        %v1788 = vpop.f32.mrb[0].mxu0
        %v1789 = vadd.f32 0.0, %v1788
        %v1790 = vpop.f32.mrb[0].mxu0
        %v1791 = vpop.f32.mrb[0].mxu0
        %v1792 = vadd.f32 0.0, %v1791
        %v1793 = vpop.f32.mrb[0].mxu0
        %1794 = vmatprep.mubr.bf16.mxu0 0
        %1795 = vmatmul.mubr.bf16.gmra.mrb[0].mxu0 %v1645
        %v1796 = vpop.f32.mrb[0].mxu0
        %v1797 = vadd.f32 0.0, %v1796
        %v1798 = vpop.f32.mrb[0].mxu0
        %v1799 = vpop.f32.mrb[0].mxu0
        %v1800 = vadd.f32 0.0, %v1799
        %v1801 = vpop.f32.mrb[0].mxu0
        %1802 = vmatprep.mubr.bf16.mxu0 0
        %1803 = vmatmul.mubr.bf16.gmra.mrb[0].mxu0 %v1649
        %v1804 = vpop.f32.mrb[0].mxu0
        %v1805 = vadd.f32 0.0, %v1804
        %v1806 = vpop.f32.mrb[0].mxu0
        %v1807 = vpop.f32.mrb[0].mxu0
        %v1808 = vadd.f32 0.0, %v1807
        %v1809 = vpop.f32.mrb[0].mxu0
        %1810 = vmatprep.mubr.bf16.mxu0 0
        %1811 = vmatmul.mubr.bf16.gmra.mrb[0].mxu0 %v1653
        %v1812 = vpop.f32.mrb[0].mxu0
        %v1813 = vadd.f32 0.0, %v1812
        %v1814 = vpop.f32.mrb[0].mxu0
        %v1815 = vpop.f32.mrb[0].mxu0
        %v1816 = vadd.f32 0.0, %v1815
        %v1817 = vpop.f32.mrb[0].mxu0
        %1818 = vmatprep.mubr.bf16.mxu0 0
        %1819 = vmatmul.mubr.bf16.gmra.mrb[0].mxu0 %v1657
        %v1820 = vpop.f32.mrb[0].mxu0
        %v1821 = vadd.f32 0.0, %v1820
        %v1822 = vpop.f32.mrb[0].mxu0
        %v1823 = vpop.f32.mrb[0].mxu0
        %v1824 = vadd.f32 0.0, %v1823
        %v1825 = vpop.f32.mrb[0].mxu0
        %1826 = vmatprep.mubr.bf16.mxu0 0
        %1827 = vmatmul.mubr.bf16.gmra.mrb[0].mxu0 %v1661
        %v1828 = vpop.f32.mrb[0].mxu0
        %v1829 = vadd.f32 0.0, %v1828
        %v1830 = vpop.f32.mrb[0].mxu0
        %v1831 = vpop.f32.mrb[0].mxu0
        %v1832 = vadd.f32 0.0, %v1831
        %v1833 = vpop.f32.mrb[0].mxu0
        %1834 = vmatprep.mubr.bf16.mxu0 0
        %1835 = vmatmul.mubr.bf16.gmra.mrb[0].mxu0 %v1665
        %v1836 = vpop.f32.mrb[0].mxu0
        %v1837 = vadd.f32 0.0, %v1836
        %v1838 = vpop.f32.mrb[0].mxu0
        %v1839 = vpop.f32.mrb[0].mxu0
        %v1840 = vadd.f32 0.0, %v1839
        %v1841 = vpop.f32.mrb[0].mxu0
        %1842 = vmatprep.mubr.bf16.mxu0 0
        %1843 = vmatmul.mubr.bf16.gmra.mrb[0].mxu0 %v1669
        %v1844 = vpop.f32.mrb[0].mxu0
        %v1845 = vadd.f32 0.0, %v1844
        %v1846 = vpop.f32.mrb[0].mxu0
        %v1847 = vpop.f32.mrb[0].mxu0
        %v1848 = vadd.f32 0.0, %v1847
        %v1849 = vpop.f32.mrb[0].mxu0
        %1850 = vmatprep.mubr.bf16.mxu0 0
        %1851 = vmatmul.mubr.bf16.gmra.mrb[0].mxu0 %v1678
        %v1852 = vpop.f32.mrb[0].mxu0
        %v1853 = vadd.f32 0.0, %v1852
        %v1854 = vpop.f32.mrb[0].mxu0
        %v1855 = vpop.f32.mrb[0].mxu0
        %v1856 = vadd.f32 0.0, %v1855
        %v1857 = vpop.f32.mrb[0].mxu0
        %1858 = vdwg.mxu0
        %v1859 = vadd.f32 %v1582, %v1773
        %v1860 = vadd.f32 %v1583, %v1776
        %v1861 = vadd.f32 %v1584, %v1781
        %v1862 = vadd.f32 %v1585, %v1784
        %v1863 = vadd.f32 %v1586, %v1789
        %v1864 = vadd.f32 %v1587, %v1792
        %v1865 = vadd.f32 %v1588, %v1797
        %v1866 = vadd.f32 %v1589, %v1800
        %v1867 = vadd.f32 %v1590, %v1805
        %v1868 = vadd.f32 %v1591, %v1808
        %v1869 = vadd.f32 %v1592, %v1813
        %v1870 = vadd.f32 %v1593, %v1816
        %v1871 = vadd.f32 %v1594, %v1821
        %v1872 = vadd.f32 %v1595, %v1824
        %v1873 = vadd.f32 %v1596, %v1829
        %v1874 = vadd.f32 %v1597, %v1832
        %v1875 = vadd.f32 %v1598, %v1837
        %v1876 = vadd.f32 %v1599, %v1840
        %v1877 = vadd.f32 %v1600, %v1845
        %v1878 = vadd.f32 %v1601, %v1848
        %v1879 = vadd.f32 %v1602, %v1853
        %v1880 = vadd.f32 %v1603, %v1856
        %v1881 = vld [vmem:[#allocation2] sm:$0xfc]
        %v1882 = vld [vmem:[#allocation12 + $0x100] sm:$0xf]
        %v1883 = vld [vmem:[#allocation12 + $0x104] sm:$0xf]
        %v1884 = vld [vmem:[#allocation12 + $0x108] sm:$0xf]
        %v1885 = vld [vmem:[#allocation12 + $0x10c] sm:$0xf]
        %v1886 = vld [vmem:[#allocation12 + $0x110] sm:$0xf]
        %v1887 = vld [vmem:[#allocation12 + $0x114] sm:$0xf]
        %v1888 = vld [vmem:[#allocation12 + $0x118] sm:$0xf]
        %v1889 = vld [vmem:[#allocation12 + $0x11c] sm:$0xf]
        %v1890 = vld [vmem:[#allocation12 + $0x120] sm:$0xf]
        %v1891 = vld [vmem:[#allocation12 + $0x124] sm:$0xf]
        %v1892 = vld [vmem:[#allocation12 + $0x128] sm:$0xf]
        %v1893 = vld [vmem:[#allocation12 + $0x12c] sm:$0xf]
        %v1894 = vld [vmem:[#allocation12 + $0x130] sm:$0xf]
        %v1895 = vld [vmem:[#allocation12 + $0x134] sm:$0xf]
        %v1896 = vld [vmem:[#allocation12 + $0x138] sm:$0xf]
        %v1897 = vld [vmem:[#allocation12 + $0x13c] sm:$0xf]
        %vm1900 = vcmask 1045504
        %v1901 = vrot.slane %v1881, 2
        %v1902 = vrot.slane %v880, 2
        %v1903 = vsel %vm1900, %v1901, %v1902
        %v1904 = vrot.slane %v881, 2
        %v1905 = vsel %vm1900, %v1902, %v1904
        %v1906 = vrot.slane %v882, 2
        %v1907 = vsel %vm1900, %v1904, %v1906
        %v1908 = vrot.slane %v883, 2
        %v1909 = vsel %vm1900, %v1906, %v1908
        %v1910 = vrot.slane %v884, 2
        %v1911 = vsel %vm1900, %v1908, %v1910
        %v1912 = vrot.slane %v885, 2
        %v1913 = vsel %vm1900, %v1910, %v1912
        %v1914 = vrot.slane %v886, 2
        %v1915 = vsel %vm1900, %v1912, %v1914
        %v1916 = vrot.slane %v887, 2
        %v1917 = vsel %vm1900, %v1914, %v1916
        %v1918 = vrot.slane %v888, 2
        %v1919 = vsel %vm1900, %v1916, %v1918
        %v1920 = vrot.slane %v889, 2
        %v1921 = vsel %vm1900, %v1918, %v1920
        %v1922 = vrot.slane %v1604, 2
        %v1923 = vsel %vm1900, %v1920, %v1922
        %v1951 = vunpack.c.l.b16 %v1882
        %v1952 = vunpack.c.l.b16 %v1883
        %v1953 = vunpack.c.l.b16 %v1884
        %v1954 = vunpack.c.l.b16 %v1885
        %v1955 = vunpack.c.l.b16 %v1886
        %v1956 = vunpack.c.l.b16 %v1887
        %v1957 = vunpack.c.l.b16 %v1888
        %v1958 = vunpack.c.l.b16 %v1889
        %v1959 = vunpack.c.l.b16 %v1890
        %v1960 = vunpack.c.l.b16 %v1891
        %v1961 = vunpack.c.l.b16 %v1892
        %v1962 = vunpack.c.l.b16 %v1893
        %v1963 = vunpack.c.l.b16 %v1894
        %v1964 = vunpack.c.l.b16 %v1895
        %v1965 = vunpack.c.l.b16 %v1896
        %v1966 = vunpack.c.l.b16 %v1897
        %v1967 = vpack.c.b16 %v1952, %v1951
        %v1968 = vpack.c.b16 %v1954, %v1953
        %v1969 = vpack.c.b16 %v1956, %v1955
        %v1970 = vpack.c.b16 %v1958, %v1957
        %v1971 = vpack.c.b16 %v1960, %v1959
        %v1972 = vpack.c.b16 %v1962, %v1961
        %v1973 = vpack.c.b16 %v1964, %v1963
        %v1974 = vpack.c.b16 %v1966, %v1965
        %1983 = vmatprep.subr.bf16.mxu0 0
        %1984 = vmatpush1.bf16.msra.mxu0 %v1967
        %1985 = vmatprep.subr.bf16.mxu0 0
        %1986 = vmatpush1.bf16.msra.mxu0 %v1968
        %1987 = vmatprep.subr.bf16.mxu0 0
        %1988 = vmatpush1.bf16.msra.mxu0 %v1969
        %1989 = vmatprep.subr.bf16.mxu0 0
        %1990 = vmatpush1.bf16.msra.mxu0 %v1970
        %1991 = vmatprep.subr.bf16.mxu0 0
        %1992 = vmatpush1.bf16.msra.mxu0 %v1971
        %1993 = vmatprep.subr.bf16.mxu0 0
        %1994 = vmatpush1.bf16.msra.mxu0 %v1972
        %1995 = vmatprep.subr.bf16.mxu0 0
        %1996 = vmatpush1.bf16.msra.mxu0 %v1973
        %1997 = vmatprep.subr.bf16.mxu0 0
        %1998 = vmatpush1.bf16.msra.mxu0 %v1974
        %1999 = vmatprep.subr.bf16.mxu0 0
        %2000 = vmatpush1.bf16.msra.mxu0 0
        %2001 = vmatprep.subr.bf16.mxu0 0
        %2002 = vmatpush1.bf16.msra.mxu0 0
        %2003 = vmatprep.subr.bf16.mxu0 0
        %2004 = vmatpush1.bf16.msra.mxu0 0
        %2005 = vmatprep.subr.bf16.mxu0 0
        %2006 = vmatpush1.bf16.msra.mxu0 0
        %2007 = vmatprep.subr.bf16.mxu0 0
        %2008 = vmatpush1.bf16.msra.mxu0 0
        %2009 = vmatprep.subr.bf16.mxu0 0
        %2010 = vmatpush1.bf16.msra.mxu0 0
        %2011 = vmatprep.subr.bf16.mxu0 0
        %2012 = vmatpush1.bf16.msra.mxu0 0
        %2013 = vmatprep.subr.bf16.mxu0 0
        %2014 = vmatpush1.bf16.msra.mxu0 0
        %2015 = vmatprep.mubr.bf16.mxu0 0
        %2016 = vmatmul.mubr.bf16.gmra.mrb[0].mxu0 %v1903
        %v2017 = vpop.f32.mrb[0].mxu0
        %v2018 = vadd.f32 0.0, %v2017
        %v2019 = vpop.f32.mrb[0].mxu0
        %v2020 = vpop.f32.mrb[0].mxu0
        %v2021 = vadd.f32 0.0, %v2020
        %v2022 = vpop.f32.mrb[0].mxu0
        %2023 = vmatprep.mubr.bf16.mxu0 0
        %2024 = vmatmul.mubr.bf16.gmra.mrb[0].mxu0 %v1905
        %v2025 = vpop.f32.mrb[0].mxu0
        %v2026 = vadd.f32 0.0, %v2025
        %v2027 = vpop.f32.mrb[0].mxu0
        %v2028 = vpop.f32.mrb[0].mxu0
        %v2029 = vadd.f32 0.0, %v2028
        %v2030 = vpop.f32.mrb[0].mxu0
        %2031 = vmatprep.mubr.bf16.mxu0 0
        %2032 = vmatmul.mubr.bf16.gmra.mrb[0].mxu0 %v1907
        %v2033 = vpop.f32.mrb[0].mxu0
        %v2034 = vadd.f32 0.0, %v2033
        %v2035 = vpop.f32.mrb[0].mxu0
        %v2036 = vpop.f32.mrb[0].mxu0
        %v2037 = vadd.f32 0.0, %v2036
        %v2038 = vpop.f32.mrb[0].mxu0
        %2039 = vmatprep.mubr.bf16.mxu0 0
        %2040 = vmatmul.mubr.bf16.gmra.mrb[0].mxu0 %v1909
        %v2041 = vpop.f32.mrb[0].mxu0
        %v2042 = vadd.f32 0.0, %v2041
        %v2043 = vpop.f32.mrb[0].mxu0
        %v2044 = vpop.f32.mrb[0].mxu0
        %v2045 = vadd.f32 0.0, %v2044
        %v2046 = vpop.f32.mrb[0].mxu0
        %2047 = vmatprep.mubr.bf16.mxu0 0
        %2048 = vmatmul.mubr.bf16.gmra.mrb[0].mxu0 %v1911
        %v2049 = vpop.f32.mrb[0].mxu0
        %v2050 = vadd.f32 0.0, %v2049
        %v2051 = vpop.f32.mrb[0].mxu0
        %v2052 = vpop.f32.mrb[0].mxu0
        %v2053 = vadd.f32 0.0, %v2052
        %v2054 = vpop.f32.mrb[0].mxu0
        %2055 = vmatprep.mubr.bf16.mxu0 0
        %2056 = vmatmul.mubr.bf16.gmra.mrb[0].mxu0 %v1913
        %v2057 = vpop.f32.mrb[0].mxu0
        %v2058 = vadd.f32 0.0, %v2057
        %v2059 = vpop.f32.mrb[0].mxu0
        %v2060 = vpop.f32.mrb[0].mxu0
        %v2061 = vadd.f32 0.0, %v2060
        %v2062 = vpop.f32.mrb[0].mxu0
        %2063 = vmatprep.mubr.bf16.mxu0 0
        %2064 = vmatmul.mubr.bf16.gmra.mrb[0].mxu0 %v1915
        %v2065 = vpop.f32.mrb[0].mxu0
        %v2066 = vadd.f32 0.0, %v2065
        %v2067 = vpop.f32.mrb[0].mxu0
        %v2068 = vpop.f32.mrb[0].mxu0
        %v2069 = vadd.f32 0.0, %v2068
        %v2070 = vpop.f32.mrb[0].mxu0
        %2071 = vmatprep.mubr.bf16.mxu0 0
        %2072 = vmatmul.mubr.bf16.gmra.mrb[0].mxu0 %v1917
        %v2073 = vpop.f32.mrb[0].mxu0
        %v2074 = vadd.f32 0.0, %v2073
        %v2075 = vpop.f32.mrb[0].mxu0
        %v2076 = vpop.f32.mrb[0].mxu0
        %v2077 = vadd.f32 0.0, %v2076
        %v2078 = vpop.f32.mrb[0].mxu0
        %2079 = vmatprep.mubr.bf16.mxu0 0
        %2080 = vmatmul.mubr.bf16.gmra.mrb[0].mxu0 %v1919
        %v2081 = vpop.f32.mrb[0].mxu0
        %v2082 = vadd.f32 0.0, %v2081
        %v2083 = vpop.f32.mrb[0].mxu0
        %v2084 = vpop.f32.mrb[0].mxu0
        %v2085 = vadd.f32 0.0, %v2084
        %v2086 = vpop.f32.mrb[0].mxu0
        %2087 = vmatprep.mubr.bf16.mxu0 0
        %2088 = vmatmul.mubr.bf16.gmra.mrb[0].mxu0 %v1921
        %v2089 = vpop.f32.mrb[0].mxu0
        %v2090 = vadd.f32 0.0, %v2089
        %v2091 = vpop.f32.mrb[0].mxu0
        %v2092 = vpop.f32.mrb[0].mxu0
        %v2093 = vadd.f32 0.0, %v2092
        %v2094 = vpop.f32.mrb[0].mxu0
        %2095 = vmatprep.mubr.bf16.mxu0 0
        %2096 = vmatmul.mubr.bf16.gmra.mrb[0].mxu0 %v1923
        %v2097 = vpop.f32.mrb[0].mxu0
        %v2098 = vadd.f32 0.0, %v2097
        %v2099 = vpop.f32.mrb[0].mxu0
        %v2100 = vpop.f32.mrb[0].mxu0
        %v2101 = vadd.f32 0.0, %v2100
        %v2102 = vpop.f32.mrb[0].mxu0
        %2103 = vdwg.mxu0
        %v2104 = vadd.f32 %v1859, %v2018
        %v2105 = vadd.f32 %v1860, %v2021
        %v2106 = vadd.f32 %v1861, %v2026
        %v2107 = vadd.f32 %v1862, %v2029
        %v2108 = vadd.f32 %v1863, %v2034
        %v2109 = vadd.f32 %v1864, %v2037
        %v2110 = vadd.f32 %v1865, %v2042
        %v2111 = vadd.f32 %v1866, %v2045
        %v2112 = vadd.f32 %v1867, %v2050
        %v2113 = vadd.f32 %v1868, %v2053
        %v2114 = vadd.f32 %v1869, %v2058
        %v2115 = vadd.f32 %v1870, %v2061
        %v2116 = vadd.f32 %v1871, %v2066
        %v2117 = vadd.f32 %v1872, %v2069
        %v2118 = vadd.f32 %v1873, %v2074
        %v2119 = vadd.f32 %v1874, %v2077
        %v2120 = vadd.f32 %v1875, %v2082
        %v2121 = vadd.f32 %v1876, %v2085
        %v2122 = vadd.f32 %v1877, %v2090
        %v2123 = vadd.f32 %v1878, %v2093
        %v2124 = vadd.f32 %v1879, %v2098
        %v2125 = vadd.f32 %v1880, %v2101
        %v2126 = vld [vmem:[#allocation2 + $0x58] sm:$0x7]
        %v2127 = vld [vmem:[#allocation12 + $0x140] sm:$0xf]
        %v2128 = vld [vmem:[#allocation12 + $0x144] sm:$0xf]
        %v2129 = vld [vmem:[#allocation12 + $0x148] sm:$0xf]
        %v2130 = vld [vmem:[#allocation12 + $0x14c] sm:$0xf]
        %v2131 = vld [vmem:[#allocation12 + $0x150] sm:$0xf]
        %v2132 = vld [vmem:[#allocation12 + $0x154] sm:$0xf]
        %v2133 = vld [vmem:[#allocation12 + $0x158] sm:$0xf]
        %v2134 = vld [vmem:[#allocation12 + $0x15c] sm:$0xf]
        %v2135 = vld [vmem:[#allocation12 + $0x160] sm:$0xf]
        %v2136 = vld [vmem:[#allocation12 + $0x164] sm:$0xf]
        %v2137 = vld [vmem:[#allocation12 + $0x168] sm:$0xf]
        %v2138 = vld [vmem:[#allocation12 + $0x16c] sm:$0xf]
        %v2139 = vld [vmem:[#allocation12 + $0x170] sm:$0xf]
        %v2140 = vld [vmem:[#allocation12 + $0x174] sm:$0xf]
        %v2141 = vld [vmem:[#allocation12 + $0x178] sm:$0xf]
        %v2142 = vld [vmem:[#allocation12 + $0x17c] sm:$0xf]
        %vm2143 = vsmask.f32 5376
        %v2145 = vshrl.u32 %v1881, 16
        %v2147 = vrot.slane %v2145, 2
        %v2148 = vshll.u32 %v1881, 16
        %v2150 = vrot.slane %v2148, 3
        %v2151 = vor.u32 %v2147, %v2150
        %v2152 = vrot.slane %v920, 2
        %v2153 = vrot.slane %v916, 3
        %v2154 = vor.u32 %v2152, %v2153
        %v2155 = vsel %vm2143, %v2151, %v2154
        %v2156 = vrot.slane %v928, 2
        %v2157 = vrot.slane %v924, 3
        %v2158 = vor.u32 %v2156, %v2157
        %v2159 = vsel %vm2143, %v2154, %v2158
        %v2160 = vrot.slane %v936, 2
        %v2161 = vrot.slane %v932, 3
        %v2162 = vor.u32 %v2160, %v2161
        %v2163 = vsel %vm2143, %v2158, %v2162
        %v2164 = vrot.slane %v944, 2
        %v2165 = vrot.slane %v940, 3
        %v2166 = vor.u32 %v2164, %v2165
        %v2167 = vsel %vm2143, %v2162, %v2166
        %v2168 = vrot.slane %v952, 2
        %v2169 = vrot.slane %v948, 3
        %v2170 = vor.u32 %v2168, %v2169
        %v2171 = vsel %vm2143, %v2166, %v2170
        %v2172 = vrot.slane %v960, 2
        %v2173 = vrot.slane %v956, 3
        %v2174 = vor.u32 %v2172, %v2173
        %v2175 = vsel %vm2143, %v2170, %v2174
        %v2176 = vrot.slane %v968, 2
        %v2177 = vrot.slane %v964, 3
        %v2178 = vor.u32 %v2176, %v2177
        %v2179 = vsel %vm2143, %v2174, %v2178
        %v2180 = vrot.slane %v976, 2
        %v2181 = vrot.slane %v972, 3
        %v2182 = vor.u32 %v2180, %v2181
        %v2183 = vsel %vm2143, %v2178, %v2182
        %v2184 = vrot.slane %v984, 2
        %v2185 = vrot.slane %v980, 3
        %v2186 = vor.u32 %v2184, %v2185
        %v2187 = vsel %vm2143, %v2182, %v2186
        %v2188 = vrot.slane %v992, 2
        %v2189 = vrot.slane %v988, 3
        %v2190 = vor.u32 %v2188, %v2189
        %v2191 = vsel %vm2143, %v2186, %v2190
        %v2193 = vshrl.u32 %v2126, 16
        %v2195 = vrot.slane %v2193, 2
        %v2196 = vshll.u32 %v2126, 16
        %v2198 = vrot.slane %v2196, 3
        %v2199 = vor.u32 %v2195, %v2198
        %v2200 = vsel %vm2143, %v2190, %v2199
        %v2228 = vunpack.c.l.b16 %v2127
        %v2229 = vunpack.c.l.b16 %v2128
        %v2230 = vunpack.c.l.b16 %v2129
        %v2231 = vunpack.c.l.b16 %v2130
        %v2232 = vunpack.c.l.b16 %v2131
        %v2233 = vunpack.c.l.b16 %v2132
        %v2234 = vunpack.c.l.b16 %v2133
        %v2235 = vunpack.c.l.b16 %v2134
        %v2236 = vunpack.c.l.b16 %v2135
        %v2237 = vunpack.c.l.b16 %v2136
        %v2238 = vunpack.c.l.b16 %v2137
        %v2239 = vunpack.c.l.b16 %v2138
        %v2240 = vunpack.c.l.b16 %v2139
        %v2241 = vunpack.c.l.b16 %v2140
        %v2242 = vunpack.c.l.b16 %v2141
        %v2243 = vunpack.c.l.b16 %v2142
        %v2244 = vpack.c.b16 %v2229, %v2228
        %v2245 = vpack.c.b16 %v2231, %v2230
        %v2246 = vpack.c.b16 %v2233, %v2232
        %v2247 = vpack.c.b16 %v2235, %v2234
        %v2248 = vpack.c.b16 %v2237, %v2236
        %v2249 = vpack.c.b16 %v2239, %v2238
        %v2250 = vpack.c.b16 %v2241, %v2240
        %v2251 = vpack.c.b16 %v2243, %v2242
        %2260 = vmatprep.subr.bf16.mxu0 0
        %2261 = vmatpush1.bf16.msra.mxu0 %v2244
        %2262 = vmatprep.subr.bf16.mxu0 0
        %2263 = vmatpush1.bf16.msra.mxu0 %v2245
        %2264 = vmatprep.subr.bf16.mxu0 0
        %2265 = vmatpush1.bf16.msra.mxu0 %v2246
        %2266 = vmatprep.subr.bf16.mxu0 0
        %2267 = vmatpush1.bf16.msra.mxu0 %v2247
        %2268 = vmatprep.subr.bf16.mxu0 0
        %2269 = vmatpush1.bf16.msra.mxu0 %v2248
        %2270 = vmatprep.subr.bf16.mxu0 0
        %2271 = vmatpush1.bf16.msra.mxu0 %v2249
        %2272 = vmatprep.subr.bf16.mxu0 0
        %2273 = vmatpush1.bf16.msra.mxu0 %v2250
        %2274 = vmatprep.subr.bf16.mxu0 0
        %2275 = vmatpush1.bf16.msra.mxu0 %v2251
        %2276 = vmatprep.subr.bf16.mxu0 0
        %2277 = vmatpush1.bf16.msra.mxu0 0
        %2278 = vmatprep.subr.bf16.mxu0 0
        %2279 = vmatpush1.bf16.msra.mxu0 0
        %2280 = vmatprep.subr.bf16.mxu0 0
        %2281 = vmatpush1.bf16.msra.mxu0 0
        %2282 = vmatprep.subr.bf16.mxu0 0
        %2283 = vmatpush1.bf16.msra.mxu0 0
        %2284 = vmatprep.subr.bf16.mxu0 0
        %2285 = vmatpush1.bf16.msra.mxu0 0
        %2286 = vmatprep.subr.bf16.mxu0 0
        %2287 = vmatpush1.bf16.msra.mxu0 0
        %2288 = vmatprep.subr.bf16.mxu0 0
        %2289 = vmatpush1.bf16.msra.mxu0 0
        %2290 = vmatprep.subr.bf16.mxu0 0
        %2291 = vmatpush1.bf16.msra.mxu0 0
        %2292 = vmatprep.mubr.bf16.mxu0 0
        %2293 = vmatmul.mubr.bf16.gmra.mrb[0].mxu0 %v2155
        %v2294 = vpop.f32.mrb[0].mxu0
        %v2295 = vadd.f32 0.0, %v2294
        %v2296 = vpop.f32.mrb[0].mxu0
        %v2297 = vpop.f32.mrb[0].mxu0
        %v2298 = vadd.f32 0.0, %v2297
        %v2299 = vpop.f32.mrb[0].mxu0
        %2300 = vmatprep.mubr.bf16.mxu0 0
        %2301 = vmatmul.mubr.bf16.gmra.mrb[0].mxu0 %v2159
        %v2302 = vpop.f32.mrb[0].mxu0
        %v2303 = vadd.f32 0.0, %v2302
        %v2304 = vpop.f32.mrb[0].mxu0
        %v2305 = vpop.f32.mrb[0].mxu0
        %v2306 = vadd.f32 0.0, %v2305
        %v2307 = vpop.f32.mrb[0].mxu0
        %2308 = vmatprep.mubr.bf16.mxu0 0
        %2309 = vmatmul.mubr.bf16.gmra.mrb[0].mxu0 %v2163
        %v2310 = vpop.f32.mrb[0].mxu0
        %v2311 = vadd.f32 0.0, %v2310
        %v2312 = vpop.f32.mrb[0].mxu0
        %v2313 = vpop.f32.mrb[0].mxu0
        %v2314 = vadd.f32 0.0, %v2313
        %v2315 = vpop.f32.mrb[0].mxu0
        %2316 = vmatprep.mubr.bf16.mxu0 0
        %2317 = vmatmul.mubr.bf16.gmra.mrb[0].mxu0 %v2167
        %v2318 = vpop.f32.mrb[0].mxu0
        %v2319 = vadd.f32 0.0, %v2318
        %v2320 = vpop.f32.mrb[0].mxu0
        %v2321 = vpop.f32.mrb[0].mxu0
        %v2322 = vadd.f32 0.0, %v2321
        %v2323 = vpop.f32.mrb[0].mxu0
        %2324 = vmatprep.mubr.bf16.mxu0 0
        %2325 = vmatmul.mubr.bf16.gmra.mrb[0].mxu0 %v2171
        %v2326 = vpop.f32.mrb[0].mxu0
        %v2327 = vadd.f32 0.0, %v2326
        %v2328 = vpop.f32.mrb[0].mxu0
        %v2329 = vpop.f32.mrb[0].mxu0
        %v2330 = vadd.f32 0.0, %v2329
        %v2331 = vpop.f32.mrb[0].mxu0
        %2332 = vmatprep.mubr.bf16.mxu0 0
        %2333 = vmatmul.mubr.bf16.gmra.mrb[0].mxu0 %v2175
        %v2334 = vpop.f32.mrb[0].mxu0
        %v2335 = vadd.f32 0.0, %v2334
        %v2336 = vpop.f32.mrb[0].mxu0
        %v2337 = vpop.f32.mrb[0].mxu0
        %v2338 = vadd.f32 0.0, %v2337
        %v2339 = vpop.f32.mrb[0].mxu0
        %2340 = vmatprep.mubr.bf16.mxu0 0
        %2341 = vmatmul.mubr.bf16.gmra.mrb[0].mxu0 %v2179
        %v2342 = vpop.f32.mrb[0].mxu0
        %v2343 = vadd.f32 0.0, %v2342
        %v2344 = vpop.f32.mrb[0].mxu0
        %v2345 = vpop.f32.mrb[0].mxu0
        %v2346 = vadd.f32 0.0, %v2345
        %v2347 = vpop.f32.mrb[0].mxu0
        %2348 = vmatprep.mubr.bf16.mxu0 0
        %2349 = vmatmul.mubr.bf16.gmra.mrb[0].mxu0 %v2183
        %v2350 = vpop.f32.mrb[0].mxu0
        %v2351 = vadd.f32 0.0, %v2350
        %v2352 = vpop.f32.mrb[0].mxu0
        %v2353 = vpop.f32.mrb[0].mxu0
        %v2354 = vadd.f32 0.0, %v2353
        %v2355 = vpop.f32.mrb[0].mxu0
        %2356 = vmatprep.mubr.bf16.mxu0 0
        %2357 = vmatmul.mubr.bf16.gmra.mrb[0].mxu0 %v2187
        %v2358 = vpop.f32.mrb[0].mxu0
        %v2359 = vadd.f32 0.0, %v2358
        %v2360 = vpop.f32.mrb[0].mxu0
        %v2361 = vpop.f32.mrb[0].mxu0
        %v2362 = vadd.f32 0.0, %v2361
        %v2363 = vpop.f32.mrb[0].mxu0
        %2364 = vmatprep.mubr.bf16.mxu0 0
        %2365 = vmatmul.mubr.bf16.gmra.mrb[0].mxu0 %v2191
        %v2366 = vpop.f32.mrb[0].mxu0
        %v2367 = vadd.f32 0.0, %v2366
        %v2368 = vpop.f32.mrb[0].mxu0
        %v2369 = vpop.f32.mrb[0].mxu0
        %v2370 = vadd.f32 0.0, %v2369
        %v2371 = vpop.f32.mrb[0].mxu0
        %2372 = vmatprep.mubr.bf16.mxu0 0
        %2373 = vmatmul.mubr.bf16.gmra.mrb[0].mxu0 %v2200
        %v2374 = vpop.f32.mrb[0].mxu0
        %v2375 = vadd.f32 0.0, %v2374
        %v2376 = vpop.f32.mrb[0].mxu0
        %v2377 = vpop.f32.mrb[0].mxu0
        %v2378 = vadd.f32 0.0, %v2377
        %v2379 = vpop.f32.mrb[0].mxu0
        %2380 = vdwg.mxu0
        %v2381 = vadd.f32 %v2104, %v2295
        %v2382 = vadd.f32 %v2105, %v2298
        %v2383 = vadd.f32 %v2106, %v2303
        %v2384 = vadd.f32 %v2107, %v2306
        %v2385 = vadd.f32 %v2108, %v2311
        %v2386 = vadd.f32 %v2109, %v2314
        %v2387 = vadd.f32 %v2110, %v2319
        %v2388 = vadd.f32 %v2111, %v2322
        %v2389 = vadd.f32 %v2112, %v2327
        %v2390 = vadd.f32 %v2113, %v2330
        %v2391 = vadd.f32 %v2114, %v2335
        %v2392 = vadd.f32 %v2115, %v2338
        %v2393 = vadd.f32 %v2116, %v2343
        %v2394 = vadd.f32 %v2117, %v2346
        %v2395 = vadd.f32 %v2118, %v2351
        %v2396 = vadd.f32 %v2119, %v2354
        %v2397 = vadd.f32 %v2120, %v2359
        %v2398 = vadd.f32 %v2121, %v2362
        %v2399 = vadd.f32 %v2122, %v2367
        %v2400 = vadd.f32 %v2123, %v2370
        %v2401 = vadd.f32 %v2124, %v2375
        %v2402 = vadd.f32 %v2125, %v2378
        %v2403 = vld [vmem:[#allocation2] sm:$0xf8]
        %v2404 = vld [vmem:[#allocation12 + $0x180] sm:$0xf]
        %v2405 = vld [vmem:[#allocation12 + $0x184] sm:$0xf]
        %v2406 = vld [vmem:[#allocation12 + $0x188] sm:$0xf]
        %v2407 = vld [vmem:[#allocation12 + $0x18c] sm:$0xf]
        %v2408 = vld [vmem:[#allocation12 + $0x190] sm:$0xf]
        %v2409 = vld [vmem:[#allocation12 + $0x194] sm:$0xf]
        %v2410 = vld [vmem:[#allocation12 + $0x198] sm:$0xf]
        %v2411 = vld [vmem:[#allocation12 + $0x19c] sm:$0xf]
        %v2412 = vld [vmem:[#allocation12 + $0x1a0] sm:$0xf]
        %v2413 = vld [vmem:[#allocation12 + $0x1a4] sm:$0xf]
        %v2414 = vld [vmem:[#allocation12 + $0x1a8] sm:$0xf]
        %v2415 = vld [vmem:[#allocation12 + $0x1ac] sm:$0xf]
        %v2416 = vld [vmem:[#allocation12 + $0x1b0] sm:$0xf]
        %v2417 = vld [vmem:[#allocation12 + $0x1b4] sm:$0xf]
        %v2418 = vld [vmem:[#allocation12 + $0x1b8] sm:$0xf]
        %v2419 = vld [vmem:[#allocation12 + $0x1bc] sm:$0xf]
        %vm2422 = vcmask 1044480
        %v2423 = vrot.slane %v2403, 3
        %v2424 = vrot.slane %v880, 3
        %v2425 = vsel %vm2422, %v2423, %v2424
        %v2426 = vrot.slane %v881, 3
        %v2427 = vsel %vm2422, %v2424, %v2426
        %v2428 = vrot.slane %v882, 3
        %v2429 = vsel %vm2422, %v2426, %v2428
        %v2430 = vrot.slane %v883, 3
        %v2431 = vsel %vm2422, %v2428, %v2430
        %v2432 = vrot.slane %v884, 3
        %v2433 = vsel %vm2422, %v2430, %v2432
        %v2434 = vrot.slane %v885, 3
        %v2435 = vsel %vm2422, %v2432, %v2434
        %v2436 = vrot.slane %v886, 3
        %v2437 = vsel %vm2422, %v2434, %v2436
        %v2438 = vrot.slane %v887, 3
        %v2439 = vsel %vm2422, %v2436, %v2438
        %v2440 = vrot.slane %v888, 3
        %v2441 = vsel %vm2422, %v2438, %v2440
        %v2442 = vrot.slane %v889, 3
        %v2443 = vsel %vm2422, %v2440, %v2442
        %v2444 = vrot.slane %v2126, 3
        %v2445 = vsel %vm2422, %v2442, %v2444
        %v2473 = vunpack.c.l.b16 %v2404
        %v2474 = vunpack.c.l.b16 %v2405
        %v2475 = vunpack.c.l.b16 %v2406
        %v2476 = vunpack.c.l.b16 %v2407
        %v2477 = vunpack.c.l.b16 %v2408
        %v2478 = vunpack.c.l.b16 %v2409
        %v2479 = vunpack.c.l.b16 %v2410
        %v2480 = vunpack.c.l.b16 %v2411
        %v2481 = vunpack.c.l.b16 %v2412
        %v2482 = vunpack.c.l.b16 %v2413
        %v2483 = vunpack.c.l.b16 %v2414
        %v2484 = vunpack.c.l.b16 %v2415
        %v2485 = vunpack.c.l.b16 %v2416
        %v2486 = vunpack.c.l.b16 %v2417
        %v2487 = vunpack.c.l.b16 %v2418
        %v2488 = vunpack.c.l.b16 %v2419
        %v2489 = vpack.c.b16 %v2474, %v2473
        %v2490 = vpack.c.b16 %v2476, %v2475
        %v2491 = vpack.c.b16 %v2478, %v2477
        %v2492 = vpack.c.b16 %v2480, %v2479
        %v2493 = vpack.c.b16 %v2482, %v2481
        %v2494 = vpack.c.b16 %v2484, %v2483
        %v2495 = vpack.c.b16 %v2486, %v2485
        %v2496 = vpack.c.b16 %v2488, %v2487
        %2505 = vmatprep.subr.bf16.mxu0 0
        %2506 = vmatpush1.bf16.msra.mxu0 %v2489
        %2507 = vmatprep.subr.bf16.mxu0 0
        %2508 = vmatpush1.bf16.msra.mxu0 %v2490
        %2509 = vmatprep.subr.bf16.mxu0 0
        %2510 = vmatpush1.bf16.msra.mxu0 %v2491
        %2511 = vmatprep.subr.bf16.mxu0 0
        %2512 = vmatpush1.bf16.msra.mxu0 %v2492
        %2513 = vmatprep.subr.bf16.mxu0 0
        %2514 = vmatpush1.bf16.msra.mxu0 %v2493
        %2515 = vmatprep.subr.bf16.mxu0 0
        %2516 = vmatpush1.bf16.msra.mxu0 %v2494
        %2517 = vmatprep.subr.bf16.mxu0 0
        %2518 = vmatpush1.bf16.msra.mxu0 %v2495
        %2519 = vmatprep.subr.bf16.mxu0 0
        %2520 = vmatpush1.bf16.msra.mxu0 %v2496
        %2521 = vmatprep.subr.bf16.mxu0 0
        %2522 = vmatpush1.bf16.msra.mxu0 0
        %2523 = vmatprep.subr.bf16.mxu0 0
        %2524 = vmatpush1.bf16.msra.mxu0 0
        %2525 = vmatprep.subr.bf16.mxu0 0
        %2526 = vmatpush1.bf16.msra.mxu0 0
        %2527 = vmatprep.subr.bf16.mxu0 0
        %2528 = vmatpush1.bf16.msra.mxu0 0
        %2529 = vmatprep.subr.bf16.mxu0 0
        %2530 = vmatpush1.bf16.msra.mxu0 0
        %2531 = vmatprep.subr.bf16.mxu0 0
        %2532 = vmatpush1.bf16.msra.mxu0 0
        %2533 = vmatprep.subr.bf16.mxu0 0
        %2534 = vmatpush1.bf16.msra.mxu0 0
        %2535 = vmatprep.subr.bf16.mxu0 0
        %2536 = vmatpush1.bf16.msra.mxu0 0
        %2537 = vmatprep.mubr.bf16.mxu0 0
        %2538 = vmatmul.mubr.bf16.gmra.mrb[0].mxu0 %v2425
        %v2539 = vpop.f32.mrb[0].mxu0
        %v2540 = vadd.f32 0.0, %v2539
        %v2541 = vpop.f32.mrb[0].mxu0
        %v2542 = vpop.f32.mrb[0].mxu0
        %v2543 = vadd.f32 0.0, %v2542
        %v2544 = vpop.f32.mrb[0].mxu0
        %2545 = vmatprep.mubr.bf16.mxu0 0
        %2546 = vmatmul.mubr.bf16.gmra.mrb[0].mxu0 %v2427
        %v2547 = vpop.f32.mrb[0].mxu0
        %v2548 = vadd.f32 0.0, %v2547
        %v2549 = vpop.f32.mrb[0].mxu0
        %v2550 = vpop.f32.mrb[0].mxu0
        %v2551 = vadd.f32 0.0, %v2550
        %v2552 = vpop.f32.mrb[0].mxu0
        %2553 = vmatprep.mubr.bf16.mxu0 0
        %2554 = vmatmul.mubr.bf16.gmra.mrb[0].mxu0 %v2429
        %v2555 = vpop.f32.mrb[0].mxu0
        %v2556 = vadd.f32 0.0, %v2555
        %v2557 = vpop.f32.mrb[0].mxu0
        %v2558 = vpop.f32.mrb[0].mxu0
        %v2559 = vadd.f32 0.0, %v2558
        %v2560 = vpop.f32.mrb[0].mxu0
        %2561 = vmatprep.mubr.bf16.mxu0 0
        %2562 = vmatmul.mubr.bf16.gmra.mrb[0].mxu0 %v2431
        %v2563 = vpop.f32.mrb[0].mxu0
        %v2564 = vadd.f32 0.0, %v2563
        %v2565 = vpop.f32.mrb[0].mxu0
        %v2566 = vpop.f32.mrb[0].mxu0
        %v2567 = vadd.f32 0.0, %v2566
        %v2568 = vpop.f32.mrb[0].mxu0
        %2569 = vmatprep.mubr.bf16.mxu0 0
        %2570 = vmatmul.mubr.bf16.gmra.mrb[0].mxu0 %v2433
        %v2571 = vpop.f32.mrb[0].mxu0
        %v2572 = vadd.f32 0.0, %v2571
        %v2573 = vpop.f32.mrb[0].mxu0
        %v2574 = vpop.f32.mrb[0].mxu0
        %v2575 = vadd.f32 0.0, %v2574
        %v2576 = vpop.f32.mrb[0].mxu0
        %2577 = vmatprep.mubr.bf16.mxu0 0
        %2578 = vmatmul.mubr.bf16.gmra.mrb[0].mxu0 %v2435
        %v2579 = vpop.f32.mrb[0].mxu0
        %v2580 = vadd.f32 0.0, %v2579
        %v2581 = vpop.f32.mrb[0].mxu0
        %v2582 = vpop.f32.mrb[0].mxu0
        %v2583 = vadd.f32 0.0, %v2582
        %v2584 = vpop.f32.mrb[0].mxu0
        %2585 = vmatprep.mubr.bf16.mxu0 0
        %2586 = vmatmul.mubr.bf16.gmra.mrb[0].mxu0 %v2437
        %v2587 = vpop.f32.mrb[0].mxu0
        %v2588 = vadd.f32 0.0, %v2587
        %v2589 = vpop.f32.mrb[0].mxu0
        %v2590 = vpop.f32.mrb[0].mxu0
        %v2591 = vadd.f32 0.0, %v2590
        %v2592 = vpop.f32.mrb[0].mxu0
        %2593 = vmatprep.mubr.bf16.mxu0 0
        %2594 = vmatmul.mubr.bf16.gmra.mrb[0].mxu0 %v2439
        %v2595 = vpop.f32.mrb[0].mxu0
        %v2596 = vadd.f32 0.0, %v2595
        %v2597 = vpop.f32.mrb[0].mxu0
        %v2598 = vpop.f32.mrb[0].mxu0
        %v2599 = vadd.f32 0.0, %v2598
        %v2600 = vpop.f32.mrb[0].mxu0
        %2601 = vmatprep.mubr.bf16.mxu0 0
        %2602 = vmatmul.mubr.bf16.gmra.mrb[0].mxu0 %v2441
        %v2603 = vpop.f32.mrb[0].mxu0
        %v2604 = vadd.f32 0.0, %v2603
        %v2605 = vpop.f32.mrb[0].mxu0
        %v2606 = vpop.f32.mrb[0].mxu0
        %v2607 = vadd.f32 0.0, %v2606
        %v2608 = vpop.f32.mrb[0].mxu0
        %2609 = vmatprep.mubr.bf16.mxu0 0
        %2610 = vmatmul.mubr.bf16.gmra.mrb[0].mxu0 %v2443
        %v2611 = vpop.f32.mrb[0].mxu0
        %v2612 = vadd.f32 0.0, %v2611
        %v2613 = vpop.f32.mrb[0].mxu0
        %v2614 = vpop.f32.mrb[0].mxu0
        %v2615 = vadd.f32 0.0, %v2614
        %v2616 = vpop.f32.mrb[0].mxu0
        %2617 = vmatprep.mubr.bf16.mxu0 0
        %2618 = vmatmul.mubr.bf16.gmra.mrb[0].mxu0 %v2445
        %v2619 = vpop.f32.mrb[0].mxu0
        %v2620 = vadd.f32 0.0, %v2619
        %v2621 = vpop.f32.mrb[0].mxu0
        %v2622 = vpop.f32.mrb[0].mxu0
        %v2623 = vadd.f32 0.0, %v2622
        %v2624 = vpop.f32.mrb[0].mxu0
        %2625 = vdwg.mxu0
        %v2626 = vadd.f32 %v2381, %v2540
        %v2627 = vadd.f32 %v2382, %v2543
        %v2628 = vadd.f32 %v2383, %v2548
        %v2629 = vadd.f32 %v2384, %v2551
        %v2630 = vadd.f32 %v2385, %v2556
        %v2631 = vadd.f32 %v2386, %v2559
        %v2632 = vadd.f32 %v2387, %v2564
        %v2633 = vadd.f32 %v2388, %v2567
        %v2634 = vadd.f32 %v2389, %v2572
        %v2635 = vadd.f32 %v2390, %v2575
        %v2636 = vadd.f32 %v2391, %v2580
        %v2637 = vadd.f32 %v2392, %v2583
        %v2638 = vadd.f32 %v2393, %v2588
        %v2639 = vadd.f32 %v2394, %v2591
        %v2640 = vadd.f32 %v2395, %v2596
        %v2641 = vadd.f32 %v2396, %v2599
        %v2642 = vadd.f32 %v2397, %v2604
        %v2643 = vadd.f32 %v2398, %v2607
        %v2644 = vadd.f32 %v2399, %v2612
        %v2645 = vadd.f32 %v2400, %v2615
        %v2646 = vadd.f32 %v2401, %v2620
        %v2647 = vadd.f32 %v2402, %v2623
        %v2648 = vld [vmem:[#allocation2 + $0x58] sm:$0xf]
        %v2649 = vld [vmem:[#allocation12 + $0x1c0] sm:$0xf]
        %v2650 = vld [vmem:[#allocation12 + $0x1c4] sm:$0xf]
        %v2651 = vld [vmem:[#allocation12 + $0x1c8] sm:$0xf]
        %v2652 = vld [vmem:[#allocation12 + $0x1cc] sm:$0xf]
        %v2653 = vld [vmem:[#allocation12 + $0x1d0] sm:$0xf]
        %v2654 = vld [vmem:[#allocation12 + $0x1d4] sm:$0xf]
        %v2655 = vld [vmem:[#allocation12 + $0x1d8] sm:$0xf]
        %v2656 = vld [vmem:[#allocation12 + $0x1dc] sm:$0xf]
        %v2657 = vld [vmem:[#allocation12 + $0x1e0] sm:$0xf]
        %v2658 = vld [vmem:[#allocation12 + $0x1e4] sm:$0xf]
        %v2659 = vld [vmem:[#allocation12 + $0x1e8] sm:$0xf]
        %v2660 = vld [vmem:[#allocation12 + $0x1ec] sm:$0xf]
        %v2661 = vld [vmem:[#allocation12 + $0x1f0] sm:$0xf]
        %v2662 = vld [vmem:[#allocation12 + $0x1f4] sm:$0xf]
        %v2663 = vld [vmem:[#allocation12 + $0x1f8] sm:$0xf]
        %v2664 = vld [vmem:[#allocation12 + $0x1fc] sm:$0xf]
        %vm2665 = vsmask.f32 4352
        %v2667 = vshrl.u32 %v2403, 16
        %v2669 = vrot.slane %v2667, 3
        %v2670 = vshll.u32 %v2403, 16
        %v2672 = vrot.slane %v2670, 4
        %v2673 = vor.u32 %v2669, %v2672
        %v2674 = vrot.slane %v920, 3
        %v2675 = vrot.slane %v916, 4
        %v2676 = vor.u32 %v2674, %v2675
        %v2677 = vsel %vm2665, %v2673, %v2676
        %v2678 = vrot.slane %v928, 3
        %v2679 = vrot.slane %v924, 4
        %v2680 = vor.u32 %v2678, %v2679
        %v2681 = vsel %vm2665, %v2676, %v2680
        %v2682 = vrot.slane %v936, 3
        %v2683 = vrot.slane %v932, 4
        %v2684 = vor.u32 %v2682, %v2683
        %v2685 = vsel %vm2665, %v2680, %v2684
        %v2686 = vrot.slane %v944, 3
        %v2687 = vrot.slane %v940, 4
        %v2688 = vor.u32 %v2686, %v2687
        %v2689 = vsel %vm2665, %v2684, %v2688
        %v2690 = vrot.slane %v952, 3
        %v2691 = vrot.slane %v948, 4
        %v2692 = vor.u32 %v2690, %v2691
        %v2693 = vsel %vm2665, %v2688, %v2692
        %v2694 = vrot.slane %v960, 3
        %v2695 = vrot.slane %v956, 4
        %v2696 = vor.u32 %v2694, %v2695
        %v2697 = vsel %vm2665, %v2692, %v2696
        %v2698 = vrot.slane %v968, 3
        %v2699 = vrot.slane %v964, 4
        %v2700 = vor.u32 %v2698, %v2699
        %v2701 = vsel %vm2665, %v2696, %v2700
        %v2702 = vrot.slane %v976, 3
        %v2703 = vrot.slane %v972, 4
        %v2704 = vor.u32 %v2702, %v2703
        %v2705 = vsel %vm2665, %v2700, %v2704
        %v2706 = vrot.slane %v984, 3
        %v2707 = vrot.slane %v980, 4
        %v2708 = vor.u32 %v2706, %v2707
        %v2709 = vsel %vm2665, %v2704, %v2708
        %v2710 = vrot.slane %v992, 3
        %v2711 = vrot.slane %v988, 4
        %v2712 = vor.u32 %v2710, %v2711
        %v2713 = vsel %vm2665, %v2708, %v2712
        %v2715 = vshrl.u32 %v2648, 16
        %v2717 = vrot.slane %v2715, 3
        %v2718 = vshll.u32 %v2648, 16
        %v2720 = vrot.slane %v2718, 4
        %v2721 = vor.u32 %v2717, %v2720
        %v2722 = vsel %vm2665, %v2712, %v2721
        %v2750 = vunpack.c.l.b16 %v2649
        %v2751 = vunpack.c.l.b16 %v2650
        %v2752 = vunpack.c.l.b16 %v2651
        %v2753 = vunpack.c.l.b16 %v2652
        %v2754 = vunpack.c.l.b16 %v2653
        %v2755 = vunpack.c.l.b16 %v2654
        %v2756 = vunpack.c.l.b16 %v2655
        %v2757 = vunpack.c.l.b16 %v2656
        %v2758 = vunpack.c.l.b16 %v2657
        %v2759 = vunpack.c.l.b16 %v2658
        %v2760 = vunpack.c.l.b16 %v2659
        %v2761 = vunpack.c.l.b16 %v2660
        %v2762 = vunpack.c.l.b16 %v2661
        %v2763 = vunpack.c.l.b16 %v2662
        %v2764 = vunpack.c.l.b16 %v2663
        %v2765 = vunpack.c.l.b16 %v2664
        %v2766 = vpack.c.b16 %v2751, %v2750
        %v2767 = vpack.c.b16 %v2753, %v2752
        %v2768 = vpack.c.b16 %v2755, %v2754
        %v2769 = vpack.c.b16 %v2757, %v2756
        %v2770 = vpack.c.b16 %v2759, %v2758
        %v2771 = vpack.c.b16 %v2761, %v2760
        %v2772 = vpack.c.b16 %v2763, %v2762
        %v2773 = vpack.c.b16 %v2765, %v2764
        %2782 = vmatprep.subr.bf16.mxu0 0
        %2783 = vmatpush1.bf16.msra.mxu0 %v2766
        %2784 = vmatprep.subr.bf16.mxu0 0
        %2785 = vmatpush1.bf16.msra.mxu0 %v2767
        %2786 = vmatprep.subr.bf16.mxu0 0
        %2787 = vmatpush1.bf16.msra.mxu0 %v2768
        %2788 = vmatprep.subr.bf16.mxu0 0
        %2789 = vmatpush1.bf16.msra.mxu0 %v2769
        %2790 = vmatprep.subr.bf16.mxu0 0
        %2791 = vmatpush1.bf16.msra.mxu0 %v2770
        %2792 = vmatprep.subr.bf16.mxu0 0
        %2793 = vmatpush1.bf16.msra.mxu0 %v2771
        %2794 = vmatprep.subr.bf16.mxu0 0
        %2795 = vmatpush1.bf16.msra.mxu0 %v2772
        %2796 = vmatprep.subr.bf16.mxu0 0
        %2797 = vmatpush1.bf16.msra.mxu0 %v2773
        %2798 = vmatprep.subr.bf16.mxu0 0
        %2799 = vmatpush1.bf16.msra.mxu0 0
        %2800 = vmatprep.subr.bf16.mxu0 0
        %2801 = vmatpush1.bf16.msra.mxu0 0
        %2802 = vmatprep.subr.bf16.mxu0 0
        %2803 = vmatpush1.bf16.msra.mxu0 0
        %2804 = vmatprep.subr.bf16.mxu0 0
        %2805 = vmatpush1.bf16.msra.mxu0 0
        %2806 = vmatprep.subr.bf16.mxu0 0
        %2807 = vmatpush1.bf16.msra.mxu0 0
        %2808 = vmatprep.subr.bf16.mxu0 0
        %2809 = vmatpush1.bf16.msra.mxu0 0
        %2810 = vmatprep.subr.bf16.mxu0 0
        %2811 = vmatpush1.bf16.msra.mxu0 0
        %2812 = vmatprep.subr.bf16.mxu0 0
        %2813 = vmatpush1.bf16.msra.mxu0 0
        %2814 = vmatprep.mubr.bf16.mxu0 0
        %2815 = vmatmul.mubr.bf16.gmra.mrb[0].mxu0 %v2677
        %v2816 = vpop.f32.mrb[0].mxu0
        %v2817 = vadd.f32 0.0, %v2816
        %v2818 = vpop.f32.mrb[0].mxu0
        %v2819 = vpop.f32.mrb[0].mxu0
        %v2820 = vadd.f32 0.0, %v2819
        %v2821 = vpop.f32.mrb[0].mxu0
        %2822 = vmatprep.mubr.bf16.mxu0 0
        %2823 = vmatmul.mubr.bf16.gmra.mrb[0].mxu0 %v2681
        %v2824 = vpop.f32.mrb[0].mxu0
        %v2825 = vadd.f32 0.0, %v2824
        %v2826 = vpop.f32.mrb[0].mxu0
        %v2827 = vpop.f32.mrb[0].mxu0
        %v2828 = vadd.f32 0.0, %v2827
        %v2829 = vpop.f32.mrb[0].mxu0
        %2830 = vmatprep.mubr.bf16.mxu0 0
        %2831 = vmatmul.mubr.bf16.gmra.mrb[0].mxu0 %v2685
        %v2832 = vpop.f32.mrb[0].mxu0
        %v2833 = vadd.f32 0.0, %v2832
        %v2834 = vpop.f32.mrb[0].mxu0
        %v2835 = vpop.f32.mrb[0].mxu0
        %v2836 = vadd.f32 0.0, %v2835
        %v2837 = vpop.f32.mrb[0].mxu0
        %2838 = vmatprep.mubr.bf16.mxu0 0
        %2839 = vmatmul.mubr.bf16.gmra.mrb[0].mxu0 %v2689
        %v2840 = vpop.f32.mrb[0].mxu0
        %v2841 = vadd.f32 0.0, %v2840
        %v2842 = vpop.f32.mrb[0].mxu0
        %v2843 = vpop.f32.mrb[0].mxu0
        %v2844 = vadd.f32 0.0, %v2843
        %v2845 = vpop.f32.mrb[0].mxu0
        %2846 = vmatprep.mubr.bf16.mxu0 0
        %2847 = vmatmul.mubr.bf16.gmra.mrb[0].mxu0 %v2693
        %v2848 = vpop.f32.mrb[0].mxu0
        %v2849 = vadd.f32 0.0, %v2848
        %v2850 = vpop.f32.mrb[0].mxu0
        %v2851 = vpop.f32.mrb[0].mxu0
        %v2852 = vadd.f32 0.0, %v2851
        %v2853 = vpop.f32.mrb[0].mxu0
        %2854 = vmatprep.mubr.bf16.mxu0 0
        %2855 = vmatmul.mubr.bf16.gmra.mrb[0].mxu0 %v2697
        %v2856 = vpop.f32.mrb[0].mxu0
        %v2857 = vadd.f32 0.0, %v2856
        %v2858 = vpop.f32.mrb[0].mxu0
        %v2859 = vpop.f32.mrb[0].mxu0
        %v2860 = vadd.f32 0.0, %v2859
        %v2861 = vpop.f32.mrb[0].mxu0
        %2862 = vmatprep.mubr.bf16.mxu0 0
        %2863 = vmatmul.mubr.bf16.gmra.mrb[0].mxu0 %v2701
        %v2864 = vpop.f32.mrb[0].mxu0
        %v2865 = vadd.f32 0.0, %v2864
        %v2866 = vpop.f32.mrb[0].mxu0
        %v2867 = vpop.f32.mrb[0].mxu0
        %v2868 = vadd.f32 0.0, %v2867
        %v2869 = vpop.f32.mrb[0].mxu0
        %2870 = vmatprep.mubr.bf16.mxu0 0
        %2871 = vmatmul.mubr.bf16.gmra.mrb[0].mxu0 %v2705
        %v2872 = vpop.f32.mrb[0].mxu0
        %v2873 = vadd.f32 0.0, %v2872
        %v2874 = vpop.f32.mrb[0].mxu0
        %v2875 = vpop.f32.mrb[0].mxu0
        %v2876 = vadd.f32 0.0, %v2875
        %v2877 = vpop.f32.mrb[0].mxu0
        %2878 = vmatprep.mubr.bf16.mxu0 0
        %2879 = vmatmul.mubr.bf16.gmra.mrb[0].mxu0 %v2709
        %v2880 = vpop.f32.mrb[0].mxu0
        %v2881 = vadd.f32 0.0, %v2880
        %v2882 = vpop.f32.mrb[0].mxu0
        %v2883 = vpop.f32.mrb[0].mxu0
        %v2884 = vadd.f32 0.0, %v2883
        %v2885 = vpop.f32.mrb[0].mxu0
        %2886 = vmatprep.mubr.bf16.mxu0 0
        %2887 = vmatmul.mubr.bf16.gmra.mrb[0].mxu0 %v2713
        %v2888 = vpop.f32.mrb[0].mxu0
        %v2889 = vadd.f32 0.0, %v2888
        %v2890 = vpop.f32.mrb[0].mxu0
        %v2891 = vpop.f32.mrb[0].mxu0
        %v2892 = vadd.f32 0.0, %v2891
        %v2893 = vpop.f32.mrb[0].mxu0
        %2894 = vmatprep.mubr.bf16.mxu0 0
        %2895 = vmatmul.mubr.bf16.gmra.mrb[0].mxu0 %v2722
        %v2896 = vpop.f32.mrb[0].mxu0
        %v2897 = vadd.f32 0.0, %v2896
        %v2898 = vpop.f32.mrb[0].mxu0
        %v2899 = vpop.f32.mrb[0].mxu0
        %v2900 = vadd.f32 0.0, %v2899
        %v2901 = vpop.f32.mrb[0].mxu0
        %2902 = vdwg.mxu0
        %v2903 = vadd.f32 %v2626, %v2817
        %v2904 = vadd.f32 %v2627, %v2820
        %v2905 = vadd.f32 %v2628, %v2825
        %v2906 = vadd.f32 %v2629, %v2828
        %v2907 = vadd.f32 %v2630, %v2833
        %v2908 = vadd.f32 %v2631, %v2836
        %v2909 = vadd.f32 %v2632, %v2841
        %v2910 = vadd.f32 %v2633, %v2844
        %v2911 = vadd.f32 %v2634, %v2849
        %v2912 = vadd.f32 %v2635, %v2852
        %v2913 = vadd.f32 %v2636, %v2857
        %v2914 = vadd.f32 %v2637, %v2860
        %v2915 = vadd.f32 %v2638, %v2865
        %v2916 = vadd.f32 %v2639, %v2868
        %v2917 = vadd.f32 %v2640, %v2873
        %v2918 = vadd.f32 %v2641, %v2876
        %v2919 = vadd.f32 %v2642, %v2881
        %v2920 = vadd.f32 %v2643, %v2884
        %v2921 = vadd.f32 %v2644, %v2889
        %v2922 = vadd.f32 %v2645, %v2892
        %v2923 = vadd.f32 %v2646, %v2897
        %v2924 = vadd.f32 %v2647, %v2900
        %v2925 = vld [vmem:[#allocation2] sm:$0xf0]
        %v2926 = vld [vmem:[#allocation12 + $0x200] sm:$0xf]
        %v2927 = vld [vmem:[#allocation12 + $0x204] sm:$0xf]
        %v2928 = vld [vmem:[#allocation12 + $0x208] sm:$0xf]
        %v2929 = vld [vmem:[#allocation12 + $0x20c] sm:$0xf]
        %v2930 = vld [vmem:[#allocation12 + $0x210] sm:$0xf]
        %v2931 = vld [vmem:[#allocation12 + $0x214] sm:$0xf]
        %v2932 = vld [vmem:[#allocation12 + $0x218] sm:$0xf]
        %v2933 = vld [vmem:[#allocation12 + $0x21c] sm:$0xf]
        %v2934 = vld [vmem:[#allocation12 + $0x220] sm:$0xf]
        %v2935 = vld [vmem:[#allocation12 + $0x224] sm:$0xf]
        %v2936 = vld [vmem:[#allocation12 + $0x228] sm:$0xf]
        %v2937 = vld [vmem:[#allocation12 + $0x22c] sm:$0xf]
        %v2938 = vld [vmem:[#allocation12 + $0x230] sm:$0xf]
        %v2939 = vld [vmem:[#allocation12 + $0x234] sm:$0xf]
        %v2940 = vld [vmem:[#allocation12 + $0x238] sm:$0xf]
        %v2941 = vld [vmem:[#allocation12 + $0x23c] sm:$0xf]
        %vm2944 = vcmask 1043456
        %v2945 = vrot.slane %v2925, 4
        %v2946 = vrot.slane %v880, 4
        %v2947 = vsel %vm2944, %v2945, %v2946
        %v2948 = vrot.slane %v881, 4
        %v2949 = vsel %vm2944, %v2946, %v2948
        %v2950 = vrot.slane %v882, 4
        %v2951 = vsel %vm2944, %v2948, %v2950
        %v2952 = vrot.slane %v883, 4
        %v2953 = vsel %vm2944, %v2950, %v2952
        %v2954 = vrot.slane %v884, 4
        %v2955 = vsel %vm2944, %v2952, %v2954
        %v2956 = vrot.slane %v885, 4
        %v2957 = vsel %vm2944, %v2954, %v2956
        %v2958 = vrot.slane %v886, 4
        %v2959 = vsel %vm2944, %v2956, %v2958
        %v2960 = vrot.slane %v887, 4
        %v2961 = vsel %vm2944, %v2958, %v2960
        %v2962 = vrot.slane %v888, 4
        %v2963 = vsel %vm2944, %v2960, %v2962
        %v2964 = vrot.slane %v889, 4
        %v2965 = vsel %vm2944, %v2962, %v2964
        %v2966 = vrot.slane %v2648, 4
        %v2967 = vsel %vm2944, %v2964, %v2966
        %v2995 = vunpack.c.l.b16 %v2926
        %v2996 = vunpack.c.l.b16 %v2927
        %v2997 = vunpack.c.l.b16 %v2928
        %v2998 = vunpack.c.l.b16 %v2929
        %v2999 = vunpack.c.l.b16 %v2930
        %v3000 = vunpack.c.l.b16 %v2931
        %v3001 = vunpack.c.l.b16 %v2932
        %v3002 = vunpack.c.l.b16 %v2933
        %v3003 = vunpack.c.l.b16 %v2934
        %v3004 = vunpack.c.l.b16 %v2935
        %v3005 = vunpack.c.l.b16 %v2936
        %v3006 = vunpack.c.l.b16 %v2937
        %v3007 = vunpack.c.l.b16 %v2938
        %v3008 = vunpack.c.l.b16 %v2939
        %v3009 = vunpack.c.l.b16 %v2940
        %v3010 = vunpack.c.l.b16 %v2941
        %v3011 = vpack.c.b16 %v2996, %v2995
        %v3012 = vpack.c.b16 %v2998, %v2997
        %v3013 = vpack.c.b16 %v3000, %v2999
        %v3014 = vpack.c.b16 %v3002, %v3001
        %v3015 = vpack.c.b16 %v3004, %v3003
        %v3016 = vpack.c.b16 %v3006, %v3005
        %v3017 = vpack.c.b16 %v3008, %v3007
        %v3018 = vpack.c.b16 %v3010, %v3009
        %3027 = vmatprep.subr.bf16.mxu0 0
        %3028 = vmatpush1.bf16.msra.mxu0 %v3011
        %3029 = vmatprep.subr.bf16.mxu0 0
        %3030 = vmatpush1.bf16.msra.mxu0 %v3012
        %3031 = vmatprep.subr.bf16.mxu0 0
        %3032 = vmatpush1.bf16.msra.mxu0 %v3013
        %3033 = vmatprep.subr.bf16.mxu0 0
        %3034 = vmatpush1.bf16.msra.mxu0 %v3014
        %3035 = vmatprep.subr.bf16.mxu0 0
        %3036 = vmatpush1.bf16.msra.mxu0 %v3015
        %3037 = vmatprep.subr.bf16.mxu0 0
        %3038 = vmatpush1.bf16.msra.mxu0 %v3016
        %3039 = vmatprep.subr.bf16.mxu0 0
        %3040 = vmatpush1.bf16.msra.mxu0 %v3017
        %3041 = vmatprep.subr.bf16.mxu0 0
        %3042 = vmatpush1.bf16.msra.mxu0 %v3018
        %3043 = vmatprep.subr.bf16.mxu0 0
        %3044 = vmatpush1.bf16.msra.mxu0 0
        %3045 = vmatprep.subr.bf16.mxu0 0
        %3046 = vmatpush1.bf16.msra.mxu0 0
        %3047 = vmatprep.subr.bf16.mxu0 0
        %3048 = vmatpush1.bf16.msra.mxu0 0
        %3049 = vmatprep.subr.bf16.mxu0 0
        %3050 = vmatpush1.bf16.msra.mxu0 0
        %3051 = vmatprep.subr.bf16.mxu0 0
        %3052 = vmatpush1.bf16.msra.mxu0 0
        %3053 = vmatprep.subr.bf16.mxu0 0
        %3054 = vmatpush1.bf16.msra.mxu0 0
        %3055 = vmatprep.subr.bf16.mxu0 0
        %3056 = vmatpush1.bf16.msra.mxu0 0
        %3057 = vmatprep.subr.bf16.mxu0 0
        %3058 = vmatpush1.bf16.msra.mxu0 0
        %3059 = vmatprep.mubr.bf16.mxu0 0
        %3060 = vmatmul.mubr.bf16.gmra.mrb[0].mxu0 %v2947
        %v3061 = vpop.f32.mrb[0].mxu0
        %v3062 = vadd.f32 0.0, %v3061
        %v3063 = vpop.f32.mrb[0].mxu0
        %v3064 = vpop.f32.mrb[0].mxu0
        %v3065 = vadd.f32 0.0, %v3064
        %v3066 = vpop.f32.mrb[0].mxu0
        %3067 = vmatprep.mubr.bf16.mxu0 0
        %3068 = vmatmul.mubr.bf16.gmra.mrb[0].mxu0 %v2949
        %v3069 = vpop.f32.mrb[0].mxu0
        %v3070 = vadd.f32 0.0, %v3069
        %v3071 = vpop.f32.mrb[0].mxu0
        %v3072 = vpop.f32.mrb[0].mxu0
        %v3073 = vadd.f32 0.0, %v3072
        %v3074 = vpop.f32.mrb[0].mxu0
        %3075 = vmatprep.mubr.bf16.mxu0 0
        %3076 = vmatmul.mubr.bf16.gmra.mrb[0].mxu0 %v2951
        %v3077 = vpop.f32.mrb[0].mxu0
        %v3078 = vadd.f32 0.0, %v3077
        %v3079 = vpop.f32.mrb[0].mxu0
        %v3080 = vpop.f32.mrb[0].mxu0
        %v3081 = vadd.f32 0.0, %v3080
        %v3082 = vpop.f32.mrb[0].mxu0
        %3083 = vmatprep.mubr.bf16.mxu0 0
        %3084 = vmatmul.mubr.bf16.gmra.mrb[0].mxu0 %v2953
        %v3085 = vpop.f32.mrb[0].mxu0
        %v3086 = vadd.f32 0.0, %v3085
        %v3087 = vpop.f32.mrb[0].mxu0
        %v3088 = vpop.f32.mrb[0].mxu0
        %v3089 = vadd.f32 0.0, %v3088
        %v3090 = vpop.f32.mrb[0].mxu0
        %3091 = vmatprep.mubr.bf16.mxu0 0
        %3092 = vmatmul.mubr.bf16.gmra.mrb[0].mxu0 %v2955
        %v3093 = vpop.f32.mrb[0].mxu0
        %v3094 = vadd.f32 0.0, %v3093
        %v3095 = vpop.f32.mrb[0].mxu0
        %v3096 = vpop.f32.mrb[0].mxu0
        %v3097 = vadd.f32 0.0, %v3096
        %v3098 = vpop.f32.mrb[0].mxu0
        %3099 = vmatprep.mubr.bf16.mxu0 0
        %3100 = vmatmul.mubr.bf16.gmra.mrb[0].mxu0 %v2957
        %v3101 = vpop.f32.mrb[0].mxu0
        %v3102 = vadd.f32 0.0, %v3101
        %v3103 = vpop.f32.mrb[0].mxu0
        %v3104 = vpop.f32.mrb[0].mxu0
        %v3105 = vadd.f32 0.0, %v3104
        %v3106 = vpop.f32.mrb[0].mxu0
        %3107 = vmatprep.mubr.bf16.mxu0 0
        %3108 = vmatmul.mubr.bf16.gmra.mrb[0].mxu0 %v2959
        %v3109 = vpop.f32.mrb[0].mxu0
        %v3110 = vadd.f32 0.0, %v3109
        %v3111 = vpop.f32.mrb[0].mxu0
        %v3112 = vpop.f32.mrb[0].mxu0
        %v3113 = vadd.f32 0.0, %v3112
        %v3114 = vpop.f32.mrb[0].mxu0
        %3115 = vmatprep.mubr.bf16.mxu0 0
        %3116 = vmatmul.mubr.bf16.gmra.mrb[0].mxu0 %v2961
        %v3117 = vpop.f32.mrb[0].mxu0
        %v3118 = vadd.f32 0.0, %v3117
        %v3119 = vpop.f32.mrb[0].mxu0
        %v3120 = vpop.f32.mrb[0].mxu0
        %v3121 = vadd.f32 0.0, %v3120
        %v3122 = vpop.f32.mrb[0].mxu0
        %3123 = vmatprep.mubr.bf16.mxu0 0
        %3124 = vmatmul.mubr.bf16.gmra.mrb[0].mxu0 %v2963
        %v3125 = vpop.f32.mrb[0].mxu0
        %v3126 = vadd.f32 0.0, %v3125
        %v3127 = vpop.f32.mrb[0].mxu0
        %v3128 = vpop.f32.mrb[0].mxu0
        %v3129 = vadd.f32 0.0, %v3128
        %v3130 = vpop.f32.mrb[0].mxu0
        %3131 = vmatprep.mubr.bf16.mxu0 0
        %3132 = vmatmul.mubr.bf16.gmra.mrb[0].mxu0 %v2965
        %v3133 = vpop.f32.mrb[0].mxu0
        %v3134 = vadd.f32 0.0, %v3133
        %v3135 = vpop.f32.mrb[0].mxu0
        %v3136 = vpop.f32.mrb[0].mxu0
        %v3137 = vadd.f32 0.0, %v3136
        %v3138 = vpop.f32.mrb[0].mxu0
        %3139 = vmatprep.mubr.bf16.mxu0 0
        %3140 = vmatmul.mubr.bf16.gmra.mrb[0].mxu0 %v2967
        %v3141 = vpop.f32.mrb[0].mxu0
        %v3142 = vadd.f32 0.0, %v3141
        %v3143 = vpop.f32.mrb[0].mxu0
        %v3144 = vpop.f32.mrb[0].mxu0
        %v3145 = vadd.f32 0.0, %v3144
        %v3146 = vpop.f32.mrb[0].mxu0
        %3147 = vdwg.mxu0
        %v3148 = vadd.f32 %v2903, %v3062
        %v3149 = vadd.f32 %v2904, %v3065
        %v3150 = vadd.f32 %v2905, %v3070
        %v3151 = vadd.f32 %v2906, %v3073
        %v3152 = vadd.f32 %v2907, %v3078
        %v3153 = vadd.f32 %v2908, %v3081
        %v3154 = vadd.f32 %v2909, %v3086
        %v3155 = vadd.f32 %v2910, %v3089
        %v3156 = vadd.f32 %v2911, %v3094
        %v3157 = vadd.f32 %v2912, %v3097
        %v3158 = vadd.f32 %v2913, %v3102
        %v3159 = vadd.f32 %v2914, %v3105
        %v3160 = vadd.f32 %v2915, %v3110
        %v3161 = vadd.f32 %v2916, %v3113
        %v3162 = vadd.f32 %v2917, %v3118
        %v3163 = vadd.f32 %v2918, %v3121
        %v3164 = vadd.f32 %v2919, %v3126
        %v3165 = vadd.f32 %v2920, %v3129
        %v3166 = vadd.f32 %v2921, %v3134
        %v3167 = vadd.f32 %v2922, %v3137
        %v3168 = vadd.f32 %v2923, %v3142
        %v3169 = vadd.f32 %v2924, %v3145
        %v3170 = vld [vmem:[#allocation2 + $0x58] sm:$0x1f]
        %v3171 = vld [vmem:[#allocation12 + $0x240] sm:$0xf]
        %v3172 = vld [vmem:[#allocation12 + $0x244] sm:$0xf]
        %v3173 = vld [vmem:[#allocation12 + $0x248] sm:$0xf]
        %v3174 = vld [vmem:[#allocation12 + $0x24c] sm:$0xf]
        %v3175 = vld [vmem:[#allocation12 + $0x250] sm:$0xf]
        %v3176 = vld [vmem:[#allocation12 + $0x254] sm:$0xf]
        %v3177 = vld [vmem:[#allocation12 + $0x258] sm:$0xf]
        %v3178 = vld [vmem:[#allocation12 + $0x25c] sm:$0xf]
        %v3179 = vld [vmem:[#allocation12 + $0x260] sm:$0xf]
        %v3180 = vld [vmem:[#allocation12 + $0x264] sm:$0xf]
        %v3181 = vld [vmem:[#allocation12 + $0x268] sm:$0xf]
        %v3182 = vld [vmem:[#allocation12 + $0x26c] sm:$0xf]
        %v3183 = vld [vmem:[#allocation12 + $0x270] sm:$0xf]
        %v3184 = vld [vmem:[#allocation12 + $0x274] sm:$0xf]
        %v3185 = vld [vmem:[#allocation12 + $0x278] sm:$0xf]
        %v3186 = vld [vmem:[#allocation12 + $0x27c] sm:$0xf]
        %vm3187 = vsmask.f32 3328
        %v3189 = vshrl.u32 %v2925, 16
        %v3191 = vrot.slane %v3189, 4
        %v3192 = vshll.u32 %v2925, 16
        %v3194 = vrot.slane %v3192, 5
        %v3195 = vor.u32 %v3191, %v3194
        %v3196 = vrot.slane %v920, 4
        %v3197 = vrot.slane %v916, 5
        %v3198 = vor.u32 %v3196, %v3197
        %v3199 = vsel %vm3187, %v3195, %v3198
        %v3200 = vrot.slane %v928, 4
        %v3201 = vrot.slane %v924, 5
        %v3202 = vor.u32 %v3200, %v3201
        %v3203 = vsel %vm3187, %v3198, %v3202
        %v3204 = vrot.slane %v936, 4
        %v3205 = vrot.slane %v932, 5
        %v3206 = vor.u32 %v3204, %v3205
        %v3207 = vsel %vm3187, %v3202, %v3206
        %v3208 = vrot.slane %v944, 4
        %v3209 = vrot.slane %v940, 5
        %v3210 = vor.u32 %v3208, %v3209
        %v3211 = vsel %vm3187, %v3206, %v3210
        %v3212 = vrot.slane %v952, 4
        %v3213 = vrot.slane %v948, 5
        %v3214 = vor.u32 %v3212, %v3213
        %v3215 = vsel %vm3187, %v3210, %v3214
        %v3216 = vrot.slane %v960, 4
        %v3217 = vrot.slane %v956, 5
        %v3218 = vor.u32 %v3216, %v3217
        %v3219 = vsel %vm3187, %v3214, %v3218
        %v3220 = vrot.slane %v968, 4
        %v3221 = vrot.slane %v964, 5
        %v3222 = vor.u32 %v3220, %v3221
        %v3223 = vsel %vm3187, %v3218, %v3222
        %v3224 = vrot.slane %v976, 4
        %v3225 = vrot.slane %v972, 5
        %v3226 = vor.u32 %v3224, %v3225
        %v3227 = vsel %vm3187, %v3222, %v3226
        %v3228 = vrot.slane %v984, 4
        %v3229 = vrot.slane %v980, 5
        %v3230 = vor.u32 %v3228, %v3229
        %v3231 = vsel %vm3187, %v3226, %v3230
        %v3232 = vrot.slane %v992, 4
        %v3233 = vrot.slane %v988, 5
        %v3234 = vor.u32 %v3232, %v3233
        %v3235 = vsel %vm3187, %v3230, %v3234
        %v3237 = vshrl.u32 %v3170, 16
        %v3239 = vrot.slane %v3237, 4
        %v3240 = vshll.u32 %v3170, 16
        %v3242 = vrot.slane %v3240, 5
        %v3243 = vor.u32 %v3239, %v3242
        %v3244 = vsel %vm3187, %v3234, %v3243
        %v3272 = vunpack.c.l.b16 %v3171
        %v3273 = vunpack.c.l.b16 %v3172
        %v3274 = vunpack.c.l.b16 %v3173
        %v3275 = vunpack.c.l.b16 %v3174
        %v3276 = vunpack.c.l.b16 %v3175
        %v3277 = vunpack.c.l.b16 %v3176
        %v3278 = vunpack.c.l.b16 %v3177
        %v3279 = vunpack.c.l.b16 %v3178
        %v3280 = vunpack.c.l.b16 %v3179
        %v3281 = vunpack.c.l.b16 %v3180
        %v3282 = vunpack.c.l.b16 %v3181
        %v3283 = vunpack.c.l.b16 %v3182
        %v3284 = vunpack.c.l.b16 %v3183
        %v3285 = vunpack.c.l.b16 %v3184
        %v3286 = vunpack.c.l.b16 %v3185
        %v3287 = vunpack.c.l.b16 %v3186
        %v3288 = vpack.c.b16 %v3273, %v3272
        %v3289 = vpack.c.b16 %v3275, %v3274
        %v3290 = vpack.c.b16 %v3277, %v3276
        %v3291 = vpack.c.b16 %v3279, %v3278
        %v3292 = vpack.c.b16 %v3281, %v3280
        %v3293 = vpack.c.b16 %v3283, %v3282
        %v3294 = vpack.c.b16 %v3285, %v3284
        %v3295 = vpack.c.b16 %v3287, %v3286
        %3304 = vmatprep.subr.bf16.mxu0 0
        %3305 = vmatpush1.bf16.msra.mxu0 %v3288
        %3306 = vmatprep.subr.bf16.mxu0 0
        %3307 = vmatpush1.bf16.msra.mxu0 %v3289
        %3308 = vmatprep.subr.bf16.mxu0 0
        %3309 = vmatpush1.bf16.msra.mxu0 %v3290
        %3310 = vmatprep.subr.bf16.mxu0 0
        %3311 = vmatpush1.bf16.msra.mxu0 %v3291
        %3312 = vmatprep.subr.bf16.mxu0 0
        %3313 = vmatpush1.bf16.msra.mxu0 %v3292
        %3314 = vmatprep.subr.bf16.mxu0 0
        %3315 = vmatpush1.bf16.msra.mxu0 %v3293
        %3316 = vmatprep.subr.bf16.mxu0 0
        %3317 = vmatpush1.bf16.msra.mxu0 %v3294
        %3318 = vmatprep.subr.bf16.mxu0 0
        %3319 = vmatpush1.bf16.msra.mxu0 %v3295
        %3320 = vmatprep.subr.bf16.mxu0 0
        %3321 = vmatpush1.bf16.msra.mxu0 0
        %3322 = vmatprep.subr.bf16.mxu0 0
        %3323 = vmatpush1.bf16.msra.mxu0 0
        %3324 = vmatprep.subr.bf16.mxu0 0
        %3325 = vmatpush1.bf16.msra.mxu0 0
        %3326 = vmatprep.subr.bf16.mxu0 0
        %3327 = vmatpush1.bf16.msra.mxu0 0
        %3328 = vmatprep.subr.bf16.mxu0 0
        %3329 = vmatpush1.bf16.msra.mxu0 0
        %3330 = vmatprep.subr.bf16.mxu0 0
        %3331 = vmatpush1.bf16.msra.mxu0 0
        %3332 = vmatprep.subr.bf16.mxu0 0
        %3333 = vmatpush1.bf16.msra.mxu0 0
        %3334 = vmatprep.subr.bf16.mxu0 0
        %3335 = vmatpush1.bf16.msra.mxu0 0
        %3336 = vmatprep.mubr.bf16.mxu0 0
        %3337 = vmatmul.mubr.bf16.gmra.mrb[0].mxu0 %v3199
        %v3338 = vpop.f32.mrb[0].mxu0
        %v3339 = vadd.f32 0.0, %v3338
        %v3340 = vpop.f32.mrb[0].mxu0
        %v3341 = vpop.f32.mrb[0].mxu0
        %v3342 = vadd.f32 0.0, %v3341
        %v3343 = vpop.f32.mrb[0].mxu0
        %3344 = vmatprep.mubr.bf16.mxu0 0
        %3345 = vmatmul.mubr.bf16.gmra.mrb[0].mxu0 %v3203
        %v3346 = vpop.f32.mrb[0].mxu0
        %v3347 = vadd.f32 0.0, %v3346
        %v3348 = vpop.f32.mrb[0].mxu0
        %v3349 = vpop.f32.mrb[0].mxu0
        %v3350 = vadd.f32 0.0, %v3349
        %v3351 = vpop.f32.mrb[0].mxu0
        %3352 = vmatprep.mubr.bf16.mxu0 0
        %3353 = vmatmul.mubr.bf16.gmra.mrb[0].mxu0 %v3207
        %v3354 = vpop.f32.mrb[0].mxu0
        %v3355 = vadd.f32 0.0, %v3354
        %v3356 = vpop.f32.mrb[0].mxu0
        %v3357 = vpop.f32.mrb[0].mxu0
        %v3358 = vadd.f32 0.0, %v3357
        %v3359 = vpop.f32.mrb[0].mxu0
        %3360 = vmatprep.mubr.bf16.mxu0 0
        %3361 = vmatmul.mubr.bf16.gmra.mrb[0].mxu0 %v3211
        %v3362 = vpop.f32.mrb[0].mxu0
        %v3363 = vadd.f32 0.0, %v3362
        %v3364 = vpop.f32.mrb[0].mxu0
        %v3365 = vpop.f32.mrb[0].mxu0
        %v3366 = vadd.f32 0.0, %v3365
        %v3367 = vpop.f32.mrb[0].mxu0
        %3368 = vmatprep.mubr.bf16.mxu0 0
        %3369 = vmatmul.mubr.bf16.gmra.mrb[0].mxu0 %v3215
        %v3370 = vpop.f32.mrb[0].mxu0
        %v3371 = vadd.f32 0.0, %v3370
        %v3372 = vpop.f32.mrb[0].mxu0
        %v3373 = vpop.f32.mrb[0].mxu0
        %v3374 = vadd.f32 0.0, %v3373
        %v3375 = vpop.f32.mrb[0].mxu0
        %3376 = vmatprep.mubr.bf16.mxu0 0
        %3377 = vmatmul.mubr.bf16.gmra.mrb[0].mxu0 %v3219
        %v3378 = vpop.f32.mrb[0].mxu0
        %v3379 = vadd.f32 0.0, %v3378
        %v3380 = vpop.f32.mrb[0].mxu0
        %v3381 = vpop.f32.mrb[0].mxu0
        %v3382 = vadd.f32 0.0, %v3381
        %v3383 = vpop.f32.mrb[0].mxu0
        %3384 = vmatprep.mubr.bf16.mxu0 0
        %3385 = vmatmul.mubr.bf16.gmra.mrb[0].mxu0 %v3223
        %v3386 = vpop.f32.mrb[0].mxu0
        %v3387 = vadd.f32 0.0, %v3386
        %v3388 = vpop.f32.mrb[0].mxu0
        %v3389 = vpop.f32.mrb[0].mxu0
        %v3390 = vadd.f32 0.0, %v3389
        %v3391 = vpop.f32.mrb[0].mxu0
        %3392 = vmatprep.mubr.bf16.mxu0 0
        %3393 = vmatmul.mubr.bf16.gmra.mrb[0].mxu0 %v3227
        %v3394 = vpop.f32.mrb[0].mxu0
        %v3395 = vadd.f32 0.0, %v3394
        %v3396 = vpop.f32.mrb[0].mxu0
        %v3397 = vpop.f32.mrb[0].mxu0
        %v3398 = vadd.f32 0.0, %v3397
        %v3399 = vpop.f32.mrb[0].mxu0
        %3400 = vmatprep.mubr.bf16.mxu0 0
        %3401 = vmatmul.mubr.bf16.gmra.mrb[0].mxu0 %v3231
        %v3402 = vpop.f32.mrb[0].mxu0
        %v3403 = vadd.f32 0.0, %v3402
        %v3404 = vpop.f32.mrb[0].mxu0
        %v3405 = vpop.f32.mrb[0].mxu0
        %v3406 = vadd.f32 0.0, %v3405
        %v3407 = vpop.f32.mrb[0].mxu0
        %3408 = vmatprep.mubr.bf16.mxu0 0
        %3409 = vmatmul.mubr.bf16.gmra.mrb[0].mxu0 %v3235
        %v3410 = vpop.f32.mrb[0].mxu0
        %v3411 = vadd.f32 0.0, %v3410
        %v3412 = vpop.f32.mrb[0].mxu0
        %v3413 = vpop.f32.mrb[0].mxu0
        %v3414 = vadd.f32 0.0, %v3413
        %v3415 = vpop.f32.mrb[0].mxu0
        %3416 = vmatprep.mubr.bf16.mxu0 0
        %3417 = vmatmul.mubr.bf16.gmra.mrb[0].mxu0 %v3244
        %v3418 = vpop.f32.mrb[0].mxu0
        %v3419 = vadd.f32 0.0, %v3418
        %v3420 = vpop.f32.mrb[0].mxu0
        %v3421 = vpop.f32.mrb[0].mxu0
        %v3422 = vadd.f32 0.0, %v3421
        %v3423 = vpop.f32.mrb[0].mxu0
        %3424 = vdwg.mxu0
        %v3425 = vadd.f32 %v3148, %v3339
        %v3426 = vadd.f32 %v3149, %v3342
        %v3427 = vadd.f32 %v3150, %v3347
        %v3428 = vadd.f32 %v3151, %v3350
        %v3429 = vadd.f32 %v3152, %v3355
        %v3430 = vadd.f32 %v3153, %v3358
        %v3431 = vadd.f32 %v3154, %v3363
        %v3432 = vadd.f32 %v3155, %v3366
        %v3433 = vadd.f32 %v3156, %v3371
        %v3434 = vadd.f32 %v3157, %v3374
        %v3435 = vadd.f32 %v3158, %v3379
        %v3436 = vadd.f32 %v3159, %v3382
        %v3437 = vadd.f32 %v3160, %v3387
        %v3438 = vadd.f32 %v3161, %v3390
        %v3439 = vadd.f32 %v3162, %v3395
        %v3440 = vadd.f32 %v3163, %v3398
        %v3441 = vadd.f32 %v3164, %v3403
        %v3442 = vadd.f32 %v3165, %v3406
        %v3443 = vadd.f32 %v3166, %v3411
        %v3444 = vadd.f32 %v3167, %v3414
        %v3445 = vadd.f32 %v3168, %v3419
        %v3446 = vadd.f32 %v3169, %v3422
        %v3447 = vld [vmem:[#allocation13] sm:$0x1]
        %v3449 = vlaneseq
        %v3450 = vshrl.u32 %v3449, 7
        %v3451 = vsub.s32 0, %v3450
        %v3452 = vrot.slane %v3447, %v3451
        %v3454 = vadd.f32 %v3425, %v3452
        %v3455 = vadd.f32 %v3426, %v3452
        %v3456 = vadd.f32 %v3427, %v3452
        %v3457 = vadd.f32 %v3428, %v3452
        %v3458 = vadd.f32 %v3429, %v3452
        %v3459 = vadd.f32 %v3430, %v3452
        %v3460 = vadd.f32 %v3431, %v3452
        %v3461 = vadd.f32 %v3432, %v3452
        %v3462 = vadd.f32 %v3433, %v3452
        %v3463 = vadd.f32 %v3434, %v3452
        %v3464 = vadd.f32 %v3435, %v3452
        %v3465 = vadd.f32 %v3436, %v3452
        %v3466 = vadd.f32 %v3437, %v3452
        %v3467 = vadd.f32 %v3438, %v3452
        %v3468 = vadd.f32 %v3439, %v3452
        %v3469 = vadd.f32 %v3440, %v3452
        %v3470 = vadd.f32 %v3441, %v3452
        %v3471 = vadd.f32 %v3442, %v3452
        %v3472 = vadd.f32 %v3443, %v3452
        %v3473 = vadd.f32 %v3444, %v3452
        %v3474 = vadd.f32 %v3445, %v3452
        %v3475 = vadd.f32 %v3446, %v3452
        %v3476 = vmax.f32 %v3454, 0.0
        %v3477 = vmax.f32 %v3455, 0.0
        %v3478 = vmax.f32 %v3456, 0.0
        %v3479 = vmax.f32 %v3457, 0.0
        %v3480 = vmax.f32 %v3458, 0.0
        %v3481 = vmax.f32 %v3459, 0.0
        %v3482 = vmax.f32 %v3460, 0.0
        %v3483 = vmax.f32 %v3461, 0.0
        %v3484 = vmax.f32 %v3462, 0.0
        %v3485 = vmax.f32 %v3463, 0.0
        %v3486 = vmax.f32 %v3464, 0.0
        %v3487 = vmax.f32 %v3465, 0.0
        %v3488 = vmax.f32 %v3466, 0.0
        %v3489 = vmax.f32 %v3467, 0.0
        %v3490 = vmax.f32 %v3468, 0.0
        %v3491 = vmax.f32 %v3469, 0.0
        %v3492 = vmax.f32 %v3470, 0.0
        %v3493 = vmax.f32 %v3471, 0.0
        %v3494 = vmax.f32 %v3472, 0.0
        %v3495 = vmax.f32 %v3473, 0.0
        %v3496 = vmax.f32 %v3474, 0.0
        %v3497 = vmax.f32 %v3475, 0.0
        %v3498 = vpack.c.bf16 %v3477, %v3476
        %v3499 = vpack.c.bf16 %v3479, %v3478
        %v3500 = vpack.c.bf16 %v3481, %v3480
        %v3501 = vpack.c.bf16 %v3483, %v3482
        %v3502 = vpack.c.bf16 %v3485, %v3484
        %v3503 = vpack.c.bf16 %v3487, %v3486
        %v3504 = vpack.c.bf16 %v3489, %v3488
        %v3505 = vpack.c.bf16 %v3491, %v3490
        %v3506 = vpack.c.bf16 %v3493, %v3492
        %v3507 = vpack.c.bf16 %v3495, %v3494
        %v3508 = vpack.c.bf16 %v3497, %v3496
        %3509 = vst [vmem:[#allocation3] sm:$0xff] %v3498
        %3510 = vst [vmem:[#allocation3 + $0x8] sm:$0xff] %v3499
        %3511 = vst [vmem:[#allocation3 + $0x10] sm:$0xff] %v3500
        %3512 = vst [vmem:[#allocation3 + $0x18] sm:$0xff] %v3501
        %3513 = vst [vmem:[#allocation3 + $0x20] sm:$0xff] %v3502
        %3514 = vst [vmem:[#allocation3 + $0x28] sm:$0xff] %v3503
        %3515 = vst [vmem:[#allocation3 + $0x30] sm:$0xff] %v3504
        %3516 = vst [vmem:[#allocation3 + $0x38] sm:$0xff] %v3505
        %3517 = vst [vmem:[#allocation3 + $0x40] sm:$0xff] %v3506
        %3518 = vst [vmem:[#allocation3 + $0x48] sm:$0xff] %v3507
        %3519 = vst [vmem:[#allocation3 + $0x50] sm:$0xff] %v3508
        %v3520 = vld [vmem:[#allocation3] sm:$0xff]
        %v3521 = vld [vmem:[#allocation3 + $0x8] sm:$0xff]
        %v3522 = vld [vmem:[#allocation3 + $0x10] sm:$0xff]
        %v3523 = vld [vmem:[#allocation3 + $0x18] sm:$0xff]
        %v3524 = vld [vmem:[#allocation3 + $0x20] sm:$0xf]
        %v3525 = vunpack.c.l.bf16 %v3520
        %v3526 = vunpack.c.h.bf16 %v3520
        %v3527 = vunpack.c.l.bf16 %v3521
        %v3528 = vunpack.c.h.bf16 %v3521
        %v3529 = vunpack.c.l.bf16 %v3522
        %v3530 = vunpack.c.h.bf16 %v3522
        %v3531 = vunpack.c.l.bf16 %v3523
        %v3532 = vunpack.c.h.bf16 %v3523
        %v3533 = vunpack.c.l.bf16 %v3524
        %v3543 = vcombine.high %v3525, %v3525
        %v3545 = vunpack.c.l.s4 1966171168
        %v3546 = vunpack.c.0.s8 %v3545
        %v3547 = vlaneseq
        %v3548 = vshrl.u32 %v3547, 7
        %v3549 = vsub.s32 %v3546, %v3548
        %v3550 = vrot.slane %v3525, %v3549
        %v3552 = vunpack.c.l.s4 1966171168
        %v3553 = vunpack.c.0.s8 %v3552
        %v3554 = vlaneseq
        %v3555 = vshrl.u32 %v3554, 7
        %v3556 = vsub.s32 %v3553, %v3555
        %v3557 = vrot.slane %v3543, %v3556
        %v3558 = vcombine.high %v3550, %v3550
        %v3559 = vcombine.high %v3557, %v3557
        %v3561 = vunpack.c.l.s4 1966171168
        %v3562 = vunpack.c.0.s8 %v3561
        %v3563 = vlaneseq
        %v3564 = vshrl.u32 %v3563, 7
        %v3565 = vsub.s32 %v3562, %v3564
        %v3566 = vrot.slane %v3550, %v3565
        %v3568 = vunpack.c.l.s4 1966171168
        %v3569 = vunpack.c.0.s8 %v3568
        %v3570 = vlaneseq
        %v3571 = vshrl.u32 %v3570, 7
        %v3572 = vsub.s32 %v3569, %v3571
        %v3573 = vrot.slane %v3557, %v3572
        %v3575 = vunpack.c.l.s4 1966171168
        %v3576 = vunpack.c.0.s8 %v3575
        %v3577 = vlaneseq
        %v3578 = vshrl.u32 %v3577, 7
        %v3579 = vsub.s32 %v3576, %v3578
        %v3580 = vrot.slane %v3558, %v3579
        %v3582 = vunpack.c.l.s4 1966171168
        %v3583 = vunpack.c.0.s8 %v3582
        %v3584 = vlaneseq
        %v3585 = vshrl.u32 %v3584, 7
        %v3586 = vsub.s32 %v3583, %v3585
        %v3587 = vrot.slane %v3559, %v3586
        %v3588 = vcombine.high %v3566, %v3566
        %v3589 = vcombine.high %v3573, %v3573
        %v3590 = vcombine.high %v3580, %v3580
        %v3591 = vcombine.high %v3587, %v3587
        %v3592 = vcombine.high %v3526, %v3526
        %v3594 = vunpack.c.l.s4 1966171168
        %v3595 = vunpack.c.0.s8 %v3594
        %v3596 = vlaneseq
        %v3597 = vshrl.u32 %v3596, 7
        %v3598 = vsub.s32 %v3595, %v3597
        %v3599 = vrot.slane %v3526, %v3598
        %v3601 = vunpack.c.l.s4 1966171168
        %v3602 = vunpack.c.0.s8 %v3601
        %v3603 = vlaneseq
        %v3604 = vshrl.u32 %v3603, 7
        %v3605 = vsub.s32 %v3602, %v3604
        %v3606 = vrot.slane %v3592, %v3605
        %v3607 = vcombine.high %v3599, %v3599
        %v3608 = vcombine.high %v3606, %v3606
        %v3610 = vunpack.c.l.s4 1966171168
        %v3611 = vunpack.c.0.s8 %v3610
        %v3612 = vlaneseq
        %v3613 = vshrl.u32 %v3612, 7
        %v3614 = vsub.s32 %v3611, %v3613
        %v3615 = vrot.slane %v3599, %v3614
        %v3617 = vunpack.c.l.s4 1966171168
        %v3618 = vunpack.c.0.s8 %v3617
        %v3619 = vlaneseq
        %v3620 = vshrl.u32 %v3619, 7
        %v3621 = vsub.s32 %v3618, %v3620
        %v3622 = vrot.slane %v3606, %v3621
        %v3624 = vunpack.c.l.s4 1966171168
        %v3625 = vunpack.c.0.s8 %v3624
        %v3626 = vlaneseq
        %v3627 = vshrl.u32 %v3626, 7
        %v3628 = vsub.s32 %v3625, %v3627
        %v3629 = vrot.slane %v3607, %v3628
        %v3631 = vunpack.c.l.s4 1966171168
        %v3632 = vunpack.c.0.s8 %v3631
        %v3633 = vlaneseq
        %v3634 = vshrl.u32 %v3633, 7
        %v3635 = vsub.s32 %v3632, %v3634
        %v3636 = vrot.slane %v3608, %v3635
        %v3637 = vcombine.high %v3615, %v3615
        %v3638 = vcombine.high %v3622, %v3622
        %v3639 = vcombine.high %v3629, %v3629
        %v3640 = vcombine.high %v3636, %v3636
        %v3641 = vcombine.high %v3527, %v3527
        %v3643 = vunpack.c.l.s4 1966171168
        %v3644 = vunpack.c.0.s8 %v3643
        %v3645 = vlaneseq
        %v3646 = vshrl.u32 %v3645, 7
        %v3647 = vsub.s32 %v3644, %v3646
        %v3648 = vrot.slane %v3527, %v3647
        %v3650 = vunpack.c.l.s4 1966171168
        %v3651 = vunpack.c.0.s8 %v3650
        %v3652 = vlaneseq
        %v3653 = vshrl.u32 %v3652, 7
        %v3654 = vsub.s32 %v3651, %v3653
        %v3655 = vrot.slane %v3641, %v3654
        %v3656 = vcombine.high %v3648, %v3648
        %v3657 = vcombine.high %v3655, %v3655
        %v3659 = vunpack.c.l.s4 1966171168
        %v3660 = vunpack.c.0.s8 %v3659
        %v3661 = vlaneseq
        %v3662 = vshrl.u32 %v3661, 7
        %v3663 = vsub.s32 %v3660, %v3662
        %v3664 = vrot.slane %v3648, %v3663
        %v3666 = vunpack.c.l.s4 1966171168
        %v3667 = vunpack.c.0.s8 %v3666
        %v3668 = vlaneseq
        %v3669 = vshrl.u32 %v3668, 7
        %v3670 = vsub.s32 %v3667, %v3669
        %v3671 = vrot.slane %v3655, %v3670
        %v3673 = vunpack.c.l.s4 1966171168
        %v3674 = vunpack.c.0.s8 %v3673
        %v3675 = vlaneseq
        %v3676 = vshrl.u32 %v3675, 7
        %v3677 = vsub.s32 %v3674, %v3676
        %v3678 = vrot.slane %v3656, %v3677
        %v3680 = vunpack.c.l.s4 1966171168
        %v3681 = vunpack.c.0.s8 %v3680
        %v3682 = vlaneseq
        %v3683 = vshrl.u32 %v3682, 7
        %v3684 = vsub.s32 %v3681, %v3683
        %v3685 = vrot.slane %v3657, %v3684
        %v3686 = vcombine.high %v3664, %v3664
        %v3687 = vcombine.high %v3671, %v3671
        %v3688 = vcombine.high %v3678, %v3678
        %v3689 = vcombine.high %v3685, %v3685
        %v3690 = vcombine.high %v3528, %v3528
        %v3692 = vunpack.c.l.s4 1966171168
        %v3693 = vunpack.c.0.s8 %v3692
        %v3694 = vlaneseq
        %v3695 = vshrl.u32 %v3694, 7
        %v3696 = vsub.s32 %v3693, %v3695
        %v3697 = vrot.slane %v3528, %v3696
        %v3699 = vunpack.c.l.s4 1966171168
        %v3700 = vunpack.c.0.s8 %v3699
        %v3701 = vlaneseq
        %v3702 = vshrl.u32 %v3701, 7
        %v3703 = vsub.s32 %v3700, %v3702
        %v3704 = vrot.slane %v3690, %v3703
        %v3705 = vcombine.high %v3697, %v3697
        %v3706 = vcombine.high %v3704, %v3704
        %v3708 = vunpack.c.l.s4 1966171168
        %v3709 = vunpack.c.0.s8 %v3708
        %v3710 = vlaneseq
        %v3711 = vshrl.u32 %v3710, 7
        %v3712 = vsub.s32 %v3709, %v3711
        %v3713 = vrot.slane %v3697, %v3712
        %v3715 = vunpack.c.l.s4 1966171168
        %v3716 = vunpack.c.0.s8 %v3715
        %v3717 = vlaneseq
        %v3718 = vshrl.u32 %v3717, 7
        %v3719 = vsub.s32 %v3716, %v3718
        %v3720 = vrot.slane %v3704, %v3719
        %v3722 = vunpack.c.l.s4 1966171168
        %v3723 = vunpack.c.0.s8 %v3722
        %v3724 = vlaneseq
        %v3725 = vshrl.u32 %v3724, 7
        %v3726 = vsub.s32 %v3723, %v3725
        %v3727 = vrot.slane %v3705, %v3726
        %v3729 = vunpack.c.l.s4 1966171168
        %v3730 = vunpack.c.0.s8 %v3729
        %v3731 = vlaneseq
        %v3732 = vshrl.u32 %v3731, 7
        %v3733 = vsub.s32 %v3730, %v3732
        %v3734 = vrot.slane %v3706, %v3733
        %v3735 = vcombine.high %v3713, %v3713
        %v3736 = vcombine.high %v3720, %v3720
        %v3737 = vcombine.high %v3727, %v3727
        %v3738 = vcombine.high %v3734, %v3734
        %v3739 = vcombine.high %v3529, %v3529
        %v3741 = vunpack.c.l.s4 1966171168
        %v3742 = vunpack.c.0.s8 %v3741
        %v3743 = vlaneseq
        %v3744 = vshrl.u32 %v3743, 7
        %v3745 = vsub.s32 %v3742, %v3744
        %v3746 = vrot.slane %v3529, %v3745
        %v3748 = vunpack.c.l.s4 1966171168
        %v3749 = vunpack.c.0.s8 %v3748
        %v3750 = vlaneseq
        %v3751 = vshrl.u32 %v3750, 7
        %v3752 = vsub.s32 %v3749, %v3751
        %v3753 = vrot.slane %v3739, %v3752
        %v3754 = vcombine.high %v3746, %v3746
        %v3755 = vcombine.high %v3753, %v3753
        %v3757 = vunpack.c.l.s4 1966171168
        %v3758 = vunpack.c.0.s8 %v3757
        %v3759 = vlaneseq
        %v3760 = vshrl.u32 %v3759, 7
        %v3761 = vsub.s32 %v3758, %v3760
        %v3762 = vrot.slane %v3746, %v3761
        %v3764 = vunpack.c.l.s4 1966171168
        %v3765 = vunpack.c.0.s8 %v3764
        %v3766 = vlaneseq
        %v3767 = vshrl.u32 %v3766, 7
        %v3768 = vsub.s32 %v3765, %v3767
        %v3769 = vrot.slane %v3753, %v3768
        %v3771 = vunpack.c.l.s4 1966171168
        %v3772 = vunpack.c.0.s8 %v3771
        %v3773 = vlaneseq
        %v3774 = vshrl.u32 %v3773, 7
        %v3775 = vsub.s32 %v3772, %v3774
        %v3776 = vrot.slane %v3754, %v3775
        %v3778 = vunpack.c.l.s4 1966171168
        %v3779 = vunpack.c.0.s8 %v3778
        %v3780 = vlaneseq
        %v3781 = vshrl.u32 %v3780, 7
        %v3782 = vsub.s32 %v3779, %v3781
        %v3783 = vrot.slane %v3755, %v3782
        %v3784 = vcombine.high %v3762, %v3762
        %v3785 = vcombine.high %v3769, %v3769
        %v3786 = vcombine.high %v3776, %v3776
        %v3787 = vcombine.high %v3783, %v3783
        %v3788 = vcombine.high %v3530, %v3530
        %v3790 = vunpack.c.l.s4 1966171168
        %v3791 = vunpack.c.0.s8 %v3790
        %v3792 = vlaneseq
        %v3793 = vshrl.u32 %v3792, 7
        %v3794 = vsub.s32 %v3791, %v3793
        %v3795 = vrot.slane %v3530, %v3794
        %v3797 = vunpack.c.l.s4 1966171168
        %v3798 = vunpack.c.0.s8 %v3797
        %v3799 = vlaneseq
        %v3800 = vshrl.u32 %v3799, 7
        %v3801 = vsub.s32 %v3798, %v3800
        %v3802 = vrot.slane %v3788, %v3801
        %v3803 = vcombine.high %v3795, %v3795
        %v3804 = vcombine.high %v3802, %v3802
        %v3806 = vunpack.c.l.s4 1966171168
        %v3807 = vunpack.c.0.s8 %v3806
        %v3808 = vlaneseq
        %v3809 = vshrl.u32 %v3808, 7
        %v3810 = vsub.s32 %v3807, %v3809
        %v3811 = vrot.slane %v3795, %v3810
        %v3813 = vunpack.c.l.s4 1966171168
        %v3814 = vunpack.c.0.s8 %v3813
        %v3815 = vlaneseq
        %v3816 = vshrl.u32 %v3815, 7
        %v3817 = vsub.s32 %v3814, %v3816
        %v3818 = vrot.slane %v3802, %v3817
        %v3820 = vunpack.c.l.s4 1966171168
        %v3821 = vunpack.c.0.s8 %v3820
        %v3822 = vlaneseq
        %v3823 = vshrl.u32 %v3822, 7
        %v3824 = vsub.s32 %v3821, %v3823
        %v3825 = vrot.slane %v3803, %v3824
        %v3827 = vunpack.c.l.s4 1966171168
        %v3828 = vunpack.c.0.s8 %v3827
        %v3829 = vlaneseq
        %v3830 = vshrl.u32 %v3829, 7
        %v3831 = vsub.s32 %v3828, %v3830
        %v3832 = vrot.slane %v3804, %v3831
        %v3833 = vcombine.high %v3811, %v3811
        %v3834 = vcombine.high %v3818, %v3818
        %v3835 = vcombine.high %v3825, %v3825
        %v3836 = vcombine.high %v3832, %v3832
        %v3837 = vcombine.high %v3531, %v3531
        %v3839 = vunpack.c.l.s4 1966171168
        %v3840 = vunpack.c.0.s8 %v3839
        %v3841 = vlaneseq
        %v3842 = vshrl.u32 %v3841, 7
        %v3843 = vsub.s32 %v3840, %v3842
        %v3844 = vrot.slane %v3531, %v3843
        %v3846 = vunpack.c.l.s4 1966171168
        %v3847 = vunpack.c.0.s8 %v3846
        %v3848 = vlaneseq
        %v3849 = vshrl.u32 %v3848, 7
        %v3850 = vsub.s32 %v3847, %v3849
        %v3851 = vrot.slane %v3837, %v3850
        %v3852 = vcombine.high %v3844, %v3844
        %v3853 = vcombine.high %v3851, %v3851
        %v3855 = vunpack.c.l.s4 1966171168
        %v3856 = vunpack.c.0.s8 %v3855
        %v3857 = vlaneseq
        %v3858 = vshrl.u32 %v3857, 7
        %v3859 = vsub.s32 %v3856, %v3858
        %v3860 = vrot.slane %v3844, %v3859
        %v3862 = vunpack.c.l.s4 1966171168
        %v3863 = vunpack.c.0.s8 %v3862
        %v3864 = vlaneseq
        %v3865 = vshrl.u32 %v3864, 7
        %v3866 = vsub.s32 %v3863, %v3865
        %v3867 = vrot.slane %v3851, %v3866
        %v3869 = vunpack.c.l.s4 1966171168
        %v3870 = vunpack.c.0.s8 %v3869
        %v3871 = vlaneseq
        %v3872 = vshrl.u32 %v3871, 7
        %v3873 = vsub.s32 %v3870, %v3872
        %v3874 = vrot.slane %v3852, %v3873
        %v3876 = vunpack.c.l.s4 1966171168
        %v3877 = vunpack.c.0.s8 %v3876
        %v3878 = vlaneseq
        %v3879 = vshrl.u32 %v3878, 7
        %v3880 = vsub.s32 %v3877, %v3879
        %v3881 = vrot.slane %v3853, %v3880
        %v3882 = vcombine.high %v3860, %v3860
        %v3883 = vcombine.high %v3867, %v3867
        %v3884 = vcombine.high %v3874, %v3874
        %v3885 = vcombine.high %v3881, %v3881
        %v3886 = vcombine.high %v3532, %v3532
        %v3888 = vunpack.c.l.s4 1966171168
        %v3889 = vunpack.c.0.s8 %v3888
        %v3890 = vlaneseq
        %v3891 = vshrl.u32 %v3890, 7
        %v3892 = vsub.s32 %v3889, %v3891
        %v3893 = vrot.slane %v3532, %v3892
        %v3895 = vunpack.c.l.s4 1966171168
        %v3896 = vunpack.c.0.s8 %v3895
        %v3897 = vlaneseq
        %v3898 = vshrl.u32 %v3897, 7
        %v3899 = vsub.s32 %v3896, %v3898
        %v3900 = vrot.slane %v3886, %v3899
        %v3901 = vcombine.high %v3893, %v3893
        %v3902 = vcombine.high %v3900, %v3900
        %v3904 = vunpack.c.l.s4 1966171168
        %v3905 = vunpack.c.0.s8 %v3904
        %v3906 = vlaneseq
        %v3907 = vshrl.u32 %v3906, 7
        %v3908 = vsub.s32 %v3905, %v3907
        %v3909 = vrot.slane %v3893, %v3908
        %v3911 = vunpack.c.l.s4 1966171168
        %v3912 = vunpack.c.0.s8 %v3911
        %v3913 = vlaneseq
        %v3914 = vshrl.u32 %v3913, 7
        %v3915 = vsub.s32 %v3912, %v3914
        %v3916 = vrot.slane %v3900, %v3915
        %v3918 = vunpack.c.l.s4 1966171168
        %v3919 = vunpack.c.0.s8 %v3918
        %v3920 = vlaneseq
        %v3921 = vshrl.u32 %v3920, 7
        %v3922 = vsub.s32 %v3919, %v3921
        %v3923 = vrot.slane %v3901, %v3922
        %v3925 = vunpack.c.l.s4 1966171168
        %v3926 = vunpack.c.0.s8 %v3925
        %v3927 = vlaneseq
        %v3928 = vshrl.u32 %v3927, 7
        %v3929 = vsub.s32 %v3926, %v3928
        %v3930 = vrot.slane %v3902, %v3929
        %v3931 = vcombine.high %v3909, %v3909
        %v3932 = vcombine.high %v3916, %v3916
        %v3933 = vcombine.high %v3923, %v3923
        %v3934 = vcombine.high %v3930, %v3930
        %v3935 = vcombine.high %v3533, %v3533
        %v3937 = vunpack.c.l.s4 1966171168
        %v3938 = vunpack.c.0.s8 %v3937
        %v3939 = vlaneseq
        %v3940 = vshrl.u32 %v3939, 7
        %v3941 = vsub.s32 %v3938, %v3940
        %v3942 = vrot.slane %v3533, %v3941
        %v3944 = vunpack.c.l.s4 1966171168
        %v3945 = vunpack.c.0.s8 %v3944
        %v3946 = vlaneseq
        %v3947 = vshrl.u32 %v3946, 7
        %v3948 = vsub.s32 %v3945, %v3947
        %v3949 = vrot.slane %v3935, %v3948
        %v3950 = vcombine.high %v3942, %v3942
        %v3951 = vcombine.high %v3949, %v3949
        %v3953 = vunpack.c.l.s4 1966171168
        %v3954 = vunpack.c.0.s8 %v3953
        %v3955 = vlaneseq
        %v3956 = vshrl.u32 %v3955, 7
        %v3957 = vsub.s32 %v3954, %v3956
        %v3958 = vrot.slane %v3942, %v3957
        %v3960 = vunpack.c.l.s4 1966171168
        %v3961 = vunpack.c.0.s8 %v3960
        %v3962 = vlaneseq
        %v3963 = vshrl.u32 %v3962, 7
        %v3964 = vsub.s32 %v3961, %v3963
        %v3965 = vrot.slane %v3949, %v3964
        %v3967 = vunpack.c.l.s4 1966171168
        %v3968 = vunpack.c.0.s8 %v3967
        %v3969 = vlaneseq
        %v3970 = vshrl.u32 %v3969, 7
        %v3971 = vsub.s32 %v3968, %v3970
        %v3972 = vrot.slane %v3950, %v3971
        %v3974 = vunpack.c.l.s4 1966171168
        %v3975 = vunpack.c.0.s8 %v3974
        %v3976 = vlaneseq
        %v3977 = vshrl.u32 %v3976, 7
        %v3978 = vsub.s32 %v3975, %v3977
        %v3979 = vrot.slane %v3951, %v3978
        %v3980 = vcombine.high %v3958, %v3958
        %v3981 = vcombine.high %v3965, %v3965
        %v3982 = vcombine.high %v3972, %v3972
        %v3983 = vcombine.high %v3979, %v3979
        %v3984 = vcombine.low %v3566, %v3580
        %v3986 = vunpack.c.l.s4 1966171168
        %v3987 = vunpack.c.0.s8 %v3986
        %v3988 = vlaneseq
        %v3989 = vshrl.u32 %v3988, 7
        %v3990 = vsub.s32 %v3987, %v3989
        %v3991 = vrot.slane %v3984, %v3990
        %v3993 = vunpack.c.l.s4 1966171168
        %v3994 = vunpack.c.0.s8 %v3993
        %v3995 = vlaneseq
        %v3996 = vshrl.u32 %v3995, 7
        %v3997 = vsub.s32 %v3994, %v3996
        %v3998 = vrot.slane %v3588, %v3997
        %v3999 = vcombine.low %v3991, %v3998
        %v4001 = vunpack.c.l.s4 1966171168
        %v4002 = vunpack.c.0.s8 %v4001
        %v4003 = vlaneseq
        %v4004 = vshrl.u32 %v4003, 7
        %v4005 = vsub.s32 %v4002, %v4004
        %v4006 = vrot.slane %v3999, %v4005
        %v4007 = vcombine.low %v3590, %v3573
        %v4009 = vunpack.c.l.s4 1966171168
        %v4010 = vunpack.c.0.s8 %v4009
        %v4011 = vlaneseq
        %v4012 = vshrl.u32 %v4011, 7
        %v4013 = vsub.s32 %v4010, %v4012
        %v4014 = vrot.slane %v4007, %v4013
        %v4016 = vunpack.c.l.s4 1966171168
        %v4017 = vunpack.c.0.s8 %v4016
        %v4018 = vlaneseq
        %v4019 = vshrl.u32 %v4018, 7
        %v4020 = vsub.s32 %v4017, %v4019
        %v4021 = vrot.slane %v3587, %v4020
        %v4022 = vcombine.low %v4014, %v4021
        %v4024 = vunpack.c.l.s4 1966171168
        %v4025 = vunpack.c.0.s8 %v4024
        %v4026 = vlaneseq
        %v4027 = vshrl.u32 %v4026, 7
        %v4028 = vsub.s32 %v4025, %v4027
        %v4029 = vrot.slane %v4022, %v4028
        %v4030 = vcombine.low %v3589, %v3591
        %v4032 = vunpack.c.l.s4 1966171168
        %v4033 = vunpack.c.0.s8 %v4032
        %v4034 = vlaneseq
        %v4035 = vshrl.u32 %v4034, 7
        %v4036 = vsub.s32 %v4033, %v4035
        %v4037 = vrot.slane %v4030, %v4036
        %v4039 = vunpack.c.l.s4 1966171168
        %v4040 = vunpack.c.0.s8 %v4039
        %v4041 = vlaneseq
        %v4042 = vshrl.u32 %v4041, 7
        %v4043 = vsub.s32 %v4040, %v4042
        %v4044 = vrot.slane %v3615, %v4043
        %v4045 = vcombine.low %v4037, %v4044
        %v4047 = vunpack.c.l.s4 1966171168
        %v4048 = vunpack.c.0.s8 %v4047
        %v4049 = vlaneseq
        %v4050 = vshrl.u32 %v4049, 7
        %v4051 = vsub.s32 %v4048, %v4050
        %v4052 = vrot.slane %v4045, %v4051
        %v4053 = vcombine.low %v3629, %v3637
        %v4055 = vunpack.c.l.s4 1966171168
        %v4056 = vunpack.c.0.s8 %v4055
        %v4057 = vlaneseq
        %v4058 = vshrl.u32 %v4057, 7
        %v4059 = vsub.s32 %v4056, %v4058
        %v4060 = vrot.slane %v4053, %v4059
        %v4062 = vunpack.c.l.s4 1966171168
        %v4063 = vunpack.c.0.s8 %v4062
        %v4064 = vlaneseq
        %v4065 = vshrl.u32 %v4064, 7
        %v4066 = vsub.s32 %v4063, %v4065
        %v4067 = vrot.slane %v3639, %v4066
        %v4068 = vcombine.low %v4060, %v4067
        %v4070 = vunpack.c.l.s4 1966171168
        %v4071 = vunpack.c.0.s8 %v4070
        %v4072 = vlaneseq
        %v4073 = vshrl.u32 %v4072, 7
        %v4074 = vsub.s32 %v4071, %v4073
        %v4075 = vrot.slane %v4068, %v4074
        %v4076 = vcombine.low %v3622, %v3636
        %v4078 = vunpack.c.l.s4 1966171168
        %v4079 = vunpack.c.0.s8 %v4078
        %v4080 = vlaneseq
        %v4081 = vshrl.u32 %v4080, 7
        %v4082 = vsub.s32 %v4079, %v4081
        %v4083 = vrot.slane %v4076, %v4082
        %v4085 = vunpack.c.l.s4 1966171168
        %v4086 = vunpack.c.0.s8 %v4085
        %v4087 = vlaneseq
        %v4088 = vshrl.u32 %v4087, 7
        %v4089 = vsub.s32 %v4086, %v4088
        %v4090 = vrot.slane %v3638, %v4089
        %v4091 = vcombine.low %v4083, %v4090
        %v4093 = vunpack.c.l.s4 1966171168
        %v4094 = vunpack.c.0.s8 %v4093
        %v4095 = vlaneseq
        %v4096 = vshrl.u32 %v4095, 7
        %v4097 = vsub.s32 %v4094, %v4096
        %v4098 = vrot.slane %v4091, %v4097
        %v4099 = vcombine.low %v3640, %v3664
        %v4101 = vunpack.c.l.s4 1966171168
        %v4102 = vunpack.c.0.s8 %v4101
        %v4103 = vlaneseq
        %v4104 = vshrl.u32 %v4103, 7
        %v4105 = vsub.s32 %v4102, %v4104
        %v4106 = vrot.slane %v4099, %v4105
        %v4108 = vunpack.c.l.s4 1966171168
        %v4109 = vunpack.c.0.s8 %v4108
        %v4110 = vlaneseq
        %v4111 = vshrl.u32 %v4110, 7
        %v4112 = vsub.s32 %v4109, %v4111
        %v4113 = vrot.slane %v3678, %v4112
        %v4114 = vcombine.low %v4106, %v4113
        %v4116 = vunpack.c.l.s4 1966171168
        %v4117 = vunpack.c.0.s8 %v4116
        %v4118 = vlaneseq
        %v4119 = vshrl.u32 %v4118, 7
        %v4120 = vsub.s32 %v4117, %v4119
        %v4121 = vrot.slane %v4114, %v4120
        %v4122 = vcombine.low %v3686, %v3688
        %v4124 = vunpack.c.l.s4 1966171168
        %v4125 = vunpack.c.0.s8 %v4124
        %v4126 = vlaneseq
        %v4127 = vshrl.u32 %v4126, 7
        %v4128 = vsub.s32 %v4125, %v4127
        %v4129 = vrot.slane %v4122, %v4128
        %v4131 = vunpack.c.l.s4 1966171168
        %v4132 = vunpack.c.0.s8 %v4131
        %v4133 = vlaneseq
        %v4134 = vshrl.u32 %v4133, 7
        %v4135 = vsub.s32 %v4132, %v4134
        %v4136 = vrot.slane %v3671, %v4135
        %v4137 = vcombine.low %v4129, %v4136
        %v4139 = vunpack.c.l.s4 1966171168
        %v4140 = vunpack.c.0.s8 %v4139
        %v4141 = vlaneseq
        %v4142 = vshrl.u32 %v4141, 7
        %v4143 = vsub.s32 %v4140, %v4142
        %v4144 = vrot.slane %v4137, %v4143
        %v4145 = vcombine.low %v3685, %v3687
        %v4147 = vunpack.c.l.s4 1966171168
        %v4148 = vunpack.c.0.s8 %v4147
        %v4149 = vlaneseq
        %v4150 = vshrl.u32 %v4149, 7
        %v4151 = vsub.s32 %v4148, %v4150
        %v4152 = vrot.slane %v4145, %v4151
        %v4154 = vunpack.c.l.s4 1966171168
        %v4155 = vunpack.c.0.s8 %v4154
        %v4156 = vlaneseq
        %v4157 = vshrl.u32 %v4156, 7
        %v4158 = vsub.s32 %v4155, %v4157
        %v4159 = vrot.slane %v3689, %v4158
        %v4160 = vcombine.low %v4152, %v4159
        %v4162 = vunpack.c.l.s4 1966171168
        %v4163 = vunpack.c.0.s8 %v4162
        %v4164 = vlaneseq
        %v4165 = vshrl.u32 %v4164, 7
        %v4166 = vsub.s32 %v4163, %v4165
        %v4167 = vrot.slane %v4160, %v4166
        %v4168 = vcombine.low %v3713, %v3727
        %v4170 = vunpack.c.l.s4 1966171168
        %v4171 = vunpack.c.0.s8 %v4170
        %v4172 = vlaneseq
        %v4173 = vshrl.u32 %v4172, 7
        %v4174 = vsub.s32 %v4171, %v4173
        %v4175 = vrot.slane %v4168, %v4174
        %v4177 = vunpack.c.l.s4 1966171168
        %v4178 = vunpack.c.0.s8 %v4177
        %v4179 = vlaneseq
        %v4180 = vshrl.u32 %v4179, 7
        %v4181 = vsub.s32 %v4178, %v4180
        %v4182 = vrot.slane %v3735, %v4181
        %v4183 = vcombine.low %v4175, %v4182
        %v4185 = vunpack.c.l.s4 1966171168
        %v4186 = vunpack.c.0.s8 %v4185
        %v4187 = vlaneseq
        %v4188 = vshrl.u32 %v4187, 7
        %v4189 = vsub.s32 %v4186, %v4188
        %v4190 = vrot.slane %v4183, %v4189
        %v4191 = vcombine.low %v3737, %v3720
        %v4193 = vunpack.c.l.s4 1966171168
        %v4194 = vunpack.c.0.s8 %v4193
        %v4195 = vlaneseq
        %v4196 = vshrl.u32 %v4195, 7
        %v4197 = vsub.s32 %v4194, %v4196
        %v4198 = vrot.slane %v4191, %v4197
        %v4200 = vunpack.c.l.s4 1966171168
        %v4201 = vunpack.c.0.s8 %v4200
        %v4202 = vlaneseq
        %v4203 = vshrl.u32 %v4202, 7
        %v4204 = vsub.s32 %v4201, %v4203
        %v4205 = vrot.slane %v3734, %v4204
        %v4206 = vcombine.low %v4198, %v4205
        %v4208 = vunpack.c.l.s4 1966171168
        %v4209 = vunpack.c.0.s8 %v4208
        %v4210 = vlaneseq
        %v4211 = vshrl.u32 %v4210, 7
        %v4212 = vsub.s32 %v4209, %v4211
        %v4213 = vrot.slane %v4206, %v4212
        %v4214 = vcombine.low %v3736, %v3738
        %v4216 = vunpack.c.l.s4 1966171168
        %v4217 = vunpack.c.0.s8 %v4216
        %v4218 = vlaneseq
        %v4219 = vshrl.u32 %v4218, 7
        %v4220 = vsub.s32 %v4217, %v4219
        %v4221 = vrot.slane %v4214, %v4220
        %v4223 = vunpack.c.l.s4 1966171168
        %v4224 = vunpack.c.0.s8 %v4223
        %v4225 = vlaneseq
        %v4226 = vshrl.u32 %v4225, 7
        %v4227 = vsub.s32 %v4224, %v4226
        %v4228 = vrot.slane %v3762, %v4227
        %v4229 = vcombine.low %v4221, %v4228
        %v4231 = vunpack.c.l.s4 1966171168
        %v4232 = vunpack.c.0.s8 %v4231
        %v4233 = vlaneseq
        %v4234 = vshrl.u32 %v4233, 7
        %v4235 = vsub.s32 %v4232, %v4234
        %v4236 = vrot.slane %v4229, %v4235
        %v4237 = vcombine.low %v3776, %v3784
        %v4239 = vunpack.c.l.s4 1966171168
        %v4240 = vunpack.c.0.s8 %v4239
        %v4241 = vlaneseq
        %v4242 = vshrl.u32 %v4241, 7
        %v4243 = vsub.s32 %v4240, %v4242
        %v4244 = vrot.slane %v4237, %v4243
        %v4246 = vunpack.c.l.s4 1966171168
        %v4247 = vunpack.c.0.s8 %v4246
        %v4248 = vlaneseq
        %v4249 = vshrl.u32 %v4248, 7
        %v4250 = vsub.s32 %v4247, %v4249
        %v4251 = vrot.slane %v3786, %v4250
        %v4252 = vcombine.low %v4244, %v4251
        %v4254 = vunpack.c.l.s4 1966171168
        %v4255 = vunpack.c.0.s8 %v4254
        %v4256 = vlaneseq
        %v4257 = vshrl.u32 %v4256, 7
        %v4258 = vsub.s32 %v4255, %v4257
        %v4259 = vrot.slane %v4252, %v4258
        %v4260 = vcombine.low %v3769, %v3783
        %v4262 = vunpack.c.l.s4 1966171168
        %v4263 = vunpack.c.0.s8 %v4262
        %v4264 = vlaneseq
        %v4265 = vshrl.u32 %v4264, 7
        %v4266 = vsub.s32 %v4263, %v4265
        %v4267 = vrot.slane %v4260, %v4266
        %v4269 = vunpack.c.l.s4 1966171168
        %v4270 = vunpack.c.0.s8 %v4269
        %v4271 = vlaneseq
        %v4272 = vshrl.u32 %v4271, 7
        %v4273 = vsub.s32 %v4270, %v4272
        %v4274 = vrot.slane %v3785, %v4273
        %v4275 = vcombine.low %v4267, %v4274
        %v4277 = vunpack.c.l.s4 1966171168
        %v4278 = vunpack.c.0.s8 %v4277
        %v4279 = vlaneseq
        %v4280 = vshrl.u32 %v4279, 7
        %v4281 = vsub.s32 %v4278, %v4280
        %v4282 = vrot.slane %v4275, %v4281
        %v4283 = vcombine.low %v3787, %v3811
        %v4285 = vunpack.c.l.s4 1966171168
        %v4286 = vunpack.c.0.s8 %v4285
        %v4287 = vlaneseq
        %v4288 = vshrl.u32 %v4287, 7
        %v4289 = vsub.s32 %v4286, %v4288
        %v4290 = vrot.slane %v4283, %v4289
        %v4292 = vunpack.c.l.s4 1966171168
        %v4293 = vunpack.c.0.s8 %v4292
        %v4294 = vlaneseq
        %v4295 = vshrl.u32 %v4294, 7
        %v4296 = vsub.s32 %v4293, %v4295
        %v4297 = vrot.slane %v3825, %v4296
        %v4298 = vcombine.low %v4290, %v4297
        %v4300 = vunpack.c.l.s4 1966171168
        %v4301 = vunpack.c.0.s8 %v4300
        %v4302 = vlaneseq
        %v4303 = vshrl.u32 %v4302, 7
        %v4304 = vsub.s32 %v4301, %v4303
        %v4305 = vrot.slane %v4298, %v4304
        %v4306 = vcombine.low %v3833, %v3835
        %v4308 = vunpack.c.l.s4 1966171168
        %v4309 = vunpack.c.0.s8 %v4308
        %v4310 = vlaneseq
        %v4311 = vshrl.u32 %v4310, 7
        %v4312 = vsub.s32 %v4309, %v4311
        %v4313 = vrot.slane %v4306, %v4312
        %v4315 = vunpack.c.l.s4 1966171168
        %v4316 = vunpack.c.0.s8 %v4315
        %v4317 = vlaneseq
        %v4318 = vshrl.u32 %v4317, 7
        %v4319 = vsub.s32 %v4316, %v4318
        %v4320 = vrot.slane %v3818, %v4319
        %v4321 = vcombine.low %v4313, %v4320
        %v4323 = vunpack.c.l.s4 1966171168
        %v4324 = vunpack.c.0.s8 %v4323
        %v4325 = vlaneseq
        %v4326 = vshrl.u32 %v4325, 7
        %v4327 = vsub.s32 %v4324, %v4326
        %v4328 = vrot.slane %v4321, %v4327
        %v4329 = vcombine.low %v3832, %v3834
        %v4331 = vunpack.c.l.s4 1966171168
        %v4332 = vunpack.c.0.s8 %v4331
        %v4333 = vlaneseq
        %v4334 = vshrl.u32 %v4333, 7
        %v4335 = vsub.s32 %v4332, %v4334
        %v4336 = vrot.slane %v4329, %v4335
        %v4338 = vunpack.c.l.s4 1966171168
        %v4339 = vunpack.c.0.s8 %v4338
        %v4340 = vlaneseq
        %v4341 = vshrl.u32 %v4340, 7
        %v4342 = vsub.s32 %v4339, %v4341
        %v4343 = vrot.slane %v3836, %v4342
        %v4344 = vcombine.low %v4336, %v4343
        %v4346 = vunpack.c.l.s4 1966171168
        %v4347 = vunpack.c.0.s8 %v4346
        %v4348 = vlaneseq
        %v4349 = vshrl.u32 %v4348, 7
        %v4350 = vsub.s32 %v4347, %v4349
        %v4351 = vrot.slane %v4344, %v4350
        %v4352 = vcombine.low %v3860, %v3874
        %v4354 = vunpack.c.l.s4 1966171168
        %v4355 = vunpack.c.0.s8 %v4354
        %v4356 = vlaneseq
        %v4357 = vshrl.u32 %v4356, 7
        %v4358 = vsub.s32 %v4355, %v4357
        %v4359 = vrot.slane %v4352, %v4358
        %v4361 = vunpack.c.l.s4 1966171168
        %v4362 = vunpack.c.0.s8 %v4361
        %v4363 = vlaneseq
        %v4364 = vshrl.u32 %v4363, 7
        %v4365 = vsub.s32 %v4362, %v4364
        %v4366 = vrot.slane %v3882, %v4365
        %v4367 = vcombine.low %v4359, %v4366
        %v4369 = vunpack.c.l.s4 1966171168
        %v4370 = vunpack.c.0.s8 %v4369
        %v4371 = vlaneseq
        %v4372 = vshrl.u32 %v4371, 7
        %v4373 = vsub.s32 %v4370, %v4372
        %v4374 = vrot.slane %v4367, %v4373
        %v4375 = vcombine.low %v3884, %v3867
        %v4377 = vunpack.c.l.s4 1966171168
        %v4378 = vunpack.c.0.s8 %v4377
        %v4379 = vlaneseq
        %v4380 = vshrl.u32 %v4379, 7
        %v4381 = vsub.s32 %v4378, %v4380
        %v4382 = vrot.slane %v4375, %v4381
        %v4384 = vunpack.c.l.s4 1966171168
        %v4385 = vunpack.c.0.s8 %v4384
        %v4386 = vlaneseq
        %v4387 = vshrl.u32 %v4386, 7
        %v4388 = vsub.s32 %v4385, %v4387
        %v4389 = vrot.slane %v3881, %v4388
        %v4390 = vcombine.low %v4382, %v4389
        %v4392 = vunpack.c.l.s4 1966171168
        %v4393 = vunpack.c.0.s8 %v4392
        %v4394 = vlaneseq
        %v4395 = vshrl.u32 %v4394, 7
        %v4396 = vsub.s32 %v4393, %v4395
        %v4397 = vrot.slane %v4390, %v4396
        %v4398 = vcombine.low %v3883, %v3885
        %v4400 = vunpack.c.l.s4 1966171168
        %v4401 = vunpack.c.0.s8 %v4400
        %v4402 = vlaneseq
        %v4403 = vshrl.u32 %v4402, 7
        %v4404 = vsub.s32 %v4401, %v4403
        %v4405 = vrot.slane %v4398, %v4404
        %v4407 = vunpack.c.l.s4 1966171168
        %v4408 = vunpack.c.0.s8 %v4407
        %v4409 = vlaneseq
        %v4410 = vshrl.u32 %v4409, 7
        %v4411 = vsub.s32 %v4408, %v4410
        %v4412 = vrot.slane %v3909, %v4411
        %v4413 = vcombine.low %v4405, %v4412
        %v4415 = vunpack.c.l.s4 1966171168
        %v4416 = vunpack.c.0.s8 %v4415
        %v4417 = vlaneseq
        %v4418 = vshrl.u32 %v4417, 7
        %v4419 = vsub.s32 %v4416, %v4418
        %v4420 = vrot.slane %v4413, %v4419
        %v4421 = vcombine.low %v3923, %v3931
        %v4423 = vunpack.c.l.s4 1966171168
        %v4424 = vunpack.c.0.s8 %v4423
        %v4425 = vlaneseq
        %v4426 = vshrl.u32 %v4425, 7
        %v4427 = vsub.s32 %v4424, %v4426
        %v4428 = vrot.slane %v4421, %v4427
        %v4430 = vunpack.c.l.s4 1966171168
        %v4431 = vunpack.c.0.s8 %v4430
        %v4432 = vlaneseq
        %v4433 = vshrl.u32 %v4432, 7
        %v4434 = vsub.s32 %v4431, %v4433
        %v4435 = vrot.slane %v3933, %v4434
        %v4436 = vcombine.low %v4428, %v4435
        %v4438 = vunpack.c.l.s4 1966171168
        %v4439 = vunpack.c.0.s8 %v4438
        %v4440 = vlaneseq
        %v4441 = vshrl.u32 %v4440, 7
        %v4442 = vsub.s32 %v4439, %v4441
        %v4443 = vrot.slane %v4436, %v4442
        %v4444 = vcombine.low %v3916, %v3930
        %v4446 = vunpack.c.l.s4 1966171168
        %v4447 = vunpack.c.0.s8 %v4446
        %v4448 = vlaneseq
        %v4449 = vshrl.u32 %v4448, 7
        %v4450 = vsub.s32 %v4447, %v4449
        %v4451 = vrot.slane %v4444, %v4450
        %v4453 = vunpack.c.l.s4 1966171168
        %v4454 = vunpack.c.0.s8 %v4453
        %v4455 = vlaneseq
        %v4456 = vshrl.u32 %v4455, 7
        %v4457 = vsub.s32 %v4454, %v4456
        %v4458 = vrot.slane %v3932, %v4457
        %v4459 = vcombine.low %v4451, %v4458
        %v4461 = vunpack.c.l.s4 1966171168
        %v4462 = vunpack.c.0.s8 %v4461
        %v4463 = vlaneseq
        %v4464 = vshrl.u32 %v4463, 7
        %v4465 = vsub.s32 %v4462, %v4464
        %v4466 = vrot.slane %v4459, %v4465
        %v4467 = vcombine.low %v3934, %v3958
        %v4469 = vunpack.c.l.s4 1966171168
        %v4470 = vunpack.c.0.s8 %v4469
        %v4471 = vlaneseq
        %v4472 = vshrl.u32 %v4471, 7
        %v4473 = vsub.s32 %v4470, %v4472
        %v4474 = vrot.slane %v4467, %v4473
        %v4476 = vunpack.c.l.s4 1966171168
        %v4477 = vunpack.c.0.s8 %v4476
        %v4478 = vlaneseq
        %v4479 = vshrl.u32 %v4478, 7
        %v4480 = vsub.s32 %v4477, %v4479
        %v4481 = vrot.slane %v3972, %v4480
        %v4482 = vcombine.low %v4474, %v4481
        %v4484 = vunpack.c.l.s4 1966171168
        %v4485 = vunpack.c.0.s8 %v4484
        %v4486 = vlaneseq
        %v4487 = vshrl.u32 %v4486, 7
        %v4488 = vsub.s32 %v4485, %v4487
        %v4489 = vrot.slane %v4482, %v4488
        %v4490 = vcombine.low %v3980, %v3982
        %v4492 = vunpack.c.l.s4 1966171168
        %v4493 = vunpack.c.0.s8 %v4492
        %v4494 = vlaneseq
        %v4495 = vshrl.u32 %v4494, 7
        %v4496 = vsub.s32 %v4493, %v4495
        %v4497 = vrot.slane %v4490, %v4496
        %v4499 = vunpack.c.l.s4 1966171168
        %v4500 = vunpack.c.0.s8 %v4499
        %v4501 = vlaneseq
        %v4502 = vshrl.u32 %v4501, 7
        %v4503 = vsub.s32 %v4500, %v4502
        %v4504 = vrot.slane %v3965, %v4503
        %v4505 = vcombine.low %v4497, %v4504
        %v4507 = vunpack.c.l.s4 1966171168
        %v4508 = vunpack.c.0.s8 %v4507
        %v4509 = vlaneseq
        %v4510 = vshrl.u32 %v4509, 7
        %v4511 = vsub.s32 %v4508, %v4510
        %v4512 = vrot.slane %v4505, %v4511
        %v4513 = vcombine.low %v3979, %v3981
        %v4515 = vunpack.c.l.s4 1966171168
        %v4516 = vunpack.c.0.s8 %v4515
        %v4517 = vlaneseq
        %v4518 = vshrl.u32 %v4517, 7
        %v4519 = vsub.s32 %v4516, %v4518
        %v4520 = vrot.slane %v4513, %v4519
        %v4522 = vunpack.c.l.s4 1966171168
        %v4523 = vunpack.c.0.s8 %v4522
        %v4524 = vlaneseq
        %v4525 = vshrl.u32 %v4524, 7
        %v4526 = vsub.s32 %v4523, %v4525
        %v4527 = vrot.slane %v3983, %v4526
        %v4528 = vcombine.low %v4520, %v4527
        %v4530 = vunpack.c.l.s4 1966171168
        %v4531 = vunpack.c.0.s8 %v4530
        %v4532 = vlaneseq
        %v4533 = vshrl.u32 %v4532, 7
        %v4534 = vsub.s32 %v4531, %v4533
        %v4535 = vrot.slane %v4528, %v4534
        %vm4560 = vcmask 1042432
        %v4561 = vsel %vm4560, %v4006, -inf
        %v4562 = vrot.slane %v4561, 4
        %v4563 = vmax.f32 %v4561, %v4562
        %v4564 = vrot.slane %v4563, 2
        %v4565 = vmax.f32 %v4563, %v4564
        %v4566 = vrot.slane %v4565, 1
        %v4567 = vmax.f32 %v4565, %v4566
        %v4568 = vsel %vm4560, %v4029, -inf
        %v4569 = vrot.slane %v4568, 4
        %v4570 = vmax.f32 %v4568, %v4569
        %v4571 = vrot.slane %v4570, 2
        %v4572 = vmax.f32 %v4570, %v4571
        %v4573 = vrot.slane %v4572, 1
        %v4574 = vmax.f32 %v4572, %v4573
        %v4575 = vsel %vm4560, %v4052, -inf
        %v4576 = vrot.slane %v4575, 4
        %v4577 = vmax.f32 %v4575, %v4576
        %v4578 = vrot.slane %v4577, 2
        %v4579 = vmax.f32 %v4577, %v4578
        %v4580 = vrot.slane %v4579, 1
        %v4581 = vmax.f32 %v4579, %v4580
        %v4582 = vsel %vm4560, %v4075, -inf
        %v4583 = vrot.slane %v4582, 4
        %v4584 = vmax.f32 %v4582, %v4583
        %v4585 = vrot.slane %v4584, 2
        %v4586 = vmax.f32 %v4584, %v4585
        %v4587 = vrot.slane %v4586, 1
        %v4588 = vmax.f32 %v4586, %v4587
        %v4589 = vsel %vm4560, %v4098, -inf
        %v4590 = vrot.slane %v4589, 4
        %v4591 = vmax.f32 %v4589, %v4590
        %v4592 = vrot.slane %v4591, 2
        %v4593 = vmax.f32 %v4591, %v4592
        %v4594 = vrot.slane %v4593, 1
        %v4595 = vmax.f32 %v4593, %v4594
        %v4596 = vsel %vm4560, %v4121, -inf
        %v4597 = vrot.slane %v4596, 4
        %v4598 = vmax.f32 %v4596, %v4597
        %v4599 = vrot.slane %v4598, 2
        %v4600 = vmax.f32 %v4598, %v4599
        %v4601 = vrot.slane %v4600, 1
        %v4602 = vmax.f32 %v4600, %v4601
        %v4603 = vsel %vm4560, %v4144, -inf
        %v4604 = vrot.slane %v4603, 4
        %v4605 = vmax.f32 %v4603, %v4604
        %v4606 = vrot.slane %v4605, 2
        %v4607 = vmax.f32 %v4605, %v4606
        %v4608 = vrot.slane %v4607, 1
        %v4609 = vmax.f32 %v4607, %v4608
        %v4610 = vsel %vm4560, %v4167, -inf
        %v4611 = vrot.slane %v4610, 4
        %v4612 = vmax.f32 %v4610, %v4611
        %v4613 = vrot.slane %v4612, 2
        %v4614 = vmax.f32 %v4612, %v4613
        %v4615 = vrot.slane %v4614, 1
        %v4616 = vmax.f32 %v4614, %v4615
        %v4617 = vsel %vm4560, %v4190, -inf
        %v4618 = vrot.slane %v4617, 4
        %v4619 = vmax.f32 %v4617, %v4618
        %v4620 = vrot.slane %v4619, 2
        %v4621 = vmax.f32 %v4619, %v4620
        %v4622 = vrot.slane %v4621, 1
        %v4623 = vmax.f32 %v4621, %v4622
        %v4624 = vsel %vm4560, %v4213, -inf
        %v4625 = vrot.slane %v4624, 4
        %v4626 = vmax.f32 %v4624, %v4625
        %v4627 = vrot.slane %v4626, 2
        %v4628 = vmax.f32 %v4626, %v4627
        %v4629 = vrot.slane %v4628, 1
        %v4630 = vmax.f32 %v4628, %v4629
        %v4631 = vsel %vm4560, %v4236, -inf
        %v4632 = vrot.slane %v4631, 4
        %v4633 = vmax.f32 %v4631, %v4632
        %v4634 = vrot.slane %v4633, 2
        %v4635 = vmax.f32 %v4633, %v4634
        %v4636 = vrot.slane %v4635, 1
        %v4637 = vmax.f32 %v4635, %v4636
        %v4638 = vsel %vm4560, %v4259, -inf
        %v4639 = vrot.slane %v4638, 4
        %v4640 = vmax.f32 %v4638, %v4639
        %v4641 = vrot.slane %v4640, 2
        %v4642 = vmax.f32 %v4640, %v4641
        %v4643 = vrot.slane %v4642, 1
        %v4644 = vmax.f32 %v4642, %v4643
        %v4645 = vsel %vm4560, %v4282, -inf
        %v4646 = vrot.slane %v4645, 4
        %v4647 = vmax.f32 %v4645, %v4646
        %v4648 = vrot.slane %v4647, 2
        %v4649 = vmax.f32 %v4647, %v4648
        %v4650 = vrot.slane %v4649, 1
        %v4651 = vmax.f32 %v4649, %v4650
        %v4652 = vsel %vm4560, %v4305, -inf
        %v4653 = vrot.slane %v4652, 4
        %v4654 = vmax.f32 %v4652, %v4653
        %v4655 = vrot.slane %v4654, 2
        %v4656 = vmax.f32 %v4654, %v4655
        %v4657 = vrot.slane %v4656, 1
        %v4658 = vmax.f32 %v4656, %v4657
        %v4659 = vsel %vm4560, %v4328, -inf
        %v4660 = vrot.slane %v4659, 4
        %v4661 = vmax.f32 %v4659, %v4660
        %v4662 = vrot.slane %v4661, 2
        %v4663 = vmax.f32 %v4661, %v4662
        %v4664 = vrot.slane %v4663, 1
        %v4665 = vmax.f32 %v4663, %v4664
        %v4666 = vsel %vm4560, %v4351, -inf
        %v4667 = vrot.slane %v4666, 4
        %v4668 = vmax.f32 %v4666, %v4667
        %v4669 = vrot.slane %v4668, 2
        %v4670 = vmax.f32 %v4668, %v4669
        %v4671 = vrot.slane %v4670, 1
        %v4672 = vmax.f32 %v4670, %v4671
        %v4673 = vsel %vm4560, %v4374, -inf
        %v4674 = vrot.slane %v4673, 4
        %v4675 = vmax.f32 %v4673, %v4674
        %v4676 = vrot.slane %v4675, 2
        %v4677 = vmax.f32 %v4675, %v4676
        %v4678 = vrot.slane %v4677, 1
        %v4679 = vmax.f32 %v4677, %v4678
        %v4680 = vsel %vm4560, %v4397, -inf
        %v4681 = vrot.slane %v4680, 4
        %v4682 = vmax.f32 %v4680, %v4681
        %v4683 = vrot.slane %v4682, 2
        %v4684 = vmax.f32 %v4682, %v4683
        %v4685 = vrot.slane %v4684, 1
        %v4686 = vmax.f32 %v4684, %v4685
        %v4687 = vsel %vm4560, %v4420, -inf
        %v4688 = vrot.slane %v4687, 4
        %v4689 = vmax.f32 %v4687, %v4688
        %v4690 = vrot.slane %v4689, 2
        %v4691 = vmax.f32 %v4689, %v4690
        %v4692 = vrot.slane %v4691, 1
        %v4693 = vmax.f32 %v4691, %v4692
        %v4694 = vsel %vm4560, %v4443, -inf
        %v4695 = vrot.slane %v4694, 4
        %v4696 = vmax.f32 %v4694, %v4695
        %v4697 = vrot.slane %v4696, 2
        %v4698 = vmax.f32 %v4696, %v4697
        %v4699 = vrot.slane %v4698, 1
        %v4700 = vmax.f32 %v4698, %v4699
        %v4701 = vsel %vm4560, %v4466, -inf
        %v4702 = vrot.slane %v4701, 4
        %v4703 = vmax.f32 %v4701, %v4702
        %v4704 = vrot.slane %v4703, 2
        %v4705 = vmax.f32 %v4703, %v4704
        %v4706 = vrot.slane %v4705, 1
        %v4707 = vmax.f32 %v4705, %v4706
        %v4708 = vsel %vm4560, %v4489, -inf
        %v4709 = vrot.slane %v4708, 4
        %v4710 = vmax.f32 %v4708, %v4709
        %v4711 = vrot.slane %v4710, 2
        %v4712 = vmax.f32 %v4710, %v4711
        %v4713 = vrot.slane %v4712, 1
        %v4714 = vmax.f32 %v4712, %v4713
        %v4715 = vsel %vm4560, %v4512, -inf
        %v4716 = vrot.slane %v4715, 4
        %v4717 = vmax.f32 %v4715, %v4716
        %v4718 = vrot.slane %v4717, 2
        %v4719 = vmax.f32 %v4717, %v4718
        %v4720 = vrot.slane %v4719, 1
        %v4721 = vmax.f32 %v4719, %v4720
        %v4722 = vsel %vm4560, %v4535, -inf
        %v4723 = vrot.slane %v4722, 4
        %v4724 = vmax.f32 %v4722, %v4723
        %v4725 = vrot.slane %v4724, 2
        %v4726 = vmax.f32 %v4724, %v4725
        %v4727 = vrot.slane %v4726, 1
        %v4728 = vmax.f32 %v4726, %v4727
        %v4729 = vpack.c.bf16 %v4567, %v4567
        %v4730 = vpack.c.bf16 %v4574, %v4574
        %v4731 = vpack.c.bf16 %v4581, %v4581
        %v4732 = vpack.c.bf16 %v4588, %v4588
        %v4733 = vpack.c.bf16 %v4595, %v4595
        %v4734 = vpack.c.bf16 %v4602, %v4602
        %v4735 = vpack.c.bf16 %v4609, %v4609
        %v4736 = vpack.c.bf16 %v4616, %v4616
        %v4737 = vpack.c.bf16 %v4623, %v4623
        %v4738 = vpack.c.bf16 %v4630, %v4630
        %v4739 = vpack.c.bf16 %v4637, %v4637
        %v4740 = vpack.c.bf16 %v4644, %v4644
        %v4741 = vpack.c.bf16 %v4651, %v4651
        %v4742 = vpack.c.bf16 %v4658, %v4658
        %v4743 = vpack.c.bf16 %v4665, %v4665
        %v4744 = vpack.c.bf16 %v4672, %v4672
        %v4745 = vpack.c.bf16 %v4679, %v4679
        %v4746 = vpack.c.bf16 %v4686, %v4686
        %v4747 = vpack.c.bf16 %v4693, %v4693
        %v4748 = vpack.c.bf16 %v4700, %v4700
        %v4749 = vpack.c.bf16 %v4707, %v4707
        %v4750 = vpack.c.bf16 %v4714, %v4714
        %v4751 = vpack.c.bf16 %v4721, %v4721
        %v4752 = vpack.c.bf16 %v4728, %v4728
        %v4777 = vunpack.c.l.b16 %v4729
        %v4778 = vunpack.c.l.b16 %v4730
        %v4779 = vunpack.c.l.b16 %v4731
        %v4780 = vunpack.c.l.b16 %v4732
        %v4781 = vunpack.c.l.b16 %v4733
        %v4782 = vunpack.c.l.b16 %v4734
        %v4783 = vunpack.c.l.b16 %v4735
        %v4784 = vunpack.c.l.b16 %v4736
        %v4785 = vunpack.c.l.b16 %v4737
        %v4786 = vunpack.c.l.b16 %v4738
        %v4787 = vunpack.c.l.b16 %v4739
        %v4788 = vunpack.c.l.b16 %v4740
        %v4789 = vunpack.c.l.b16 %v4741
        %v4790 = vunpack.c.l.b16 %v4742
        %v4791 = vunpack.c.l.b16 %v4743
        %v4792 = vunpack.c.l.b16 %v4744
        %v4793 = vunpack.c.l.b16 %v4745
        %v4794 = vunpack.c.l.b16 %v4746
        %v4795 = vunpack.c.l.b16 %v4747
        %v4796 = vunpack.c.l.b16 %v4748
        %v4797 = vunpack.c.l.b16 %v4749
        %v4798 = vunpack.c.l.b16 %v4750
        %v4799 = vunpack.c.l.b16 %v4751
        %v4800 = vunpack.c.l.b16 %v4752
        %vm4801 = vcmask 1041409
        %v4802 = vsel %vm4801, %v4778, %v4777
        %vm4803 = vcmask 1042434
        %v4804 = vsel %vm4803, %v4779, %v4802
        %vm4805 = vcmask 1043459
        %v4806 = vsel %vm4805, %v4780, %v4804
        %vm4807 = vcmask 1044484
        %v4808 = vsel %vm4807, %v4781, %v4806
        %vm4809 = vcmask 1045509
        %v4810 = vsel %vm4809, %v4782, %v4808
        %vm4811 = vcmask 1046534
        %v4812 = vsel %vm4811, %v4783, %v4810
        %vm4813 = vcmask 1047559
        %v4814 = vsel %vm4813, %v4784, %v4812
        %v4815 = vsel %vm4801, %v4786, %v4785
        %v4816 = vsel %vm4803, %v4787, %v4815
        %v4817 = vsel %vm4805, %v4788, %v4816
        %v4818 = vsel %vm4807, %v4789, %v4817
        %v4819 = vsel %vm4809, %v4790, %v4818
        %v4820 = vsel %vm4811, %v4791, %v4819
        %v4821 = vsel %vm4813, %v4792, %v4820
        %v4822 = vsel %vm4801, %v4794, %v4793
        %v4823 = vsel %vm4803, %v4795, %v4822
        %v4824 = vsel %vm4805, %v4796, %v4823
        %v4825 = vsel %vm4807, %v4797, %v4824
        %v4826 = vsel %vm4809, %v4798, %v4825
        %v4827 = vsel %vm4811, %v4799, %v4826
        %v4828 = vsel %vm4813, %v4800, %v4827
        %v4829 = vpack.c.b16 %v4821, %v4814
        %v4830 = vpack.c.b16 %v4828, %v4828
        %4833 = vst [vmem:[#allocation4] sm:$0xff] %v4829
        %4834 = vst [vmem:[#allocation4 + $0x8] sm:$0xf] %v4830
        %v4835 = vld [vmem:[#allocation3 + $0x28] sm:$0xf0]
        %v4836 = vld [vmem:[#allocation3 + $0x30] sm:$0xff]
        %v4837 = vld [vmem:[#allocation3 + $0x38] sm:$0xff]
        %v4838 = vld [vmem:[#allocation3 + $0x40] sm:$0xff]
        %v4839 = vld [vmem:[#allocation3 + $0x48] sm:$0xff]
        %v4845 = vrot.slane %v4835, 4
        %v4846 = vrot.slane %v4836, 4
        %v4847 = vsel %vm2944, %v4845, %v4846
        %v4848 = vrot.slane %v4837, 4
        %v4849 = vsel %vm2944, %v4846, %v4848
        %v4850 = vrot.slane %v4838, 4
        %v4851 = vsel %vm2944, %v4848, %v4850
        %v4852 = vrot.slane %v4839, 4
        %v4853 = vsel %vm2944, %v4850, %v4852
        %v4859 = vunpack.c.l.bf16 %v4847
        %v4860 = vunpack.c.h.bf16 %v4847
        %v4861 = vunpack.c.l.bf16 %v4849
        %v4862 = vunpack.c.h.bf16 %v4849
        %v4863 = vunpack.c.l.bf16 %v4851
        %v4864 = vunpack.c.h.bf16 %v4851
        %v4865 = vunpack.c.l.bf16 %v4853
        %v4866 = vunpack.c.h.bf16 %v4853
        %v4867 = vunpack.c.l.bf16 %v4852
        %v4877 = vcombine.high %v4859, %v4859
        %v4879 = vunpack.c.l.s4 1966171168
        %v4880 = vunpack.c.0.s8 %v4879
        %v4881 = vlaneseq
        %v4882 = vshrl.u32 %v4881, 7
        %v4883 = vsub.s32 %v4880, %v4882
        %v4884 = vrot.slane %v4859, %v4883
        %v4886 = vunpack.c.l.s4 1966171168
        %v4887 = vunpack.c.0.s8 %v4886
        %v4888 = vlaneseq
        %v4889 = vshrl.u32 %v4888, 7
        %v4890 = vsub.s32 %v4887, %v4889
        %v4891 = vrot.slane %v4877, %v4890
        %v4892 = vcombine.high %v4884, %v4884
        %v4893 = vcombine.high %v4891, %v4891
        %v4895 = vunpack.c.l.s4 1966171168
        %v4896 = vunpack.c.0.s8 %v4895
        %v4897 = vlaneseq
        %v4898 = vshrl.u32 %v4897, 7
        %v4899 = vsub.s32 %v4896, %v4898
        %v4900 = vrot.slane %v4884, %v4899
        %v4902 = vunpack.c.l.s4 1966171168
        %v4903 = vunpack.c.0.s8 %v4902
        %v4904 = vlaneseq
        %v4905 = vshrl.u32 %v4904, 7
        %v4906 = vsub.s32 %v4903, %v4905
        %v4907 = vrot.slane %v4891, %v4906
        %v4909 = vunpack.c.l.s4 1966171168
        %v4910 = vunpack.c.0.s8 %v4909
        %v4911 = vlaneseq
        %v4912 = vshrl.u32 %v4911, 7
        %v4913 = vsub.s32 %v4910, %v4912
        %v4914 = vrot.slane %v4892, %v4913
        %v4916 = vunpack.c.l.s4 1966171168
        %v4917 = vunpack.c.0.s8 %v4916
        %v4918 = vlaneseq
        %v4919 = vshrl.u32 %v4918, 7
        %v4920 = vsub.s32 %v4917, %v4919
        %v4921 = vrot.slane %v4893, %v4920
        %v4922 = vcombine.high %v4900, %v4900
        %v4923 = vcombine.high %v4907, %v4907
        %v4924 = vcombine.high %v4914, %v4914
        %v4925 = vcombine.high %v4921, %v4921
        %v4926 = vcombine.high %v4860, %v4860
        %v4928 = vunpack.c.l.s4 1966171168
        %v4929 = vunpack.c.0.s8 %v4928
        %v4930 = vlaneseq
        %v4931 = vshrl.u32 %v4930, 7
        %v4932 = vsub.s32 %v4929, %v4931
        %v4933 = vrot.slane %v4860, %v4932
        %v4935 = vunpack.c.l.s4 1966171168
        %v4936 = vunpack.c.0.s8 %v4935
        %v4937 = vlaneseq
        %v4938 = vshrl.u32 %v4937, 7
        %v4939 = vsub.s32 %v4936, %v4938
        %v4940 = vrot.slane %v4926, %v4939
        %v4941 = vcombine.high %v4933, %v4933
        %v4942 = vcombine.high %v4940, %v4940
        %v4944 = vunpack.c.l.s4 1966171168
        %v4945 = vunpack.c.0.s8 %v4944
        %v4946 = vlaneseq
        %v4947 = vshrl.u32 %v4946, 7
        %v4948 = vsub.s32 %v4945, %v4947
        %v4949 = vrot.slane %v4933, %v4948
        %v4951 = vunpack.c.l.s4 1966171168
        %v4952 = vunpack.c.0.s8 %v4951
        %v4953 = vlaneseq
        %v4954 = vshrl.u32 %v4953, 7
        %v4955 = vsub.s32 %v4952, %v4954
        %v4956 = vrot.slane %v4940, %v4955
        %v4958 = vunpack.c.l.s4 1966171168
        %v4959 = vunpack.c.0.s8 %v4958
        %v4960 = vlaneseq
        %v4961 = vshrl.u32 %v4960, 7
        %v4962 = vsub.s32 %v4959, %v4961
        %v4963 = vrot.slane %v4941, %v4962
        %v4965 = vunpack.c.l.s4 1966171168
        %v4966 = vunpack.c.0.s8 %v4965
        %v4967 = vlaneseq
        %v4968 = vshrl.u32 %v4967, 7
        %v4969 = vsub.s32 %v4966, %v4968
        %v4970 = vrot.slane %v4942, %v4969
        %v4971 = vcombine.high %v4949, %v4949
        %v4972 = vcombine.high %v4956, %v4956
        %v4973 = vcombine.high %v4963, %v4963
        %v4974 = vcombine.high %v4970, %v4970
        %v4975 = vcombine.high %v4861, %v4861
        %v4977 = vunpack.c.l.s4 1966171168
        %v4978 = vunpack.c.0.s8 %v4977
        %v4979 = vlaneseq
        %v4980 = vshrl.u32 %v4979, 7
        %v4981 = vsub.s32 %v4978, %v4980
        %v4982 = vrot.slane %v4861, %v4981
        %v4984 = vunpack.c.l.s4 1966171168
        %v4985 = vunpack.c.0.s8 %v4984
        %v4986 = vlaneseq
        %v4987 = vshrl.u32 %v4986, 7
        %v4988 = vsub.s32 %v4985, %v4987
        %v4989 = vrot.slane %v4975, %v4988
        %v4990 = vcombine.high %v4982, %v4982
        %v4991 = vcombine.high %v4989, %v4989
        %v4993 = vunpack.c.l.s4 1966171168
        %v4994 = vunpack.c.0.s8 %v4993
        %v4995 = vlaneseq
        %v4996 = vshrl.u32 %v4995, 7
        %v4997 = vsub.s32 %v4994, %v4996
        %v4998 = vrot.slane %v4982, %v4997
        %v5000 = vunpack.c.l.s4 1966171168
        %v5001 = vunpack.c.0.s8 %v5000
        %v5002 = vlaneseq
        %v5003 = vshrl.u32 %v5002, 7
        %v5004 = vsub.s32 %v5001, %v5003
        %v5005 = vrot.slane %v4989, %v5004
        %v5007 = vunpack.c.l.s4 1966171168
        %v5008 = vunpack.c.0.s8 %v5007
        %v5009 = vlaneseq
        %v5010 = vshrl.u32 %v5009, 7
        %v5011 = vsub.s32 %v5008, %v5010
        %v5012 = vrot.slane %v4990, %v5011
        %v5014 = vunpack.c.l.s4 1966171168
        %v5015 = vunpack.c.0.s8 %v5014
        %v5016 = vlaneseq
        %v5017 = vshrl.u32 %v5016, 7
        %v5018 = vsub.s32 %v5015, %v5017
        %v5019 = vrot.slane %v4991, %v5018
        %v5020 = vcombine.high %v4998, %v4998
        %v5021 = vcombine.high %v5005, %v5005
        %v5022 = vcombine.high %v5012, %v5012
        %v5023 = vcombine.high %v5019, %v5019
        %v5024 = vcombine.high %v4862, %v4862
        %v5026 = vunpack.c.l.s4 1966171168
        %v5027 = vunpack.c.0.s8 %v5026
        %v5028 = vlaneseq
        %v5029 = vshrl.u32 %v5028, 7
        %v5030 = vsub.s32 %v5027, %v5029
        %v5031 = vrot.slane %v4862, %v5030
        %v5033 = vunpack.c.l.s4 1966171168
        %v5034 = vunpack.c.0.s8 %v5033
        %v5035 = vlaneseq
        %v5036 = vshrl.u32 %v5035, 7
        %v5037 = vsub.s32 %v5034, %v5036
        %v5038 = vrot.slane %v5024, %v5037
        %v5039 = vcombine.high %v5031, %v5031
        %v5040 = vcombine.high %v5038, %v5038
        %v5042 = vunpack.c.l.s4 1966171168
        %v5043 = vunpack.c.0.s8 %v5042
        %v5044 = vlaneseq
        %v5045 = vshrl.u32 %v5044, 7
        %v5046 = vsub.s32 %v5043, %v5045
        %v5047 = vrot.slane %v5031, %v5046
        %v5049 = vunpack.c.l.s4 1966171168
        %v5050 = vunpack.c.0.s8 %v5049
        %v5051 = vlaneseq
        %v5052 = vshrl.u32 %v5051, 7
        %v5053 = vsub.s32 %v5050, %v5052
        %v5054 = vrot.slane %v5038, %v5053
        %v5056 = vunpack.c.l.s4 1966171168
        %v5057 = vunpack.c.0.s8 %v5056
        %v5058 = vlaneseq
        %v5059 = vshrl.u32 %v5058, 7
        %v5060 = vsub.s32 %v5057, %v5059
        %v5061 = vrot.slane %v5039, %v5060
        %v5063 = vunpack.c.l.s4 1966171168
        %v5064 = vunpack.c.0.s8 %v5063
        %v5065 = vlaneseq
        %v5066 = vshrl.u32 %v5065, 7
        %v5067 = vsub.s32 %v5064, %v5066
        %v5068 = vrot.slane %v5040, %v5067
        %v5069 = vcombine.high %v5047, %v5047
        %v5070 = vcombine.high %v5054, %v5054
        %v5071 = vcombine.high %v5061, %v5061
        %v5072 = vcombine.high %v5068, %v5068
        %v5073 = vcombine.high %v4863, %v4863
        %v5075 = vunpack.c.l.s4 1966171168
        %v5076 = vunpack.c.0.s8 %v5075
        %v5077 = vlaneseq
        %v5078 = vshrl.u32 %v5077, 7
        %v5079 = vsub.s32 %v5076, %v5078
        %v5080 = vrot.slane %v4863, %v5079
        %v5082 = vunpack.c.l.s4 1966171168
        %v5083 = vunpack.c.0.s8 %v5082
        %v5084 = vlaneseq
        %v5085 = vshrl.u32 %v5084, 7
        %v5086 = vsub.s32 %v5083, %v5085
        %v5087 = vrot.slane %v5073, %v5086
        %v5088 = vcombine.high %v5080, %v5080
        %v5089 = vcombine.high %v5087, %v5087
        %v5091 = vunpack.c.l.s4 1966171168
        %v5092 = vunpack.c.0.s8 %v5091
        %v5093 = vlaneseq
        %v5094 = vshrl.u32 %v5093, 7
        %v5095 = vsub.s32 %v5092, %v5094
        %v5096 = vrot.slane %v5080, %v5095
        %v5098 = vunpack.c.l.s4 1966171168
        %v5099 = vunpack.c.0.s8 %v5098
        %v5100 = vlaneseq
        %v5101 = vshrl.u32 %v5100, 7
        %v5102 = vsub.s32 %v5099, %v5101
        %v5103 = vrot.slane %v5087, %v5102
        %v5105 = vunpack.c.l.s4 1966171168
        %v5106 = vunpack.c.0.s8 %v5105
        %v5107 = vlaneseq
        %v5108 = vshrl.u32 %v5107, 7
        %v5109 = vsub.s32 %v5106, %v5108
        %v5110 = vrot.slane %v5088, %v5109
        %v5112 = vunpack.c.l.s4 1966171168
        %v5113 = vunpack.c.0.s8 %v5112
        %v5114 = vlaneseq
        %v5115 = vshrl.u32 %v5114, 7
        %v5116 = vsub.s32 %v5113, %v5115
        %v5117 = vrot.slane %v5089, %v5116
        %v5118 = vcombine.high %v5096, %v5096
        %v5119 = vcombine.high %v5103, %v5103
        %v5120 = vcombine.high %v5110, %v5110
        %v5121 = vcombine.high %v5117, %v5117
        %v5122 = vcombine.high %v4864, %v4864
        %v5124 = vunpack.c.l.s4 1966171168
        %v5125 = vunpack.c.0.s8 %v5124
        %v5126 = vlaneseq
        %v5127 = vshrl.u32 %v5126, 7
        %v5128 = vsub.s32 %v5125, %v5127
        %v5129 = vrot.slane %v4864, %v5128
        %v5131 = vunpack.c.l.s4 1966171168
        %v5132 = vunpack.c.0.s8 %v5131
        %v5133 = vlaneseq
        %v5134 = vshrl.u32 %v5133, 7
        %v5135 = vsub.s32 %v5132, %v5134
        %v5136 = vrot.slane %v5122, %v5135
        %v5137 = vcombine.high %v5129, %v5129
        %v5138 = vcombine.high %v5136, %v5136
        %v5140 = vunpack.c.l.s4 1966171168
        %v5141 = vunpack.c.0.s8 %v5140
        %v5142 = vlaneseq
        %v5143 = vshrl.u32 %v5142, 7
        %v5144 = vsub.s32 %v5141, %v5143
        %v5145 = vrot.slane %v5129, %v5144
        %v5147 = vunpack.c.l.s4 1966171168
        %v5148 = vunpack.c.0.s8 %v5147
        %v5149 = vlaneseq
        %v5150 = vshrl.u32 %v5149, 7
        %v5151 = vsub.s32 %v5148, %v5150
        %v5152 = vrot.slane %v5136, %v5151
        %v5154 = vunpack.c.l.s4 1966171168
        %v5155 = vunpack.c.0.s8 %v5154
        %v5156 = vlaneseq
        %v5157 = vshrl.u32 %v5156, 7
        %v5158 = vsub.s32 %v5155, %v5157
        %v5159 = vrot.slane %v5137, %v5158
        %v5161 = vunpack.c.l.s4 1966171168
        %v5162 = vunpack.c.0.s8 %v5161
        %v5163 = vlaneseq
        %v5164 = vshrl.u32 %v5163, 7
        %v5165 = vsub.s32 %v5162, %v5164
        %v5166 = vrot.slane %v5138, %v5165
        %v5167 = vcombine.high %v5145, %v5145
        %v5168 = vcombine.high %v5152, %v5152
        %v5169 = vcombine.high %v5159, %v5159
        %v5170 = vcombine.high %v5166, %v5166
        %v5171 = vcombine.high %v4865, %v4865
        %v5173 = vunpack.c.l.s4 1966171168
        %v5174 = vunpack.c.0.s8 %v5173
        %v5175 = vlaneseq
        %v5176 = vshrl.u32 %v5175, 7
        %v5177 = vsub.s32 %v5174, %v5176
        %v5178 = vrot.slane %v4865, %v5177
        %v5180 = vunpack.c.l.s4 1966171168
        %v5181 = vunpack.c.0.s8 %v5180
        %v5182 = vlaneseq
        %v5183 = vshrl.u32 %v5182, 7
        %v5184 = vsub.s32 %v5181, %v5183
        %v5185 = vrot.slane %v5171, %v5184
        %v5186 = vcombine.high %v5178, %v5178
        %v5187 = vcombine.high %v5185, %v5185
        %v5189 = vunpack.c.l.s4 1966171168
        %v5190 = vunpack.c.0.s8 %v5189
        %v5191 = vlaneseq
        %v5192 = vshrl.u32 %v5191, 7
        %v5193 = vsub.s32 %v5190, %v5192
        %v5194 = vrot.slane %v5178, %v5193
        %v5196 = vunpack.c.l.s4 1966171168
        %v5197 = vunpack.c.0.s8 %v5196
        %v5198 = vlaneseq
        %v5199 = vshrl.u32 %v5198, 7
        %v5200 = vsub.s32 %v5197, %v5199
        %v5201 = vrot.slane %v5185, %v5200
        %v5203 = vunpack.c.l.s4 1966171168
        %v5204 = vunpack.c.0.s8 %v5203
        %v5205 = vlaneseq
        %v5206 = vshrl.u32 %v5205, 7
        %v5207 = vsub.s32 %v5204, %v5206
        %v5208 = vrot.slane %v5186, %v5207
        %v5210 = vunpack.c.l.s4 1966171168
        %v5211 = vunpack.c.0.s8 %v5210
        %v5212 = vlaneseq
        %v5213 = vshrl.u32 %v5212, 7
        %v5214 = vsub.s32 %v5211, %v5213
        %v5215 = vrot.slane %v5187, %v5214
        %v5216 = vcombine.high %v5194, %v5194
        %v5217 = vcombine.high %v5201, %v5201
        %v5218 = vcombine.high %v5208, %v5208
        %v5219 = vcombine.high %v5215, %v5215
        %v5220 = vcombine.high %v4866, %v4866
        %v5222 = vunpack.c.l.s4 1966171168
        %v5223 = vunpack.c.0.s8 %v5222
        %v5224 = vlaneseq
        %v5225 = vshrl.u32 %v5224, 7
        %v5226 = vsub.s32 %v5223, %v5225
        %v5227 = vrot.slane %v4866, %v5226
        %v5229 = vunpack.c.l.s4 1966171168
        %v5230 = vunpack.c.0.s8 %v5229
        %v5231 = vlaneseq
        %v5232 = vshrl.u32 %v5231, 7
        %v5233 = vsub.s32 %v5230, %v5232
        %v5234 = vrot.slane %v5220, %v5233
        %v5235 = vcombine.high %v5227, %v5227
        %v5236 = vcombine.high %v5234, %v5234
        %v5238 = vunpack.c.l.s4 1966171168
        %v5239 = vunpack.c.0.s8 %v5238
        %v5240 = vlaneseq
        %v5241 = vshrl.u32 %v5240, 7
        %v5242 = vsub.s32 %v5239, %v5241
        %v5243 = vrot.slane %v5227, %v5242
        %v5245 = vunpack.c.l.s4 1966171168
        %v5246 = vunpack.c.0.s8 %v5245
        %v5247 = vlaneseq
        %v5248 = vshrl.u32 %v5247, 7
        %v5249 = vsub.s32 %v5246, %v5248
        %v5250 = vrot.slane %v5234, %v5249
        %v5252 = vunpack.c.l.s4 1966171168
        %v5253 = vunpack.c.0.s8 %v5252
        %v5254 = vlaneseq
        %v5255 = vshrl.u32 %v5254, 7
        %v5256 = vsub.s32 %v5253, %v5255
        %v5257 = vrot.slane %v5235, %v5256
        %v5259 = vunpack.c.l.s4 1966171168
        %v5260 = vunpack.c.0.s8 %v5259
        %v5261 = vlaneseq
        %v5262 = vshrl.u32 %v5261, 7
        %v5263 = vsub.s32 %v5260, %v5262
        %v5264 = vrot.slane %v5236, %v5263
        %v5265 = vcombine.high %v5243, %v5243
        %v5266 = vcombine.high %v5250, %v5250
        %v5267 = vcombine.high %v5257, %v5257
        %v5268 = vcombine.high %v5264, %v5264
        %v5269 = vcombine.high %v4867, %v4867
        %v5271 = vunpack.c.l.s4 1966171168
        %v5272 = vunpack.c.0.s8 %v5271
        %v5273 = vlaneseq
        %v5274 = vshrl.u32 %v5273, 7
        %v5275 = vsub.s32 %v5272, %v5274
        %v5276 = vrot.slane %v4867, %v5275
        %v5278 = vunpack.c.l.s4 1966171168
        %v5279 = vunpack.c.0.s8 %v5278
        %v5280 = vlaneseq
        %v5281 = vshrl.u32 %v5280, 7
        %v5282 = vsub.s32 %v5279, %v5281
        %v5283 = vrot.slane %v5269, %v5282
        %v5284 = vcombine.high %v5276, %v5276
        %v5285 = vcombine.high %v5283, %v5283
        %v5287 = vunpack.c.l.s4 1966171168
        %v5288 = vunpack.c.0.s8 %v5287
        %v5289 = vlaneseq
        %v5290 = vshrl.u32 %v5289, 7
        %v5291 = vsub.s32 %v5288, %v5290
        %v5292 = vrot.slane %v5276, %v5291
        %v5294 = vunpack.c.l.s4 1966171168
        %v5295 = vunpack.c.0.s8 %v5294
        %v5296 = vlaneseq
        %v5297 = vshrl.u32 %v5296, 7
        %v5298 = vsub.s32 %v5295, %v5297
        %v5299 = vrot.slane %v5283, %v5298
        %v5301 = vunpack.c.l.s4 1966171168
        %v5302 = vunpack.c.0.s8 %v5301
        %v5303 = vlaneseq
        %v5304 = vshrl.u32 %v5303, 7
        %v5305 = vsub.s32 %v5302, %v5304
        %v5306 = vrot.slane %v5284, %v5305
        %v5308 = vunpack.c.l.s4 1966171168
        %v5309 = vunpack.c.0.s8 %v5308
        %v5310 = vlaneseq
        %v5311 = vshrl.u32 %v5310, 7
        %v5312 = vsub.s32 %v5309, %v5311
        %v5313 = vrot.slane %v5285, %v5312
        %v5314 = vcombine.high %v5292, %v5292
        %v5315 = vcombine.high %v5299, %v5299
        %v5316 = vcombine.high %v5306, %v5306
        %v5317 = vcombine.high %v5313, %v5313
        %v5318 = vcombine.low %v4900, %v4914
        %v5320 = vunpack.c.l.s4 1966171168
        %v5321 = vunpack.c.0.s8 %v5320
        %v5322 = vlaneseq
        %v5323 = vshrl.u32 %v5322, 7
        %v5324 = vsub.s32 %v5321, %v5323
        %v5325 = vrot.slane %v5318, %v5324
        %v5327 = vunpack.c.l.s4 1966171168
        %v5328 = vunpack.c.0.s8 %v5327
        %v5329 = vlaneseq
        %v5330 = vshrl.u32 %v5329, 7
        %v5331 = vsub.s32 %v5328, %v5330
        %v5332 = vrot.slane %v4922, %v5331
        %v5333 = vcombine.low %v5325, %v5332
        %v5335 = vunpack.c.l.s4 1966171168
        %v5336 = vunpack.c.0.s8 %v5335
        %v5337 = vlaneseq
        %v5338 = vshrl.u32 %v5337, 7
        %v5339 = vsub.s32 %v5336, %v5338
        %v5340 = vrot.slane %v5333, %v5339
        %v5341 = vcombine.low %v4924, %v4907
        %v5343 = vunpack.c.l.s4 1966171168
        %v5344 = vunpack.c.0.s8 %v5343
        %v5345 = vlaneseq
        %v5346 = vshrl.u32 %v5345, 7
        %v5347 = vsub.s32 %v5344, %v5346
        %v5348 = vrot.slane %v5341, %v5347
        %v5350 = vunpack.c.l.s4 1966171168
        %v5351 = vunpack.c.0.s8 %v5350
        %v5352 = vlaneseq
        %v5353 = vshrl.u32 %v5352, 7
        %v5354 = vsub.s32 %v5351, %v5353
        %v5355 = vrot.slane %v4921, %v5354
        %v5356 = vcombine.low %v5348, %v5355
        %v5358 = vunpack.c.l.s4 1966171168
        %v5359 = vunpack.c.0.s8 %v5358
        %v5360 = vlaneseq
        %v5361 = vshrl.u32 %v5360, 7
        %v5362 = vsub.s32 %v5359, %v5361
        %v5363 = vrot.slane %v5356, %v5362
        %v5364 = vcombine.low %v4923, %v4925
        %v5366 = vunpack.c.l.s4 1966171168
        %v5367 = vunpack.c.0.s8 %v5366
        %v5368 = vlaneseq
        %v5369 = vshrl.u32 %v5368, 7
        %v5370 = vsub.s32 %v5367, %v5369
        %v5371 = vrot.slane %v5364, %v5370
        %v5373 = vunpack.c.l.s4 1966171168
        %v5374 = vunpack.c.0.s8 %v5373
        %v5375 = vlaneseq
        %v5376 = vshrl.u32 %v5375, 7
        %v5377 = vsub.s32 %v5374, %v5376
        %v5378 = vrot.slane %v4949, %v5377
        %v5379 = vcombine.low %v5371, %v5378
        %v5381 = vunpack.c.l.s4 1966171168
        %v5382 = vunpack.c.0.s8 %v5381
        %v5383 = vlaneseq
        %v5384 = vshrl.u32 %v5383, 7
        %v5385 = vsub.s32 %v5382, %v5384
        %v5386 = vrot.slane %v5379, %v5385
        %v5387 = vcombine.low %v4963, %v4971
        %v5389 = vunpack.c.l.s4 1966171168
        %v5390 = vunpack.c.0.s8 %v5389
        %v5391 = vlaneseq
        %v5392 = vshrl.u32 %v5391, 7
        %v5393 = vsub.s32 %v5390, %v5392
        %v5394 = vrot.slane %v5387, %v5393
        %v5396 = vunpack.c.l.s4 1966171168
        %v5397 = vunpack.c.0.s8 %v5396
        %v5398 = vlaneseq
        %v5399 = vshrl.u32 %v5398, 7
        %v5400 = vsub.s32 %v5397, %v5399
        %v5401 = vrot.slane %v4973, %v5400
        %v5402 = vcombine.low %v5394, %v5401
        %v5404 = vunpack.c.l.s4 1966171168
        %v5405 = vunpack.c.0.s8 %v5404
        %v5406 = vlaneseq
        %v5407 = vshrl.u32 %v5406, 7
        %v5408 = vsub.s32 %v5405, %v5407
        %v5409 = vrot.slane %v5402, %v5408
        %v5410 = vcombine.low %v4956, %v4970
        %v5412 = vunpack.c.l.s4 1966171168
        %v5413 = vunpack.c.0.s8 %v5412
        %v5414 = vlaneseq
        %v5415 = vshrl.u32 %v5414, 7
        %v5416 = vsub.s32 %v5413, %v5415
        %v5417 = vrot.slane %v5410, %v5416
        %v5419 = vunpack.c.l.s4 1966171168
        %v5420 = vunpack.c.0.s8 %v5419
        %v5421 = vlaneseq
        %v5422 = vshrl.u32 %v5421, 7
        %v5423 = vsub.s32 %v5420, %v5422
        %v5424 = vrot.slane %v4972, %v5423
        %v5425 = vcombine.low %v5417, %v5424
        %v5427 = vunpack.c.l.s4 1966171168
        %v5428 = vunpack.c.0.s8 %v5427
        %v5429 = vlaneseq
        %v5430 = vshrl.u32 %v5429, 7
        %v5431 = vsub.s32 %v5428, %v5430
        %v5432 = vrot.slane %v5425, %v5431
        %v5433 = vcombine.low %v4974, %v4998
        %v5435 = vunpack.c.l.s4 1966171168
        %v5436 = vunpack.c.0.s8 %v5435
        %v5437 = vlaneseq
        %v5438 = vshrl.u32 %v5437, 7
        %v5439 = vsub.s32 %v5436, %v5438
        %v5440 = vrot.slane %v5433, %v5439
        %v5442 = vunpack.c.l.s4 1966171168
        %v5443 = vunpack.c.0.s8 %v5442
        %v5444 = vlaneseq
        %v5445 = vshrl.u32 %v5444, 7
        %v5446 = vsub.s32 %v5443, %v5445
        %v5447 = vrot.slane %v5012, %v5446
        %v5448 = vcombine.low %v5440, %v5447
        %v5450 = vunpack.c.l.s4 1966171168
        %v5451 = vunpack.c.0.s8 %v5450
        %v5452 = vlaneseq
        %v5453 = vshrl.u32 %v5452, 7
        %v5454 = vsub.s32 %v5451, %v5453
        %v5455 = vrot.slane %v5448, %v5454
        %v5456 = vcombine.low %v5020, %v5022
        %v5458 = vunpack.c.l.s4 1966171168
        %v5459 = vunpack.c.0.s8 %v5458
        %v5460 = vlaneseq
        %v5461 = vshrl.u32 %v5460, 7
        %v5462 = vsub.s32 %v5459, %v5461
        %v5463 = vrot.slane %v5456, %v5462
        %v5465 = vunpack.c.l.s4 1966171168
        %v5466 = vunpack.c.0.s8 %v5465
        %v5467 = vlaneseq
        %v5468 = vshrl.u32 %v5467, 7
        %v5469 = vsub.s32 %v5466, %v5468
        %v5470 = vrot.slane %v5005, %v5469
        %v5471 = vcombine.low %v5463, %v5470
        %v5473 = vunpack.c.l.s4 1966171168
        %v5474 = vunpack.c.0.s8 %v5473
        %v5475 = vlaneseq
        %v5476 = vshrl.u32 %v5475, 7
        %v5477 = vsub.s32 %v5474, %v5476
        %v5478 = vrot.slane %v5471, %v5477
        %v5479 = vcombine.low %v5019, %v5021
        %v5481 = vunpack.c.l.s4 1966171168
        %v5482 = vunpack.c.0.s8 %v5481
        %v5483 = vlaneseq
        %v5484 = vshrl.u32 %v5483, 7
        %v5485 = vsub.s32 %v5482, %v5484
        %v5486 = vrot.slane %v5479, %v5485
        %v5488 = vunpack.c.l.s4 1966171168
        %v5489 = vunpack.c.0.s8 %v5488
        %v5490 = vlaneseq
        %v5491 = vshrl.u32 %v5490, 7
        %v5492 = vsub.s32 %v5489, %v5491
        %v5493 = vrot.slane %v5023, %v5492
        %v5494 = vcombine.low %v5486, %v5493
        %v5496 = vunpack.c.l.s4 1966171168
        %v5497 = vunpack.c.0.s8 %v5496
        %v5498 = vlaneseq
        %v5499 = vshrl.u32 %v5498, 7
        %v5500 = vsub.s32 %v5497, %v5499
        %v5501 = vrot.slane %v5494, %v5500
        %v5502 = vcombine.low %v5047, %v5061
        %v5504 = vunpack.c.l.s4 1966171168
        %v5505 = vunpack.c.0.s8 %v5504
        %v5506 = vlaneseq
        %v5507 = vshrl.u32 %v5506, 7
        %v5508 = vsub.s32 %v5505, %v5507
        %v5509 = vrot.slane %v5502, %v5508
        %v5511 = vunpack.c.l.s4 1966171168
        %v5512 = vunpack.c.0.s8 %v5511
        %v5513 = vlaneseq
        %v5514 = vshrl.u32 %v5513, 7
        %v5515 = vsub.s32 %v5512, %v5514
        %v5516 = vrot.slane %v5069, %v5515
        %v5517 = vcombine.low %v5509, %v5516
        %v5519 = vunpack.c.l.s4 1966171168
        %v5520 = vunpack.c.0.s8 %v5519
        %v5521 = vlaneseq
        %v5522 = vshrl.u32 %v5521, 7
        %v5523 = vsub.s32 %v5520, %v5522
        %v5524 = vrot.slane %v5517, %v5523
        %v5525 = vcombine.low %v5071, %v5054
        %v5527 = vunpack.c.l.s4 1966171168
        %v5528 = vunpack.c.0.s8 %v5527
        %v5529 = vlaneseq
        %v5530 = vshrl.u32 %v5529, 7
        %v5531 = vsub.s32 %v5528, %v5530
        %v5532 = vrot.slane %v5525, %v5531
        %v5534 = vunpack.c.l.s4 1966171168
        %v5535 = vunpack.c.0.s8 %v5534
        %v5536 = vlaneseq
        %v5537 = vshrl.u32 %v5536, 7
        %v5538 = vsub.s32 %v5535, %v5537
        %v5539 = vrot.slane %v5068, %v5538
        %v5540 = vcombine.low %v5532, %v5539
        %v5542 = vunpack.c.l.s4 1966171168
        %v5543 = vunpack.c.0.s8 %v5542
        %v5544 = vlaneseq
        %v5545 = vshrl.u32 %v5544, 7
        %v5546 = vsub.s32 %v5543, %v5545
        %v5547 = vrot.slane %v5540, %v5546
        %v5548 = vcombine.low %v5070, %v5072
        %v5550 = vunpack.c.l.s4 1966171168
        %v5551 = vunpack.c.0.s8 %v5550
        %v5552 = vlaneseq
        %v5553 = vshrl.u32 %v5552, 7
        %v5554 = vsub.s32 %v5551, %v5553
        %v5555 = vrot.slane %v5548, %v5554
        %v5557 = vunpack.c.l.s4 1966171168
        %v5558 = vunpack.c.0.s8 %v5557
        %v5559 = vlaneseq
        %v5560 = vshrl.u32 %v5559, 7
        %v5561 = vsub.s32 %v5558, %v5560
        %v5562 = vrot.slane %v5096, %v5561
        %v5563 = vcombine.low %v5555, %v5562
        %v5565 = vunpack.c.l.s4 1966171168
        %v5566 = vunpack.c.0.s8 %v5565
        %v5567 = vlaneseq
        %v5568 = vshrl.u32 %v5567, 7
        %v5569 = vsub.s32 %v5566, %v5568
        %v5570 = vrot.slane %v5563, %v5569
        %v5571 = vcombine.low %v5110, %v5118
        %v5573 = vunpack.c.l.s4 1966171168
        %v5574 = vunpack.c.0.s8 %v5573
        %v5575 = vlaneseq
        %v5576 = vshrl.u32 %v5575, 7
        %v5577 = vsub.s32 %v5574, %v5576
        %v5578 = vrot.slane %v5571, %v5577
        %v5580 = vunpack.c.l.s4 1966171168
        %v5581 = vunpack.c.0.s8 %v5580
        %v5582 = vlaneseq
        %v5583 = vshrl.u32 %v5582, 7
        %v5584 = vsub.s32 %v5581, %v5583
        %v5585 = vrot.slane %v5120, %v5584
        %v5586 = vcombine.low %v5578, %v5585
        %v5588 = vunpack.c.l.s4 1966171168
        %v5589 = vunpack.c.0.s8 %v5588
        %v5590 = vlaneseq
        %v5591 = vshrl.u32 %v5590, 7
        %v5592 = vsub.s32 %v5589, %v5591
        %v5593 = vrot.slane %v5586, %v5592
        %v5594 = vcombine.low %v5103, %v5117
        %v5596 = vunpack.c.l.s4 1966171168
        %v5597 = vunpack.c.0.s8 %v5596
        %v5598 = vlaneseq
        %v5599 = vshrl.u32 %v5598, 7
        %v5600 = vsub.s32 %v5597, %v5599
        %v5601 = vrot.slane %v5594, %v5600
        %v5603 = vunpack.c.l.s4 1966171168
        %v5604 = vunpack.c.0.s8 %v5603
        %v5605 = vlaneseq
        %v5606 = vshrl.u32 %v5605, 7
        %v5607 = vsub.s32 %v5604, %v5606
        %v5608 = vrot.slane %v5119, %v5607
        %v5609 = vcombine.low %v5601, %v5608
        %v5611 = vunpack.c.l.s4 1966171168
        %v5612 = vunpack.c.0.s8 %v5611
        %v5613 = vlaneseq
        %v5614 = vshrl.u32 %v5613, 7
        %v5615 = vsub.s32 %v5612, %v5614
        %v5616 = vrot.slane %v5609, %v5615
        %v5617 = vcombine.low %v5121, %v5145
        %v5619 = vunpack.c.l.s4 1966171168
        %v5620 = vunpack.c.0.s8 %v5619
        %v5621 = vlaneseq
        %v5622 = vshrl.u32 %v5621, 7
        %v5623 = vsub.s32 %v5620, %v5622
        %v5624 = vrot.slane %v5617, %v5623
        %v5626 = vunpack.c.l.s4 1966171168
        %v5627 = vunpack.c.0.s8 %v5626
        %v5628 = vlaneseq
        %v5629 = vshrl.u32 %v5628, 7
        %v5630 = vsub.s32 %v5627, %v5629
        %v5631 = vrot.slane %v5159, %v5630
        %v5632 = vcombine.low %v5624, %v5631
        %v5634 = vunpack.c.l.s4 1966171168
        %v5635 = vunpack.c.0.s8 %v5634
        %v5636 = vlaneseq
        %v5637 = vshrl.u32 %v5636, 7
        %v5638 = vsub.s32 %v5635, %v5637
        %v5639 = vrot.slane %v5632, %v5638
        %v5640 = vcombine.low %v5167, %v5169
        %v5642 = vunpack.c.l.s4 1966171168
        %v5643 = vunpack.c.0.s8 %v5642
        %v5644 = vlaneseq
        %v5645 = vshrl.u32 %v5644, 7
        %v5646 = vsub.s32 %v5643, %v5645
        %v5647 = vrot.slane %v5640, %v5646
        %v5649 = vunpack.c.l.s4 1966171168
        %v5650 = vunpack.c.0.s8 %v5649
        %v5651 = vlaneseq
        %v5652 = vshrl.u32 %v5651, 7
        %v5653 = vsub.s32 %v5650, %v5652
        %v5654 = vrot.slane %v5152, %v5653
        %v5655 = vcombine.low %v5647, %v5654
        %v5657 = vunpack.c.l.s4 1966171168
        %v5658 = vunpack.c.0.s8 %v5657
        %v5659 = vlaneseq
        %v5660 = vshrl.u32 %v5659, 7
        %v5661 = vsub.s32 %v5658, %v5660
        %v5662 = vrot.slane %v5655, %v5661
        %v5663 = vcombine.low %v5166, %v5168
        %v5665 = vunpack.c.l.s4 1966171168
        %v5666 = vunpack.c.0.s8 %v5665
        %v5667 = vlaneseq
        %v5668 = vshrl.u32 %v5667, 7
        %v5669 = vsub.s32 %v5666, %v5668
        %v5670 = vrot.slane %v5663, %v5669
        %v5672 = vunpack.c.l.s4 1966171168
        %v5673 = vunpack.c.0.s8 %v5672
        %v5674 = vlaneseq
        %v5675 = vshrl.u32 %v5674, 7
        %v5676 = vsub.s32 %v5673, %v5675
        %v5677 = vrot.slane %v5170, %v5676
        %v5678 = vcombine.low %v5670, %v5677
        %v5680 = vunpack.c.l.s4 1966171168
        %v5681 = vunpack.c.0.s8 %v5680
        %v5682 = vlaneseq
        %v5683 = vshrl.u32 %v5682, 7
        %v5684 = vsub.s32 %v5681, %v5683
        %v5685 = vrot.slane %v5678, %v5684
        %v5686 = vcombine.low %v5194, %v5208
        %v5688 = vunpack.c.l.s4 1966171168
        %v5689 = vunpack.c.0.s8 %v5688
        %v5690 = vlaneseq
        %v5691 = vshrl.u32 %v5690, 7
        %v5692 = vsub.s32 %v5689, %v5691
        %v5693 = vrot.slane %v5686, %v5692
        %v5695 = vunpack.c.l.s4 1966171168
        %v5696 = vunpack.c.0.s8 %v5695
        %v5697 = vlaneseq
        %v5698 = vshrl.u32 %v5697, 7
        %v5699 = vsub.s32 %v5696, %v5698
        %v5700 = vrot.slane %v5216, %v5699
        %v5701 = vcombine.low %v5693, %v5700
        %v5703 = vunpack.c.l.s4 1966171168
        %v5704 = vunpack.c.0.s8 %v5703
        %v5705 = vlaneseq
        %v5706 = vshrl.u32 %v5705, 7
        %v5707 = vsub.s32 %v5704, %v5706
        %v5708 = vrot.slane %v5701, %v5707
        %v5709 = vcombine.low %v5218, %v5201
        %v5711 = vunpack.c.l.s4 1966171168
        %v5712 = vunpack.c.0.s8 %v5711
        %v5713 = vlaneseq
        %v5714 = vshrl.u32 %v5713, 7
        %v5715 = vsub.s32 %v5712, %v5714
        %v5716 = vrot.slane %v5709, %v5715
        %v5718 = vunpack.c.l.s4 1966171168
        %v5719 = vunpack.c.0.s8 %v5718
        %v5720 = vlaneseq
        %v5721 = vshrl.u32 %v5720, 7
        %v5722 = vsub.s32 %v5719, %v5721
        %v5723 = vrot.slane %v5215, %v5722
        %v5724 = vcombine.low %v5716, %v5723
        %v5726 = vunpack.c.l.s4 1966171168
        %v5727 = vunpack.c.0.s8 %v5726
        %v5728 = vlaneseq
        %v5729 = vshrl.u32 %v5728, 7
        %v5730 = vsub.s32 %v5727, %v5729
        %v5731 = vrot.slane %v5724, %v5730
        %v5732 = vcombine.low %v5217, %v5219
        %v5734 = vunpack.c.l.s4 1966171168
        %v5735 = vunpack.c.0.s8 %v5734
        %v5736 = vlaneseq
        %v5737 = vshrl.u32 %v5736, 7
        %v5738 = vsub.s32 %v5735, %v5737
        %v5739 = vrot.slane %v5732, %v5738
        %v5741 = vunpack.c.l.s4 1966171168
        %v5742 = vunpack.c.0.s8 %v5741
        %v5743 = vlaneseq
        %v5744 = vshrl.u32 %v5743, 7
        %v5745 = vsub.s32 %v5742, %v5744
        %v5746 = vrot.slane %v5243, %v5745
        %v5747 = vcombine.low %v5739, %v5746
        %v5749 = vunpack.c.l.s4 1966171168
        %v5750 = vunpack.c.0.s8 %v5749
        %v5751 = vlaneseq
        %v5752 = vshrl.u32 %v5751, 7
        %v5753 = vsub.s32 %v5750, %v5752
        %v5754 = vrot.slane %v5747, %v5753
        %v5755 = vcombine.low %v5257, %v5265
        %v5757 = vunpack.c.l.s4 1966171168
        %v5758 = vunpack.c.0.s8 %v5757
        %v5759 = vlaneseq
        %v5760 = vshrl.u32 %v5759, 7
        %v5761 = vsub.s32 %v5758, %v5760
        %v5762 = vrot.slane %v5755, %v5761
        %v5764 = vunpack.c.l.s4 1966171168
        %v5765 = vunpack.c.0.s8 %v5764
        %v5766 = vlaneseq
        %v5767 = vshrl.u32 %v5766, 7
        %v5768 = vsub.s32 %v5765, %v5767
        %v5769 = vrot.slane %v5267, %v5768
        %v5770 = vcombine.low %v5762, %v5769
        %v5772 = vunpack.c.l.s4 1966171168
        %v5773 = vunpack.c.0.s8 %v5772
        %v5774 = vlaneseq
        %v5775 = vshrl.u32 %v5774, 7
        %v5776 = vsub.s32 %v5773, %v5775
        %v5777 = vrot.slane %v5770, %v5776
        %v5778 = vcombine.low %v5250, %v5264
        %v5780 = vunpack.c.l.s4 1966171168
        %v5781 = vunpack.c.0.s8 %v5780
        %v5782 = vlaneseq
        %v5783 = vshrl.u32 %v5782, 7
        %v5784 = vsub.s32 %v5781, %v5783
        %v5785 = vrot.slane %v5778, %v5784
        %v5787 = vunpack.c.l.s4 1966171168
        %v5788 = vunpack.c.0.s8 %v5787
        %v5789 = vlaneseq
        %v5790 = vshrl.u32 %v5789, 7
        %v5791 = vsub.s32 %v5788, %v5790
        %v5792 = vrot.slane %v5266, %v5791
        %v5793 = vcombine.low %v5785, %v5792
        %v5795 = vunpack.c.l.s4 1966171168
        %v5796 = vunpack.c.0.s8 %v5795
        %v5797 = vlaneseq
        %v5798 = vshrl.u32 %v5797, 7
        %v5799 = vsub.s32 %v5796, %v5798
        %v5800 = vrot.slane %v5793, %v5799
        %v5801 = vcombine.low %v5268, %v5292
        %v5803 = vunpack.c.l.s4 1966171168
        %v5804 = vunpack.c.0.s8 %v5803
        %v5805 = vlaneseq
        %v5806 = vshrl.u32 %v5805, 7
        %v5807 = vsub.s32 %v5804, %v5806
        %v5808 = vrot.slane %v5801, %v5807
        %v5810 = vunpack.c.l.s4 1966171168
        %v5811 = vunpack.c.0.s8 %v5810
        %v5812 = vlaneseq
        %v5813 = vshrl.u32 %v5812, 7
        %v5814 = vsub.s32 %v5811, %v5813
        %v5815 = vrot.slane %v5306, %v5814
        %v5816 = vcombine.low %v5808, %v5815
        %v5818 = vunpack.c.l.s4 1966171168
        %v5819 = vunpack.c.0.s8 %v5818
        %v5820 = vlaneseq
        %v5821 = vshrl.u32 %v5820, 7
        %v5822 = vsub.s32 %v5819, %v5821
        %v5823 = vrot.slane %v5816, %v5822
        %v5824 = vcombine.low %v5314, %v5316
        %v5826 = vunpack.c.l.s4 1966171168
        %v5827 = vunpack.c.0.s8 %v5826
        %v5828 = vlaneseq
        %v5829 = vshrl.u32 %v5828, 7
        %v5830 = vsub.s32 %v5827, %v5829
        %v5831 = vrot.slane %v5824, %v5830
        %v5833 = vunpack.c.l.s4 1966171168
        %v5834 = vunpack.c.0.s8 %v5833
        %v5835 = vlaneseq
        %v5836 = vshrl.u32 %v5835, 7
        %v5837 = vsub.s32 %v5834, %v5836
        %v5838 = vrot.slane %v5299, %v5837
        %v5839 = vcombine.low %v5831, %v5838
        %v5841 = vunpack.c.l.s4 1966171168
        %v5842 = vunpack.c.0.s8 %v5841
        %v5843 = vlaneseq
        %v5844 = vshrl.u32 %v5843, 7
        %v5845 = vsub.s32 %v5842, %v5844
        %v5846 = vrot.slane %v5839, %v5845
        %v5847 = vcombine.low %v5313, %v5315
        %v5849 = vunpack.c.l.s4 1966171168
        %v5850 = vunpack.c.0.s8 %v5849
        %v5851 = vlaneseq
        %v5852 = vshrl.u32 %v5851, 7
        %v5853 = vsub.s32 %v5850, %v5852
        %v5854 = vrot.slane %v5847, %v5853
        %v5856 = vunpack.c.l.s4 1966171168
        %v5857 = vunpack.c.0.s8 %v5856
        %v5858 = vlaneseq
        %v5859 = vshrl.u32 %v5858, 7
        %v5860 = vsub.s32 %v5857, %v5859
        %v5861 = vrot.slane %v5317, %v5860
        %v5862 = vcombine.low %v5854, %v5861
        %v5864 = vunpack.c.l.s4 1966171168
        %v5865 = vunpack.c.0.s8 %v5864
        %v5866 = vlaneseq
        %v5867 = vshrl.u32 %v5866, 7
        %v5868 = vsub.s32 %v5865, %v5867
        %v5869 = vrot.slane %v5862, %v5868
        %v5894 = vsel %vm4560, %v5340, -inf
        %v5895 = vrot.slane %v5894, 4
        %v5896 = vmax.f32 %v5894, %v5895
        %v5897 = vrot.slane %v5896, 2
        %v5898 = vmax.f32 %v5896, %v5897
        %v5899 = vrot.slane %v5898, 1
        %v5900 = vmax.f32 %v5898, %v5899
        %v5901 = vsel %vm4560, %v5363, -inf
        %v5902 = vrot.slane %v5901, 4
        %v5903 = vmax.f32 %v5901, %v5902
        %v5904 = vrot.slane %v5903, 2
        %v5905 = vmax.f32 %v5903, %v5904
        %v5906 = vrot.slane %v5905, 1
        %v5907 = vmax.f32 %v5905, %v5906
        %v5908 = vsel %vm4560, %v5386, -inf
        %v5909 = vrot.slane %v5908, 4
        %v5910 = vmax.f32 %v5908, %v5909
        %v5911 = vrot.slane %v5910, 2
        %v5912 = vmax.f32 %v5910, %v5911
        %v5913 = vrot.slane %v5912, 1
        %v5914 = vmax.f32 %v5912, %v5913
        %v5915 = vsel %vm4560, %v5409, -inf
        %v5916 = vrot.slane %v5915, 4
        %v5917 = vmax.f32 %v5915, %v5916
        %v5918 = vrot.slane %v5917, 2
        %v5919 = vmax.f32 %v5917, %v5918
        %v5920 = vrot.slane %v5919, 1
        %v5921 = vmax.f32 %v5919, %v5920
        %v5922 = vsel %vm4560, %v5432, -inf
        %v5923 = vrot.slane %v5922, 4
        %v5924 = vmax.f32 %v5922, %v5923
        %v5925 = vrot.slane %v5924, 2
        %v5926 = vmax.f32 %v5924, %v5925
        %v5927 = vrot.slane %v5926, 1
        %v5928 = vmax.f32 %v5926, %v5927
        %v5929 = vsel %vm4560, %v5455, -inf
        %v5930 = vrot.slane %v5929, 4
        %v5931 = vmax.f32 %v5929, %v5930
        %v5932 = vrot.slane %v5931, 2
        %v5933 = vmax.f32 %v5931, %v5932
        %v5934 = vrot.slane %v5933, 1
        %v5935 = vmax.f32 %v5933, %v5934
        %v5936 = vsel %vm4560, %v5478, -inf
        %v5937 = vrot.slane %v5936, 4
        %v5938 = vmax.f32 %v5936, %v5937
        %v5939 = vrot.slane %v5938, 2
        %v5940 = vmax.f32 %v5938, %v5939
        %v5941 = vrot.slane %v5940, 1
        %v5942 = vmax.f32 %v5940, %v5941
        %v5943 = vsel %vm4560, %v5501, -inf
        %v5944 = vrot.slane %v5943, 4
        %v5945 = vmax.f32 %v5943, %v5944
        %v5946 = vrot.slane %v5945, 2
        %v5947 = vmax.f32 %v5945, %v5946
        %v5948 = vrot.slane %v5947, 1
        %v5949 = vmax.f32 %v5947, %v5948
        %v5950 = vsel %vm4560, %v5524, -inf
        %v5951 = vrot.slane %v5950, 4
        %v5952 = vmax.f32 %v5950, %v5951
        %v5953 = vrot.slane %v5952, 2
        %v5954 = vmax.f32 %v5952, %v5953
        %v5955 = vrot.slane %v5954, 1
        %v5956 = vmax.f32 %v5954, %v5955
        %v5957 = vsel %vm4560, %v5547, -inf
        %v5958 = vrot.slane %v5957, 4
        %v5959 = vmax.f32 %v5957, %v5958
        %v5960 = vrot.slane %v5959, 2
        %v5961 = vmax.f32 %v5959, %v5960
        %v5962 = vrot.slane %v5961, 1
        %v5963 = vmax.f32 %v5961, %v5962
        %v5964 = vsel %vm4560, %v5570, -inf
        %v5965 = vrot.slane %v5964, 4
        %v5966 = vmax.f32 %v5964, %v5965
        %v5967 = vrot.slane %v5966, 2
        %v5968 = vmax.f32 %v5966, %v5967
        %v5969 = vrot.slane %v5968, 1
        %v5970 = vmax.f32 %v5968, %v5969
        %v5971 = vsel %vm4560, %v5593, -inf
        %v5972 = vrot.slane %v5971, 4
        %v5973 = vmax.f32 %v5971, %v5972
        %v5974 = vrot.slane %v5973, 2
        %v5975 = vmax.f32 %v5973, %v5974
        %v5976 = vrot.slane %v5975, 1
        %v5977 = vmax.f32 %v5975, %v5976
        %v5978 = vsel %vm4560, %v5616, -inf
        %v5979 = vrot.slane %v5978, 4
        %v5980 = vmax.f32 %v5978, %v5979
        %v5981 = vrot.slane %v5980, 2
        %v5982 = vmax.f32 %v5980, %v5981
        %v5983 = vrot.slane %v5982, 1
        %v5984 = vmax.f32 %v5982, %v5983
        %v5985 = vsel %vm4560, %v5639, -inf
        %v5986 = vrot.slane %v5985, 4
        %v5987 = vmax.f32 %v5985, %v5986
        %v5988 = vrot.slane %v5987, 2
        %v5989 = vmax.f32 %v5987, %v5988
        %v5990 = vrot.slane %v5989, 1
        %v5991 = vmax.f32 %v5989, %v5990
        %v5992 = vsel %vm4560, %v5662, -inf
        %v5993 = vrot.slane %v5992, 4
        %v5994 = vmax.f32 %v5992, %v5993
        %v5995 = vrot.slane %v5994, 2
        %v5996 = vmax.f32 %v5994, %v5995
        %v5997 = vrot.slane %v5996, 1
        %v5998 = vmax.f32 %v5996, %v5997
        %v5999 = vsel %vm4560, %v5685, -inf
        %v6000 = vrot.slane %v5999, 4
        %v6001 = vmax.f32 %v5999, %v6000
        %v6002 = vrot.slane %v6001, 2
        %v6003 = vmax.f32 %v6001, %v6002
        %v6004 = vrot.slane %v6003, 1
        %v6005 = vmax.f32 %v6003, %v6004
        %v6006 = vsel %vm4560, %v5708, -inf
        %v6007 = vrot.slane %v6006, 4
        %v6008 = vmax.f32 %v6006, %v6007
        %v6009 = vrot.slane %v6008, 2
        %v6010 = vmax.f32 %v6008, %v6009
        %v6011 = vrot.slane %v6010, 1
        %v6012 = vmax.f32 %v6010, %v6011
        %v6013 = vsel %vm4560, %v5731, -inf
        %v6014 = vrot.slane %v6013, 4
        %v6015 = vmax.f32 %v6013, %v6014
        %v6016 = vrot.slane %v6015, 2
        %v6017 = vmax.f32 %v6015, %v6016
        %v6018 = vrot.slane %v6017, 1
        %v6019 = vmax.f32 %v6017, %v6018
        %v6020 = vsel %vm4560, %v5754, -inf
        %v6021 = vrot.slane %v6020, 4
        %v6022 = vmax.f32 %v6020, %v6021
        %v6023 = vrot.slane %v6022, 2
        %v6024 = vmax.f32 %v6022, %v6023
        %v6025 = vrot.slane %v6024, 1
        %v6026 = vmax.f32 %v6024, %v6025
        %v6027 = vsel %vm4560, %v5777, -inf
        %v6028 = vrot.slane %v6027, 4
        %v6029 = vmax.f32 %v6027, %v6028
        %v6030 = vrot.slane %v6029, 2
        %v6031 = vmax.f32 %v6029, %v6030
        %v6032 = vrot.slane %v6031, 1
        %v6033 = vmax.f32 %v6031, %v6032
        %v6034 = vsel %vm4560, %v5800, -inf
        %v6035 = vrot.slane %v6034, 4
        %v6036 = vmax.f32 %v6034, %v6035
        %v6037 = vrot.slane %v6036, 2
        %v6038 = vmax.f32 %v6036, %v6037
        %v6039 = vrot.slane %v6038, 1
        %v6040 = vmax.f32 %v6038, %v6039
        %v6041 = vsel %vm4560, %v5823, -inf
        %v6042 = vrot.slane %v6041, 4
        %v6043 = vmax.f32 %v6041, %v6042
        %v6044 = vrot.slane %v6043, 2
        %v6045 = vmax.f32 %v6043, %v6044
        %v6046 = vrot.slane %v6045, 1
        %v6047 = vmax.f32 %v6045, %v6046
        %v6048 = vsel %vm4560, %v5846, -inf
        %v6049 = vrot.slane %v6048, 4
        %v6050 = vmax.f32 %v6048, %v6049
        %v6051 = vrot.slane %v6050, 2
        %v6052 = vmax.f32 %v6050, %v6051
        %v6053 = vrot.slane %v6052, 1
        %v6054 = vmax.f32 %v6052, %v6053
        %v6055 = vsel %vm4560, %v5869, -inf
        %v6056 = vrot.slane %v6055, 4
        %v6057 = vmax.f32 %v6055, %v6056
        %v6058 = vrot.slane %v6057, 2
        %v6059 = vmax.f32 %v6057, %v6058
        %v6060 = vrot.slane %v6059, 1
        %v6061 = vmax.f32 %v6059, %v6060
        %v6062 = vpack.c.bf16 %v5900, %v5900
        %v6063 = vpack.c.bf16 %v5907, %v5907
        %v6064 = vpack.c.bf16 %v5914, %v5914
        %v6065 = vpack.c.bf16 %v5921, %v5921
        %v6066 = vpack.c.bf16 %v5928, %v5928
        %v6067 = vpack.c.bf16 %v5935, %v5935
        %v6068 = vpack.c.bf16 %v5942, %v5942
        %v6069 = vpack.c.bf16 %v5949, %v5949
        %v6070 = vpack.c.bf16 %v5956, %v5956
        %v6071 = vpack.c.bf16 %v5963, %v5963
        %v6072 = vpack.c.bf16 %v5970, %v5970
        %v6073 = vpack.c.bf16 %v5977, %v5977
        %v6074 = vpack.c.bf16 %v5984, %v5984
        %v6075 = vpack.c.bf16 %v5991, %v5991
        %v6076 = vpack.c.bf16 %v5998, %v5998
        %v6077 = vpack.c.bf16 %v6005, %v6005
        %v6078 = vpack.c.bf16 %v6012, %v6012
        %v6079 = vpack.c.bf16 %v6019, %v6019
        %v6080 = vpack.c.bf16 %v6026, %v6026
        %v6081 = vpack.c.bf16 %v6033, %v6033
        %v6082 = vpack.c.bf16 %v6040, %v6040
        %v6083 = vpack.c.bf16 %v6047, %v6047
        %v6084 = vpack.c.bf16 %v6054, %v6054
        %v6085 = vpack.c.bf16 %v6061, %v6061
        %v6110 = vunpack.c.l.b16 %v6062
        %v6111 = vunpack.c.l.b16 %v6063
        %v6112 = vunpack.c.l.b16 %v6064
        %v6113 = vunpack.c.l.b16 %v6065
        %v6114 = vunpack.c.l.b16 %v6066
        %v6115 = vunpack.c.l.b16 %v6067
        %v6116 = vunpack.c.l.b16 %v6068
        %v6117 = vunpack.c.l.b16 %v6069
        %v6118 = vunpack.c.l.b16 %v6070
        %v6119 = vunpack.c.l.b16 %v6071
        %v6120 = vunpack.c.l.b16 %v6072
        %v6121 = vunpack.c.l.b16 %v6073
        %v6122 = vunpack.c.l.b16 %v6074
        %v6123 = vunpack.c.l.b16 %v6075
        %v6124 = vunpack.c.l.b16 %v6076
        %v6125 = vunpack.c.l.b16 %v6077
        %v6126 = vunpack.c.l.b16 %v6078
        %v6127 = vunpack.c.l.b16 %v6079
        %v6128 = vunpack.c.l.b16 %v6080
        %v6129 = vunpack.c.l.b16 %v6081
        %v6130 = vunpack.c.l.b16 %v6082
        %v6131 = vunpack.c.l.b16 %v6083
        %v6132 = vunpack.c.l.b16 %v6084
        %v6133 = vunpack.c.l.b16 %v6085
        %v6134 = vsel %vm4801, %v6111, %v6110
        %v6135 = vsel %vm4803, %v6112, %v6134
        %v6136 = vsel %vm4805, %v6113, %v6135
        %v6137 = vsel %vm4807, %v6114, %v6136
        %v6138 = vsel %vm4809, %v6115, %v6137
        %v6139 = vsel %vm4811, %v6116, %v6138
        %v6140 = vsel %vm4813, %v6117, %v6139
        %v6141 = vsel %vm4801, %v6119, %v6118
        %v6142 = vsel %vm4803, %v6120, %v6141
        %v6143 = vsel %vm4805, %v6121, %v6142
        %v6144 = vsel %vm4807, %v6122, %v6143
        %v6145 = vsel %vm4809, %v6123, %v6144
        %v6146 = vsel %vm4811, %v6124, %v6145
        %v6147 = vsel %vm4813, %v6125, %v6146
        %v6148 = vsel %vm4801, %v6127, %v6126
        %v6149 = vsel %vm4803, %v6128, %v6148
        %v6150 = vsel %vm4805, %v6129, %v6149
        %v6151 = vsel %vm4807, %v6130, %v6150
        %v6152 = vsel %vm4809, %v6131, %v6151
        %v6153 = vsel %vm4811, %v6132, %v6152
        %v6154 = vsel %vm4813, %v6133, %v6153
        %v6155 = vpack.c.b16 %v6140, %v6140
        %v6156 = vpack.c.b16 %v6154, %v6147
        %6159 = vst [vmem:[#allocation4 + $0x8] sm:$0xf0] %v6155
        %6160 = vst [vmem:[#allocation4 + $0x10] sm:$0xff] %v6156
        %v6161 = vld [vmem:[#allocation4] sm:$0xff]
        %v6162 = vld [vmem:[#allocation4 + $0x8] sm:$0xff]
        %v6163 = vld [vmem:[#allocation4 + $0x10] sm:$0xff]
        %v6164 = vld [vmem:[#allocation15] sm:$0xff]
        %v6165 = vld [vmem:[#allocation15 + $0x8] sm:$0xff]
        %v6166 = vld [vmem:[#allocation15 + $0x10] sm:$0xff]
        %v6167 = vld [vmem:[#allocation15 + $0x18] sm:$0xff]
        %v6168 = vld [vmem:[#allocation15 + $0x20] sm:$0xff]
        %v6169 = vld [vmem:[#allocation15 + $0x28] sm:$0xff]
        %v6170 = vld [vmem:[#allocation15 + $0x30] sm:$0xff]
        %v6171 = vld [vmem:[#allocation15 + $0x38] sm:$0xff]
        %v6172 = vld [vmem:[#allocation15 + $0x40] sm:$0xff]
        %v6173 = vld [vmem:[#allocation15 + $0x48] sm:$0xff]
        %v6174 = vld [vmem:[#allocation15 + $0x50] sm:$0xff]
        %v6175 = vld [vmem:[#allocation15 + $0x58] sm:$0xff]
        %v6176 = vld [vmem:[#allocation15 + $0x60] sm:$0xff]
        %v6177 = vld [vmem:[#allocation15 + $0x68] sm:$0xff]
        %v6178 = vld [vmem:[#allocation15 + $0x70] sm:$0xff]
        %v6179 = vld [vmem:[#allocation15 + $0x78] sm:$0xff]
        %v6180 = vld [vmem:[#allocation4] sm:$0xff]
        %v6181 = vld [vmem:[#allocation4 + $0x8] sm:$0xff]
        %v6182 = vld [vmem:[#allocation4 + $0x10] sm:$0xff]
        %v6183 = vld [vmem:[#allocation4 + $0x18] sm:$0x1]
        %v6184 = vld [vmem:[#allocation15 + $0x80] sm:$0xff]
        %v6185 = vld [vmem:[#allocation15 + $0x88] sm:$0xff]
        %v6186 = vld [vmem:[#allocation15 + $0x90] sm:$0xff]
        %v6187 = vld [vmem:[#allocation15 + $0x98] sm:$0xff]
        %v6188 = vld [vmem:[#allocation15 + $0xa0] sm:$0xff]
        %v6189 = vld [vmem:[#allocation15 + $0xa8] sm:$0xff]
        %v6190 = vld [vmem:[#allocation15 + $0xb0] sm:$0xff]
        %v6191 = vld [vmem:[#allocation15 + $0xb8] sm:$0xff]
        %v6192 = vld [vmem:[#allocation15 + $0xc0] sm:$0xff]
        %v6193 = vld [vmem:[#allocation15 + $0xc8] sm:$0xff]
        %v6194 = vld [vmem:[#allocation15 + $0xd0] sm:$0xff]
        %v6195 = vld [vmem:[#allocation15 + $0xd8] sm:$0xff]
        %v6196 = vld [vmem:[#allocation15 + $0xe0] sm:$0xff]
        %v6197 = vld [vmem:[#allocation15 + $0xe8] sm:$0xff]
        %v6198 = vld [vmem:[#allocation15 + $0xf0] sm:$0xff]
        %v6199 = vld [vmem:[#allocation15 + $0xf8] sm:$0xff]
        %v6201 = vshrl.u32 %v6180, 16
        %v6203 = vshll.u32 %v6180, 16
        %v6205 = vrot.slane %v6203, 1
        %v6206 = vor.u32 %v6201, %v6205
        %v6208 = vshll.u32 %v6181, 16
        %v6210 = vrot.slane %v6208, 1
        %v6211 = vsel %vm907, %v6206, %v6210
        %v6212 = vshrl.u32 %v6181, 16
        %v6214 = vor.u32 %v6212, %v6210
        %v6216 = vshll.u32 %v6182, 16
        %v6218 = vrot.slane %v6216, 1
        %v6219 = vsel %vm907, %v6214, %v6218
        %v6220 = vshrl.u32 %v6182, 16
        %v6222 = vor.u32 %v6220, %v6218
        %v6224 = vshll.u32 %v6183, 16
        %v6226 = vrot.slane %v6224, 1
        %v6227 = vsel %vm907, %v6222, %v6226
        %v6247 = vunpack.c.l.b16 %v6184
        %v6248 = vunpack.c.h.b16 %v6184
        %v6249 = vunpack.c.l.b16 %v6185
        %v6250 = vunpack.c.h.b16 %v6185
        %v6251 = vunpack.c.l.b16 %v6186
        %v6252 = vunpack.c.h.b16 %v6186
        %v6253 = vunpack.c.l.b16 %v6187
        %v6254 = vunpack.c.h.b16 %v6187
        %v6255 = vunpack.c.l.b16 %v6188
        %v6256 = vunpack.c.h.b16 %v6188
        %v6257 = vunpack.c.l.b16 %v6189
        %v6258 = vunpack.c.h.b16 %v6189
        %v6259 = vunpack.c.l.b16 %v6190
        %v6260 = vunpack.c.h.b16 %v6190
        %v6261 = vunpack.c.l.b16 %v6191
        %v6262 = vunpack.c.h.b16 %v6191
        %v6263 = vunpack.c.l.b16 %v6192
        %v6264 = vunpack.c.h.b16 %v6192
        %v6265 = vunpack.c.l.b16 %v6193
        %v6266 = vunpack.c.h.b16 %v6193
        %v6267 = vunpack.c.l.b16 %v6194
        %v6268 = vunpack.c.h.b16 %v6194
        %v6269 = vunpack.c.l.b16 %v6195
        %v6270 = vunpack.c.h.b16 %v6195
        %v6271 = vunpack.c.l.b16 %v6196
        %v6272 = vunpack.c.h.b16 %v6196
        %v6273 = vunpack.c.l.b16 %v6197
        %v6274 = vunpack.c.h.b16 %v6197
        %v6275 = vunpack.c.l.b16 %v6198
        %v6276 = vunpack.c.h.b16 %v6198
        %v6277 = vunpack.c.l.b16 %v6199
        %v6278 = vunpack.c.h.b16 %v6199
        %v6279 = vpack.c.b16 %v6249, %v6247
        %v6280 = vpack.c.b16 %v6250, %v6248
        %v6281 = vpack.c.b16 %v6253, %v6251
        %v6282 = vpack.c.b16 %v6254, %v6252
        %v6283 = vpack.c.b16 %v6257, %v6255
        %v6284 = vpack.c.b16 %v6258, %v6256
        %v6285 = vpack.c.b16 %v6261, %v6259
        %v6286 = vpack.c.b16 %v6262, %v6260
        %v6287 = vpack.c.b16 %v6265, %v6263
        %v6288 = vpack.c.b16 %v6266, %v6264
        %v6289 = vpack.c.b16 %v6269, %v6267
        %v6290 = vpack.c.b16 %v6270, %v6268
        %v6291 = vpack.c.b16 %v6273, %v6271
        %v6292 = vpack.c.b16 %v6274, %v6272
        %v6293 = vpack.c.b16 %v6277, %v6275
        %v6294 = vpack.c.b16 %v6278, %v6276
        %6311 = vmatprep.subr.bf16.mxu0 %v6280
        %6312 = vmatpush1.bf16.msra.mxu0 %v6279
        %6313 = vmatprep.subr.bf16.mxu0 %v6282
        %6314 = vmatpush1.bf16.msra.mxu0 %v6281
        %6315 = vmatprep.subr.bf16.mxu0 %v6284
        %6316 = vmatpush1.bf16.msra.mxu0 %v6283
        %6317 = vmatprep.subr.bf16.mxu0 %v6286
        %6318 = vmatpush1.bf16.msra.mxu0 %v6285
        %6319 = vmatprep.subr.bf16.mxu0 %v6288
        %6320 = vmatpush1.bf16.msra.mxu0 %v6287
        %6321 = vmatprep.subr.bf16.mxu0 %v6290
        %6322 = vmatpush1.bf16.msra.mxu0 %v6289
        %6323 = vmatprep.subr.bf16.mxu0 %v6292
        %6324 = vmatpush1.bf16.msra.mxu0 %v6291
        %6325 = vmatprep.subr.bf16.mxu0 %v6294
        %6326 = vmatpush1.bf16.msra.mxu0 %v6293
        %6327 = vmatprep.subr.bf16.mxu0 0
        %6328 = vmatpush1.bf16.msra.mxu0 0
        %6329 = vmatprep.subr.bf16.mxu0 0
        %6330 = vmatpush1.bf16.msra.mxu0 0
        %6331 = vmatprep.subr.bf16.mxu0 0
        %6332 = vmatpush1.bf16.msra.mxu0 0
        %6333 = vmatprep.subr.bf16.mxu0 0
        %6334 = vmatpush1.bf16.msra.mxu0 0
        %6335 = vmatprep.subr.bf16.mxu0 0
        %6336 = vmatpush1.bf16.msra.mxu0 0
        %6337 = vmatprep.subr.bf16.mxu0 0
        %6338 = vmatpush1.bf16.msra.mxu0 0
        %6339 = vmatprep.subr.bf16.mxu0 0
        %6340 = vmatpush1.bf16.msra.mxu0 0
        %6341 = vmatprep.subr.bf16.mxu0 0
        %6342 = vmatpush1.bf16.msra.mxu0 0
        %6343 = vmatprep.mubr.bf16.mxu0 0
        %6344 = vmatmul.mubr.bf16.gmra.mrb[0].mxu0 %v6211
        %v6345 = vpop.f32.mrb[0].mxu0
        %v6346 = vadd.f32 0.0, %v6345
        %v6347 = vpop.f32.mrb[0].mxu0
        %v6348 = vadd.f32 0.0, %v6347
        %v6349 = vpop.f32.mrb[0].mxu0
        %v6350 = vadd.f32 0.0, %v6349
        %v6351 = vpop.f32.mrb[0].mxu0
        %v6352 = vadd.f32 0.0, %v6351
        %6353 = vmatprep.mubr.bf16.mxu0 0
        %6354 = vmatmul.mubr.bf16.gmra.mrb[0].mxu0 %v6219
        %v6355 = vpop.f32.mrb[0].mxu0
        %v6356 = vadd.f32 0.0, %v6355
        %v6357 = vpop.f32.mrb[0].mxu0
        %v6358 = vadd.f32 0.0, %v6357
        %v6359 = vpop.f32.mrb[0].mxu0
        %v6360 = vadd.f32 0.0, %v6359
        %v6361 = vpop.f32.mrb[0].mxu0
        %v6362 = vadd.f32 0.0, %v6361
        %6363 = vmatprep.mubr.bf16.mxu0 0
        %6364 = vmatmul.mubr.bf16.gmra.mrb[0].mxu0 %v6227
        %v6365 = vpop.f32.mrb[0].mxu0
        %v6366 = vadd.f32 0.0, %v6365
        %v6367 = vpop.f32.mrb[0].mxu0
        %v6368 = vadd.f32 0.0, %v6367
        %v6369 = vpop.f32.mrb[0].mxu0
        %v6370 = vadd.f32 0.0, %v6369
        %v6371 = vpop.f32.mrb[0].mxu0
        %v6372 = vadd.f32 0.0, %v6371
        %6373 = vdwg.mxu0
        %v6390 = vunpack.c.l.b16 %v6164
        %v6391 = vunpack.c.h.b16 %v6164
        %v6392 = vunpack.c.l.b16 %v6165
        %v6393 = vunpack.c.h.b16 %v6165
        %v6394 = vunpack.c.l.b16 %v6166
        %v6395 = vunpack.c.h.b16 %v6166
        %v6396 = vunpack.c.l.b16 %v6167
        %v6397 = vunpack.c.h.b16 %v6167
        %v6398 = vunpack.c.l.b16 %v6168
        %v6399 = vunpack.c.h.b16 %v6168
        %v6400 = vunpack.c.l.b16 %v6169
        %v6401 = vunpack.c.h.b16 %v6169
        %v6402 = vunpack.c.l.b16 %v6170
        %v6403 = vunpack.c.h.b16 %v6170
        %v6404 = vunpack.c.l.b16 %v6171
        %v6405 = vunpack.c.h.b16 %v6171
        %v6406 = vunpack.c.l.b16 %v6172
        %v6407 = vunpack.c.h.b16 %v6172
        %v6408 = vunpack.c.l.b16 %v6173
        %v6409 = vunpack.c.h.b16 %v6173
        %v6410 = vunpack.c.l.b16 %v6174
        %v6411 = vunpack.c.h.b16 %v6174
        %v6412 = vunpack.c.l.b16 %v6175
        %v6413 = vunpack.c.h.b16 %v6175
        %v6414 = vunpack.c.l.b16 %v6176
        %v6415 = vunpack.c.h.b16 %v6176
        %v6416 = vunpack.c.l.b16 %v6177
        %v6417 = vunpack.c.h.b16 %v6177
        %v6418 = vunpack.c.l.b16 %v6178
        %v6419 = vunpack.c.h.b16 %v6178
        %v6420 = vunpack.c.l.b16 %v6179
        %v6421 = vunpack.c.h.b16 %v6179
        %v6422 = vpack.c.b16 %v6392, %v6390
        %v6423 = vpack.c.b16 %v6393, %v6391
        %v6424 = vpack.c.b16 %v6396, %v6394
        %v6425 = vpack.c.b16 %v6397, %v6395
        %v6426 = vpack.c.b16 %v6400, %v6398
        %v6427 = vpack.c.b16 %v6401, %v6399
        %v6428 = vpack.c.b16 %v6404, %v6402
        %v6429 = vpack.c.b16 %v6405, %v6403
        %v6430 = vpack.c.b16 %v6408, %v6406
        %v6431 = vpack.c.b16 %v6409, %v6407
        %v6432 = vpack.c.b16 %v6412, %v6410
        %v6433 = vpack.c.b16 %v6413, %v6411
        %v6434 = vpack.c.b16 %v6416, %v6414
        %v6435 = vpack.c.b16 %v6417, %v6415
        %v6436 = vpack.c.b16 %v6420, %v6418
        %v6437 = vpack.c.b16 %v6421, %v6419
        %6454 = vmatprep.subr.bf16.mxu0 %v6423
        %6455 = vmatpush1.bf16.msra.mxu0 %v6422
        %6456 = vmatprep.subr.bf16.mxu0 %v6425
        %6457 = vmatpush1.bf16.msra.mxu0 %v6424
        %6458 = vmatprep.subr.bf16.mxu0 %v6427
        %6459 = vmatpush1.bf16.msra.mxu0 %v6426
        %6460 = vmatprep.subr.bf16.mxu0 %v6429
        %6461 = vmatpush1.bf16.msra.mxu0 %v6428
        %6462 = vmatprep.subr.bf16.mxu0 %v6431
        %6463 = vmatpush1.bf16.msra.mxu0 %v6430
        %6464 = vmatprep.subr.bf16.mxu0 %v6433
        %6465 = vmatpush1.bf16.msra.mxu0 %v6432
        %6466 = vmatprep.subr.bf16.mxu0 %v6435
        %6467 = vmatpush1.bf16.msra.mxu0 %v6434
        %6468 = vmatprep.subr.bf16.mxu0 %v6437
        %6469 = vmatpush1.bf16.msra.mxu0 %v6436
        %6470 = vmatprep.subr.bf16.mxu0 0
        %6471 = vmatpush1.bf16.msra.mxu0 0
        %6472 = vmatprep.subr.bf16.mxu0 0
        %6473 = vmatpush1.bf16.msra.mxu0 0
        %6474 = vmatprep.subr.bf16.mxu0 0
        %6475 = vmatpush1.bf16.msra.mxu0 0
        %6476 = vmatprep.subr.bf16.mxu0 0
        %6477 = vmatpush1.bf16.msra.mxu0 0
        %6478 = vmatprep.subr.bf16.mxu0 0
        %6479 = vmatpush1.bf16.msra.mxu0 0
        %6480 = vmatprep.subr.bf16.mxu0 0
        %6481 = vmatpush1.bf16.msra.mxu0 0
        %6482 = vmatprep.subr.bf16.mxu0 0
        %6483 = vmatpush1.bf16.msra.mxu0 0
        %6484 = vmatprep.subr.bf16.mxu0 0
        %6485 = vmatpush1.bf16.msra.mxu0 0
        %6486 = vmatprep.mubr.bf16.mxu0 0
        %6487 = vmatmul.mubr.bf16.gmra.mrb[0].mxu0 %v6161
        %v6488 = vpop.f32.mrb[0].mxu0
        %v6489 = vadd.f32 %v6346, %v6488
        %v6490 = vpop.f32.mrb[0].mxu0
        %v6491 = vadd.f32 %v6348, %v6490
        %v6492 = vpop.f32.mrb[0].mxu0
        %v6493 = vadd.f32 %v6350, %v6492
        %v6494 = vpop.f32.mrb[0].mxu0
        %v6495 = vadd.f32 %v6352, %v6494
        %6496 = vmatprep.mubr.bf16.mxu0 0
        %6497 = vmatmul.mubr.bf16.gmra.mrb[0].mxu0 %v6162
        %v6498 = vpop.f32.mrb[0].mxu0
        %v6499 = vadd.f32 %v6356, %v6498
        %v6500 = vpop.f32.mrb[0].mxu0
        %v6501 = vadd.f32 %v6358, %v6500
        %v6502 = vpop.f32.mrb[0].mxu0
        %v6503 = vadd.f32 %v6360, %v6502
        %v6504 = vpop.f32.mrb[0].mxu0
        %v6505 = vadd.f32 %v6362, %v6504
        %6506 = vmatprep.mubr.bf16.mxu0 0
        %6507 = vmatmul.mubr.bf16.gmra.mrb[0].mxu0 %v6163
        %v6508 = vpop.f32.mrb[0].mxu0
        %v6509 = vadd.f32 %v6366, %v6508
        %v6510 = vpop.f32.mrb[0].mxu0
        %v6511 = vadd.f32 %v6368, %v6510
        %v6512 = vpop.f32.mrb[0].mxu0
        %v6513 = vadd.f32 %v6370, %v6512
        %v6514 = vpop.f32.mrb[0].mxu0
        %v6515 = vadd.f32 %v6372, %v6514
        %6516 = vdwg.mxu0
        %v6517 = vld [vmem:[#allocation4] sm:$0xfe]
        %v6518 = vld [vmem:[#allocation15 + $0x100] sm:$0xff]
        %v6519 = vld [vmem:[#allocation15 + $0x108] sm:$0xff]
        %v6520 = vld [vmem:[#allocation15 + $0x110] sm:$0xff]
        %v6521 = vld [vmem:[#allocation15 + $0x118] sm:$0xff]
        %v6522 = vld [vmem:[#allocation15 + $0x120] sm:$0xff]
        %v6523 = vld [vmem:[#allocation15 + $0x128] sm:$0xff]
        %v6524 = vld [vmem:[#allocation15 + $0x130] sm:$0xff]
        %v6525 = vld [vmem:[#allocation15 + $0x138] sm:$0xff]
        %v6526 = vld [vmem:[#allocation15 + $0x140] sm:$0xff]
        %v6527 = vld [vmem:[#allocation15 + $0x148] sm:$0xff]
        %v6528 = vld [vmem:[#allocation15 + $0x150] sm:$0xff]
        %v6529 = vld [vmem:[#allocation15 + $0x158] sm:$0xff]
        %v6530 = vld [vmem:[#allocation15 + $0x160] sm:$0xff]
        %v6531 = vld [vmem:[#allocation15 + $0x168] sm:$0xff]
        %v6532 = vld [vmem:[#allocation15 + $0x170] sm:$0xff]
        %v6533 = vld [vmem:[#allocation15 + $0x178] sm:$0xff]
        %v6538 = vrot.slane %v6517, 1
        %v6539 = vrot.slane %v6181, 1
        %v6540 = vsel %vm1378, %v6538, %v6539
        %v6541 = vrot.slane %v6182, 1
        %v6542 = vsel %vm1378, %v6539, %v6541
        %v6543 = vrot.slane %v6183, 1
        %v6544 = vsel %vm1378, %v6541, %v6543
        %v6564 = vunpack.c.l.b16 %v6518
        %v6565 = vunpack.c.h.b16 %v6518
        %v6566 = vunpack.c.l.b16 %v6519
        %v6567 = vunpack.c.h.b16 %v6519
        %v6568 = vunpack.c.l.b16 %v6520
        %v6569 = vunpack.c.h.b16 %v6520
        %v6570 = vunpack.c.l.b16 %v6521
        %v6571 = vunpack.c.h.b16 %v6521
        %v6572 = vunpack.c.l.b16 %v6522
        %v6573 = vunpack.c.h.b16 %v6522
        %v6574 = vunpack.c.l.b16 %v6523
        %v6575 = vunpack.c.h.b16 %v6523
        %v6576 = vunpack.c.l.b16 %v6524
        %v6577 = vunpack.c.h.b16 %v6524
        %v6578 = vunpack.c.l.b16 %v6525
        %v6579 = vunpack.c.h.b16 %v6525
        %v6580 = vunpack.c.l.b16 %v6526
        %v6581 = vunpack.c.h.b16 %v6526
        %v6582 = vunpack.c.l.b16 %v6527
        %v6583 = vunpack.c.h.b16 %v6527
        %v6584 = vunpack.c.l.b16 %v6528
        %v6585 = vunpack.c.h.b16 %v6528
        %v6586 = vunpack.c.l.b16 %v6529
        %v6587 = vunpack.c.h.b16 %v6529
        %v6588 = vunpack.c.l.b16 %v6530
        %v6589 = vunpack.c.h.b16 %v6530
        %v6590 = vunpack.c.l.b16 %v6531
        %v6591 = vunpack.c.h.b16 %v6531
        %v6592 = vunpack.c.l.b16 %v6532
        %v6593 = vunpack.c.h.b16 %v6532
        %v6594 = vunpack.c.l.b16 %v6533
        %v6595 = vunpack.c.h.b16 %v6533
        %v6596 = vpack.c.b16 %v6566, %v6564
        %v6597 = vpack.c.b16 %v6567, %v6565
        %v6598 = vpack.c.b16 %v6570, %v6568
        %v6599 = vpack.c.b16 %v6571, %v6569
        %v6600 = vpack.c.b16 %v6574, %v6572
        %v6601 = vpack.c.b16 %v6575, %v6573
        %v6602 = vpack.c.b16 %v6578, %v6576
        %v6603 = vpack.c.b16 %v6579, %v6577
        %v6604 = vpack.c.b16 %v6582, %v6580
        %v6605 = vpack.c.b16 %v6583, %v6581
        %v6606 = vpack.c.b16 %v6586, %v6584
        %v6607 = vpack.c.b16 %v6587, %v6585
        %v6608 = vpack.c.b16 %v6590, %v6588
        %v6609 = vpack.c.b16 %v6591, %v6589
        %v6610 = vpack.c.b16 %v6594, %v6592
        %v6611 = vpack.c.b16 %v6595, %v6593
        %6628 = vmatprep.subr.bf16.mxu0 %v6597
        %6629 = vmatpush1.bf16.msra.mxu0 %v6596
        %6630 = vmatprep.subr.bf16.mxu0 %v6599
        %6631 = vmatpush1.bf16.msra.mxu0 %v6598
        %6632 = vmatprep.subr.bf16.mxu0 %v6601
        %6633 = vmatpush1.bf16.msra.mxu0 %v6600
        %6634 = vmatprep.subr.bf16.mxu0 %v6603
        %6635 = vmatpush1.bf16.msra.mxu0 %v6602
        %6636 = vmatprep.subr.bf16.mxu0 %v6605
        %6637 = vmatpush1.bf16.msra.mxu0 %v6604
        %6638 = vmatprep.subr.bf16.mxu0 %v6607
        %6639 = vmatpush1.bf16.msra.mxu0 %v6606
        %6640 = vmatprep.subr.bf16.mxu0 %v6609
        %6641 = vmatpush1.bf16.msra.mxu0 %v6608
        %6642 = vmatprep.subr.bf16.mxu0 %v6611
        %6643 = vmatpush1.bf16.msra.mxu0 %v6610
        %6644 = vmatprep.subr.bf16.mxu0 0
        %6645 = vmatpush1.bf16.msra.mxu0 0
        %6646 = vmatprep.subr.bf16.mxu0 0
        %6647 = vmatpush1.bf16.msra.mxu0 0
        %6648 = vmatprep.subr.bf16.mxu0 0
        %6649 = vmatpush1.bf16.msra.mxu0 0
        %6650 = vmatprep.subr.bf16.mxu0 0
        %6651 = vmatpush1.bf16.msra.mxu0 0
        %6652 = vmatprep.subr.bf16.mxu0 0
        %6653 = vmatpush1.bf16.msra.mxu0 0
        %6654 = vmatprep.subr.bf16.mxu0 0
        %6655 = vmatpush1.bf16.msra.mxu0 0
        %6656 = vmatprep.subr.bf16.mxu0 0
        %6657 = vmatpush1.bf16.msra.mxu0 0
        %6658 = vmatprep.subr.bf16.mxu0 0
        %6659 = vmatpush1.bf16.msra.mxu0 0
        %6660 = vmatprep.mubr.bf16.mxu0 0
        %6661 = vmatmul.mubr.bf16.gmra.mrb[0].mxu0 %v6540
        %v6662 = vpop.f32.mrb[0].mxu0
        %v6663 = vadd.f32 0.0, %v6662
        %v6664 = vpop.f32.mrb[0].mxu0
        %v6665 = vadd.f32 0.0, %v6664
        %v6666 = vpop.f32.mrb[0].mxu0
        %v6667 = vadd.f32 0.0, %v6666
        %v6668 = vpop.f32.mrb[0].mxu0
        %v6669 = vadd.f32 0.0, %v6668
        %6670 = vmatprep.mubr.bf16.mxu0 0
        %6671 = vmatmul.mubr.bf16.gmra.mrb[0].mxu0 %v6542
        %v6672 = vpop.f32.mrb[0].mxu0
        %v6673 = vadd.f32 0.0, %v6672
        %v6674 = vpop.f32.mrb[0].mxu0
        %v6675 = vadd.f32 0.0, %v6674
        %v6676 = vpop.f32.mrb[0].mxu0
        %v6677 = vadd.f32 0.0, %v6676
        %v6678 = vpop.f32.mrb[0].mxu0
        %v6679 = vadd.f32 0.0, %v6678
        %6680 = vmatprep.mubr.bf16.mxu0 0
        %6681 = vmatmul.mubr.bf16.gmra.mrb[0].mxu0 %v6544
        %v6682 = vpop.f32.mrb[0].mxu0
        %v6683 = vadd.f32 0.0, %v6682
        %v6684 = vpop.f32.mrb[0].mxu0
        %v6685 = vadd.f32 0.0, %v6684
        %v6686 = vpop.f32.mrb[0].mxu0
        %v6687 = vadd.f32 0.0, %v6686
        %v6688 = vpop.f32.mrb[0].mxu0
        %v6689 = vadd.f32 0.0, %v6688
        %6690 = vdwg.mxu0
        %v6691 = vadd.f32 %v6489, %v6663
        %v6692 = vadd.f32 %v6491, %v6665
        %v6693 = vadd.f32 %v6493, %v6667
        %v6694 = vadd.f32 %v6495, %v6669
        %v6695 = vadd.f32 %v6499, %v6673
        %v6696 = vadd.f32 %v6501, %v6675
        %v6697 = vadd.f32 %v6503, %v6677
        %v6698 = vadd.f32 %v6505, %v6679
        %v6699 = vadd.f32 %v6509, %v6683
        %v6700 = vadd.f32 %v6511, %v6685
        %v6701 = vadd.f32 %v6513, %v6687
        %v6702 = vadd.f32 %v6515, %v6689
        %v6703 = vld [vmem:[#allocation4 + $0x18] sm:$0x3]
        %v6704 = vld [vmem:[#allocation15 + $0x180] sm:$0xff]
        %v6705 = vld [vmem:[#allocation15 + $0x188] sm:$0xff]
        %v6706 = vld [vmem:[#allocation15 + $0x190] sm:$0xff]
        %v6707 = vld [vmem:[#allocation15 + $0x198] sm:$0xff]
        %v6708 = vld [vmem:[#allocation15 + $0x1a0] sm:$0xff]
        %v6709 = vld [vmem:[#allocation15 + $0x1a8] sm:$0xff]
        %v6710 = vld [vmem:[#allocation15 + $0x1b0] sm:$0xff]
        %v6711 = vld [vmem:[#allocation15 + $0x1b8] sm:$0xff]
        %v6712 = vld [vmem:[#allocation15 + $0x1c0] sm:$0xff]
        %v6713 = vld [vmem:[#allocation15 + $0x1c8] sm:$0xff]
        %v6714 = vld [vmem:[#allocation15 + $0x1d0] sm:$0xff]
        %v6715 = vld [vmem:[#allocation15 + $0x1d8] sm:$0xff]
        %v6716 = vld [vmem:[#allocation15 + $0x1e0] sm:$0xff]
        %v6717 = vld [vmem:[#allocation15 + $0x1e8] sm:$0xff]
        %v6718 = vld [vmem:[#allocation15 + $0x1f0] sm:$0xff]
        %v6719 = vld [vmem:[#allocation15 + $0x1f8] sm:$0xff]
        %v6721 = vshrl.u32 %v6517, 16
        %v6723 = vrot.slane %v6721, 1
        %v6724 = vshll.u32 %v6517, 16
        %v6726 = vrot.slane %v6724, 2
        %v6727 = vor.u32 %v6723, %v6726
        %v6728 = vrot.slane %v6212, 1
        %v6729 = vrot.slane %v6208, 2
        %v6730 = vor.u32 %v6728, %v6729
        %v6731 = vsel %vm1621, %v6727, %v6730
        %v6732 = vrot.slane %v6220, 1
        %v6733 = vrot.slane %v6216, 2
        %v6734 = vor.u32 %v6732, %v6733
        %v6735 = vsel %vm1621, %v6730, %v6734
        %v6737 = vshrl.u32 %v6703, 16
        %v6739 = vrot.slane %v6737, 1
        %v6740 = vshll.u32 %v6703, 16
        %v6742 = vrot.slane %v6740, 2
        %v6743 = vor.u32 %v6739, %v6742
        %v6744 = vsel %vm1621, %v6734, %v6743
        %v6764 = vunpack.c.l.b16 %v6704
        %v6765 = vunpack.c.h.b16 %v6704
        %v6766 = vunpack.c.l.b16 %v6705
        %v6767 = vunpack.c.h.b16 %v6705
        %v6768 = vunpack.c.l.b16 %v6706
        %v6769 = vunpack.c.h.b16 %v6706
        %v6770 = vunpack.c.l.b16 %v6707
        %v6771 = vunpack.c.h.b16 %v6707
        %v6772 = vunpack.c.l.b16 %v6708
        %v6773 = vunpack.c.h.b16 %v6708
        %v6774 = vunpack.c.l.b16 %v6709
        %v6775 = vunpack.c.h.b16 %v6709
        %v6776 = vunpack.c.l.b16 %v6710
        %v6777 = vunpack.c.h.b16 %v6710
        %v6778 = vunpack.c.l.b16 %v6711
        %v6779 = vunpack.c.h.b16 %v6711
        %v6780 = vunpack.c.l.b16 %v6712
        %v6781 = vunpack.c.h.b16 %v6712
        %v6782 = vunpack.c.l.b16 %v6713
        %v6783 = vunpack.c.h.b16 %v6713
        %v6784 = vunpack.c.l.b16 %v6714
        %v6785 = vunpack.c.h.b16 %v6714
        %v6786 = vunpack.c.l.b16 %v6715
        %v6787 = vunpack.c.h.b16 %v6715
        %v6788 = vunpack.c.l.b16 %v6716
        %v6789 = vunpack.c.h.b16 %v6716
        %v6790 = vunpack.c.l.b16 %v6717
        %v6791 = vunpack.c.h.b16 %v6717
        %v6792 = vunpack.c.l.b16 %v6718
        %v6793 = vunpack.c.h.b16 %v6718
        %v6794 = vunpack.c.l.b16 %v6719
        %v6795 = vunpack.c.h.b16 %v6719
        %v6796 = vpack.c.b16 %v6766, %v6764
        %v6797 = vpack.c.b16 %v6767, %v6765
        %v6798 = vpack.c.b16 %v6770, %v6768
        %v6799 = vpack.c.b16 %v6771, %v6769
        %v6800 = vpack.c.b16 %v6774, %v6772
        %v6801 = vpack.c.b16 %v6775, %v6773
        %v6802 = vpack.c.b16 %v6778, %v6776
        %v6803 = vpack.c.b16 %v6779, %v6777
        %v6804 = vpack.c.b16 %v6782, %v6780
        %v6805 = vpack.c.b16 %v6783, %v6781
        %v6806 = vpack.c.b16 %v6786, %v6784
        %v6807 = vpack.c.b16 %v6787, %v6785
        %v6808 = vpack.c.b16 %v6790, %v6788
        %v6809 = vpack.c.b16 %v6791, %v6789
        %v6810 = vpack.c.b16 %v6794, %v6792
        %v6811 = vpack.c.b16 %v6795, %v6793
        %6828 = vmatprep.subr.bf16.mxu0 %v6797
        %6829 = vmatpush1.bf16.msra.mxu0 %v6796
        %6830 = vmatprep.subr.bf16.mxu0 %v6799
        %6831 = vmatpush1.bf16.msra.mxu0 %v6798
        %6832 = vmatprep.subr.bf16.mxu0 %v6801
        %6833 = vmatpush1.bf16.msra.mxu0 %v6800
        %6834 = vmatprep.subr.bf16.mxu0 %v6803
        %6835 = vmatpush1.bf16.msra.mxu0 %v6802
        %6836 = vmatprep.subr.bf16.mxu0 %v6805
        %6837 = vmatpush1.bf16.msra.mxu0 %v6804
        %6838 = vmatprep.subr.bf16.mxu0 %v6807
        %6839 = vmatpush1.bf16.msra.mxu0 %v6806
        %6840 = vmatprep.subr.bf16.mxu0 %v6809
        %6841 = vmatpush1.bf16.msra.mxu0 %v6808
        %6842 = vmatprep.subr.bf16.mxu0 %v6811
        %6843 = vmatpush1.bf16.msra.mxu0 %v6810
        %6844 = vmatprep.subr.bf16.mxu0 0
        %6845 = vmatpush1.bf16.msra.mxu0 0
        %6846 = vmatprep.subr.bf16.mxu0 0
        %6847 = vmatpush1.bf16.msra.mxu0 0
        %6848 = vmatprep.subr.bf16.mxu0 0
        %6849 = vmatpush1.bf16.msra.mxu0 0
        %6850 = vmatprep.subr.bf16.mxu0 0
        %6851 = vmatpush1.bf16.msra.mxu0 0
        %6852 = vmatprep.subr.bf16.mxu0 0
        %6853 = vmatpush1.bf16.msra.mxu0 0
        %6854 = vmatprep.subr.bf16.mxu0 0
        %6855 = vmatpush1.bf16.msra.mxu0 0
        %6856 = vmatprep.subr.bf16.mxu0 0
        %6857 = vmatpush1.bf16.msra.mxu0 0
        %6858 = vmatprep.subr.bf16.mxu0 0
        %6859 = vmatpush1.bf16.msra.mxu0 0
        %6860 = vmatprep.mubr.bf16.mxu0 0
        %6861 = vmatmul.mubr.bf16.gmra.mrb[0].mxu0 %v6731
        %v6862 = vpop.f32.mrb[0].mxu0
        %v6863 = vadd.f32 0.0, %v6862
        %v6864 = vpop.f32.mrb[0].mxu0
        %v6865 = vadd.f32 0.0, %v6864
        %v6866 = vpop.f32.mrb[0].mxu0
        %v6867 = vadd.f32 0.0, %v6866
        %v6868 = vpop.f32.mrb[0].mxu0
        %v6869 = vadd.f32 0.0, %v6868
        %6870 = vmatprep.mubr.bf16.mxu0 0
        %6871 = vmatmul.mubr.bf16.gmra.mrb[0].mxu0 %v6735
        %v6872 = vpop.f32.mrb[0].mxu0
        %v6873 = vadd.f32 0.0, %v6872
        %v6874 = vpop.f32.mrb[0].mxu0
        %v6875 = vadd.f32 0.0, %v6874
        %v6876 = vpop.f32.mrb[0].mxu0
        %v6877 = vadd.f32 0.0, %v6876
        %v6878 = vpop.f32.mrb[0].mxu0
        %v6879 = vadd.f32 0.0, %v6878
        %6880 = vmatprep.mubr.bf16.mxu0 0
        %6881 = vmatmul.mubr.bf16.gmra.mrb[0].mxu0 %v6744
        %v6882 = vpop.f32.mrb[0].mxu0
        %v6883 = vadd.f32 0.0, %v6882
        %v6884 = vpop.f32.mrb[0].mxu0
        %v6885 = vadd.f32 0.0, %v6884
        %v6886 = vpop.f32.mrb[0].mxu0
        %v6887 = vadd.f32 0.0, %v6886
        %v6888 = vpop.f32.mrb[0].mxu0
        %v6889 = vadd.f32 0.0, %v6888
        %6890 = vdwg.mxu0
        %v6891 = vadd.f32 %v6691, %v6863
        %v6892 = vadd.f32 %v6692, %v6865
        %v6893 = vadd.f32 %v6693, %v6867
        %v6894 = vadd.f32 %v6694, %v6869
        %v6895 = vadd.f32 %v6695, %v6873
        %v6896 = vadd.f32 %v6696, %v6875
        %v6897 = vadd.f32 %v6697, %v6877
        %v6898 = vadd.f32 %v6698, %v6879
        %v6899 = vadd.f32 %v6699, %v6883
        %v6900 = vadd.f32 %v6700, %v6885
        %v6901 = vadd.f32 %v6701, %v6887
        %v6902 = vadd.f32 %v6702, %v6889
        %v6903 = vld [vmem:[#allocation4] sm:$0xfc]
        %v6904 = vld [vmem:[#allocation15 + $0x200] sm:$0xff]
        %v6905 = vld [vmem:[#allocation15 + $0x208] sm:$0xff]
        %v6906 = vld [vmem:[#allocation15 + $0x210] sm:$0xff]
        %v6907 = vld [vmem:[#allocation15 + $0x218] sm:$0xff]
        %v6908 = vld [vmem:[#allocation15 + $0x220] sm:$0xff]
        %v6909 = vld [vmem:[#allocation15 + $0x228] sm:$0xff]
        %v6910 = vld [vmem:[#allocation15 + $0x230] sm:$0xff]
        %v6911 = vld [vmem:[#allocation15 + $0x238] sm:$0xff]
        %v6912 = vld [vmem:[#allocation15 + $0x240] sm:$0xff]
        %v6913 = vld [vmem:[#allocation15 + $0x248] sm:$0xff]
        %v6914 = vld [vmem:[#allocation15 + $0x250] sm:$0xff]
        %v6915 = vld [vmem:[#allocation15 + $0x258] sm:$0xff]
        %v6916 = vld [vmem:[#allocation15 + $0x260] sm:$0xff]
        %v6917 = vld [vmem:[#allocation15 + $0x268] sm:$0xff]
        %v6918 = vld [vmem:[#allocation15 + $0x270] sm:$0xff]
        %v6919 = vld [vmem:[#allocation15 + $0x278] sm:$0xff]
        %v6922 = vrot.slane %v6903, 2
        %v6923 = vrot.slane %v6181, 2
        %v6924 = vsel %vm1900, %v6922, %v6923
        %v6925 = vrot.slane %v6182, 2
        %v6926 = vsel %vm1900, %v6923, %v6925
        %v6927 = vrot.slane %v6703, 2
        %v6928 = vsel %vm1900, %v6925, %v6927
        %v6948 = vunpack.c.l.b16 %v6904
        %v6949 = vunpack.c.h.b16 %v6904
        %v6950 = vunpack.c.l.b16 %v6905
        %v6951 = vunpack.c.h.b16 %v6905
        %v6952 = vunpack.c.l.b16 %v6906
        %v6953 = vunpack.c.h.b16 %v6906
        %v6954 = vunpack.c.l.b16 %v6907
        %v6955 = vunpack.c.h.b16 %v6907
        %v6956 = vunpack.c.l.b16 %v6908
        %v6957 = vunpack.c.h.b16 %v6908
        %v6958 = vunpack.c.l.b16 %v6909
        %v6959 = vunpack.c.h.b16 %v6909
        %v6960 = vunpack.c.l.b16 %v6910
        %v6961 = vunpack.c.h.b16 %v6910
        %v6962 = vunpack.c.l.b16 %v6911
        %v6963 = vunpack.c.h.b16 %v6911
        %v6964 = vunpack.c.l.b16 %v6912
        %v6965 = vunpack.c.h.b16 %v6912
        %v6966 = vunpack.c.l.b16 %v6913
        %v6967 = vunpack.c.h.b16 %v6913
        %v6968 = vunpack.c.l.b16 %v6914
        %v6969 = vunpack.c.h.b16 %v6914
        %v6970 = vunpack.c.l.b16 %v6915
        %v6971 = vunpack.c.h.b16 %v6915
        %v6972 = vunpack.c.l.b16 %v6916
        %v6973 = vunpack.c.h.b16 %v6916
        %v6974 = vunpack.c.l.b16 %v6917
        %v6975 = vunpack.c.h.b16 %v6917
        %v6976 = vunpack.c.l.b16 %v6918
        %v6977 = vunpack.c.h.b16 %v6918
        %v6978 = vunpack.c.l.b16 %v6919
        %v6979 = vunpack.c.h.b16 %v6919
        %v6980 = vpack.c.b16 %v6950, %v6948
        %v6981 = vpack.c.b16 %v6951, %v6949
        %v6982 = vpack.c.b16 %v6954, %v6952
        %v6983 = vpack.c.b16 %v6955, %v6953
        %v6984 = vpack.c.b16 %v6958, %v6956
        %v6985 = vpack.c.b16 %v6959, %v6957
        %v6986 = vpack.c.b16 %v6962, %v6960
        %v6987 = vpack.c.b16 %v6963, %v6961
        %v6988 = vpack.c.b16 %v6966, %v6964
        %v6989 = vpack.c.b16 %v6967, %v6965
        %v6990 = vpack.c.b16 %v6970, %v6968
        %v6991 = vpack.c.b16 %v6971, %v6969
        %v6992 = vpack.c.b16 %v6974, %v6972
        %v6993 = vpack.c.b16 %v6975, %v6973
        %v6994 = vpack.c.b16 %v6978, %v6976
        %v6995 = vpack.c.b16 %v6979, %v6977
        %7012 = vmatprep.subr.bf16.mxu0 %v6981
        %7013 = vmatpush1.bf16.msra.mxu0 %v6980
        %7014 = vmatprep.subr.bf16.mxu0 %v6983
        %7015 = vmatpush1.bf16.msra.mxu0 %v6982
        %7016 = vmatprep.subr.bf16.mxu0 %v6985
        %7017 = vmatpush1.bf16.msra.mxu0 %v6984
        %7018 = vmatprep.subr.bf16.mxu0 %v6987
        %7019 = vmatpush1.bf16.msra.mxu0 %v6986
        %7020 = vmatprep.subr.bf16.mxu0 %v6989
        %7021 = vmatpush1.bf16.msra.mxu0 %v6988
        %7022 = vmatprep.subr.bf16.mxu0 %v6991
        %7023 = vmatpush1.bf16.msra.mxu0 %v6990
        %7024 = vmatprep.subr.bf16.mxu0 %v6993
        %7025 = vmatpush1.bf16.msra.mxu0 %v6992
        %7026 = vmatprep.subr.bf16.mxu0 %v6995
        %7027 = vmatpush1.bf16.msra.mxu0 %v6994
        %7028 = vmatprep.subr.bf16.mxu0 0
        %7029 = vmatpush1.bf16.msra.mxu0 0
        %7030 = vmatprep.subr.bf16.mxu0 0
        %7031 = vmatpush1.bf16.msra.mxu0 0
        %7032 = vmatprep.subr.bf16.mxu0 0
        %7033 = vmatpush1.bf16.msra.mxu0 0
        %7034 = vmatprep.subr.bf16.mxu0 0
        %7035 = vmatpush1.bf16.msra.mxu0 0
        %7036 = vmatprep.subr.bf16.mxu0 0
        %7037 = vmatpush1.bf16.msra.mxu0 0
        %7038 = vmatprep.subr.bf16.mxu0 0
        %7039 = vmatpush1.bf16.msra.mxu0 0
        %7040 = vmatprep.subr.bf16.mxu0 0
        %7041 = vmatpush1.bf16.msra.mxu0 0
        %7042 = vmatprep.subr.bf16.mxu0 0
        %7043 = vmatpush1.bf16.msra.mxu0 0
        %7044 = vmatprep.mubr.bf16.mxu0 0
        %7045 = vmatmul.mubr.bf16.gmra.mrb[0].mxu0 %v6924
        %v7046 = vpop.f32.mrb[0].mxu0
        %v7047 = vadd.f32 0.0, %v7046
        %v7048 = vpop.f32.mrb[0].mxu0
        %v7049 = vadd.f32 0.0, %v7048
        %v7050 = vpop.f32.mrb[0].mxu0
        %v7051 = vadd.f32 0.0, %v7050
        %v7052 = vpop.f32.mrb[0].mxu0
        %v7053 = vadd.f32 0.0, %v7052
        %7054 = vmatprep.mubr.bf16.mxu0 0
        %7055 = vmatmul.mubr.bf16.gmra.mrb[0].mxu0 %v6926
        %v7056 = vpop.f32.mrb[0].mxu0
        %v7057 = vadd.f32 0.0, %v7056
        %v7058 = vpop.f32.mrb[0].mxu0
        %v7059 = vadd.f32 0.0, %v7058
        %v7060 = vpop.f32.mrb[0].mxu0
        %v7061 = vadd.f32 0.0, %v7060
        %v7062 = vpop.f32.mrb[0].mxu0
        %v7063 = vadd.f32 0.0, %v7062
        %7064 = vmatprep.mubr.bf16.mxu0 0
        %7065 = vmatmul.mubr.bf16.gmra.mrb[0].mxu0 %v6928
        %v7066 = vpop.f32.mrb[0].mxu0
        %v7067 = vadd.f32 0.0, %v7066
        %v7068 = vpop.f32.mrb[0].mxu0
        %v7069 = vadd.f32 0.0, %v7068
        %v7070 = vpop.f32.mrb[0].mxu0
        %v7071 = vadd.f32 0.0, %v7070
        %v7072 = vpop.f32.mrb[0].mxu0
        %v7073 = vadd.f32 0.0, %v7072
        %7074 = vdwg.mxu0
        %v7075 = vadd.f32 %v6891, %v7047
        %v7076 = vadd.f32 %v6892, %v7049
        %v7077 = vadd.f32 %v6893, %v7051
        %v7078 = vadd.f32 %v6894, %v7053
        %v7079 = vadd.f32 %v6895, %v7057
        %v7080 = vadd.f32 %v6896, %v7059
        %v7081 = vadd.f32 %v6897, %v7061
        %v7082 = vadd.f32 %v6898, %v7063
        %v7083 = vadd.f32 %v6899, %v7067
        %v7084 = vadd.f32 %v6900, %v7069
        %v7085 = vadd.f32 %v6901, %v7071
        %v7086 = vadd.f32 %v6902, %v7073
        %v7087 = vld [vmem:[#allocation4 + $0x18] sm:$0x7]
        %v7088 = vld [vmem:[#allocation15 + $0x280] sm:$0xff]
        %v7089 = vld [vmem:[#allocation15 + $0x288] sm:$0xff]
        %v7090 = vld [vmem:[#allocation15 + $0x290] sm:$0xff]
        %v7091 = vld [vmem:[#allocation15 + $0x298] sm:$0xff]
        %v7092 = vld [vmem:[#allocation15 + $0x2a0] sm:$0xff]
        %v7093 = vld [vmem:[#allocation15 + $0x2a8] sm:$0xff]
        %v7094 = vld [vmem:[#allocation15 + $0x2b0] sm:$0xff]
        %v7095 = vld [vmem:[#allocation15 + $0x2b8] sm:$0xff]
        %v7096 = vld [vmem:[#allocation15 + $0x2c0] sm:$0xff]
        %v7097 = vld [vmem:[#allocation15 + $0x2c8] sm:$0xff]
        %v7098 = vld [vmem:[#allocation15 + $0x2d0] sm:$0xff]
        %v7099 = vld [vmem:[#allocation15 + $0x2d8] sm:$0xff]
        %v7100 = vld [vmem:[#allocation15 + $0x2e0] sm:$0xff]
        %v7101 = vld [vmem:[#allocation15 + $0x2e8] sm:$0xff]
        %v7102 = vld [vmem:[#allocation15 + $0x2f0] sm:$0xff]
        %v7103 = vld [vmem:[#allocation15 + $0x2f8] sm:$0xff]
        %v7105 = vshrl.u32 %v6903, 16
        %v7107 = vrot.slane %v7105, 2
        %v7108 = vshll.u32 %v6903, 16
        %v7110 = vrot.slane %v7108, 3
        %v7111 = vor.u32 %v7107, %v7110
        %v7112 = vrot.slane %v6212, 2
        %v7113 = vrot.slane %v6208, 3
        %v7114 = vor.u32 %v7112, %v7113
        %v7115 = vsel %vm2143, %v7111, %v7114
        %v7116 = vrot.slane %v6220, 2
        %v7117 = vrot.slane %v6216, 3
        %v7118 = vor.u32 %v7116, %v7117
        %v7119 = vsel %vm2143, %v7114, %v7118
        %v7121 = vshrl.u32 %v7087, 16
        %v7123 = vrot.slane %v7121, 2
        %v7124 = vshll.u32 %v7087, 16
        %v7126 = vrot.slane %v7124, 3
        %v7127 = vor.u32 %v7123, %v7126
        %v7128 = vsel %vm2143, %v7118, %v7127
        %v7148 = vunpack.c.l.b16 %v7088
        %v7149 = vunpack.c.h.b16 %v7088
        %v7150 = vunpack.c.l.b16 %v7089
        %v7151 = vunpack.c.h.b16 %v7089
        %v7152 = vunpack.c.l.b16 %v7090
        %v7153 = vunpack.c.h.b16 %v7090
        %v7154 = vunpack.c.l.b16 %v7091
        %v7155 = vunpack.c.h.b16 %v7091
        %v7156 = vunpack.c.l.b16 %v7092
        %v7157 = vunpack.c.h.b16 %v7092
        %v7158 = vunpack.c.l.b16 %v7093
        %v7159 = vunpack.c.h.b16 %v7093
        %v7160 = vunpack.c.l.b16 %v7094
        %v7161 = vunpack.c.h.b16 %v7094
        %v7162 = vunpack.c.l.b16 %v7095
        %v7163 = vunpack.c.h.b16 %v7095
        %v7164 = vunpack.c.l.b16 %v7096
        %v7165 = vunpack.c.h.b16 %v7096
        %v7166 = vunpack.c.l.b16 %v7097
        %v7167 = vunpack.c.h.b16 %v7097
        %v7168 = vunpack.c.l.b16 %v7098
        %v7169 = vunpack.c.h.b16 %v7098
        %v7170 = vunpack.c.l.b16 %v7099
        %v7171 = vunpack.c.h.b16 %v7099
        %v7172 = vunpack.c.l.b16 %v7100
        %v7173 = vunpack.c.h.b16 %v7100
        %v7174 = vunpack.c.l.b16 %v7101
        %v7175 = vunpack.c.h.b16 %v7101
        %v7176 = vunpack.c.l.b16 %v7102
        %v7177 = vunpack.c.h.b16 %v7102
        %v7178 = vunpack.c.l.b16 %v7103
        %v7179 = vunpack.c.h.b16 %v7103
        %v7180 = vpack.c.b16 %v7150, %v7148
        %v7181 = vpack.c.b16 %v7151, %v7149
        %v7182 = vpack.c.b16 %v7154, %v7152
        %v7183 = vpack.c.b16 %v7155, %v7153
        %v7184 = vpack.c.b16 %v7158, %v7156
        %v7185 = vpack.c.b16 %v7159, %v7157
        %v7186 = vpack.c.b16 %v7162, %v7160
        %v7187 = vpack.c.b16 %v7163, %v7161
        %v7188 = vpack.c.b16 %v7166, %v7164
        %v7189 = vpack.c.b16 %v7167, %v7165
        %v7190 = vpack.c.b16 %v7170, %v7168
        %v7191 = vpack.c.b16 %v7171, %v7169
        %v7192 = vpack.c.b16 %v7174, %v7172
        %v7193 = vpack.c.b16 %v7175, %v7173
        %v7194 = vpack.c.b16 %v7178, %v7176
        %v7195 = vpack.c.b16 %v7179, %v7177
        %7212 = vmatprep.subr.bf16.mxu0 %v7181
        %7213 = vmatpush1.bf16.msra.mxu0 %v7180
        %7214 = vmatprep.subr.bf16.mxu0 %v7183
        %7215 = vmatpush1.bf16.msra.mxu0 %v7182
        %7216 = vmatprep.subr.bf16.mxu0 %v7185
        %7217 = vmatpush1.bf16.msra.mxu0 %v7184
        %7218 = vmatprep.subr.bf16.mxu0 %v7187
        %7219 = vmatpush1.bf16.msra.mxu0 %v7186
        %7220 = vmatprep.subr.bf16.mxu0 %v7189
        %7221 = vmatpush1.bf16.msra.mxu0 %v7188
        %7222 = vmatprep.subr.bf16.mxu0 %v7191
        %7223 = vmatpush1.bf16.msra.mxu0 %v7190
        %7224 = vmatprep.subr.bf16.mxu0 %v7193
        %7225 = vmatpush1.bf16.msra.mxu0 %v7192
        %7226 = vmatprep.subr.bf16.mxu0 %v7195
        %7227 = vmatpush1.bf16.msra.mxu0 %v7194
        %7228 = vmatprep.subr.bf16.mxu0 0
        %7229 = vmatpush1.bf16.msra.mxu0 0
        %7230 = vmatprep.subr.bf16.mxu0 0
        %7231 = vmatpush1.bf16.msra.mxu0 0
        %7232 = vmatprep.subr.bf16.mxu0 0
        %7233 = vmatpush1.bf16.msra.mxu0 0
        %7234 = vmatprep.subr.bf16.mxu0 0
        %7235 = vmatpush1.bf16.msra.mxu0 0
        %7236 = vmatprep.subr.bf16.mxu0 0
        %7237 = vmatpush1.bf16.msra.mxu0 0
        %7238 = vmatprep.subr.bf16.mxu0 0
        %7239 = vmatpush1.bf16.msra.mxu0 0
        %7240 = vmatprep.subr.bf16.mxu0 0
        %7241 = vmatpush1.bf16.msra.mxu0 0
        %7242 = vmatprep.subr.bf16.mxu0 0
        %7243 = vmatpush1.bf16.msra.mxu0 0
        %7244 = vmatprep.mubr.bf16.mxu0 0
        %7245 = vmatmul.mubr.bf16.gmra.mrb[0].mxu0 %v7115
        %v7246 = vpop.f32.mrb[0].mxu0
        %v7247 = vadd.f32 0.0, %v7246
        %v7248 = vpop.f32.mrb[0].mxu0
        %v7249 = vadd.f32 0.0, %v7248
        %v7250 = vpop.f32.mrb[0].mxu0
        %v7251 = vadd.f32 0.0, %v7250
        %v7252 = vpop.f32.mrb[0].mxu0
        %v7253 = vadd.f32 0.0, %v7252
        %7254 = vmatprep.mubr.bf16.mxu0 0
        %7255 = vmatmul.mubr.bf16.gmra.mrb[0].mxu0 %v7119
        %v7256 = vpop.f32.mrb[0].mxu0
        %v7257 = vadd.f32 0.0, %v7256
        %v7258 = vpop.f32.mrb[0].mxu0
        %v7259 = vadd.f32 0.0, %v7258
        %v7260 = vpop.f32.mrb[0].mxu0
        %v7261 = vadd.f32 0.0, %v7260
        %v7262 = vpop.f32.mrb[0].mxu0
        %v7263 = vadd.f32 0.0, %v7262
        %7264 = vmatprep.mubr.bf16.mxu0 0
        %7265 = vmatmul.mubr.bf16.gmra.mrb[0].mxu0 %v7128
        %v7266 = vpop.f32.mrb[0].mxu0
        %v7267 = vadd.f32 0.0, %v7266
        %v7268 = vpop.f32.mrb[0].mxu0
        %v7269 = vadd.f32 0.0, %v7268
        %v7270 = vpop.f32.mrb[0].mxu0
        %v7271 = vadd.f32 0.0, %v7270
        %v7272 = vpop.f32.mrb[0].mxu0
        %v7273 = vadd.f32 0.0, %v7272
        %7274 = vdwg.mxu0
        %v7275 = vadd.f32 %v7075, %v7247
        %v7276 = vadd.f32 %v7076, %v7249
        %v7277 = vadd.f32 %v7077, %v7251
        %v7278 = vadd.f32 %v7078, %v7253
        %v7279 = vadd.f32 %v7079, %v7257
        %v7280 = vadd.f32 %v7080, %v7259
        %v7281 = vadd.f32 %v7081, %v7261
        %v7282 = vadd.f32 %v7082, %v7263
        %v7283 = vadd.f32 %v7083, %v7267
        %v7284 = vadd.f32 %v7084, %v7269
        %v7285 = vadd.f32 %v7085, %v7271
        %v7286 = vadd.f32 %v7086, %v7273
        %v7287 = vld [vmem:[#allocation4] sm:$0xf8]
        %v7288 = vld [vmem:[#allocation15 + $0x300] sm:$0xff]
        %v7289 = vld [vmem:[#allocation15 + $0x308] sm:$0xff]
        %v7290 = vld [vmem:[#allocation15 + $0x310] sm:$0xff]
        %v7291 = vld [vmem:[#allocation15 + $0x318] sm:$0xff]
        %v7292 = vld [vmem:[#allocation15 + $0x320] sm:$0xff]
        %v7293 = vld [vmem:[#allocation15 + $0x328] sm:$0xff]
        %v7294 = vld [vmem:[#allocation15 + $0x330] sm:$0xff]
        %v7295 = vld [vmem:[#allocation15 + $0x338] sm:$0xff]
        %v7296 = vld [vmem:[#allocation15 + $0x340] sm:$0xff]
        %v7297 = vld [vmem:[#allocation15 + $0x348] sm:$0xff]
        %v7298 = vld [vmem:[#allocation15 + $0x350] sm:$0xff]
        %v7299 = vld [vmem:[#allocation15 + $0x358] sm:$0xff]
        %v7300 = vld [vmem:[#allocation15 + $0x360] sm:$0xff]
        %v7301 = vld [vmem:[#allocation15 + $0x368] sm:$0xff]
        %v7302 = vld [vmem:[#allocation15 + $0x370] sm:$0xff]
        %v7303 = vld [vmem:[#allocation15 + $0x378] sm:$0xff]
        %v7306 = vrot.slane %v7287, 3
        %v7307 = vrot.slane %v6181, 3
        %v7308 = vsel %vm2422, %v7306, %v7307
        %v7309 = vrot.slane %v6182, 3
        %v7310 = vsel %vm2422, %v7307, %v7309
        %v7311 = vrot.slane %v7087, 3
        %v7312 = vsel %vm2422, %v7309, %v7311
        %v7332 = vunpack.c.l.b16 %v7288
        %v7333 = vunpack.c.h.b16 %v7288
        %v7334 = vunpack.c.l.b16 %v7289
        %v7335 = vunpack.c.h.b16 %v7289
        %v7336 = vunpack.c.l.b16 %v7290
        %v7337 = vunpack.c.h.b16 %v7290
        %v7338 = vunpack.c.l.b16 %v7291
        %v7339 = vunpack.c.h.b16 %v7291
        %v7340 = vunpack.c.l.b16 %v7292
        %v7341 = vunpack.c.h.b16 %v7292
        %v7342 = vunpack.c.l.b16 %v7293
        %v7343 = vunpack.c.h.b16 %v7293
        %v7344 = vunpack.c.l.b16 %v7294
        %v7345 = vunpack.c.h.b16 %v7294
        %v7346 = vunpack.c.l.b16 %v7295
        %v7347 = vunpack.c.h.b16 %v7295
        %v7348 = vunpack.c.l.b16 %v7296
        %v7349 = vunpack.c.h.b16 %v7296
        %v7350 = vunpack.c.l.b16 %v7297
        %v7351 = vunpack.c.h.b16 %v7297
        %v7352 = vunpack.c.l.b16 %v7298
        %v7353 = vunpack.c.h.b16 %v7298
        %v7354 = vunpack.c.l.b16 %v7299
        %v7355 = vunpack.c.h.b16 %v7299
        %v7356 = vunpack.c.l.b16 %v7300
        %v7357 = vunpack.c.h.b16 %v7300
        %v7358 = vunpack.c.l.b16 %v7301
        %v7359 = vunpack.c.h.b16 %v7301
        %v7360 = vunpack.c.l.b16 %v7302
        %v7361 = vunpack.c.h.b16 %v7302
        %v7362 = vunpack.c.l.b16 %v7303
        %v7363 = vunpack.c.h.b16 %v7303
        %v7364 = vpack.c.b16 %v7334, %v7332
        %v7365 = vpack.c.b16 %v7335, %v7333
        %v7366 = vpack.c.b16 %v7338, %v7336
        %v7367 = vpack.c.b16 %v7339, %v7337
        %v7368 = vpack.c.b16 %v7342, %v7340
        %v7369 = vpack.c.b16 %v7343, %v7341
        %v7370 = vpack.c.b16 %v7346, %v7344
        %v7371 = vpack.c.b16 %v7347, %v7345
        %v7372 = vpack.c.b16 %v7350, %v7348
        %v7373 = vpack.c.b16 %v7351, %v7349
        %v7374 = vpack.c.b16 %v7354, %v7352
        %v7375 = vpack.c.b16 %v7355, %v7353
        %v7376 = vpack.c.b16 %v7358, %v7356
        %v7377 = vpack.c.b16 %v7359, %v7357
        %v7378 = vpack.c.b16 %v7362, %v7360
        %v7379 = vpack.c.b16 %v7363, %v7361
        %7396 = vmatprep.subr.bf16.mxu0 %v7365
        %7397 = vmatpush1.bf16.msra.mxu0 %v7364
        %7398 = vmatprep.subr.bf16.mxu0 %v7367
        %7399 = vmatpush1.bf16.msra.mxu0 %v7366
        %7400 = vmatprep.subr.bf16.mxu0 %v7369
        %7401 = vmatpush1.bf16.msra.mxu0 %v7368
        %7402 = vmatprep.subr.bf16.mxu0 %v7371
        %7403 = vmatpush1.bf16.msra.mxu0 %v7370
        %7404 = vmatprep.subr.bf16.mxu0 %v7373
        %7405 = vmatpush1.bf16.msra.mxu0 %v7372
        %7406 = vmatprep.subr.bf16.mxu0 %v7375
        %7407 = vmatpush1.bf16.msra.mxu0 %v7374
        %7408 = vmatprep.subr.bf16.mxu0 %v7377
        %7409 = vmatpush1.bf16.msra.mxu0 %v7376
        %7410 = vmatprep.subr.bf16.mxu0 %v7379
        %7411 = vmatpush1.bf16.msra.mxu0 %v7378
        %7412 = vmatprep.subr.bf16.mxu0 0
        %7413 = vmatpush1.bf16.msra.mxu0 0
        %7414 = vmatprep.subr.bf16.mxu0 0
        %7415 = vmatpush1.bf16.msra.mxu0 0
        %7416 = vmatprep.subr.bf16.mxu0 0
        %7417 = vmatpush1.bf16.msra.mxu0 0
        %7418 = vmatprep.subr.bf16.mxu0 0
        %7419 = vmatpush1.bf16.msra.mxu0 0
        %7420 = vmatprep.subr.bf16.mxu0 0
        %7421 = vmatpush1.bf16.msra.mxu0 0
        %7422 = vmatprep.subr.bf16.mxu0 0
        %7423 = vmatpush1.bf16.msra.mxu0 0
        %7424 = vmatprep.subr.bf16.mxu0 0
        %7425 = vmatpush1.bf16.msra.mxu0 0
        %7426 = vmatprep.subr.bf16.mxu0 0
        %7427 = vmatpush1.bf16.msra.mxu0 0
        %7428 = vmatprep.mubr.bf16.mxu0 0
        %7429 = vmatmul.mubr.bf16.gmra.mrb[0].mxu0 %v7308
        %v7430 = vpop.f32.mrb[0].mxu0
        %v7431 = vadd.f32 0.0, %v7430
        %v7432 = vpop.f32.mrb[0].mxu0
        %v7433 = vadd.f32 0.0, %v7432
        %v7434 = vpop.f32.mrb[0].mxu0
        %v7435 = vadd.f32 0.0, %v7434
        %v7436 = vpop.f32.mrb[0].mxu0
        %v7437 = vadd.f32 0.0, %v7436
        %7438 = vmatprep.mubr.bf16.mxu0 0
        %7439 = vmatmul.mubr.bf16.gmra.mrb[0].mxu0 %v7310
        %v7440 = vpop.f32.mrb[0].mxu0
        %v7441 = vadd.f32 0.0, %v7440
        %v7442 = vpop.f32.mrb[0].mxu0
        %v7443 = vadd.f32 0.0, %v7442
        %v7444 = vpop.f32.mrb[0].mxu0
        %v7445 = vadd.f32 0.0, %v7444
        %v7446 = vpop.f32.mrb[0].mxu0
        %v7447 = vadd.f32 0.0, %v7446
        %7448 = vmatprep.mubr.bf16.mxu0 0
        %7449 = vmatmul.mubr.bf16.gmra.mrb[0].mxu0 %v7312
        %v7450 = vpop.f32.mrb[0].mxu0
        %v7451 = vadd.f32 0.0, %v7450
        %v7452 = vpop.f32.mrb[0].mxu0
        %v7453 = vadd.f32 0.0, %v7452
        %v7454 = vpop.f32.mrb[0].mxu0
        %v7455 = vadd.f32 0.0, %v7454
        %v7456 = vpop.f32.mrb[0].mxu0
        %v7457 = vadd.f32 0.0, %v7456
        %7458 = vdwg.mxu0
        %v7459 = vadd.f32 %v7275, %v7431
        %v7460 = vadd.f32 %v7276, %v7433
        %v7461 = vadd.f32 %v7277, %v7435
        %v7462 = vadd.f32 %v7278, %v7437
        %v7463 = vadd.f32 %v7279, %v7441
        %v7464 = vadd.f32 %v7280, %v7443
        %v7465 = vadd.f32 %v7281, %v7445
        %v7466 = vadd.f32 %v7282, %v7447
        %v7467 = vadd.f32 %v7283, %v7451
        %v7468 = vadd.f32 %v7284, %v7453
        %v7469 = vadd.f32 %v7285, %v7455
        %v7470 = vadd.f32 %v7286, %v7457
        %v7471 = vld [vmem:[#allocation4 + $0x18] sm:$0xf]
        %v7472 = vld [vmem:[#allocation15 + $0x380] sm:$0xff]
        %v7473 = vld [vmem:[#allocation15 + $0x388] sm:$0xff]
        %v7474 = vld [vmem:[#allocation15 + $0x390] sm:$0xff]
        %v7475 = vld [vmem:[#allocation15 + $0x398] sm:$0xff]
        %v7476 = vld [vmem:[#allocation15 + $0x3a0] sm:$0xff]
        %v7477 = vld [vmem:[#allocation15 + $0x3a8] sm:$0xff]
        %v7478 = vld [vmem:[#allocation15 + $0x3b0] sm:$0xff]
        %v7479 = vld [vmem:[#allocation15 + $0x3b8] sm:$0xff]
        %v7480 = vld [vmem:[#allocation15 + $0x3c0] sm:$0xff]
        %v7481 = vld [vmem:[#allocation15 + $0x3c8] sm:$0xff]
        %v7482 = vld [vmem:[#allocation15 + $0x3d0] sm:$0xff]
        %v7483 = vld [vmem:[#allocation15 + $0x3d8] sm:$0xff]
        %v7484 = vld [vmem:[#allocation15 + $0x3e0] sm:$0xff]
        %v7485 = vld [vmem:[#allocation15 + $0x3e8] sm:$0xff]
        %v7486 = vld [vmem:[#allocation15 + $0x3f0] sm:$0xff]
        %v7487 = vld [vmem:[#allocation15 + $0x3f8] sm:$0xff]
        %v7489 = vshrl.u32 %v7287, 16
        %v7491 = vrot.slane %v7489, 3
        %v7492 = vshll.u32 %v7287, 16
        %v7494 = vrot.slane %v7492, 4
        %v7495 = vor.u32 %v7491, %v7494
        %v7496 = vrot.slane %v6212, 3
        %v7497 = vrot.slane %v6208, 4
        %v7498 = vor.u32 %v7496, %v7497
        %v7499 = vsel %vm2665, %v7495, %v7498
        %v7500 = vrot.slane %v6220, 3
        %v7501 = vrot.slane %v6216, 4
        %v7502 = vor.u32 %v7500, %v7501
        %v7503 = vsel %vm2665, %v7498, %v7502
        %v7505 = vshrl.u32 %v7471, 16
        %v7507 = vrot.slane %v7505, 3
        %v7508 = vshll.u32 %v7471, 16
        %v7510 = vrot.slane %v7508, 4
        %v7511 = vor.u32 %v7507, %v7510
        %v7512 = vsel %vm2665, %v7502, %v7511
        %v7532 = vunpack.c.l.b16 %v7472
        %v7533 = vunpack.c.h.b16 %v7472
        %v7534 = vunpack.c.l.b16 %v7473
        %v7535 = vunpack.c.h.b16 %v7473
        %v7536 = vunpack.c.l.b16 %v7474
        %v7537 = vunpack.c.h.b16 %v7474
        %v7538 = vunpack.c.l.b16 %v7475
        %v7539 = vunpack.c.h.b16 %v7475
        %v7540 = vunpack.c.l.b16 %v7476
        %v7541 = vunpack.c.h.b16 %v7476
        %v7542 = vunpack.c.l.b16 %v7477
        %v7543 = vunpack.c.h.b16 %v7477
        %v7544 = vunpack.c.l.b16 %v7478
        %v7545 = vunpack.c.h.b16 %v7478
        %v7546 = vunpack.c.l.b16 %v7479
        %v7547 = vunpack.c.h.b16 %v7479
        %v7548 = vunpack.c.l.b16 %v7480
        %v7549 = vunpack.c.h.b16 %v7480
        %v7550 = vunpack.c.l.b16 %v7481
        %v7551 = vunpack.c.h.b16 %v7481
        %v7552 = vunpack.c.l.b16 %v7482
        %v7553 = vunpack.c.h.b16 %v7482
        %v7554 = vunpack.c.l.b16 %v7483
        %v7555 = vunpack.c.h.b16 %v7483
        %v7556 = vunpack.c.l.b16 %v7484
        %v7557 = vunpack.c.h.b16 %v7484
        %v7558 = vunpack.c.l.b16 %v7485
        %v7559 = vunpack.c.h.b16 %v7485
        %v7560 = vunpack.c.l.b16 %v7486
        %v7561 = vunpack.c.h.b16 %v7486
        %v7562 = vunpack.c.l.b16 %v7487
        %v7563 = vunpack.c.h.b16 %v7487
        %v7564 = vpack.c.b16 %v7534, %v7532
        %v7565 = vpack.c.b16 %v7535, %v7533
        %v7566 = vpack.c.b16 %v7538, %v7536
        %v7567 = vpack.c.b16 %v7539, %v7537
        %v7568 = vpack.c.b16 %v7542, %v7540
        %v7569 = vpack.c.b16 %v7543, %v7541
        %v7570 = vpack.c.b16 %v7546, %v7544
        %v7571 = vpack.c.b16 %v7547, %v7545
        %v7572 = vpack.c.b16 %v7550, %v7548
        %v7573 = vpack.c.b16 %v7551, %v7549
        %v7574 = vpack.c.b16 %v7554, %v7552
        %v7575 = vpack.c.b16 %v7555, %v7553
        %v7576 = vpack.c.b16 %v7558, %v7556
        %v7577 = vpack.c.b16 %v7559, %v7557
        %v7578 = vpack.c.b16 %v7562, %v7560
        %v7579 = vpack.c.b16 %v7563, %v7561
        %7596 = vmatprep.subr.bf16.mxu0 %v7565
        %7597 = vmatpush1.bf16.msra.mxu0 %v7564
        %7598 = vmatprep.subr.bf16.mxu0 %v7567
        %7599 = vmatpush1.bf16.msra.mxu0 %v7566
        %7600 = vmatprep.subr.bf16.mxu0 %v7569
        %7601 = vmatpush1.bf16.msra.mxu0 %v7568
        %7602 = vmatprep.subr.bf16.mxu0 %v7571
        %7603 = vmatpush1.bf16.msra.mxu0 %v7570
        %7604 = vmatprep.subr.bf16.mxu0 %v7573
        %7605 = vmatpush1.bf16.msra.mxu0 %v7572
        %7606 = vmatprep.subr.bf16.mxu0 %v7575
        %7607 = vmatpush1.bf16.msra.mxu0 %v7574
        %7608 = vmatprep.subr.bf16.mxu0 %v7577
        %7609 = vmatpush1.bf16.msra.mxu0 %v7576
        %7610 = vmatprep.subr.bf16.mxu0 %v7579
        %7611 = vmatpush1.bf16.msra.mxu0 %v7578
        %7612 = vmatprep.subr.bf16.mxu0 0
        %7613 = vmatpush1.bf16.msra.mxu0 0
        %7614 = vmatprep.subr.bf16.mxu0 0
        %7615 = vmatpush1.bf16.msra.mxu0 0
        %7616 = vmatprep.subr.bf16.mxu0 0
        %7617 = vmatpush1.bf16.msra.mxu0 0
        %7618 = vmatprep.subr.bf16.mxu0 0
        %7619 = vmatpush1.bf16.msra.mxu0 0
        %7620 = vmatprep.subr.bf16.mxu0 0
        %7621 = vmatpush1.bf16.msra.mxu0 0
        %7622 = vmatprep.subr.bf16.mxu0 0
        %7623 = vmatpush1.bf16.msra.mxu0 0
        %7624 = vmatprep.subr.bf16.mxu0 0
        %7625 = vmatpush1.bf16.msra.mxu0 0
        %7626 = vmatprep.subr.bf16.mxu0 0
        %7627 = vmatpush1.bf16.msra.mxu0 0
        %7628 = vmatprep.mubr.bf16.mxu0 0
        %7629 = vmatmul.mubr.bf16.gmra.mrb[0].mxu0 %v7499
        %v7630 = vpop.f32.mrb[0].mxu0
        %v7631 = vadd.f32 0.0, %v7630
        %v7632 = vpop.f32.mrb[0].mxu0
        %v7633 = vadd.f32 0.0, %v7632
        %v7634 = vpop.f32.mrb[0].mxu0
        %v7635 = vadd.f32 0.0, %v7634
        %v7636 = vpop.f32.mrb[0].mxu0
        %v7637 = vadd.f32 0.0, %v7636
        %7638 = vmatprep.mubr.bf16.mxu0 0
        %7639 = vmatmul.mubr.bf16.gmra.mrb[0].mxu0 %v7503
        %v7640 = vpop.f32.mrb[0].mxu0
        %v7641 = vadd.f32 0.0, %v7640
        %v7642 = vpop.f32.mrb[0].mxu0
        %v7643 = vadd.f32 0.0, %v7642
        %v7644 = vpop.f32.mrb[0].mxu0
        %v7645 = vadd.f32 0.0, %v7644
        %v7646 = vpop.f32.mrb[0].mxu0
        %v7647 = vadd.f32 0.0, %v7646
        %7648 = vmatprep.mubr.bf16.mxu0 0
        %7649 = vmatmul.mubr.bf16.gmra.mrb[0].mxu0 %v7512
        %v7650 = vpop.f32.mrb[0].mxu0
        %v7651 = vadd.f32 0.0, %v7650
        %v7652 = vpop.f32.mrb[0].mxu0
        %v7653 = vadd.f32 0.0, %v7652
        %v7654 = vpop.f32.mrb[0].mxu0
        %v7655 = vadd.f32 0.0, %v7654
        %v7656 = vpop.f32.mrb[0].mxu0
        %v7657 = vadd.f32 0.0, %v7656
        %7658 = vdwg.mxu0
        %v7659 = vadd.f32 %v7459, %v7631
        %v7660 = vadd.f32 %v7460, %v7633
        %v7661 = vadd.f32 %v7461, %v7635
        %v7662 = vadd.f32 %v7462, %v7637
        %v7663 = vadd.f32 %v7463, %v7641
        %v7664 = vadd.f32 %v7464, %v7643
        %v7665 = vadd.f32 %v7465, %v7645
        %v7666 = vadd.f32 %v7466, %v7647
        %v7667 = vadd.f32 %v7467, %v7651
        %v7668 = vadd.f32 %v7468, %v7653
        %v7669 = vadd.f32 %v7469, %v7655
        %v7670 = vadd.f32 %v7470, %v7657
        %v7671 = vld [vmem:[#allocation4] sm:$0xf0]
        %v7672 = vld [vmem:[#allocation15 + $0x400] sm:$0xff]
        %v7673 = vld [vmem:[#allocation15 + $0x408] sm:$0xff]
        %v7674 = vld [vmem:[#allocation15 + $0x410] sm:$0xff]
        %v7675 = vld [vmem:[#allocation15 + $0x418] sm:$0xff]
        %v7676 = vld [vmem:[#allocation15 + $0x420] sm:$0xff]
        %v7677 = vld [vmem:[#allocation15 + $0x428] sm:$0xff]
        %v7678 = vld [vmem:[#allocation15 + $0x430] sm:$0xff]
        %v7679 = vld [vmem:[#allocation15 + $0x438] sm:$0xff]
        %v7680 = vld [vmem:[#allocation15 + $0x440] sm:$0xff]
        %v7681 = vld [vmem:[#allocation15 + $0x448] sm:$0xff]
        %v7682 = vld [vmem:[#allocation15 + $0x450] sm:$0xff]
        %v7683 = vld [vmem:[#allocation15 + $0x458] sm:$0xff]
        %v7684 = vld [vmem:[#allocation15 + $0x460] sm:$0xff]
        %v7685 = vld [vmem:[#allocation15 + $0x468] sm:$0xff]
        %v7686 = vld [vmem:[#allocation15 + $0x470] sm:$0xff]
        %v7687 = vld [vmem:[#allocation15 + $0x478] sm:$0xff]
        %v7690 = vrot.slane %v7671, 4
        %v7691 = vrot.slane %v6181, 4
        %v7692 = vsel %vm2944, %v7690, %v7691
        %v7693 = vrot.slane %v6182, 4
        %v7694 = vsel %vm2944, %v7691, %v7693
        %v7695 = vrot.slane %v7471, 4
        %v7696 = vsel %vm2944, %v7693, %v7695
        %v7716 = vunpack.c.l.b16 %v7672
        %v7717 = vunpack.c.h.b16 %v7672
        %v7718 = vunpack.c.l.b16 %v7673
        %v7719 = vunpack.c.h.b16 %v7673
        %v7720 = vunpack.c.l.b16 %v7674
        %v7721 = vunpack.c.h.b16 %v7674
        %v7722 = vunpack.c.l.b16 %v7675
        %v7723 = vunpack.c.h.b16 %v7675
        %v7724 = vunpack.c.l.b16 %v7676
        %v7725 = vunpack.c.h.b16 %v7676
        %v7726 = vunpack.c.l.b16 %v7677
        %v7727 = vunpack.c.h.b16 %v7677
        %v7728 = vunpack.c.l.b16 %v7678
        %v7729 = vunpack.c.h.b16 %v7678
        %v7730 = vunpack.c.l.b16 %v7679
        %v7731 = vunpack.c.h.b16 %v7679
        %v7732 = vunpack.c.l.b16 %v7680
        %v7733 = vunpack.c.h.b16 %v7680
        %v7734 = vunpack.c.l.b16 %v7681
        %v7735 = vunpack.c.h.b16 %v7681
        %v7736 = vunpack.c.l.b16 %v7682
        %v7737 = vunpack.c.h.b16 %v7682
        %v7738 = vunpack.c.l.b16 %v7683
        %v7739 = vunpack.c.h.b16 %v7683
        %v7740 = vunpack.c.l.b16 %v7684
        %v7741 = vunpack.c.h.b16 %v7684
        %v7742 = vunpack.c.l.b16 %v7685
        %v7743 = vunpack.c.h.b16 %v7685
        %v7744 = vunpack.c.l.b16 %v7686
        %v7745 = vunpack.c.h.b16 %v7686
        %v7746 = vunpack.c.l.b16 %v7687
        %v7747 = vunpack.c.h.b16 %v7687
        %v7748 = vpack.c.b16 %v7718, %v7716
        %v7749 = vpack.c.b16 %v7719, %v7717
        %v7750 = vpack.c.b16 %v7722, %v7720
        %v7751 = vpack.c.b16 %v7723, %v7721
        %v7752 = vpack.c.b16 %v7726, %v7724
        %v7753 = vpack.c.b16 %v7727, %v7725
        %v7754 = vpack.c.b16 %v7730, %v7728
        %v7755 = vpack.c.b16 %v7731, %v7729
        %v7756 = vpack.c.b16 %v7734, %v7732
        %v7757 = vpack.c.b16 %v7735, %v7733
        %v7758 = vpack.c.b16 %v7738, %v7736
        %v7759 = vpack.c.b16 %v7739, %v7737
        %v7760 = vpack.c.b16 %v7742, %v7740
        %v7761 = vpack.c.b16 %v7743, %v7741
        %v7762 = vpack.c.b16 %v7746, %v7744
        %v7763 = vpack.c.b16 %v7747, %v7745
        %7780 = vmatprep.subr.bf16.mxu0 %v7749
        %7781 = vmatpush1.bf16.msra.mxu0 %v7748
        %7782 = vmatprep.subr.bf16.mxu0 %v7751
        %7783 = vmatpush1.bf16.msra.mxu0 %v7750
        %7784 = vmatprep.subr.bf16.mxu0 %v7753
        %7785 = vmatpush1.bf16.msra.mxu0 %v7752
        %7786 = vmatprep.subr.bf16.mxu0 %v7755
        %7787 = vmatpush1.bf16.msra.mxu0 %v7754
        %7788 = vmatprep.subr.bf16.mxu0 %v7757
        %7789 = vmatpush1.bf16.msra.mxu0 %v7756
        %7790 = vmatprep.subr.bf16.mxu0 %v7759
        %7791 = vmatpush1.bf16.msra.mxu0 %v7758
        %7792 = vmatprep.subr.bf16.mxu0 %v7761
        %7793 = vmatpush1.bf16.msra.mxu0 %v7760
        %7794 = vmatprep.subr.bf16.mxu0 %v7763
        %7795 = vmatpush1.bf16.msra.mxu0 %v7762
        %7796 = vmatprep.subr.bf16.mxu0 0
        %7797 = vmatpush1.bf16.msra.mxu0 0
        %7798 = vmatprep.subr.bf16.mxu0 0
        %7799 = vmatpush1.bf16.msra.mxu0 0
        %7800 = vmatprep.subr.bf16.mxu0 0
        %7801 = vmatpush1.bf16.msra.mxu0 0
        %7802 = vmatprep.subr.bf16.mxu0 0
        %7803 = vmatpush1.bf16.msra.mxu0 0
        %7804 = vmatprep.subr.bf16.mxu0 0
        %7805 = vmatpush1.bf16.msra.mxu0 0
        %7806 = vmatprep.subr.bf16.mxu0 0
        %7807 = vmatpush1.bf16.msra.mxu0 0
        %7808 = vmatprep.subr.bf16.mxu0 0
        %7809 = vmatpush1.bf16.msra.mxu0 0
        %7810 = vmatprep.subr.bf16.mxu0 0
        %7811 = vmatpush1.bf16.msra.mxu0 0
        %7812 = vmatprep.mubr.bf16.mxu0 0
        %7813 = vmatmul.mubr.bf16.gmra.mrb[0].mxu0 %v7692
        %v7814 = vpop.f32.mrb[0].mxu0
        %v7815 = vadd.f32 0.0, %v7814
        %v7816 = vpop.f32.mrb[0].mxu0
        %v7817 = vadd.f32 0.0, %v7816
        %v7818 = vpop.f32.mrb[0].mxu0
        %v7819 = vadd.f32 0.0, %v7818
        %v7820 = vpop.f32.mrb[0].mxu0
        %v7821 = vadd.f32 0.0, %v7820
        %7822 = vmatprep.mubr.bf16.mxu0 0
        %7823 = vmatmul.mubr.bf16.gmra.mrb[0].mxu0 %v7694
        %v7824 = vpop.f32.mrb[0].mxu0
        %v7825 = vadd.f32 0.0, %v7824
        %v7826 = vpop.f32.mrb[0].mxu0
        %v7827 = vadd.f32 0.0, %v7826
        %v7828 = vpop.f32.mrb[0].mxu0
        %v7829 = vadd.f32 0.0, %v7828
        %v7830 = vpop.f32.mrb[0].mxu0
        %v7831 = vadd.f32 0.0, %v7830
        %7832 = vmatprep.mubr.bf16.mxu0 0
        %7833 = vmatmul.mubr.bf16.gmra.mrb[0].mxu0 %v7696
        %v7834 = vpop.f32.mrb[0].mxu0
        %v7835 = vadd.f32 0.0, %v7834
        %v7836 = vpop.f32.mrb[0].mxu0
        %v7837 = vadd.f32 0.0, %v7836
        %v7838 = vpop.f32.mrb[0].mxu0
        %v7839 = vadd.f32 0.0, %v7838
        %v7840 = vpop.f32.mrb[0].mxu0
        %v7841 = vadd.f32 0.0, %v7840
        %7842 = vdwg.mxu0
        %v7843 = vadd.f32 %v7659, %v7815
        %v7844 = vadd.f32 %v7660, %v7817
        %v7845 = vadd.f32 %v7661, %v7819
        %v7846 = vadd.f32 %v7662, %v7821
        %v7847 = vadd.f32 %v7663, %v7825
        %v7848 = vadd.f32 %v7664, %v7827
        %v7849 = vadd.f32 %v7665, %v7829
        %v7850 = vadd.f32 %v7666, %v7831
        %v7851 = vadd.f32 %v7667, %v7835
        %v7852 = vadd.f32 %v7668, %v7837
        %v7853 = vadd.f32 %v7669, %v7839
        %v7854 = vadd.f32 %v7670, %v7841
        %v7855 = vld [vmem:[#allocation4 + $0x18] sm:$0x1f]
        %v7856 = vld [vmem:[#allocation15 + $0x480] sm:$0xff]
        %v7857 = vld [vmem:[#allocation15 + $0x488] sm:$0xff]
        %v7858 = vld [vmem:[#allocation15 + $0x490] sm:$0xff]
        %v7859 = vld [vmem:[#allocation15 + $0x498] sm:$0xff]
        %v7860 = vld [vmem:[#allocation15 + $0x4a0] sm:$0xff]
        %v7861 = vld [vmem:[#allocation15 + $0x4a8] sm:$0xff]
        %v7862 = vld [vmem:[#allocation15 + $0x4b0] sm:$0xff]
        %v7863 = vld [vmem:[#allocation15 + $0x4b8] sm:$0xff]
        %v7864 = vld [vmem:[#allocation15 + $0x4c0] sm:$0xff]
        %v7865 = vld [vmem:[#allocation15 + $0x4c8] sm:$0xff]
        %v7866 = vld [vmem:[#allocation15 + $0x4d0] sm:$0xff]
        %v7867 = vld [vmem:[#allocation15 + $0x4d8] sm:$0xff]
        %v7868 = vld [vmem:[#allocation15 + $0x4e0] sm:$0xff]
        %v7869 = vld [vmem:[#allocation15 + $0x4e8] sm:$0xff]
        %v7870 = vld [vmem:[#allocation15 + $0x4f0] sm:$0xff]
        %v7871 = vld [vmem:[#allocation15 + $0x4f8] sm:$0xff]
        %v7873 = vshrl.u32 %v7671, 16
        %v7875 = vrot.slane %v7873, 4
        %v7876 = vshll.u32 %v7671, 16
        %v7878 = vrot.slane %v7876, 5
        %v7879 = vor.u32 %v7875, %v7878
        %v7880 = vrot.slane %v6212, 4
        %v7881 = vrot.slane %v6208, 5
        %v7882 = vor.u32 %v7880, %v7881
        %v7883 = vsel %vm3187, %v7879, %v7882
        %v7884 = vrot.slane %v6220, 4
        %v7885 = vrot.slane %v6216, 5
        %v7886 = vor.u32 %v7884, %v7885
        %v7887 = vsel %vm3187, %v7882, %v7886
        %v7889 = vshrl.u32 %v7855, 16
        %v7891 = vrot.slane %v7889, 4
        %v7892 = vshll.u32 %v7855, 16
        %v7894 = vrot.slane %v7892, 5
        %v7895 = vor.u32 %v7891, %v7894
        %v7896 = vsel %vm3187, %v7886, %v7895
        %v7916 = vunpack.c.l.b16 %v7856
        %v7917 = vunpack.c.h.b16 %v7856
        %v7918 = vunpack.c.l.b16 %v7857
        %v7919 = vunpack.c.h.b16 %v7857
        %v7920 = vunpack.c.l.b16 %v7858
        %v7921 = vunpack.c.h.b16 %v7858
        %v7922 = vunpack.c.l.b16 %v7859
        %v7923 = vunpack.c.h.b16 %v7859
        %v7924 = vunpack.c.l.b16 %v7860
        %v7925 = vunpack.c.h.b16 %v7860
        %v7926 = vunpack.c.l.b16 %v7861
        %v7927 = vunpack.c.h.b16 %v7861
        %v7928 = vunpack.c.l.b16 %v7862
        %v7929 = vunpack.c.h.b16 %v7862
        %v7930 = vunpack.c.l.b16 %v7863
        %v7931 = vunpack.c.h.b16 %v7863
        %v7932 = vunpack.c.l.b16 %v7864
        %v7933 = vunpack.c.h.b16 %v7864
        %v7934 = vunpack.c.l.b16 %v7865
        %v7935 = vunpack.c.h.b16 %v7865
        %v7936 = vunpack.c.l.b16 %v7866
        %v7937 = vunpack.c.h.b16 %v7866
        %v7938 = vunpack.c.l.b16 %v7867
        %v7939 = vunpack.c.h.b16 %v7867
        %v7940 = vunpack.c.l.b16 %v7868
        %v7941 = vunpack.c.h.b16 %v7868
        %v7942 = vunpack.c.l.b16 %v7869
        %v7943 = vunpack.c.h.b16 %v7869
        %v7944 = vunpack.c.l.b16 %v7870
        %v7945 = vunpack.c.h.b16 %v7870
        %v7946 = vunpack.c.l.b16 %v7871
        %v7947 = vunpack.c.h.b16 %v7871
        %v7948 = vpack.c.b16 %v7918, %v7916
        %v7949 = vpack.c.b16 %v7919, %v7917
        %v7950 = vpack.c.b16 %v7922, %v7920
        %v7951 = vpack.c.b16 %v7923, %v7921
        %v7952 = vpack.c.b16 %v7926, %v7924
        %v7953 = vpack.c.b16 %v7927, %v7925
        %v7954 = vpack.c.b16 %v7930, %v7928
        %v7955 = vpack.c.b16 %v7931, %v7929
        %v7956 = vpack.c.b16 %v7934, %v7932
        %v7957 = vpack.c.b16 %v7935, %v7933
        %v7958 = vpack.c.b16 %v7938, %v7936
        %v7959 = vpack.c.b16 %v7939, %v7937
        %v7960 = vpack.c.b16 %v7942, %v7940
        %v7961 = vpack.c.b16 %v7943, %v7941
        %v7962 = vpack.c.b16 %v7946, %v7944
        %v7963 = vpack.c.b16 %v7947, %v7945
        %7980 = vmatprep.subr.bf16.mxu0 %v7949
        %7981 = vmatpush1.bf16.msra.mxu0 %v7948
        %7982 = vmatprep.subr.bf16.mxu0 %v7951
        %7983 = vmatpush1.bf16.msra.mxu0 %v7950
        %7984 = vmatprep.subr.bf16.mxu0 %v7953
        %7985 = vmatpush1.bf16.msra.mxu0 %v7952
        %7986 = vmatprep.subr.bf16.mxu0 %v7955
        %7987 = vmatpush1.bf16.msra.mxu0 %v7954
        %7988 = vmatprep.subr.bf16.mxu0 %v7957
        %7989 = vmatpush1.bf16.msra.mxu0 %v7956
        %7990 = vmatprep.subr.bf16.mxu0 %v7959
        %7991 = vmatpush1.bf16.msra.mxu0 %v7958
        %7992 = vmatprep.subr.bf16.mxu0 %v7961
        %7993 = vmatpush1.bf16.msra.mxu0 %v7960
        %7994 = vmatprep.subr.bf16.mxu0 %v7963
        %7995 = vmatpush1.bf16.msra.mxu0 %v7962
        %7996 = vmatprep.subr.bf16.mxu0 0
        %7997 = vmatpush1.bf16.msra.mxu0 0
        %7998 = vmatprep.subr.bf16.mxu0 0
        %7999 = vmatpush1.bf16.msra.mxu0 0
        %8000 = vmatprep.subr.bf16.mxu0 0
        %8001 = vmatpush1.bf16.msra.mxu0 0
        %8002 = vmatprep.subr.bf16.mxu0 0
        %8003 = vmatpush1.bf16.msra.mxu0 0
        %8004 = vmatprep.subr.bf16.mxu0 0
        %8005 = vmatpush1.bf16.msra.mxu0 0
        %8006 = vmatprep.subr.bf16.mxu0 0
        %8007 = vmatpush1.bf16.msra.mxu0 0
        %8008 = vmatprep.subr.bf16.mxu0 0
        %8009 = vmatpush1.bf16.msra.mxu0 0
        %8010 = vmatprep.subr.bf16.mxu0 0
        %8011 = vmatpush1.bf16.msra.mxu0 0
        %8012 = vmatprep.mubr.bf16.mxu0 0
        %8013 = vmatmul.mubr.bf16.gmra.mrb[0].mxu0 %v7883
        %v8014 = vpop.f32.mrb[0].mxu0
        %v8015 = vadd.f32 0.0, %v8014
        %v8016 = vpop.f32.mrb[0].mxu0
        %v8017 = vadd.f32 0.0, %v8016
        %v8018 = vpop.f32.mrb[0].mxu0
        %v8019 = vadd.f32 0.0, %v8018
        %v8020 = vpop.f32.mrb[0].mxu0
        %v8021 = vadd.f32 0.0, %v8020
        %8022 = vmatprep.mubr.bf16.mxu0 0
        %8023 = vmatmul.mubr.bf16.gmra.mrb[0].mxu0 %v7887
        %v8024 = vpop.f32.mrb[0].mxu0
        %v8025 = vadd.f32 0.0, %v8024
        %v8026 = vpop.f32.mrb[0].mxu0
        %v8027 = vadd.f32 0.0, %v8026
        %v8028 = vpop.f32.mrb[0].mxu0
        %v8029 = vadd.f32 0.0, %v8028
        %v8030 = vpop.f32.mrb[0].mxu0
        %v8031 = vadd.f32 0.0, %v8030
        %8032 = vmatprep.mubr.bf16.mxu0 0
        %8033 = vmatmul.mubr.bf16.gmra.mrb[0].mxu0 %v7896
        %v8034 = vpop.f32.mrb[0].mxu0
        %v8035 = vadd.f32 0.0, %v8034
        %v8036 = vpop.f32.mrb[0].mxu0
        %v8037 = vadd.f32 0.0, %v8036
        %v8038 = vpop.f32.mrb[0].mxu0
        %v8039 = vadd.f32 0.0, %v8038
        %v8040 = vpop.f32.mrb[0].mxu0
        %v8041 = vadd.f32 0.0, %v8040
        %8042 = vdwg.mxu0
        %v8043 = vadd.f32 %v7843, %v8015
        %v8044 = vadd.f32 %v7844, %v8017
        %v8045 = vadd.f32 %v7845, %v8019
        %v8046 = vadd.f32 %v7846, %v8021
        %v8047 = vadd.f32 %v7847, %v8025
        %v8048 = vadd.f32 %v7848, %v8027
        %v8049 = vadd.f32 %v7849, %v8029
        %v8050 = vadd.f32 %v7850, %v8031
        %v8051 = vadd.f32 %v7851, %v8035
        %v8052 = vadd.f32 %v7852, %v8037
        %v8053 = vadd.f32 %v7853, %v8039
        %v8054 = vadd.f32 %v7854, %v8041
        %v8055 = vld [vmem:[#allocation16] sm:$0x3]
        %v8057 = vlaneseq
        %v8058 = vshrl.u32 %v8057, 7
        %v8059 = vsub.s32 0, %v8058
        %v8060 = vrot.slane %v8055, %v8059
        %v8061 = vlaneseq
        %v8062 = vshrl.u32 %v8061, 7
        %v8063 = vsub.s32 1, %v8062
        %v8064 = vrot.slane %v8055, %v8063
        %v8067 = vadd.f32 %v8043, %v8060
        %v8068 = vadd.f32 %v8044, %v8064
        %v8069 = vadd.f32 %v8045, %v8060
        %v8070 = vadd.f32 %v8046, %v8064
        %v8071 = vadd.f32 %v8047, %v8060
        %v8072 = vadd.f32 %v8048, %v8064
        %v8073 = vadd.f32 %v8049, %v8060
        %v8074 = vadd.f32 %v8050, %v8064
        %v8075 = vadd.f32 %v8051, %v8060
        %v8076 = vadd.f32 %v8052, %v8064
        %v8077 = vadd.f32 %v8053, %v8060
        %v8078 = vadd.f32 %v8054, %v8064
        %v8079 = vmax.f32 %v8067, 0.0
        %v8080 = vmax.f32 %v8068, 0.0
        %v8081 = vmax.f32 %v8069, 0.0
        %v8082 = vmax.f32 %v8070, 0.0
        %v8083 = vmax.f32 %v8071, 0.0
        %v8084 = vmax.f32 %v8072, 0.0
        %v8085 = vmax.f32 %v8073, 0.0
        %v8086 = vmax.f32 %v8074, 0.0
        %v8087 = vmax.f32 %v8075, 0.0
        %v8088 = vmax.f32 %v8076, 0.0
        %v8089 = vmax.f32 %v8077, 0.0
        %v8090 = vmax.f32 %v8078, 0.0
        %v8091 = vpack.c.bf16 %v8081, %v8079
        %v8092 = vpack.c.bf16 %v8082, %v8080
        %v8093 = vpack.c.bf16 %v8085, %v8083
        %v8094 = vpack.c.bf16 %v8086, %v8084
        %v8095 = vpack.c.bf16 %v8089, %v8087
        %v8096 = vpack.c.bf16 %v8090, %v8088
        %8097 = vst [vmem:[#allocation5] sm:$0xff] %v8091
        %8098 = vst [vmem:[#allocation5 + $0x8] sm:$0xff] %v8092
        %8099 = vst [vmem:[#allocation5 + $0x10] sm:$0xff] %v8093
        %8100 = vst [vmem:[#allocation5 + $0x18] sm:$0xff] %v8094
        %8101 = vst [vmem:[#allocation5 + $0x20] sm:$0xff] %v8095
        %8102 = vst [vmem:[#allocation5 + $0x28] sm:$0xff] %v8096
        %v8103 = vlaneseq
        %v8104 = vshrl.u32 %v8103, 7
        %v8105 = vadd.s32 %v8104, 8
        %v8106 = vadd.s32 %v8104, 16
        %v8107 = vadd.s32 %v8104, 24
        %v8108 = vadd.s32 %v8104, 32
        %v8109 = vadd.s32 %v8104, 40
        %vm8110 = vcmp.lt.s32.totalorder %v8104, 0
        %v8111 = vsub.s32 0, %v8104
        %v8112 = vsel %vm8110, %v8111, %v8104
        %v8113 = vmul.u32.u64.compose %v8112, 2863311531
        %v8114 = vextract.low.u32 %v8113
        %v8115 = vextract.high.u32 %v8113
        %v8116 = vshrl.u32 %v8115, 4
        %v8117 = vmul.u32 %v8116, 24
        %v8118 = vsub.s32 %v8112, %v8117
        %v8119 = vsub.s32 0, %v8118
        %v8120 = vsel %vm8110, %v8119, %v8118
        %vm8121 = vcmp.lt.s32.totalorder %v8105, 0
        %v8122 = vsub.s32 0, %v8105
        %v8123 = vsel %vm8121, %v8122, %v8105
        %v8124 = vmul.u32.u64.compose %v8123, 2863311531
        %v8125 = vextract.low.u32 %v8124
        %v8126 = vextract.high.u32 %v8124
        %v8127 = vshrl.u32 %v8126, 4
        %v8128 = vmul.u32 %v8127, 24
        %v8129 = vsub.s32 %v8123, %v8128
        %v8130 = vsub.s32 0, %v8129
        %v8131 = vsel %vm8121, %v8130, %v8129
        %vm8132 = vcmp.lt.s32.totalorder %v8106, 0
        %v8133 = vsub.s32 0, %v8106
        %v8134 = vsel %vm8132, %v8133, %v8106
        %v8135 = vmul.u32.u64.compose %v8134, 2863311531
        %v8136 = vextract.low.u32 %v8135
        %v8137 = vextract.high.u32 %v8135
        %v8138 = vshrl.u32 %v8137, 4
        %v8139 = vmul.u32 %v8138, 24
        %v8140 = vsub.s32 %v8134, %v8139
        %v8141 = vsub.s32 0, %v8140
        %v8142 = vsel %vm8132, %v8141, %v8140
        %vm8143 = vcmp.lt.s32.totalorder %v8107, 0
        %v8144 = vsub.s32 0, %v8107
        %v8145 = vsel %vm8143, %v8144, %v8107
        %v8146 = vmul.u32.u64.compose %v8145, 2863311531
        %v8147 = vextract.low.u32 %v8146
        %v8148 = vextract.high.u32 %v8146
        %v8149 = vshrl.u32 %v8148, 4
        %v8150 = vmul.u32 %v8149, 24
        %v8151 = vsub.s32 %v8145, %v8150
        %v8152 = vsub.s32 0, %v8151
        %v8153 = vsel %vm8143, %v8152, %v8151
        %vm8154 = vcmp.lt.s32.totalorder %v8108, 0
        %v8155 = vsub.s32 0, %v8108
        %v8156 = vsel %vm8154, %v8155, %v8108
        %v8157 = vmul.u32.u64.compose %v8156, 2863311531
        %v8158 = vextract.low.u32 %v8157
        %v8159 = vextract.high.u32 %v8157
        %v8160 = vshrl.u32 %v8159, 4
        %v8161 = vmul.u32 %v8160, 24
        %v8162 = vsub.s32 %v8156, %v8161
        %v8163 = vsub.s32 0, %v8162
        %v8164 = vsel %vm8154, %v8163, %v8162
        %vm8165 = vcmp.lt.s32.totalorder %v8109, 0
        %v8166 = vsub.s32 0, %v8109
        %v8167 = vsel %vm8165, %v8166, %v8109
        %v8168 = vmul.u32.u64.compose %v8167, 2863311531
        %v8169 = vextract.low.u32 %v8168
        %v8170 = vextract.high.u32 %v8168
        %v8171 = vshrl.u32 %v8170, 4
        %v8172 = vmul.u32 %v8171, 24
        %v8173 = vsub.s32 %v8167, %v8172
        %v8174 = vsub.s32 0, %v8173
        %v8175 = vsel %vm8165, %v8174, %v8173
        %vm8176 = vcmp.ne.s32.totalorder %v8120, 0
        %vm8177 = vcmp.ne.s32.totalorder %v8131, 0
        %vm8178 = vcmp.ne.s32.totalorder %v8142, 0
        %vm8179 = vcmp.ne.s32.totalorder %v8153, 0
        %vm8180 = vcmp.ne.s32.totalorder %v8164, 0
        %vm8181 = vcmp.ne.s32.totalorder %v8175, 0
        %vm8182 = vcmp.lt.s32.totalorder %v8120, 0
        %vm8183 = vcmp.lt.s32.totalorder %v8131, 0
        %vm8184 = vcmp.lt.s32.totalorder %v8142, 0
        %vm8185 = vcmp.lt.s32.totalorder %v8153, 0
        %vm8186 = vcmp.lt.s32.totalorder %v8164, 0
        %vm8187 = vcmp.lt.s32.totalorder %v8175, 0
        %vm8188 = vmand %vm8182, %vm8176
        %vm8189 = vmand %vm8183, %vm8177
        %vm8190 = vmand %vm8184, %vm8178
        %vm8191 = vmand %vm8185, %vm8179
        %vm8192 = vmand %vm8186, %vm8180
        %vm8193 = vmand %vm8187, %vm8181
        %v8194 = vadd.s32 %v8120, 24
        %v8195 = vadd.s32 %v8131, 24
        %v8196 = vadd.s32 %v8142, 24
        %v8197 = vadd.s32 %v8153, 24
        %v8198 = vadd.s32 %v8164, 24
        %v8199 = vadd.s32 %v8175, 24
        %v8200 = vsel %vm8188, %v8194, %v8120
        %v8201 = vsel %vm8189, %v8195, %v8131
        %v8202 = vsel %vm8190, %v8196, %v8142
        %v8203 = vsel %vm8191, %v8197, %v8153
        %v8204 = vsel %vm8192, %v8198, %v8164
        %v8205 = vsel %vm8193, %v8199, %v8175
        %vm8206 = vcmp.lt.s32.totalorder %v8200, 6
        %vm8207 = vcmp.lt.s32.totalorder %v8201, 6
        %vm8208 = vcmp.lt.s32.totalorder %v8202, 6
        %vm8209 = vcmp.lt.s32.totalorder %v8203, 6
        %vm8210 = vcmp.lt.s32.totalorder %v8204, 6
        %vm8211 = vcmp.lt.s32.totalorder %v8205, 6
        %v8212 = vld [vmem:[#allocation5] sm:$0xff]
        %v8213 = vld [vmem:[#allocation5 + $0x8] sm:$0xff]
        %v8214 = vld [vmem:[#allocation5 + $0x10] sm:$0xff]
        %v8215 = vld [vmem:[#allocation5 + $0x18] sm:$0xff]
        %v8216 = vld [vmem:[#allocation5 + $0x20] sm:$0xff]
        %v8217 = vld [vmem:[#allocation5 + $0x28] sm:$0xff]
        %v8218 = vld [vmem:[#allocation18] sm:$0xff]
        %v8219 = vld [vmem:[#allocation18 + $0x8] sm:$0xff]
        %v8220 = vld [vmem:[#allocation18 + $0x10] sm:$0xff]
        %v8221 = vld [vmem:[#allocation18 + $0x18] sm:$0xff]
        %v8222 = vld [vmem:[#allocation18 + $0x20] sm:$0xff]
        %v8223 = vld [vmem:[#allocation18 + $0x28] sm:$0xff]
        %v8224 = vld [vmem:[#allocation18 + $0x30] sm:$0xff]
        %v8225 = vld [vmem:[#allocation18 + $0x38] sm:$0xff]
        %v8226 = vld [vmem:[#allocation18 + $0x40] sm:$0xff]
        %v8227 = vld [vmem:[#allocation18 + $0x48] sm:$0xff]
        %v8228 = vld [vmem:[#allocation18 + $0x50] sm:$0xff]
        %v8229 = vld [vmem:[#allocation18 + $0x58] sm:$0xff]
        %v8230 = vld [vmem:[#allocation18 + $0x60] sm:$0xff]
        %v8231 = vld [vmem:[#allocation18 + $0x68] sm:$0xff]
        %v8232 = vld [vmem:[#allocation18 + $0x70] sm:$0xff]
        %v8233 = vld [vmem:[#allocation18 + $0x78] sm:$0xff]
        %v8234 = vld [vmem:[#allocation18 + $0x80] sm:$0xff]
        %v8235 = vld [vmem:[#allocation18 + $0x88] sm:$0xff]
        %v8236 = vld [vmem:[#allocation18 + $0x90] sm:$0xff]
        %v8237 = vld [vmem:[#allocation18 + $0x98] sm:$0xff]
        %v8238 = vld [vmem:[#allocation18 + $0xa0] sm:$0xff]
        %v8239 = vld [vmem:[#allocation18 + $0xa8] sm:$0xff]
        %v8240 = vld [vmem:[#allocation18 + $0xb0] sm:$0xff]
        %v8241 = vld [vmem:[#allocation18 + $0xb8] sm:$0xff]
        %v8242 = vld [vmem:[#allocation18 + $0xc0] sm:$0xff]
        %v8243 = vld [vmem:[#allocation18 + $0xc8] sm:$0xff]
        %v8244 = vld [vmem:[#allocation18 + $0xd0] sm:$0xff]
        %v8245 = vld [vmem:[#allocation18 + $0xd8] sm:$0xff]
        %v8246 = vld [vmem:[#allocation18 + $0xe0] sm:$0xff]
        %v8247 = vld [vmem:[#allocation18 + $0xe8] sm:$0xff]
        %v8248 = vld [vmem:[#allocation18 + $0xf0] sm:$0xff]
        %v8249 = vld [vmem:[#allocation18 + $0xf8] sm:$0xff]
        %v8250 = vld [vmem:[#allocation5] sm:$0xff]
        %v8251 = vld [vmem:[#allocation5 + $0x8] sm:$0xff]
        %v8252 = vld [vmem:[#allocation5 + $0x10] sm:$0xff]
        %v8253 = vld [vmem:[#allocation5 + $0x18] sm:$0xff]
        %v8254 = vld [vmem:[#allocation5 + $0x20] sm:$0xff]
        %v8255 = vld [vmem:[#allocation5 + $0x28] sm:$0xff]
        %v8256 = vld [vmem:[#allocation5 + $0x30] sm:$0x1]
        %v8257 = vld [vmem:[#allocation5 + $0x38] sm:$0x1]
        %v8258 = vld [vmem:[#allocation18 + $0x100] sm:$0xff]
        %v8259 = vld [vmem:[#allocation18 + $0x108] sm:$0xff]
        %v8260 = vld [vmem:[#allocation18 + $0x110] sm:$0xff]
        %v8261 = vld [vmem:[#allocation18 + $0x118] sm:$0xff]
        %v8262 = vld [vmem:[#allocation18 + $0x120] sm:$0xff]
        %v8263 = vld [vmem:[#allocation18 + $0x128] sm:$0xff]
        %v8264 = vld [vmem:[#allocation18 + $0x130] sm:$0xff]
        %v8265 = vld [vmem:[#allocation18 + $0x138] sm:$0xff]
        %v8266 = vld [vmem:[#allocation18 + $0x140] sm:$0xff]
        %v8267 = vld [vmem:[#allocation18 + $0x148] sm:$0xff]
        %v8268 = vld [vmem:[#allocation18 + $0x150] sm:$0xff]
        %v8269 = vld [vmem:[#allocation18 + $0x158] sm:$0xff]
        %v8270 = vld [vmem:[#allocation18 + $0x160] sm:$0xff]
        %v8271 = vld [vmem:[#allocation18 + $0x168] sm:$0xff]
        %v8272 = vld [vmem:[#allocation18 + $0x170] sm:$0xff]
        %v8273 = vld [vmem:[#allocation18 + $0x178] sm:$0xff]
        %v8274 = vld [vmem:[#allocation18 + $0x180] sm:$0xff]
        %v8275 = vld [vmem:[#allocation18 + $0x188] sm:$0xff]
        %v8276 = vld [vmem:[#allocation18 + $0x190] sm:$0xff]
        %v8277 = vld [vmem:[#allocation18 + $0x198] sm:$0xff]
        %v8278 = vld [vmem:[#allocation18 + $0x1a0] sm:$0xff]
        %v8279 = vld [vmem:[#allocation18 + $0x1a8] sm:$0xff]
        %v8280 = vld [vmem:[#allocation18 + $0x1b0] sm:$0xff]
        %v8281 = vld [vmem:[#allocation18 + $0x1b8] sm:$0xff]
        %v8282 = vld [vmem:[#allocation18 + $0x1c0] sm:$0xff]
        %v8283 = vld [vmem:[#allocation18 + $0x1c8] sm:$0xff]
        %v8284 = vld [vmem:[#allocation18 + $0x1d0] sm:$0xff]
        %v8285 = vld [vmem:[#allocation18 + $0x1d8] sm:$0xff]
        %v8286 = vld [vmem:[#allocation18 + $0x1e0] sm:$0xff]
        %v8287 = vld [vmem:[#allocation18 + $0x1e8] sm:$0xff]
        %v8288 = vld [vmem:[#allocation18 + $0x1f0] sm:$0xff]
        %v8289 = vld [vmem:[#allocation18 + $0x1f8] sm:$0xff]
        %v8291 = vshrl.u32 %v8250, 16
        %v8293 = vshll.u32 %v8250, 16
        %v8295 = vrot.slane %v8293, 1
        %v8296 = vor.u32 %v8291, %v8295
        %v8298 = vshll.u32 %v8252, 16
        %v8300 = vrot.slane %v8298, 1
        %v8301 = vsel %vm907, %v8296, %v8300
        %v8303 = vshrl.u32 %v8251, 16
        %v8305 = vshll.u32 %v8251, 16
        %v8307 = vrot.slane %v8305, 1
        %v8308 = vor.u32 %v8303, %v8307
        %v8310 = vshll.u32 %v8253, 16
        %v8312 = vrot.slane %v8310, 1
        %v8313 = vsel %vm907, %v8308, %v8312
        %v8314 = vshrl.u32 %v8252, 16
        %v8316 = vor.u32 %v8314, %v8300
        %v8318 = vshll.u32 %v8254, 16
        %v8320 = vrot.slane %v8318, 1
        %v8321 = vsel %vm907, %v8316, %v8320
        %v8322 = vshrl.u32 %v8253, 16
        %v8324 = vor.u32 %v8322, %v8312
        %v8326 = vshll.u32 %v8255, 16
        %v8328 = vrot.slane %v8326, 1
        %v8329 = vsel %vm907, %v8324, %v8328
        %v8330 = vshrl.u32 %v8254, 16
        %v8332 = vor.u32 %v8330, %v8320
        %v8334 = vshll.u32 %v8256, 16
        %v8336 = vrot.slane %v8334, 1
        %v8337 = vsel %vm907, %v8332, %v8336
        %v8338 = vshrl.u32 %v8255, 16
        %v8340 = vor.u32 %v8338, %v8328
        %v8342 = vshll.u32 %v8257, 16
        %v8344 = vrot.slane %v8342, 1
        %v8345 = vsel %vm907, %v8340, %v8344
        %v8384 = vunpack.c.l.b16 %v8258
        %v8385 = vunpack.c.h.b16 %v8258
        %v8386 = vunpack.c.l.b16 %v8259
        %v8387 = vunpack.c.h.b16 %v8259
        %v8388 = vunpack.c.l.b16 %v8260
        %v8389 = vunpack.c.h.b16 %v8260
        %v8390 = vunpack.c.l.b16 %v8261
        %v8391 = vunpack.c.h.b16 %v8261
        %v8392 = vunpack.c.l.b16 %v8262
        %v8393 = vunpack.c.h.b16 %v8262
        %v8394 = vunpack.c.l.b16 %v8263
        %v8395 = vunpack.c.h.b16 %v8263
        %v8396 = vunpack.c.l.b16 %v8264
        %v8397 = vunpack.c.h.b16 %v8264
        %v8398 = vunpack.c.l.b16 %v8265
        %v8399 = vunpack.c.h.b16 %v8265
        %v8400 = vunpack.c.l.b16 %v8266
        %v8401 = vunpack.c.h.b16 %v8266
        %v8402 = vunpack.c.l.b16 %v8267
        %v8403 = vunpack.c.h.b16 %v8267
        %v8404 = vunpack.c.l.b16 %v8268
        %v8405 = vunpack.c.h.b16 %v8268
        %v8406 = vunpack.c.l.b16 %v8269
        %v8407 = vunpack.c.h.b16 %v8269
        %v8408 = vunpack.c.l.b16 %v8270
        %v8409 = vunpack.c.h.b16 %v8270
        %v8410 = vunpack.c.l.b16 %v8271
        %v8411 = vunpack.c.h.b16 %v8271
        %v8412 = vunpack.c.l.b16 %v8272
        %v8413 = vunpack.c.h.b16 %v8272
        %v8414 = vunpack.c.l.b16 %v8273
        %v8415 = vunpack.c.h.b16 %v8273
        %v8416 = vunpack.c.l.b16 %v8274
        %v8417 = vunpack.c.h.b16 %v8274
        %v8418 = vunpack.c.l.b16 %v8275
        %v8419 = vunpack.c.h.b16 %v8275
        %v8420 = vunpack.c.l.b16 %v8276
        %v8421 = vunpack.c.h.b16 %v8276
        %v8422 = vunpack.c.l.b16 %v8277
        %v8423 = vunpack.c.h.b16 %v8277
        %v8424 = vunpack.c.l.b16 %v8278
        %v8425 = vunpack.c.h.b16 %v8278
        %v8426 = vunpack.c.l.b16 %v8279
        %v8427 = vunpack.c.h.b16 %v8279
        %v8428 = vunpack.c.l.b16 %v8280
        %v8429 = vunpack.c.h.b16 %v8280
        %v8430 = vunpack.c.l.b16 %v8281
        %v8431 = vunpack.c.h.b16 %v8281
        %v8432 = vunpack.c.l.b16 %v8282
        %v8433 = vunpack.c.h.b16 %v8282
        %v8434 = vunpack.c.l.b16 %v8283
        %v8435 = vunpack.c.h.b16 %v8283
        %v8436 = vunpack.c.l.b16 %v8284
        %v8437 = vunpack.c.h.b16 %v8284
        %v8438 = vunpack.c.l.b16 %v8285
        %v8439 = vunpack.c.h.b16 %v8285
        %v8440 = vunpack.c.l.b16 %v8286
        %v8441 = vunpack.c.h.b16 %v8286
        %v8442 = vunpack.c.l.b16 %v8287
        %v8443 = vunpack.c.h.b16 %v8287
        %v8444 = vunpack.c.l.b16 %v8288
        %v8445 = vunpack.c.h.b16 %v8288
        %v8446 = vunpack.c.l.b16 %v8289
        %v8447 = vunpack.c.h.b16 %v8289
        %v8448 = vpack.c.b16 %v8386, %v8384
        %v8449 = vpack.c.b16 %v8387, %v8385
        %v8450 = vpack.c.b16 %v8390, %v8388
        %v8451 = vpack.c.b16 %v8391, %v8389
        %v8452 = vpack.c.b16 %v8394, %v8392
        %v8453 = vpack.c.b16 %v8395, %v8393
        %v8454 = vpack.c.b16 %v8398, %v8396
        %v8455 = vpack.c.b16 %v8399, %v8397
        %v8456 = vpack.c.b16 %v8402, %v8400
        %v8457 = vpack.c.b16 %v8403, %v8401
        %v8458 = vpack.c.b16 %v8406, %v8404
        %v8459 = vpack.c.b16 %v8407, %v8405
        %v8460 = vpack.c.b16 %v8410, %v8408
        %v8461 = vpack.c.b16 %v8411, %v8409
        %v8462 = vpack.c.b16 %v8414, %v8412
        %v8463 = vpack.c.b16 %v8415, %v8413
        %v8464 = vpack.c.b16 %v8418, %v8416
        %v8465 = vpack.c.b16 %v8419, %v8417
        %v8466 = vpack.c.b16 %v8422, %v8420
        %v8467 = vpack.c.b16 %v8423, %v8421
        %v8468 = vpack.c.b16 %v8426, %v8424
        %v8469 = vpack.c.b16 %v8427, %v8425
        %v8470 = vpack.c.b16 %v8430, %v8428
        %v8471 = vpack.c.b16 %v8431, %v8429
        %v8472 = vpack.c.b16 %v8434, %v8432
        %v8473 = vpack.c.b16 %v8435, %v8433
        %v8474 = vpack.c.b16 %v8438, %v8436
        %v8475 = vpack.c.b16 %v8439, %v8437
        %v8476 = vpack.c.b16 %v8442, %v8440
        %v8477 = vpack.c.b16 %v8443, %v8441
        %v8478 = vpack.c.b16 %v8446, %v8444
        %v8479 = vpack.c.b16 %v8447, %v8445
        %8512 = vmatprep.subr.bf16.mxu0 %v8449
        %8513 = vmatpush1.bf16.msra.mxu0 %v8448
        %8514 = vmatprep.subr.bf16.mxu0 %v8451
        %8515 = vmatpush1.bf16.msra.mxu0 %v8450
        %8516 = vmatprep.subr.bf16.mxu0 %v8453
        %8517 = vmatpush1.bf16.msra.mxu0 %v8452
        %8518 = vmatprep.subr.bf16.mxu0 %v8455
        %8519 = vmatpush1.bf16.msra.mxu0 %v8454
        %8520 = vmatprep.subr.bf16.mxu0 %v8457
        %8521 = vmatpush1.bf16.msra.mxu0 %v8456
        %8522 = vmatprep.subr.bf16.mxu0 %v8459
        %8523 = vmatpush1.bf16.msra.mxu0 %v8458
        %8524 = vmatprep.subr.bf16.mxu0 %v8461
        %8525 = vmatpush1.bf16.msra.mxu0 %v8460
        %8526 = vmatprep.subr.bf16.mxu0 %v8463
        %8527 = vmatpush1.bf16.msra.mxu0 %v8462
        %8528 = vmatprep.subr.bf16.mxu0 %v8465
        %8529 = vmatpush1.bf16.msra.mxu0 %v8464
        %8530 = vmatprep.subr.bf16.mxu0 %v8467
        %8531 = vmatpush1.bf16.msra.mxu0 %v8466
        %8532 = vmatprep.subr.bf16.mxu0 %v8469
        %8533 = vmatpush1.bf16.msra.mxu0 %v8468
        %8534 = vmatprep.subr.bf16.mxu0 %v8471
        %8535 = vmatpush1.bf16.msra.mxu0 %v8470
        %8536 = vmatprep.subr.bf16.mxu0 %v8473
        %8537 = vmatpush1.bf16.msra.mxu0 %v8472
        %8538 = vmatprep.subr.bf16.mxu0 %v8475
        %8539 = vmatpush1.bf16.msra.mxu0 %v8474
        %8540 = vmatprep.subr.bf16.mxu0 %v8477
        %8541 = vmatpush1.bf16.msra.mxu0 %v8476
        %8542 = vmatprep.subr.bf16.mxu0 %v8479
        %8543 = vmatpush1.bf16.msra.mxu0 %v8478
        %8544 = vmatprep.mubr.bf16.mxu0 %v8313
        %8545 = vmatmul.mubr.bf16.gmra.mrb[0].mxu0 %v8301
        %v8546 = vpop.f32.mrb[0].mxu0
        %v8547 = vadd.f32 0.0, %v8546
        %v8548 = vpop.f32.mrb[0].mxu0
        %v8549 = vadd.f32 0.0, %v8548
        %v8550 = vpop.f32.mrb[0].mxu0
        %v8551 = vadd.f32 0.0, %v8550
        %v8552 = vpop.f32.mrb[0].mxu0
        %v8553 = vadd.f32 0.0, %v8552
        %8554 = vmatprep.mubr.bf16.mxu0 %v8329
        %8555 = vmatmul.mubr.bf16.gmra.mrb[0].mxu0 %v8321
        %v8556 = vpop.f32.mrb[0].mxu0
        %v8557 = vadd.f32 0.0, %v8556
        %v8558 = vpop.f32.mrb[0].mxu0
        %v8559 = vadd.f32 0.0, %v8558
        %v8560 = vpop.f32.mrb[0].mxu0
        %v8561 = vadd.f32 0.0, %v8560
        %v8562 = vpop.f32.mrb[0].mxu0
        %v8563 = vadd.f32 0.0, %v8562
        %8564 = vmatprep.mubr.bf16.mxu0 %v8345
        %8565 = vmatmul.mubr.bf16.gmra.mrb[0].mxu0 %v8337
        %v8566 = vpop.f32.mrb[0].mxu0
        %v8567 = vadd.f32 0.0, %v8566
        %v8568 = vpop.f32.mrb[0].mxu0
        %v8569 = vadd.f32 0.0, %v8568
        %v8570 = vpop.f32.mrb[0].mxu0
        %v8571 = vadd.f32 0.0, %v8570
        %v8572 = vpop.f32.mrb[0].mxu0
        %v8573 = vadd.f32 0.0, %v8572
        %8574 = vdwg.mxu0
        %v8607 = vunpack.c.l.b16 %v8218
        %v8608 = vunpack.c.h.b16 %v8218
        %v8609 = vunpack.c.l.b16 %v8219
        %v8610 = vunpack.c.h.b16 %v8219
        %v8611 = vunpack.c.l.b16 %v8220
        %v8612 = vunpack.c.h.b16 %v8220
        %v8613 = vunpack.c.l.b16 %v8221
        %v8614 = vunpack.c.h.b16 %v8221
        %v8615 = vunpack.c.l.b16 %v8222
        %v8616 = vunpack.c.h.b16 %v8222
        %v8617 = vunpack.c.l.b16 %v8223
        %v8618 = vunpack.c.h.b16 %v8223
        %v8619 = vunpack.c.l.b16 %v8224
        %v8620 = vunpack.c.h.b16 %v8224
        %v8621 = vunpack.c.l.b16 %v8225
        %v8622 = vunpack.c.h.b16 %v8225
        %v8623 = vunpack.c.l.b16 %v8226
        %v8624 = vunpack.c.h.b16 %v8226
        %v8625 = vunpack.c.l.b16 %v8227
        %v8626 = vunpack.c.h.b16 %v8227
        %v8627 = vunpack.c.l.b16 %v8228
        %v8628 = vunpack.c.h.b16 %v8228
        %v8629 = vunpack.c.l.b16 %v8229
        %v8630 = vunpack.c.h.b16 %v8229
        %v8631 = vunpack.c.l.b16 %v8230
        %v8632 = vunpack.c.h.b16 %v8230
        %v8633 = vunpack.c.l.b16 %v8231
        %v8634 = vunpack.c.h.b16 %v8231
        %v8635 = vunpack.c.l.b16 %v8232
        %v8636 = vunpack.c.h.b16 %v8232
        %v8637 = vunpack.c.l.b16 %v8233
        %v8638 = vunpack.c.h.b16 %v8233
        %v8639 = vunpack.c.l.b16 %v8234
        %v8640 = vunpack.c.h.b16 %v8234
        %v8641 = vunpack.c.l.b16 %v8235
        %v8642 = vunpack.c.h.b16 %v8235
        %v8643 = vunpack.c.l.b16 %v8236
        %v8644 = vunpack.c.h.b16 %v8236
        %v8645 = vunpack.c.l.b16 %v8237
        %v8646 = vunpack.c.h.b16 %v8237
        %v8647 = vunpack.c.l.b16 %v8238
        %v8648 = vunpack.c.h.b16 %v8238
        %v8649 = vunpack.c.l.b16 %v8239
        %v8650 = vunpack.c.h.b16 %v8239
        %v8651 = vunpack.c.l.b16 %v8240
        %v8652 = vunpack.c.h.b16 %v8240
        %v8653 = vunpack.c.l.b16 %v8241
        %v8654 = vunpack.c.h.b16 %v8241
        %v8655 = vunpack.c.l.b16 %v8242
        %v8656 = vunpack.c.h.b16 %v8242
        %v8657 = vunpack.c.l.b16 %v8243
        %v8658 = vunpack.c.h.b16 %v8243
        %v8659 = vunpack.c.l.b16 %v8244
        %v8660 = vunpack.c.h.b16 %v8244
        %v8661 = vunpack.c.l.b16 %v8245
        %v8662 = vunpack.c.h.b16 %v8245
        %v8663 = vunpack.c.l.b16 %v8246
        %v8664 = vunpack.c.h.b16 %v8246
        %v8665 = vunpack.c.l.b16 %v8247
        %v8666 = vunpack.c.h.b16 %v8247
        %v8667 = vunpack.c.l.b16 %v8248
        %v8668 = vunpack.c.h.b16 %v8248
        %v8669 = vunpack.c.l.b16 %v8249
        %v8670 = vunpack.c.h.b16 %v8249
        %v8671 = vpack.c.b16 %v8609, %v8607
        %v8672 = vpack.c.b16 %v8610, %v8608
        %v8673 = vpack.c.b16 %v8613, %v8611
        %v8674 = vpack.c.b16 %v8614, %v8612
        %v8675 = vpack.c.b16 %v8617, %v8615
        %v8676 = vpack.c.b16 %v8618, %v8616
        %v8677 = vpack.c.b16 %v8621, %v8619
        %v8678 = vpack.c.b16 %v8622, %v8620
        %v8679 = vpack.c.b16 %v8625, %v8623
        %v8680 = vpack.c.b16 %v8626, %v8624
        %v8681 = vpack.c.b16 %v8629, %v8627
        %v8682 = vpack.c.b16 %v8630, %v8628
        %v8683 = vpack.c.b16 %v8633, %v8631
        %v8684 = vpack.c.b16 %v8634, %v8632
        %v8685 = vpack.c.b16 %v8637, %v8635
        %v8686 = vpack.c.b16 %v8638, %v8636
        %v8687 = vpack.c.b16 %v8641, %v8639
        %v8688 = vpack.c.b16 %v8642, %v8640
        %v8689 = vpack.c.b16 %v8645, %v8643
        %v8690 = vpack.c.b16 %v8646, %v8644
        %v8691 = vpack.c.b16 %v8649, %v8647
        %v8692 = vpack.c.b16 %v8650, %v8648
        %v8693 = vpack.c.b16 %v8653, %v8651
        %v8694 = vpack.c.b16 %v8654, %v8652
        %v8695 = vpack.c.b16 %v8657, %v8655
        %v8696 = vpack.c.b16 %v8658, %v8656
        %v8697 = vpack.c.b16 %v8661, %v8659
        %v8698 = vpack.c.b16 %v8662, %v8660
        %v8699 = vpack.c.b16 %v8665, %v8663
        %v8700 = vpack.c.b16 %v8666, %v8664
        %v8701 = vpack.c.b16 %v8669, %v8667
        %v8702 = vpack.c.b16 %v8670, %v8668
        %8735 = vmatprep.subr.bf16.mxu0 %v8672
        %8736 = vmatpush1.bf16.msra.mxu0 %v8671
        %8737 = vmatprep.subr.bf16.mxu0 %v8674
        %8738 = vmatpush1.bf16.msra.mxu0 %v8673
        %8739 = vmatprep.subr.bf16.mxu0 %v8676
        %8740 = vmatpush1.bf16.msra.mxu0 %v8675
        %8741 = vmatprep.subr.bf16.mxu0 %v8678
        %8742 = vmatpush1.bf16.msra.mxu0 %v8677
        %8743 = vmatprep.subr.bf16.mxu0 %v8680
        %8744 = vmatpush1.bf16.msra.mxu0 %v8679
        %8745 = vmatprep.subr.bf16.mxu0 %v8682
        %8746 = vmatpush1.bf16.msra.mxu0 %v8681
        %8747 = vmatprep.subr.bf16.mxu0 %v8684
        %8748 = vmatpush1.bf16.msra.mxu0 %v8683
        %8749 = vmatprep.subr.bf16.mxu0 %v8686
        %8750 = vmatpush1.bf16.msra.mxu0 %v8685
        %8751 = vmatprep.subr.bf16.mxu0 %v8688
        %8752 = vmatpush1.bf16.msra.mxu0 %v8687
        %8753 = vmatprep.subr.bf16.mxu0 %v8690
        %8754 = vmatpush1.bf16.msra.mxu0 %v8689
        %8755 = vmatprep.subr.bf16.mxu0 %v8692
        %8756 = vmatpush1.bf16.msra.mxu0 %v8691
        %8757 = vmatprep.subr.bf16.mxu0 %v8694
        %8758 = vmatpush1.bf16.msra.mxu0 %v8693
        %8759 = vmatprep.subr.bf16.mxu0 %v8696
        %8760 = vmatpush1.bf16.msra.mxu0 %v8695
        %8761 = vmatprep.subr.bf16.mxu0 %v8698
        %8762 = vmatpush1.bf16.msra.mxu0 %v8697
        %8763 = vmatprep.subr.bf16.mxu0 %v8700
        %8764 = vmatpush1.bf16.msra.mxu0 %v8699
        %8765 = vmatprep.subr.bf16.mxu0 %v8702
        %8766 = vmatpush1.bf16.msra.mxu0 %v8701
        %8767 = vmatprep.mubr.bf16.mxu0 %v8213
        %8768 = vmatmul.mubr.bf16.gmra.mrb[0].mxu0 %v8212
        %v8769 = vpop.f32.mrb[0].mxu0
        %v8770 = vadd.f32 %v8547, %v8769
        %v8771 = vpop.f32.mrb[0].mxu0
        %v8772 = vadd.f32 %v8549, %v8771
        %v8773 = vpop.f32.mrb[0].mxu0
        %v8774 = vadd.f32 %v8551, %v8773
        %v8775 = vpop.f32.mrb[0].mxu0
        %v8776 = vadd.f32 %v8553, %v8775
        %8777 = vmatprep.mubr.bf16.mxu0 %v8215
        %8778 = vmatmul.mubr.bf16.gmra.mrb[0].mxu0 %v8214
        %v8779 = vpop.f32.mrb[0].mxu0
        %v8780 = vadd.f32 %v8557, %v8779
        %v8781 = vpop.f32.mrb[0].mxu0
        %v8782 = vadd.f32 %v8559, %v8781
        %v8783 = vpop.f32.mrb[0].mxu0
        %v8784 = vadd.f32 %v8561, %v8783
        %v8785 = vpop.f32.mrb[0].mxu0
        %v8786 = vadd.f32 %v8563, %v8785
        %8787 = vmatprep.mubr.bf16.mxu0 %v8217
        %8788 = vmatmul.mubr.bf16.gmra.mrb[0].mxu0 %v8216
        %v8789 = vpop.f32.mrb[0].mxu0
        %v8790 = vadd.f32 %v8567, %v8789
        %v8791 = vpop.f32.mrb[0].mxu0
        %v8792 = vadd.f32 %v8569, %v8791
        %v8793 = vpop.f32.mrb[0].mxu0
        %v8794 = vadd.f32 %v8571, %v8793
        %v8795 = vpop.f32.mrb[0].mxu0
        %v8796 = vadd.f32 %v8573, %v8795
        %8797 = vdwg.mxu0
        %v8798 = vld [vmem:[#allocation5] sm:$0xfe]
        %v8799 = vld [vmem:[#allocation5 + $0x8] sm:$0xfe]
        %v8800 = vld [vmem:[#allocation18 + $0x200] sm:$0xff]
        %v8801 = vld [vmem:[#allocation18 + $0x208] sm:$0xff]
        %v8802 = vld [vmem:[#allocation18 + $0x210] sm:$0xff]
        %v8803 = vld [vmem:[#allocation18 + $0x218] sm:$0xff]
        %v8804 = vld [vmem:[#allocation18 + $0x220] sm:$0xff]
        %v8805 = vld [vmem:[#allocation18 + $0x228] sm:$0xff]
        %v8806 = vld [vmem:[#allocation18 + $0x230] sm:$0xff]
        %v8807 = vld [vmem:[#allocation18 + $0x238] sm:$0xff]
        %v8808 = vld [vmem:[#allocation18 + $0x240] sm:$0xff]
        %v8809 = vld [vmem:[#allocation18 + $0x248] sm:$0xff]
        %v8810 = vld [vmem:[#allocation18 + $0x250] sm:$0xff]
        %v8811 = vld [vmem:[#allocation18 + $0x258] sm:$0xff]
        %v8812 = vld [vmem:[#allocation18 + $0x260] sm:$0xff]
        %v8813 = vld [vmem:[#allocation18 + $0x268] sm:$0xff]
        %v8814 = vld [vmem:[#allocation18 + $0x270] sm:$0xff]
        %v8815 = vld [vmem:[#allocation18 + $0x278] sm:$0xff]
        %v8816 = vld [vmem:[#allocation18 + $0x280] sm:$0xff]
        %v8817 = vld [vmem:[#allocation18 + $0x288] sm:$0xff]
        %v8818 = vld [vmem:[#allocation18 + $0x290] sm:$0xff]
        %v8819 = vld [vmem:[#allocation18 + $0x298] sm:$0xff]
        %v8820 = vld [vmem:[#allocation18 + $0x2a0] sm:$0xff]
        %v8821 = vld [vmem:[#allocation18 + $0x2a8] sm:$0xff]
        %v8822 = vld [vmem:[#allocation18 + $0x2b0] sm:$0xff]
        %v8823 = vld [vmem:[#allocation18 + $0x2b8] sm:$0xff]
        %v8824 = vld [vmem:[#allocation18 + $0x2c0] sm:$0xff]
        %v8825 = vld [vmem:[#allocation18 + $0x2c8] sm:$0xff]
        %v8826 = vld [vmem:[#allocation18 + $0x2d0] sm:$0xff]
        %v8827 = vld [vmem:[#allocation18 + $0x2d8] sm:$0xff]
        %v8828 = vld [vmem:[#allocation18 + $0x2e0] sm:$0xff]
        %v8829 = vld [vmem:[#allocation18 + $0x2e8] sm:$0xff]
        %v8830 = vld [vmem:[#allocation18 + $0x2f0] sm:$0xff]
        %v8831 = vld [vmem:[#allocation18 + $0x2f8] sm:$0xff]
        %v8840 = vrot.slane %v8798, 1
        %v8841 = vrot.slane %v8252, 1
        %v8842 = vsel %vm1378, %v8840, %v8841
        %v8843 = vrot.slane %v8799, 1
        %v8844 = vrot.slane %v8253, 1
        %v8845 = vsel %vm1378, %v8843, %v8844
        %v8846 = vrot.slane %v8254, 1
        %v8847 = vsel %vm1378, %v8841, %v8846
        %v8848 = vrot.slane %v8255, 1
        %v8849 = vsel %vm1378, %v8844, %v8848
        %v8850 = vrot.slane %v8256, 1
        %v8851 = vsel %vm1378, %v8846, %v8850
        %v8852 = vrot.slane %v8257, 1
        %v8853 = vsel %vm1378, %v8848, %v8852
        %v8892 = vunpack.c.l.b16 %v8800
        %v8893 = vunpack.c.h.b16 %v8800
        %v8894 = vunpack.c.l.b16 %v8801
        %v8895 = vunpack.c.h.b16 %v8801
        %v8896 = vunpack.c.l.b16 %v8802
        %v8897 = vunpack.c.h.b16 %v8802
        %v8898 = vunpack.c.l.b16 %v8803
        %v8899 = vunpack.c.h.b16 %v8803
        %v8900 = vunpack.c.l.b16 %v8804
        %v8901 = vunpack.c.h.b16 %v8804
        %v8902 = vunpack.c.l.b16 %v8805
        %v8903 = vunpack.c.h.b16 %v8805
        %v8904 = vunpack.c.l.b16 %v8806
        %v8905 = vunpack.c.h.b16 %v8806
        %v8906 = vunpack.c.l.b16 %v8807
        %v8907 = vunpack.c.h.b16 %v8807
        %v8908 = vunpack.c.l.b16 %v8808
        %v8909 = vunpack.c.h.b16 %v8808
        %v8910 = vunpack.c.l.b16 %v8809
        %v8911 = vunpack.c.h.b16 %v8809
        %v8912 = vunpack.c.l.b16 %v8810
        %v8913 = vunpack.c.h.b16 %v8810
        %v8914 = vunpack.c.l.b16 %v8811
        %v8915 = vunpack.c.h.b16 %v8811
        %v8916 = vunpack.c.l.b16 %v8812
        %v8917 = vunpack.c.h.b16 %v8812
        %v8918 = vunpack.c.l.b16 %v8813
        %v8919 = vunpack.c.h.b16 %v8813
        %v8920 = vunpack.c.l.b16 %v8814
        %v8921 = vunpack.c.h.b16 %v8814
        %v8922 = vunpack.c.l.b16 %v8815
        %v8923 = vunpack.c.h.b16 %v8815
        %v8924 = vunpack.c.l.b16 %v8816
        %v8925 = vunpack.c.h.b16 %v8816
        %v8926 = vunpack.c.l.b16 %v8817
        %v8927 = vunpack.c.h.b16 %v8817
        %v8928 = vunpack.c.l.b16 %v8818
        %v8929 = vunpack.c.h.b16 %v8818
        %v8930 = vunpack.c.l.b16 %v8819
        %v8931 = vunpack.c.h.b16 %v8819
        %v8932 = vunpack.c.l.b16 %v8820
        %v8933 = vunpack.c.h.b16 %v8820
        %v8934 = vunpack.c.l.b16 %v8821
        %v8935 = vunpack.c.h.b16 %v8821
        %v8936 = vunpack.c.l.b16 %v8822
        %v8937 = vunpack.c.h.b16 %v8822
        %v8938 = vunpack.c.l.b16 %v8823
        %v8939 = vunpack.c.h.b16 %v8823
        %v8940 = vunpack.c.l.b16 %v8824
        %v8941 = vunpack.c.h.b16 %v8824
        %v8942 = vunpack.c.l.b16 %v8825
        %v8943 = vunpack.c.h.b16 %v8825
        %v8944 = vunpack.c.l.b16 %v8826
        %v8945 = vunpack.c.h.b16 %v8826
        %v8946 = vunpack.c.l.b16 %v8827
        %v8947 = vunpack.c.h.b16 %v8827
        %v8948 = vunpack.c.l.b16 %v8828
        %v8949 = vunpack.c.h.b16 %v8828
        %v8950 = vunpack.c.l.b16 %v8829
        %v8951 = vunpack.c.h.b16 %v8829
        %v8952 = vunpack.c.l.b16 %v8830
        %v8953 = vunpack.c.h.b16 %v8830
        %v8954 = vunpack.c.l.b16 %v8831
        %v8955 = vunpack.c.h.b16 %v8831
        %v8956 = vpack.c.b16 %v8894, %v8892
        %v8957 = vpack.c.b16 %v8895, %v8893
        %v8958 = vpack.c.b16 %v8898, %v8896
        %v8959 = vpack.c.b16 %v8899, %v8897
        %v8960 = vpack.c.b16 %v8902, %v8900
        %v8961 = vpack.c.b16 %v8903, %v8901
        %v8962 = vpack.c.b16 %v8906, %v8904
        %v8963 = vpack.c.b16 %v8907, %v8905
        %v8964 = vpack.c.b16 %v8910, %v8908
        %v8965 = vpack.c.b16 %v8911, %v8909
        %v8966 = vpack.c.b16 %v8914, %v8912
        %v8967 = vpack.c.b16 %v8915, %v8913
        %v8968 = vpack.c.b16 %v8918, %v8916
        %v8969 = vpack.c.b16 %v8919, %v8917
        %v8970 = vpack.c.b16 %v8922, %v8920
        %v8971 = vpack.c.b16 %v8923, %v8921
        %v8972 = vpack.c.b16 %v8926, %v8924
        %v8973 = vpack.c.b16 %v8927, %v8925
        %v8974 = vpack.c.b16 %v8930, %v8928
        %v8975 = vpack.c.b16 %v8931, %v8929
        %v8976 = vpack.c.b16 %v8934, %v8932
        %v8977 = vpack.c.b16 %v8935, %v8933
        %v8978 = vpack.c.b16 %v8938, %v8936
        %v8979 = vpack.c.b16 %v8939, %v8937
        %v8980 = vpack.c.b16 %v8942, %v8940
        %v8981 = vpack.c.b16 %v8943, %v8941
        %v8982 = vpack.c.b16 %v8946, %v8944
        %v8983 = vpack.c.b16 %v8947, %v8945
        %v8984 = vpack.c.b16 %v8950, %v8948
        %v8985 = vpack.c.b16 %v8951, %v8949
        %v8986 = vpack.c.b16 %v8954, %v8952
        %v8987 = vpack.c.b16 %v8955, %v8953
        %9020 = vmatprep.subr.bf16.mxu0 %v8957
        %9021 = vmatpush1.bf16.msra.mxu0 %v8956
        %9022 = vmatprep.subr.bf16.mxu0 %v8959
        %9023 = vmatpush1.bf16.msra.mxu0 %v8958
        %9024 = vmatprep.subr.bf16.mxu0 %v8961
        %9025 = vmatpush1.bf16.msra.mxu0 %v8960
        %9026 = vmatprep.subr.bf16.mxu0 %v8963
        %9027 = vmatpush1.bf16.msra.mxu0 %v8962
        %9028 = vmatprep.subr.bf16.mxu0 %v8965
        %9029 = vmatpush1.bf16.msra.mxu0 %v8964
        %9030 = vmatprep.subr.bf16.mxu0 %v8967
        %9031 = vmatpush1.bf16.msra.mxu0 %v8966
        %9032 = vmatprep.subr.bf16.mxu0 %v8969
        %9033 = vmatpush1.bf16.msra.mxu0 %v8968
        %9034 = vmatprep.subr.bf16.mxu0 %v8971
        %9035 = vmatpush1.bf16.msra.mxu0 %v8970
        %9036 = vmatprep.subr.bf16.mxu0 %v8973
        %9037 = vmatpush1.bf16.msra.mxu0 %v8972
        %9038 = vmatprep.subr.bf16.mxu0 %v8975
        %9039 = vmatpush1.bf16.msra.mxu0 %v8974
        %9040 = vmatprep.subr.bf16.mxu0 %v8977
        %9041 = vmatpush1.bf16.msra.mxu0 %v8976
        %9042 = vmatprep.subr.bf16.mxu0 %v8979
        %9043 = vmatpush1.bf16.msra.mxu0 %v8978
        %9044 = vmatprep.subr.bf16.mxu0 %v8981
        %9045 = vmatpush1.bf16.msra.mxu0 %v8980
        %9046 = vmatprep.subr.bf16.mxu0 %v8983
        %9047 = vmatpush1.bf16.msra.mxu0 %v8982
        %9048 = vmatprep.subr.bf16.mxu0 %v8985
        %9049 = vmatpush1.bf16.msra.mxu0 %v8984
        %9050 = vmatprep.subr.bf16.mxu0 %v8987
        %9051 = vmatpush1.bf16.msra.mxu0 %v8986
        %9052 = vmatprep.mubr.bf16.mxu0 %v8845
        %9053 = vmatmul.mubr.bf16.gmra.mrb[0].mxu0 %v8842
        %v9054 = vpop.f32.mrb[0].mxu0
        %v9055 = vadd.f32 0.0, %v9054
        %v9056 = vpop.f32.mrb[0].mxu0
        %v9057 = vadd.f32 0.0, %v9056
        %v9058 = vpop.f32.mrb[0].mxu0
        %v9059 = vadd.f32 0.0, %v9058
        %v9060 = vpop.f32.mrb[0].mxu0
        %v9061 = vadd.f32 0.0, %v9060
        %9062 = vmatprep.mubr.bf16.mxu0 %v8849
        %9063 = vmatmul.mubr.bf16.gmra.mrb[0].mxu0 %v8847
        %v9064 = vpop.f32.mrb[0].mxu0
        %v9065 = vadd.f32 0.0, %v9064
        %v9066 = vpop.f32.mrb[0].mxu0
        %v9067 = vadd.f32 0.0, %v9066
        %v9068 = vpop.f32.mrb[0].mxu0
        %v9069 = vadd.f32 0.0, %v9068
        %v9070 = vpop.f32.mrb[0].mxu0
        %v9071 = vadd.f32 0.0, %v9070
        %9072 = vmatprep.mubr.bf16.mxu0 %v8853
        %9073 = vmatmul.mubr.bf16.gmra.mrb[0].mxu0 %v8851
        %v9074 = vpop.f32.mrb[0].mxu0
        %v9075 = vadd.f32 0.0, %v9074
        %v9076 = vpop.f32.mrb[0].mxu0
        %v9077 = vadd.f32 0.0, %v9076
        %v9078 = vpop.f32.mrb[0].mxu0
        %v9079 = vadd.f32 0.0, %v9078
        %v9080 = vpop.f32.mrb[0].mxu0
        %v9081 = vadd.f32 0.0, %v9080
        %9082 = vdwg.mxu0
        %v9083 = vadd.f32 %v8770, %v9055
        %v9084 = vadd.f32 %v8772, %v9057
        %v9085 = vadd.f32 %v8774, %v9059
        %v9086 = vadd.f32 %v8776, %v9061
        %v9087 = vadd.f32 %v8780, %v9065
        %v9088 = vadd.f32 %v8782, %v9067
        %v9089 = vadd.f32 %v8784, %v9069
        %v9090 = vadd.f32 %v8786, %v9071
        %v9091 = vadd.f32 %v8790, %v9075
        %v9092 = vadd.f32 %v8792, %v9077
        %v9093 = vadd.f32 %v8794, %v9079
        %v9094 = vadd.f32 %v8796, %v9081
        %v9095 = vld [vmem:[#allocation5 + $0x30] sm:$0x3]
        %v9096 = vld [vmem:[#allocation5 + $0x38] sm:$0x3]
        %v9097 = vld [vmem:[#allocation18 + $0x300] sm:$0xff]
        %v9098 = vld [vmem:[#allocation18 + $0x308] sm:$0xff]
        %v9099 = vld [vmem:[#allocation18 + $0x310] sm:$0xff]
        %v9100 = vld [vmem:[#allocation18 + $0x318] sm:$0xff]
        %v9101 = vld [vmem:[#allocation18 + $0x320] sm:$0xff]
        %v9102 = vld [vmem:[#allocation18 + $0x328] sm:$0xff]
        %v9103 = vld [vmem:[#allocation18 + $0x330] sm:$0xff]
        %v9104 = vld [vmem:[#allocation18 + $0x338] sm:$0xff]
        %v9105 = vld [vmem:[#allocation18 + $0x340] sm:$0xff]
        %v9106 = vld [vmem:[#allocation18 + $0x348] sm:$0xff]
        %v9107 = vld [vmem:[#allocation18 + $0x350] sm:$0xff]
        %v9108 = vld [vmem:[#allocation18 + $0x358] sm:$0xff]
        %v9109 = vld [vmem:[#allocation18 + $0x360] sm:$0xff]
        %v9110 = vld [vmem:[#allocation18 + $0x368] sm:$0xff]
        %v9111 = vld [vmem:[#allocation18 + $0x370] sm:$0xff]
        %v9112 = vld [vmem:[#allocation18 + $0x378] sm:$0xff]
        %v9113 = vld [vmem:[#allocation18 + $0x380] sm:$0xff]
        %v9114 = vld [vmem:[#allocation18 + $0x388] sm:$0xff]
        %v9115 = vld [vmem:[#allocation18 + $0x390] sm:$0xff]
        %v9116 = vld [vmem:[#allocation18 + $0x398] sm:$0xff]
        %v9117 = vld [vmem:[#allocation18 + $0x3a0] sm:$0xff]
        %v9118 = vld [vmem:[#allocation18 + $0x3a8] sm:$0xff]
        %v9119 = vld [vmem:[#allocation18 + $0x3b0] sm:$0xff]
        %v9120 = vld [vmem:[#allocation18 + $0x3b8] sm:$0xff]
        %v9121 = vld [vmem:[#allocation18 + $0x3c0] sm:$0xff]
        %v9122 = vld [vmem:[#allocation18 + $0x3c8] sm:$0xff]
        %v9123 = vld [vmem:[#allocation18 + $0x3d0] sm:$0xff]
        %v9124 = vld [vmem:[#allocation18 + $0x3d8] sm:$0xff]
        %v9125 = vld [vmem:[#allocation18 + $0x3e0] sm:$0xff]
        %v9126 = vld [vmem:[#allocation18 + $0x3e8] sm:$0xff]
        %v9127 = vld [vmem:[#allocation18 + $0x3f0] sm:$0xff]
        %v9128 = vld [vmem:[#allocation18 + $0x3f8] sm:$0xff]
        %v9130 = vshrl.u32 %v8798, 16
        %v9132 = vrot.slane %v9130, 1
        %v9133 = vshll.u32 %v8798, 16
        %v9135 = vrot.slane %v9133, 2
        %v9136 = vor.u32 %v9132, %v9135
        %v9137 = vrot.slane %v8314, 1
        %v9138 = vrot.slane %v8298, 2
        %v9139 = vor.u32 %v9137, %v9138
        %v9140 = vsel %vm1621, %v9136, %v9139
        %v9142 = vshrl.u32 %v8799, 16
        %v9144 = vrot.slane %v9142, 1
        %v9145 = vshll.u32 %v8799, 16
        %v9147 = vrot.slane %v9145, 2
        %v9148 = vor.u32 %v9144, %v9147
        %v9149 = vrot.slane %v8322, 1
        %v9150 = vrot.slane %v8310, 2
        %v9151 = vor.u32 %v9149, %v9150
        %v9152 = vsel %vm1621, %v9148, %v9151
        %v9153 = vrot.slane %v8330, 1
        %v9154 = vrot.slane %v8318, 2
        %v9155 = vor.u32 %v9153, %v9154
        %v9156 = vsel %vm1621, %v9139, %v9155
        %v9157 = vrot.slane %v8338, 1
        %v9158 = vrot.slane %v8326, 2
        %v9159 = vor.u32 %v9157, %v9158
        %v9160 = vsel %vm1621, %v9151, %v9159
        %v9162 = vshrl.u32 %v9095, 16
        %v9164 = vrot.slane %v9162, 1
        %v9165 = vshll.u32 %v9095, 16
        %v9167 = vrot.slane %v9165, 2
        %v9168 = vor.u32 %v9164, %v9167
        %v9169 = vsel %vm1621, %v9155, %v9168
        %v9171 = vshrl.u32 %v9096, 16
        %v9173 = vrot.slane %v9171, 1
        %v9174 = vshll.u32 %v9096, 16
        %v9176 = vrot.slane %v9174, 2
        %v9177 = vor.u32 %v9173, %v9176
        %v9178 = vsel %vm1621, %v9159, %v9177
        %v9217 = vunpack.c.l.b16 %v9097
        %v9218 = vunpack.c.h.b16 %v9097
        %v9219 = vunpack.c.l.b16 %v9098
        %v9220 = vunpack.c.h.b16 %v9098
        %v9221 = vunpack.c.l.b16 %v9099
        %v9222 = vunpack.c.h.b16 %v9099
        %v9223 = vunpack.c.l.b16 %v9100
        %v9224 = vunpack.c.h.b16 %v9100
        %v9225 = vunpack.c.l.b16 %v9101
        %v9226 = vunpack.c.h.b16 %v9101
        %v9227 = vunpack.c.l.b16 %v9102
        %v9228 = vunpack.c.h.b16 %v9102
        %v9229 = vunpack.c.l.b16 %v9103
        %v9230 = vunpack.c.h.b16 %v9103
        %v9231 = vunpack.c.l.b16 %v9104
        %v9232 = vunpack.c.h.b16 %v9104
        %v9233 = vunpack.c.l.b16 %v9105
        %v9234 = vunpack.c.h.b16 %v9105
        %v9235 = vunpack.c.l.b16 %v9106
        %v9236 = vunpack.c.h.b16 %v9106
        %v9237 = vunpack.c.l.b16 %v9107
        %v9238 = vunpack.c.h.b16 %v9107
        %v9239 = vunpack.c.l.b16 %v9108
        %v9240 = vunpack.c.h.b16 %v9108
        %v9241 = vunpack.c.l.b16 %v9109
        %v9242 = vunpack.c.h.b16 %v9109
        %v9243 = vunpack.c.l.b16 %v9110
        %v9244 = vunpack.c.h.b16 %v9110
        %v9245 = vunpack.c.l.b16 %v9111
        %v9246 = vunpack.c.h.b16 %v9111
        %v9247 = vunpack.c.l.b16 %v9112
        %v9248 = vunpack.c.h.b16 %v9112
        %v9249 = vunpack.c.l.b16 %v9113
        %v9250 = vunpack.c.h.b16 %v9113
        %v9251 = vunpack.c.l.b16 %v9114
        %v9252 = vunpack.c.h.b16 %v9114
        %v9253 = vunpack.c.l.b16 %v9115
        %v9254 = vunpack.c.h.b16 %v9115
        %v9255 = vunpack.c.l.b16 %v9116
        %v9256 = vunpack.c.h.b16 %v9116
        %v9257 = vunpack.c.l.b16 %v9117
        %v9258 = vunpack.c.h.b16 %v9117
        %v9259 = vunpack.c.l.b16 %v9118
        %v9260 = vunpack.c.h.b16 %v9118
        %v9261 = vunpack.c.l.b16 %v9119
        %v9262 = vunpack.c.h.b16 %v9119
        %v9263 = vunpack.c.l.b16 %v9120
        %v9264 = vunpack.c.h.b16 %v9120
        %v9265 = vunpack.c.l.b16 %v9121
        %v9266 = vunpack.c.h.b16 %v9121
        %v9267 = vunpack.c.l.b16 %v9122
        %v9268 = vunpack.c.h.b16 %v9122
        %v9269 = vunpack.c.l.b16 %v9123
        %v9270 = vunpack.c.h.b16 %v9123
        %v9271 = vunpack.c.l.b16 %v9124
        %v9272 = vunpack.c.h.b16 %v9124
        %v9273 = vunpack.c.l.b16 %v9125
        %v9274 = vunpack.c.h.b16 %v9125
        %v9275 = vunpack.c.l.b16 %v9126
        %v9276 = vunpack.c.h.b16 %v9126
        %v9277 = vunpack.c.l.b16 %v9127
        %v9278 = vunpack.c.h.b16 %v9127
        %v9279 = vunpack.c.l.b16 %v9128
        %v9280 = vunpack.c.h.b16 %v9128
        %v9281 = vpack.c.b16 %v9219, %v9217
        %v9282 = vpack.c.b16 %v9220, %v9218
        %v9283 = vpack.c.b16 %v9223, %v9221
        %v9284 = vpack.c.b16 %v9224, %v9222
        %v9285 = vpack.c.b16 %v9227, %v9225
        %v9286 = vpack.c.b16 %v9228, %v9226
        %v9287 = vpack.c.b16 %v9231, %v9229
        %v9288 = vpack.c.b16 %v9232, %v9230
        %v9289 = vpack.c.b16 %v9235, %v9233
        %v9290 = vpack.c.b16 %v9236, %v9234
        %v9291 = vpack.c.b16 %v9239, %v9237
        %v9292 = vpack.c.b16 %v9240, %v9238
        %v9293 = vpack.c.b16 %v9243, %v9241
        %v9294 = vpack.c.b16 %v9244, %v9242
        %v9295 = vpack.c.b16 %v9247, %v9245
        %v9296 = vpack.c.b16 %v9248, %v9246
        %v9297 = vpack.c.b16 %v9251, %v9249
        %v9298 = vpack.c.b16 %v9252, %v9250
        %v9299 = vpack.c.b16 %v9255, %v9253
        %v9300 = vpack.c.b16 %v9256, %v9254
        %v9301 = vpack.c.b16 %v9259, %v9257
        %v9302 = vpack.c.b16 %v9260, %v9258
        %v9303 = vpack.c.b16 %v9263, %v9261
        %v9304 = vpack.c.b16 %v9264, %v9262
        %v9305 = vpack.c.b16 %v9267, %v9265
        %v9306 = vpack.c.b16 %v9268, %v9266
        %v9307 = vpack.c.b16 %v9271, %v9269
        %v9308 = vpack.c.b16 %v9272, %v9270
        %v9309 = vpack.c.b16 %v9275, %v9273
        %v9310 = vpack.c.b16 %v9276, %v9274
        %v9311 = vpack.c.b16 %v9279, %v9277
        %v9312 = vpack.c.b16 %v9280, %v9278
        %9345 = vmatprep.subr.bf16.mxu0 %v9282
        %9346 = vmatpush1.bf16.msra.mxu0 %v9281
        %9347 = vmatprep.subr.bf16.mxu0 %v9284
        %9348 = vmatpush1.bf16.msra.mxu0 %v9283
        %9349 = vmatprep.subr.bf16.mxu0 %v9286
        %9350 = vmatpush1.bf16.msra.mxu0 %v9285
        %9351 = vmatprep.subr.bf16.mxu0 %v9288
        %9352 = vmatpush1.bf16.msra.mxu0 %v9287
        %9353 = vmatprep.subr.bf16.mxu0 %v9290
        %9354 = vmatpush1.bf16.msra.mxu0 %v9289
        %9355 = vmatprep.subr.bf16.mxu0 %v9292
        %9356 = vmatpush1.bf16.msra.mxu0 %v9291
        %9357 = vmatprep.subr.bf16.mxu0 %v9294
        %9358 = vmatpush1.bf16.msra.mxu0 %v9293
        %9359 = vmatprep.subr.bf16.mxu0 %v9296
        %9360 = vmatpush1.bf16.msra.mxu0 %v9295
        %9361 = vmatprep.subr.bf16.mxu0 %v9298
        %9362 = vmatpush1.bf16.msra.mxu0 %v9297
        %9363 = vmatprep.subr.bf16.mxu0 %v9300
        %9364 = vmatpush1.bf16.msra.mxu0 %v9299
        %9365 = vmatprep.subr.bf16.mxu0 %v9302
        %9366 = vmatpush1.bf16.msra.mxu0 %v9301
        %9367 = vmatprep.subr.bf16.mxu0 %v9304
        %9368 = vmatpush1.bf16.msra.mxu0 %v9303
        %9369 = vmatprep.subr.bf16.mxu0 %v9306
        %9370 = vmatpush1.bf16.msra.mxu0 %v9305
        %9371 = vmatprep.subr.bf16.mxu0 %v9308
        %9372 = vmatpush1.bf16.msra.mxu0 %v9307
        %9373 = vmatprep.subr.bf16.mxu0 %v9310
        %9374 = vmatpush1.bf16.msra.mxu0 %v9309
        %9375 = vmatprep.subr.bf16.mxu0 %v9312
        %9376 = vmatpush1.bf16.msra.mxu0 %v9311
        %9377 = vmatprep.mubr.bf16.mxu0 %v9152
        %9378 = vmatmul.mubr.bf16.gmra.mrb[0].mxu0 %v9140
        %v9379 = vpop.f32.mrb[0].mxu0
        %v9380 = vadd.f32 0.0, %v9379
        %v9381 = vpop.f32.mrb[0].mxu0
        %v9382 = vadd.f32 0.0, %v9381
        %v9383 = vpop.f32.mrb[0].mxu0
        %v9384 = vadd.f32 0.0, %v9383
        %v9385 = vpop.f32.mrb[0].mxu0
        %v9386 = vadd.f32 0.0, %v9385
        %9387 = vmatprep.mubr.bf16.mxu0 %v9160
        %9388 = vmatmul.mubr.bf16.gmra.mrb[0].mxu0 %v9156
        %v9389 = vpop.f32.mrb[0].mxu0
        %v9390 = vadd.f32 0.0, %v9389
        %v9391 = vpop.f32.mrb[0].mxu0
        %v9392 = vadd.f32 0.0, %v9391
        %v9393 = vpop.f32.mrb[0].mxu0
        %v9394 = vadd.f32 0.0, %v9393
        %v9395 = vpop.f32.mrb[0].mxu0
        %v9396 = vadd.f32 0.0, %v9395
        %9397 = vmatprep.mubr.bf16.mxu0 %v9178
        %9398 = vmatmul.mubr.bf16.gmra.mrb[0].mxu0 %v9169
        %v9399 = vpop.f32.mrb[0].mxu0
        %v9400 = vadd.f32 0.0, %v9399
        %v9401 = vpop.f32.mrb[0].mxu0
        %v9402 = vadd.f32 0.0, %v9401
        %v9403 = vpop.f32.mrb[0].mxu0
        %v9404 = vadd.f32 0.0, %v9403
        %v9405 = vpop.f32.mrb[0].mxu0
        %v9406 = vadd.f32 0.0, %v9405
        %9407 = vdwg.mxu0
        %v9408 = vadd.f32 %v9083, %v9380
        %v9409 = vadd.f32 %v9084, %v9382
        %v9410 = vadd.f32 %v9085, %v9384
        %v9411 = vadd.f32 %v9086, %v9386
        %v9412 = vadd.f32 %v9087, %v9390
        %v9413 = vadd.f32 %v9088, %v9392
        %v9414 = vadd.f32 %v9089, %v9394
        %v9415 = vadd.f32 %v9090, %v9396
        %v9416 = vadd.f32 %v9091, %v9400
        %v9417 = vadd.f32 %v9092, %v9402
        %v9418 = vadd.f32 %v9093, %v9404
        %v9419 = vadd.f32 %v9094, %v9406
        %v9420 = vld [vmem:[#allocation5] sm:$0xfc]
        %v9421 = vld [vmem:[#allocation5 + $0x8] sm:$0xfc]
        %v9422 = vld [vmem:[#allocation18 + $0x400] sm:$0xff]
        %v9423 = vld [vmem:[#allocation18 + $0x408] sm:$0xff]
        %v9424 = vld [vmem:[#allocation18 + $0x410] sm:$0xff]
        %v9425 = vld [vmem:[#allocation18 + $0x418] sm:$0xff]
        %v9426 = vld [vmem:[#allocation18 + $0x420] sm:$0xff]
        %v9427 = vld [vmem:[#allocation18 + $0x428] sm:$0xff]
        %v9428 = vld [vmem:[#allocation18 + $0x430] sm:$0xff]
        %v9429 = vld [vmem:[#allocation18 + $0x438] sm:$0xff]
        %v9430 = vld [vmem:[#allocation18 + $0x440] sm:$0xff]
        %v9431 = vld [vmem:[#allocation18 + $0x448] sm:$0xff]
        %v9432 = vld [vmem:[#allocation18 + $0x450] sm:$0xff]
        %v9433 = vld [vmem:[#allocation18 + $0x458] sm:$0xff]
        %v9434 = vld [vmem:[#allocation18 + $0x460] sm:$0xff]
        %v9435 = vld [vmem:[#allocation18 + $0x468] sm:$0xff]
        %v9436 = vld [vmem:[#allocation18 + $0x470] sm:$0xff]
        %v9437 = vld [vmem:[#allocation18 + $0x478] sm:$0xff]
        %v9438 = vld [vmem:[#allocation18 + $0x480] sm:$0xff]
        %v9439 = vld [vmem:[#allocation18 + $0x488] sm:$0xff]
        %v9440 = vld [vmem:[#allocation18 + $0x490] sm:$0xff]
        %v9441 = vld [vmem:[#allocation18 + $0x498] sm:$0xff]
        %v9442 = vld [vmem:[#allocation18 + $0x4a0] sm:$0xff]
        %v9443 = vld [vmem:[#allocation18 + $0x4a8] sm:$0xff]
        %v9444 = vld [vmem:[#allocation18 + $0x4b0] sm:$0xff]
        %v9445 = vld [vmem:[#allocation18 + $0x4b8] sm:$0xff]
        %v9446 = vld [vmem:[#allocation18 + $0x4c0] sm:$0xff]
        %v9447 = vld [vmem:[#allocation18 + $0x4c8] sm:$0xff]
        %v9448 = vld [vmem:[#allocation18 + $0x4d0] sm:$0xff]
        %v9449 = vld [vmem:[#allocation18 + $0x4d8] sm:$0xff]
        %v9450 = vld [vmem:[#allocation18 + $0x4e0] sm:$0xff]
        %v9451 = vld [vmem:[#allocation18 + $0x4e8] sm:$0xff]
        %v9452 = vld [vmem:[#allocation18 + $0x4f0] sm:$0xff]
        %v9453 = vld [vmem:[#allocation18 + $0x4f8] sm:$0xff]
        %v9458 = vrot.slane %v9420, 2
        %v9459 = vrot.slane %v8252, 2
        %v9460 = vsel %vm1900, %v9458, %v9459
        %v9461 = vrot.slane %v9421, 2
        %v9462 = vrot.slane %v8253, 2
        %v9463 = vsel %vm1900, %v9461, %v9462
        %v9464 = vrot.slane %v8254, 2
        %v9465 = vsel %vm1900, %v9459, %v9464
        %v9466 = vrot.slane %v8255, 2
        %v9467 = vsel %vm1900, %v9462, %v9466
        %v9468 = vrot.slane %v9095, 2
        %v9469 = vsel %vm1900, %v9464, %v9468
        %v9470 = vrot.slane %v9096, 2
        %v9471 = vsel %vm1900, %v9466, %v9470
        %v9510 = vunpack.c.l.b16 %v9422
        %v9511 = vunpack.c.h.b16 %v9422
        %v9512 = vunpack.c.l.b16 %v9423
        %v9513 = vunpack.c.h.b16 %v9423
        %v9514 = vunpack.c.l.b16 %v9424
        %v9515 = vunpack.c.h.b16 %v9424
        %v9516 = vunpack.c.l.b16 %v9425
        %v9517 = vunpack.c.h.b16 %v9425
        %v9518 = vunpack.c.l.b16 %v9426
        %v9519 = vunpack.c.h.b16 %v9426
        %v9520 = vunpack.c.l.b16 %v9427
        %v9521 = vunpack.c.h.b16 %v9427
        %v9522 = vunpack.c.l.b16 %v9428
        %v9523 = vunpack.c.h.b16 %v9428
        %v9524 = vunpack.c.l.b16 %v9429
        %v9525 = vunpack.c.h.b16 %v9429
        %v9526 = vunpack.c.l.b16 %v9430
        %v9527 = vunpack.c.h.b16 %v9430
        %v9528 = vunpack.c.l.b16 %v9431
        %v9529 = vunpack.c.h.b16 %v9431
        %v9530 = vunpack.c.l.b16 %v9432
        %v9531 = vunpack.c.h.b16 %v9432
        %v9532 = vunpack.c.l.b16 %v9433
        %v9533 = vunpack.c.h.b16 %v9433
        %v9534 = vunpack.c.l.b16 %v9434
        %v9535 = vunpack.c.h.b16 %v9434
        %v9536 = vunpack.c.l.b16 %v9435
        %v9537 = vunpack.c.h.b16 %v9435
        %v9538 = vunpack.c.l.b16 %v9436
        %v9539 = vunpack.c.h.b16 %v9436
        %v9540 = vunpack.c.l.b16 %v9437
        %v9541 = vunpack.c.h.b16 %v9437
        %v9542 = vunpack.c.l.b16 %v9438
        %v9543 = vunpack.c.h.b16 %v9438
        %v9544 = vunpack.c.l.b16 %v9439
        %v9545 = vunpack.c.h.b16 %v9439
        %v9546 = vunpack.c.l.b16 %v9440
        %v9547 = vunpack.c.h.b16 %v9440
        %v9548 = vunpack.c.l.b16 %v9441
        %v9549 = vunpack.c.h.b16 %v9441
        %v9550 = vunpack.c.l.b16 %v9442
        %v9551 = vunpack.c.h.b16 %v9442
        %v9552 = vunpack.c.l.b16 %v9443
        %v9553 = vunpack.c.h.b16 %v9443
        %v9554 = vunpack.c.l.b16 %v9444
        %v9555 = vunpack.c.h.b16 %v9444
        %v9556 = vunpack.c.l.b16 %v9445
        %v9557 = vunpack.c.h.b16 %v9445
        %v9558 = vunpack.c.l.b16 %v9446
        %v9559 = vunpack.c.h.b16 %v9446
        %v9560 = vunpack.c.l.b16 %v9447
        %v9561 = vunpack.c.h.b16 %v9447
        %v9562 = vunpack.c.l.b16 %v9448
        %v9563 = vunpack.c.h.b16 %v9448
        %v9564 = vunpack.c.l.b16 %v9449
        %v9565 = vunpack.c.h.b16 %v9449
        %v9566 = vunpack.c.l.b16 %v9450
        %v9567 = vunpack.c.h.b16 %v9450
        %v9568 = vunpack.c.l.b16 %v9451
        %v9569 = vunpack.c.h.b16 %v9451
        %v9570 = vunpack.c.l.b16 %v9452
        %v9571 = vunpack.c.h.b16 %v9452
        %v9572 = vunpack.c.l.b16 %v9453
        %v9573 = vunpack.c.h.b16 %v9453
        %v9574 = vpack.c.b16 %v9512, %v9510
        %v9575 = vpack.c.b16 %v9513, %v9511
        %v9576 = vpack.c.b16 %v9516, %v9514
        %v9577 = vpack.c.b16 %v9517, %v9515
        %v9578 = vpack.c.b16 %v9520, %v9518
        %v9579 = vpack.c.b16 %v9521, %v9519
        %v9580 = vpack.c.b16 %v9524, %v9522
        %v9581 = vpack.c.b16 %v9525, %v9523
        %v9582 = vpack.c.b16 %v9528, %v9526
        %v9583 = vpack.c.b16 %v9529, %v9527
        %v9584 = vpack.c.b16 %v9532, %v9530
        %v9585 = vpack.c.b16 %v9533, %v9531
        %v9586 = vpack.c.b16 %v9536, %v9534
        %v9587 = vpack.c.b16 %v9537, %v9535
        %v9588 = vpack.c.b16 %v9540, %v9538
        %v9589 = vpack.c.b16 %v9541, %v9539
        %v9590 = vpack.c.b16 %v9544, %v9542
        %v9591 = vpack.c.b16 %v9545, %v9543
        %v9592 = vpack.c.b16 %v9548, %v9546
        %v9593 = vpack.c.b16 %v9549, %v9547
        %v9594 = vpack.c.b16 %v9552, %v9550
        %v9595 = vpack.c.b16 %v9553, %v9551
        %v9596 = vpack.c.b16 %v9556, %v9554
        %v9597 = vpack.c.b16 %v9557, %v9555
        %v9598 = vpack.c.b16 %v9560, %v9558
        %v9599 = vpack.c.b16 %v9561, %v9559
        %v9600 = vpack.c.b16 %v9564, %v9562
        %v9601 = vpack.c.b16 %v9565, %v9563
        %v9602 = vpack.c.b16 %v9568, %v9566
        %v9603 = vpack.c.b16 %v9569, %v9567
        %v9604 = vpack.c.b16 %v9572, %v9570
        %v9605 = vpack.c.b16 %v9573, %v9571
        %9638 = vmatprep.subr.bf16.mxu0 %v9575
        %9639 = vmatpush1.bf16.msra.mxu0 %v9574
        %9640 = vmatprep.subr.bf16.mxu0 %v9577
        %9641 = vmatpush1.bf16.msra.mxu0 %v9576
        %9642 = vmatprep.subr.bf16.mxu0 %v9579
        %9643 = vmatpush1.bf16.msra.mxu0 %v9578
        %9644 = vmatprep.subr.bf16.mxu0 %v9581
        %9645 = vmatpush1.bf16.msra.mxu0 %v9580
        %9646 = vmatprep.subr.bf16.mxu0 %v9583
        %9647 = vmatpush1.bf16.msra.mxu0 %v9582
        %9648 = vmatprep.subr.bf16.mxu0 %v9585
        %9649 = vmatpush1.bf16.msra.mxu0 %v9584
        %9650 = vmatprep.subr.bf16.mxu0 %v9587
        %9651 = vmatpush1.bf16.msra.mxu0 %v9586
        %9652 = vmatprep.subr.bf16.mxu0 %v9589
        %9653 = vmatpush1.bf16.msra.mxu0 %v9588
        %9654 = vmatprep.subr.bf16.mxu0 %v9591
        %9655 = vmatpush1.bf16.msra.mxu0 %v9590
        %9656 = vmatprep.subr.bf16.mxu0 %v9593
        %9657 = vmatpush1.bf16.msra.mxu0 %v9592
        %9658 = vmatprep.subr.bf16.mxu0 %v9595
        %9659 = vmatpush1.bf16.msra.mxu0 %v9594
        %9660 = vmatprep.subr.bf16.mxu0 %v9597
        %9661 = vmatpush1.bf16.msra.mxu0 %v9596
        %9662 = vmatprep.subr.bf16.mxu0 %v9599
        %9663 = vmatpush1.bf16.msra.mxu0 %v9598
        %9664 = vmatprep.subr.bf16.mxu0 %v9601
        %9665 = vmatpush1.bf16.msra.mxu0 %v9600
        %9666 = vmatprep.subr.bf16.mxu0 %v9603
        %9667 = vmatpush1.bf16.msra.mxu0 %v9602
        %9668 = vmatprep.subr.bf16.mxu0 %v9605
        %9669 = vmatpush1.bf16.msra.mxu0 %v9604
        %9670 = vmatprep.mubr.bf16.mxu0 %v9463
        %9671 = vmatmul.mubr.bf16.gmra.mrb[0].mxu0 %v9460
        %v9672 = vpop.f32.mrb[0].mxu0
        %v9673 = vadd.f32 0.0, %v9672
        %v9674 = vpop.f32.mrb[0].mxu0
        %v9675 = vadd.f32 0.0, %v9674
        %v9676 = vpop.f32.mrb[0].mxu0
        %v9677 = vadd.f32 0.0, %v9676
        %v9678 = vpop.f32.mrb[0].mxu0
        %v9679 = vadd.f32 0.0, %v9678
        %9680 = vmatprep.mubr.bf16.mxu0 %v9467
        %9681 = vmatmul.mubr.bf16.gmra.mrb[0].mxu0 %v9465
        %v9682 = vpop.f32.mrb[0].mxu0
        %v9683 = vadd.f32 0.0, %v9682
        %v9684 = vpop.f32.mrb[0].mxu0
        %v9685 = vadd.f32 0.0, %v9684
        %v9686 = vpop.f32.mrb[0].mxu0
        %v9687 = vadd.f32 0.0, %v9686
        %v9688 = vpop.f32.mrb[0].mxu0
        %v9689 = vadd.f32 0.0, %v9688
        %9690 = vmatprep.mubr.bf16.mxu0 %v9471
        %9691 = vmatmul.mubr.bf16.gmra.mrb[0].mxu0 %v9469
        %v9692 = vpop.f32.mrb[0].mxu0
        %v9693 = vadd.f32 0.0, %v9692
        %v9694 = vpop.f32.mrb[0].mxu0
        %v9695 = vadd.f32 0.0, %v9694
        %v9696 = vpop.f32.mrb[0].mxu0
        %v9697 = vadd.f32 0.0, %v9696
        %v9698 = vpop.f32.mrb[0].mxu0
        %v9699 = vadd.f32 0.0, %v9698
        %9700 = vdwg.mxu0
        %v9701 = vadd.f32 %v9408, %v9673
        %v9702 = vadd.f32 %v9409, %v9675
        %v9703 = vadd.f32 %v9410, %v9677
        %v9704 = vadd.f32 %v9411, %v9679
        %v9705 = vadd.f32 %v9412, %v9683
        %v9706 = vadd.f32 %v9413, %v9685
        %v9707 = vadd.f32 %v9414, %v9687
        %v9708 = vadd.f32 %v9415, %v9689
        %v9709 = vadd.f32 %v9416, %v9693
        %v9710 = vadd.f32 %v9417, %v9695
        %v9711 = vadd.f32 %v9418, %v9697
        %v9712 = vadd.f32 %v9419, %v9699
        %v9713 = vld [vmem:[#allocation5 + $0x30] sm:$0x7]
        %v9714 = vld [vmem:[#allocation5 + $0x38] sm:$0x7]
        %v9715 = vld [vmem:[#allocation18 + $0x500] sm:$0xff]
        %v9716 = vld [vmem:[#allocation18 + $0x508] sm:$0xff]
        %v9717 = vld [vmem:[#allocation18 + $0x510] sm:$0xff]
        %v9718 = vld [vmem:[#allocation18 + $0x518] sm:$0xff]
        %v9719 = vld [vmem:[#allocation18 + $0x520] sm:$0xff]
        %v9720 = vld [vmem:[#allocation18 + $0x528] sm:$0xff]
        %v9721 = vld [vmem:[#allocation18 + $0x530] sm:$0xff]
        %v9722 = vld [vmem:[#allocation18 + $0x538] sm:$0xff]
        %v9723 = vld [vmem:[#allocation18 + $0x540] sm:$0xff]
        %v9724 = vld [vmem:[#allocation18 + $0x548] sm:$0xff]
        %v9725 = vld [vmem:[#allocation18 + $0x550] sm:$0xff]
        %v9726 = vld [vmem:[#allocation18 + $0x558] sm:$0xff]
        %v9727 = vld [vmem:[#allocation18 + $0x560] sm:$0xff]
        %v9728 = vld [vmem:[#allocation18 + $0x568] sm:$0xff]
        %v9729 = vld [vmem:[#allocation18 + $0x570] sm:$0xff]
        %v9730 = vld [vmem:[#allocation18 + $0x578] sm:$0xff]
        %v9731 = vld [vmem:[#allocation18 + $0x580] sm:$0xff]
        %v9732 = vld [vmem:[#allocation18 + $0x588] sm:$0xff]
        %v9733 = vld [vmem:[#allocation18 + $0x590] sm:$0xff]
        %v9734 = vld [vmem:[#allocation18 + $0x598] sm:$0xff]
        %v9735 = vld [vmem:[#allocation18 + $0x5a0] sm:$0xff]
        %v9736 = vld [vmem:[#allocation18 + $0x5a8] sm:$0xff]
        %v9737 = vld [vmem:[#allocation18 + $0x5b0] sm:$0xff]
        %v9738 = vld [vmem:[#allocation18 + $0x5b8] sm:$0xff]
        %v9739 = vld [vmem:[#allocation18 + $0x5c0] sm:$0xff]
        %v9740 = vld [vmem:[#allocation18 + $0x5c8] sm:$0xff]
        %v9741 = vld [vmem:[#allocation18 + $0x5d0] sm:$0xff]
        %v9742 = vld [vmem:[#allocation18 + $0x5d8] sm:$0xff]
        %v9743 = vld [vmem:[#allocation18 + $0x5e0] sm:$0xff]
        %v9744 = vld [vmem:[#allocation18 + $0x5e8] sm:$0xff]
        %v9745 = vld [vmem:[#allocation18 + $0x5f0] sm:$0xff]
        %v9746 = vld [vmem:[#allocation18 + $0x5f8] sm:$0xff]
        %v9748 = vshrl.u32 %v9420, 16
        %v9750 = vrot.slane %v9748, 2
        %v9751 = vshll.u32 %v9420, 16
        %v9753 = vrot.slane %v9751, 3
        %v9754 = vor.u32 %v9750, %v9753
        %v9755 = vrot.slane %v8314, 2
        %v9756 = vrot.slane %v8298, 3
        %v9757 = vor.u32 %v9755, %v9756
        %v9758 = vsel %vm2143, %v9754, %v9757
        %v9760 = vshrl.u32 %v9421, 16
        %v9762 = vrot.slane %v9760, 2
        %v9763 = vshll.u32 %v9421, 16
        %v9765 = vrot.slane %v9763, 3
        %v9766 = vor.u32 %v9762, %v9765
        %v9767 = vrot.slane %v8322, 2
        %v9768 = vrot.slane %v8310, 3
        %v9769 = vor.u32 %v9767, %v9768
        %v9770 = vsel %vm2143, %v9766, %v9769
        %v9771 = vrot.slane %v8330, 2
        %v9772 = vrot.slane %v8318, 3
        %v9773 = vor.u32 %v9771, %v9772
        %v9774 = vsel %vm2143, %v9757, %v9773
        %v9775 = vrot.slane %v8338, 2
        %v9776 = vrot.slane %v8326, 3
        %v9777 = vor.u32 %v9775, %v9776
        %v9778 = vsel %vm2143, %v9769, %v9777
        %v9780 = vshrl.u32 %v9713, 16
        %v9782 = vrot.slane %v9780, 2
        %v9783 = vshll.u32 %v9713, 16
        %v9785 = vrot.slane %v9783, 3
        %v9786 = vor.u32 %v9782, %v9785
        %v9787 = vsel %vm2143, %v9773, %v9786
        %v9789 = vshrl.u32 %v9714, 16
        %v9791 = vrot.slane %v9789, 2
        %v9792 = vshll.u32 %v9714, 16
        %v9794 = vrot.slane %v9792, 3
        %v9795 = vor.u32 %v9791, %v9794
        %v9796 = vsel %vm2143, %v9777, %v9795
        %v9835 = vunpack.c.l.b16 %v9715
        %v9836 = vunpack.c.h.b16 %v9715
        %v9837 = vunpack.c.l.b16 %v9716
        %v9838 = vunpack.c.h.b16 %v9716
        %v9839 = vunpack.c.l.b16 %v9717
        %v9840 = vunpack.c.h.b16 %v9717
        %v9841 = vunpack.c.l.b16 %v9718
        %v9842 = vunpack.c.h.b16 %v9718
        %v9843 = vunpack.c.l.b16 %v9719
        %v9844 = vunpack.c.h.b16 %v9719
        %v9845 = vunpack.c.l.b16 %v9720
        %v9846 = vunpack.c.h.b16 %v9720
        %v9847 = vunpack.c.l.b16 %v9721
        %v9848 = vunpack.c.h.b16 %v9721
        %v9849 = vunpack.c.l.b16 %v9722
        %v9850 = vunpack.c.h.b16 %v9722
        %v9851 = vunpack.c.l.b16 %v9723
        %v9852 = vunpack.c.h.b16 %v9723
        %v9853 = vunpack.c.l.b16 %v9724
        %v9854 = vunpack.c.h.b16 %v9724
        %v9855 = vunpack.c.l.b16 %v9725
        %v9856 = vunpack.c.h.b16 %v9725
        %v9857 = vunpack.c.l.b16 %v9726
        %v9858 = vunpack.c.h.b16 %v9726
        %v9859 = vunpack.c.l.b16 %v9727
        %v9860 = vunpack.c.h.b16 %v9727
        %v9861 = vunpack.c.l.b16 %v9728
        %v9862 = vunpack.c.h.b16 %v9728
        %v9863 = vunpack.c.l.b16 %v9729
        %v9864 = vunpack.c.h.b16 %v9729
        %v9865 = vunpack.c.l.b16 %v9730
        %v9866 = vunpack.c.h.b16 %v9730
        %v9867 = vunpack.c.l.b16 %v9731
        %v9868 = vunpack.c.h.b16 %v9731
        %v9869 = vunpack.c.l.b16 %v9732
        %v9870 = vunpack.c.h.b16 %v9732
        %v9871 = vunpack.c.l.b16 %v9733
        %v9872 = vunpack.c.h.b16 %v9733
        %v9873 = vunpack.c.l.b16 %v9734
        %v9874 = vunpack.c.h.b16 %v9734
        %v9875 = vunpack.c.l.b16 %v9735
        %v9876 = vunpack.c.h.b16 %v9735
        %v9877 = vunpack.c.l.b16 %v9736
        %v9878 = vunpack.c.h.b16 %v9736
        %v9879 = vunpack.c.l.b16 %v9737
        %v9880 = vunpack.c.h.b16 %v9737
        %v9881 = vunpack.c.l.b16 %v9738
        %v9882 = vunpack.c.h.b16 %v9738
        %v9883 = vunpack.c.l.b16 %v9739
        %v9884 = vunpack.c.h.b16 %v9739
        %v9885 = vunpack.c.l.b16 %v9740
        %v9886 = vunpack.c.h.b16 %v9740
        %v9887 = vunpack.c.l.b16 %v9741
        %v9888 = vunpack.c.h.b16 %v9741
        %v9889 = vunpack.c.l.b16 %v9742
        %v9890 = vunpack.c.h.b16 %v9742
        %v9891 = vunpack.c.l.b16 %v9743
        %v9892 = vunpack.c.h.b16 %v9743
        %v9893 = vunpack.c.l.b16 %v9744
        %v9894 = vunpack.c.h.b16 %v9744
        %v9895 = vunpack.c.l.b16 %v9745
        %v9896 = vunpack.c.h.b16 %v9745
        %v9897 = vunpack.c.l.b16 %v9746
        %v9898 = vunpack.c.h.b16 %v9746
        %v9899 = vpack.c.b16 %v9837, %v9835
        %v9900 = vpack.c.b16 %v9838, %v9836
        %v9901 = vpack.c.b16 %v9841, %v9839
        %v9902 = vpack.c.b16 %v9842, %v9840
        %v9903 = vpack.c.b16 %v9845, %v9843
        %v9904 = vpack.c.b16 %v9846, %v9844
        %v9905 = vpack.c.b16 %v9849, %v9847
        %v9906 = vpack.c.b16 %v9850, %v9848
        %v9907 = vpack.c.b16 %v9853, %v9851
        %v9908 = vpack.c.b16 %v9854, %v9852
        %v9909 = vpack.c.b16 %v9857, %v9855
        %v9910 = vpack.c.b16 %v9858, %v9856
        %v9911 = vpack.c.b16 %v9861, %v9859
        %v9912 = vpack.c.b16 %v9862, %v9860
        %v9913 = vpack.c.b16 %v9865, %v9863
        %v9914 = vpack.c.b16 %v9866, %v9864
        %v9915 = vpack.c.b16 %v9869, %v9867
        %v9916 = vpack.c.b16 %v9870, %v9868
        %v9917 = vpack.c.b16 %v9873, %v9871
        %v9918 = vpack.c.b16 %v9874, %v9872
        %v9919 = vpack.c.b16 %v9877, %v9875
        %v9920 = vpack.c.b16 %v9878, %v9876
        %v9921 = vpack.c.b16 %v9881, %v9879
        %v9922 = vpack.c.b16 %v9882, %v9880
        %v9923 = vpack.c.b16 %v9885, %v9883
        %v9924 = vpack.c.b16 %v9886, %v9884
        %v9925 = vpack.c.b16 %v9889, %v9887
        %v9926 = vpack.c.b16 %v9890, %v9888
        %v9927 = vpack.c.b16 %v9893, %v9891
        %v9928 = vpack.c.b16 %v9894, %v9892
        %v9929 = vpack.c.b16 %v9897, %v9895
        %v9930 = vpack.c.b16 %v9898, %v9896
        %9963 = vmatprep.subr.bf16.mxu0 %v9900
        %9964 = vmatpush1.bf16.msra.mxu0 %v9899
        %9965 = vmatprep.subr.bf16.mxu0 %v9902
        %9966 = vmatpush1.bf16.msra.mxu0 %v9901
        %9967 = vmatprep.subr.bf16.mxu0 %v9904
        %9968 = vmatpush1.bf16.msra.mxu0 %v9903
        %9969 = vmatprep.subr.bf16.mxu0 %v9906
        %9970 = vmatpush1.bf16.msra.mxu0 %v9905
        %9971 = vmatprep.subr.bf16.mxu0 %v9908
        %9972 = vmatpush1.bf16.msra.mxu0 %v9907
        %9973 = vmatprep.subr.bf16.mxu0 %v9910
        %9974 = vmatpush1.bf16.msra.mxu0 %v9909
        %9975 = vmatprep.subr.bf16.mxu0 %v9912
        %9976 = vmatpush1.bf16.msra.mxu0 %v9911
        %9977 = vmatprep.subr.bf16.mxu0 %v9914
        %9978 = vmatpush1.bf16.msra.mxu0 %v9913
        %9979 = vmatprep.subr.bf16.mxu0 %v9916
        %9980 = vmatpush1.bf16.msra.mxu0 %v9915
        %9981 = vmatprep.subr.bf16.mxu0 %v9918
        %9982 = vmatpush1.bf16.msra.mxu0 %v9917
        %9983 = vmatprep.subr.bf16.mxu0 %v9920
        %9984 = vmatpush1.bf16.msra.mxu0 %v9919
        %9985 = vmatprep.subr.bf16.mxu0 %v9922
        %9986 = vmatpush1.bf16.msra.mxu0 %v9921
        %9987 = vmatprep.subr.bf16.mxu0 %v9924
        %9988 = vmatpush1.bf16.msra.mxu0 %v9923
        %9989 = vmatprep.subr.bf16.mxu0 %v9926
        %9990 = vmatpush1.bf16.msra.mxu0 %v9925
        %9991 = vmatprep.subr.bf16.mxu0 %v9928
        %9992 = vmatpush1.bf16.msra.mxu0 %v9927
        %9993 = vmatprep.subr.bf16.mxu0 %v9930
        %9994 = vmatpush1.bf16.msra.mxu0 %v9929
        %9995 = vmatprep.mubr.bf16.mxu0 %v9770
        %9996 = vmatmul.mubr.bf16.gmra.mrb[0].mxu0 %v9758
        %v9997 = vpop.f32.mrb[0].mxu0
        %v9998 = vadd.f32 0.0, %v9997
        %v9999 = vpop.f32.mrb[0].mxu0
        %v10000 = vadd.f32 0.0, %v9999
        %v10001 = vpop.f32.mrb[0].mxu0
        %v10002 = vadd.f32 0.0, %v10001
        %v10003 = vpop.f32.mrb[0].mxu0
        %v10004 = vadd.f32 0.0, %v10003
        %10005 = vmatprep.mubr.bf16.mxu0 %v9778
        %10006 = vmatmul.mubr.bf16.gmra.mrb[0].mxu0 %v9774
        %v10007 = vpop.f32.mrb[0].mxu0
        %v10008 = vadd.f32 0.0, %v10007
        %v10009 = vpop.f32.mrb[0].mxu0
        %v10010 = vadd.f32 0.0, %v10009
        %v10011 = vpop.f32.mrb[0].mxu0
        %v10012 = vadd.f32 0.0, %v10011
        %v10013 = vpop.f32.mrb[0].mxu0
        %v10014 = vadd.f32 0.0, %v10013
        %10015 = vmatprep.mubr.bf16.mxu0 %v9796
        %10016 = vmatmul.mubr.bf16.gmra.mrb[0].mxu0 %v9787
        %v10017 = vpop.f32.mrb[0].mxu0
        %v10018 = vadd.f32 0.0, %v10017
        %v10019 = vpop.f32.mrb[0].mxu0
        %v10020 = vadd.f32 0.0, %v10019
        %v10021 = vpop.f32.mrb[0].mxu0
        %v10022 = vadd.f32 0.0, %v10021
        %v10023 = vpop.f32.mrb[0].mxu0
        %v10024 = vadd.f32 0.0, %v10023
        %10025 = vdwg.mxu0
        %v10026 = vadd.f32 %v9701, %v9998
        %v10027 = vadd.f32 %v9702, %v10000
        %v10028 = vadd.f32 %v9703, %v10002
        %v10029 = vadd.f32 %v9704, %v10004
        %v10030 = vadd.f32 %v9705, %v10008
        %v10031 = vadd.f32 %v9706, %v10010
        %v10032 = vadd.f32 %v9707, %v10012
        %v10033 = vadd.f32 %v9708, %v10014
        %v10034 = vadd.f32 %v9709, %v10018
        %v10035 = vadd.f32 %v9710, %v10020
        %v10036 = vadd.f32 %v9711, %v10022
        %v10037 = vadd.f32 %v9712, %v10024
        %v10038 = vld [vmem:[#allocation5] sm:$0xf8]
        %v10039 = vld [vmem:[#allocation5 + $0x8] sm:$0xf8]
        %v10040 = vld [vmem:[#allocation18 + $0x600] sm:$0xff]
        %v10041 = vld [vmem:[#allocation18 + $0x608] sm:$0xff]
        %v10042 = vld [vmem:[#allocation18 + $0x610] sm:$0xff]
        %v10043 = vld [vmem:[#allocation18 + $0x618] sm:$0xff]
        %v10044 = vld [vmem:[#allocation18 + $0x620] sm:$0xff]
        %v10045 = vld [vmem:[#allocation18 + $0x628] sm:$0xff]
        %v10046 = vld [vmem:[#allocation18 + $0x630] sm:$0xff]
        %v10047 = vld [vmem:[#allocation18 + $0x638] sm:$0xff]
        %v10048 = vld [vmem:[#allocation18 + $0x640] sm:$0xff]
        %v10049 = vld [vmem:[#allocation18 + $0x648] sm:$0xff]
        %v10050 = vld [vmem:[#allocation18 + $0x650] sm:$0xff]
        %v10051 = vld [vmem:[#allocation18 + $0x658] sm:$0xff]
        %v10052 = vld [vmem:[#allocation18 + $0x660] sm:$0xff]
        %v10053 = vld [vmem:[#allocation18 + $0x668] sm:$0xff]
        %v10054 = vld [vmem:[#allocation18 + $0x670] sm:$0xff]
        %v10055 = vld [vmem:[#allocation18 + $0x678] sm:$0xff]
        %v10056 = vld [vmem:[#allocation18 + $0x680] sm:$0xff]
        %v10057 = vld [vmem:[#allocation18 + $0x688] sm:$0xff]
        %v10058 = vld [vmem:[#allocation18 + $0x690] sm:$0xff]
        %v10059 = vld [vmem:[#allocation18 + $0x698] sm:$0xff]
        %v10060 = vld [vmem:[#allocation18 + $0x6a0] sm:$0xff]
        %v10061 = vld [vmem:[#allocation18 + $0x6a8] sm:$0xff]
        %v10062 = vld [vmem:[#allocation18 + $0x6b0] sm:$0xff]
        %v10063 = vld [vmem:[#allocation18 + $0x6b8] sm:$0xff]
        %v10064 = vld [vmem:[#allocation18 + $0x6c0] sm:$0xff]
        %v10065 = vld [vmem:[#allocation18 + $0x6c8] sm:$0xff]
        %v10066 = vld [vmem:[#allocation18 + $0x6d0] sm:$0xff]
        %v10067 = vld [vmem:[#allocation18 + $0x6d8] sm:$0xff]
        %v10068 = vld [vmem:[#allocation18 + $0x6e0] sm:$0xff]
        %v10069 = vld [vmem:[#allocation18 + $0x6e8] sm:$0xff]
        %v10070 = vld [vmem:[#allocation18 + $0x6f0] sm:$0xff]
        %v10071 = vld [vmem:[#allocation18 + $0x6f8] sm:$0xff]
        %v10076 = vrot.slane %v10038, 3
        %v10077 = vrot.slane %v8252, 3
        %v10078 = vsel %vm2422, %v10076, %v10077
        %v10079 = vrot.slane %v10039, 3
        %v10080 = vrot.slane %v8253, 3
        %v10081 = vsel %vm2422, %v10079, %v10080
        %v10082 = vrot.slane %v8254, 3
        %v10083 = vsel %vm2422, %v10077, %v10082
        %v10084 = vrot.slane %v8255, 3
        %v10085 = vsel %vm2422, %v10080, %v10084
        %v10086 = vrot.slane %v9713, 3
        %v10087 = vsel %vm2422, %v10082, %v10086
        %v10088 = vrot.slane %v9714, 3
        %v10089 = vsel %vm2422, %v10084, %v10088
        %v10128 = vunpack.c.l.b16 %v10040
        %v10129 = vunpack.c.h.b16 %v10040
        %v10130 = vunpack.c.l.b16 %v10041
        %v10131 = vunpack.c.h.b16 %v10041
        %v10132 = vunpack.c.l.b16 %v10042
        %v10133 = vunpack.c.h.b16 %v10042
        %v10134 = vunpack.c.l.b16 %v10043
        %v10135 = vunpack.c.h.b16 %v10043
        %v10136 = vunpack.c.l.b16 %v10044
        %v10137 = vunpack.c.h.b16 %v10044
        %v10138 = vunpack.c.l.b16 %v10045
        %v10139 = vunpack.c.h.b16 %v10045
        %v10140 = vunpack.c.l.b16 %v10046
        %v10141 = vunpack.c.h.b16 %v10046
        %v10142 = vunpack.c.l.b16 %v10047
        %v10143 = vunpack.c.h.b16 %v10047
        %v10144 = vunpack.c.l.b16 %v10048
        %v10145 = vunpack.c.h.b16 %v10048
        %v10146 = vunpack.c.l.b16 %v10049
        %v10147 = vunpack.c.h.b16 %v10049
        %v10148 = vunpack.c.l.b16 %v10050
        %v10149 = vunpack.c.h.b16 %v10050
        %v10150 = vunpack.c.l.b16 %v10051
        %v10151 = vunpack.c.h.b16 %v10051
        %v10152 = vunpack.c.l.b16 %v10052
        %v10153 = vunpack.c.h.b16 %v10052
        %v10154 = vunpack.c.l.b16 %v10053
        %v10155 = vunpack.c.h.b16 %v10053
        %v10156 = vunpack.c.l.b16 %v10054
        %v10157 = vunpack.c.h.b16 %v10054
        %v10158 = vunpack.c.l.b16 %v10055
        %v10159 = vunpack.c.h.b16 %v10055
        %v10160 = vunpack.c.l.b16 %v10056
        %v10161 = vunpack.c.h.b16 %v10056
        %v10162 = vunpack.c.l.b16 %v10057
        %v10163 = vunpack.c.h.b16 %v10057
        %v10164 = vunpack.c.l.b16 %v10058
        %v10165 = vunpack.c.h.b16 %v10058
        %v10166 = vunpack.c.l.b16 %v10059
        %v10167 = vunpack.c.h.b16 %v10059
        %v10168 = vunpack.c.l.b16 %v10060
        %v10169 = vunpack.c.h.b16 %v10060
        %v10170 = vunpack.c.l.b16 %v10061
        %v10171 = vunpack.c.h.b16 %v10061
        %v10172 = vunpack.c.l.b16 %v10062
        %v10173 = vunpack.c.h.b16 %v10062
        %v10174 = vunpack.c.l.b16 %v10063
        %v10175 = vunpack.c.h.b16 %v10063
        %v10176 = vunpack.c.l.b16 %v10064
        %v10177 = vunpack.c.h.b16 %v10064
        %v10178 = vunpack.c.l.b16 %v10065
        %v10179 = vunpack.c.h.b16 %v10065
        %v10180 = vunpack.c.l.b16 %v10066
        %v10181 = vunpack.c.h.b16 %v10066
        %v10182 = vunpack.c.l.b16 %v10067
        %v10183 = vunpack.c.h.b16 %v10067
        %v10184 = vunpack.c.l.b16 %v10068
        %v10185 = vunpack.c.h.b16 %v10068
        %v10186 = vunpack.c.l.b16 %v10069
        %v10187 = vunpack.c.h.b16 %v10069
        %v10188 = vunpack.c.l.b16 %v10070
        %v10189 = vunpack.c.h.b16 %v10070
        %v10190 = vunpack.c.l.b16 %v10071
        %v10191 = vunpack.c.h.b16 %v10071
        %v10192 = vpack.c.b16 %v10130, %v10128
        %v10193 = vpack.c.b16 %v10131, %v10129
        %v10194 = vpack.c.b16 %v10134, %v10132
        %v10195 = vpack.c.b16 %v10135, %v10133
        %v10196 = vpack.c.b16 %v10138, %v10136
        %v10197 = vpack.c.b16 %v10139, %v10137
        %v10198 = vpack.c.b16 %v10142, %v10140
        %v10199 = vpack.c.b16 %v10143, %v10141
        %v10200 = vpack.c.b16 %v10146, %v10144
        %v10201 = vpack.c.b16 %v10147, %v10145
        %v10202 = vpack.c.b16 %v10150, %v10148
        %v10203 = vpack.c.b16 %v10151, %v10149
        %v10204 = vpack.c.b16 %v10154, %v10152
        %v10205 = vpack.c.b16 %v10155, %v10153
        %v10206 = vpack.c.b16 %v10158, %v10156
        %v10207 = vpack.c.b16 %v10159, %v10157
        %v10208 = vpack.c.b16 %v10162, %v10160
        %v10209 = vpack.c.b16 %v10163, %v10161
        %v10210 = vpack.c.b16 %v10166, %v10164
        %v10211 = vpack.c.b16 %v10167, %v10165
        %v10212 = vpack.c.b16 %v10170, %v10168
        %v10213 = vpack.c.b16 %v10171, %v10169
        %v10214 = vpack.c.b16 %v10174, %v10172
        %v10215 = vpack.c.b16 %v10175, %v10173
        %v10216 = vpack.c.b16 %v10178, %v10176
        %v10217 = vpack.c.b16 %v10179, %v10177
        %v10218 = vpack.c.b16 %v10182, %v10180
        %v10219 = vpack.c.b16 %v10183, %v10181
        %v10220 = vpack.c.b16 %v10186, %v10184
        %v10221 = vpack.c.b16 %v10187, %v10185
        %v10222 = vpack.c.b16 %v10190, %v10188
        %v10223 = vpack.c.b16 %v10191, %v10189
        %10256 = vmatprep.subr.bf16.mxu0 %v10193
        %10257 = vmatpush1.bf16.msra.mxu0 %v10192
        %10258 = vmatprep.subr.bf16.mxu0 %v10195
        %10259 = vmatpush1.bf16.msra.mxu0 %v10194
        %10260 = vmatprep.subr.bf16.mxu0 %v10197
        %10261 = vmatpush1.bf16.msra.mxu0 %v10196
        %10262 = vmatprep.subr.bf16.mxu0 %v10199
        %10263 = vmatpush1.bf16.msra.mxu0 %v10198
        %10264 = vmatprep.subr.bf16.mxu0 %v10201
        %10265 = vmatpush1.bf16.msra.mxu0 %v10200
        %10266 = vmatprep.subr.bf16.mxu0 %v10203
        %10267 = vmatpush1.bf16.msra.mxu0 %v10202
        %10268 = vmatprep.subr.bf16.mxu0 %v10205
        %10269 = vmatpush1.bf16.msra.mxu0 %v10204
        %10270 = vmatprep.subr.bf16.mxu0 %v10207
        %10271 = vmatpush1.bf16.msra.mxu0 %v10206
        %10272 = vmatprep.subr.bf16.mxu0 %v10209
        %10273 = vmatpush1.bf16.msra.mxu0 %v10208
        %10274 = vmatprep.subr.bf16.mxu0 %v10211
        %10275 = vmatpush1.bf16.msra.mxu0 %v10210
        %10276 = vmatprep.subr.bf16.mxu0 %v10213
        %10277 = vmatpush1.bf16.msra.mxu0 %v10212
        %10278 = vmatprep.subr.bf16.mxu0 %v10215
        %10279 = vmatpush1.bf16.msra.mxu0 %v10214
        %10280 = vmatprep.subr.bf16.mxu0 %v10217
        %10281 = vmatpush1.bf16.msra.mxu0 %v10216
        %10282 = vmatprep.subr.bf16.mxu0 %v10219
        %10283 = vmatpush1.bf16.msra.mxu0 %v10218
        %10284 = vmatprep.subr.bf16.mxu0 %v10221
        %10285 = vmatpush1.bf16.msra.mxu0 %v10220
        %10286 = vmatprep.subr.bf16.mxu0 %v10223
        %10287 = vmatpush1.bf16.msra.mxu0 %v10222
        %10288 = vmatprep.mubr.bf16.mxu0 %v10081
        %10289 = vmatmul.mubr.bf16.gmra.mrb[0].mxu0 %v10078
        %v10290 = vpop.f32.mrb[0].mxu0
        %v10291 = vadd.f32 0.0, %v10290
        %v10292 = vpop.f32.mrb[0].mxu0
        %v10293 = vadd.f32 0.0, %v10292
        %v10294 = vpop.f32.mrb[0].mxu0
        %v10295 = vadd.f32 0.0, %v10294
        %v10296 = vpop.f32.mrb[0].mxu0
        %v10297 = vadd.f32 0.0, %v10296
        %10298 = vmatprep.mubr.bf16.mxu0 %v10085
        %10299 = vmatmul.mubr.bf16.gmra.mrb[0].mxu0 %v10083
        %v10300 = vpop.f32.mrb[0].mxu0
        %v10301 = vadd.f32 0.0, %v10300
        %v10302 = vpop.f32.mrb[0].mxu0
        %v10303 = vadd.f32 0.0, %v10302
        %v10304 = vpop.f32.mrb[0].mxu0
        %v10305 = vadd.f32 0.0, %v10304
        %v10306 = vpop.f32.mrb[0].mxu0
        %v10307 = vadd.f32 0.0, %v10306
        %10308 = vmatprep.mubr.bf16.mxu0 %v10089
        %10309 = vmatmul.mubr.bf16.gmra.mrb[0].mxu0 %v10087
        %v10310 = vpop.f32.mrb[0].mxu0
        %v10311 = vadd.f32 0.0, %v10310
        %v10312 = vpop.f32.mrb[0].mxu0
        %v10313 = vadd.f32 0.0, %v10312
        %v10314 = vpop.f32.mrb[0].mxu0
        %v10315 = vadd.f32 0.0, %v10314
        %v10316 = vpop.f32.mrb[0].mxu0
        %v10317 = vadd.f32 0.0, %v10316
        %10318 = vdwg.mxu0
        %v10319 = vadd.f32 %v10026, %v10291
        %v10320 = vadd.f32 %v10027, %v10293
        %v10321 = vadd.f32 %v10028, %v10295
        %v10322 = vadd.f32 %v10029, %v10297
        %v10323 = vadd.f32 %v10030, %v10301
        %v10324 = vadd.f32 %v10031, %v10303
        %v10325 = vadd.f32 %v10032, %v10305
        %v10326 = vadd.f32 %v10033, %v10307
        %v10327 = vadd.f32 %v10034, %v10311
        %v10328 = vadd.f32 %v10035, %v10313
        %v10329 = vadd.f32 %v10036, %v10315
        %v10330 = vadd.f32 %v10037, %v10317
        %v10331 = vld [vmem:[#allocation5 + $0x30] sm:$0xf]
        %v10332 = vld [vmem:[#allocation5 + $0x38] sm:$0xf]
        %v10333 = vld [vmem:[#allocation18 + $0x700] sm:$0xff]
        %v10334 = vld [vmem:[#allocation18 + $0x708] sm:$0xff]
        %v10335 = vld [vmem:[#allocation18 + $0x710] sm:$0xff]
        %v10336 = vld [vmem:[#allocation18 + $0x718] sm:$0xff]
        %v10337 = vld [vmem:[#allocation18 + $0x720] sm:$0xff]
        %v10338 = vld [vmem:[#allocation18 + $0x728] sm:$0xff]
        %v10339 = vld [vmem:[#allocation18 + $0x730] sm:$0xff]
        %v10340 = vld [vmem:[#allocation18 + $0x738] sm:$0xff]
        %v10341 = vld [vmem:[#allocation18 + $0x740] sm:$0xff]
        %v10342 = vld [vmem:[#allocation18 + $0x748] sm:$0xff]
        %v10343 = vld [vmem:[#allocation18 + $0x750] sm:$0xff]
        %v10344 = vld [vmem:[#allocation18 + $0x758] sm:$0xff]
        %v10345 = vld [vmem:[#allocation18 + $0x760] sm:$0xff]
        %v10346 = vld [vmem:[#allocation18 + $0x768] sm:$0xff]
        %v10347 = vld [vmem:[#allocation18 + $0x770] sm:$0xff]
        %v10348 = vld [vmem:[#allocation18 + $0x778] sm:$0xff]
        %v10349 = vld [vmem:[#allocation18 + $0x780] sm:$0xff]
        %v10350 = vld [vmem:[#allocation18 + $0x788] sm:$0xff]
        %v10351 = vld [vmem:[#allocation18 + $0x790] sm:$0xff]
        %v10352 = vld [vmem:[#allocation18 + $0x798] sm:$0xff]
        %v10353 = vld [vmem:[#allocation18 + $0x7a0] sm:$0xff]
        %v10354 = vld [vmem:[#allocation18 + $0x7a8] sm:$0xff]
        %v10355 = vld [vmem:[#allocation18 + $0x7b0] sm:$0xff]
        %v10356 = vld [vmem:[#allocation18 + $0x7b8] sm:$0xff]
        %v10357 = vld [vmem:[#allocation18 + $0x7c0] sm:$0xff]
        %v10358 = vld [vmem:[#allocation18 + $0x7c8] sm:$0xff]
        %v10359 = vld [vmem:[#allocation18 + $0x7d0] sm:$0xff]
        %v10360 = vld [vmem:[#allocation18 + $0x7d8] sm:$0xff]
        %v10361 = vld [vmem:[#allocation18 + $0x7e0] sm:$0xff]
        %v10362 = vld [vmem:[#allocation18 + $0x7e8] sm:$0xff]
        %v10363 = vld [vmem:[#allocation18 + $0x7f0] sm:$0xff]
        %v10364 = vld [vmem:[#allocation18 + $0x7f8] sm:$0xff]
        %v10366 = vshrl.u32 %v10038, 16
        %v10368 = vrot.slane %v10366, 3
        %v10369 = vshll.u32 %v10038, 16
        %v10371 = vrot.slane %v10369, 4
        %v10372 = vor.u32 %v10368, %v10371
        %v10373 = vrot.slane %v8314, 3
        %v10374 = vrot.slane %v8298, 4
        %v10375 = vor.u32 %v10373, %v10374
        %v10376 = vsel %vm2665, %v10372, %v10375
        %v10378 = vshrl.u32 %v10039, 16
        %v10380 = vrot.slane %v10378, 3
        %v10381 = vshll.u32 %v10039, 16
        %v10383 = vrot.slane %v10381, 4
        %v10384 = vor.u32 %v10380, %v10383
        %v10385 = vrot.slane %v8322, 3
        %v10386 = vrot.slane %v8310, 4
        %v10387 = vor.u32 %v10385, %v10386
        %v10388 = vsel %vm2665, %v10384, %v10387
        %v10389 = vrot.slane %v8330, 3
        %v10390 = vrot.slane %v8318, 4
        %v10391 = vor.u32 %v10389, %v10390
        %v10392 = vsel %vm2665, %v10375, %v10391
        %v10393 = vrot.slane %v8338, 3
        %v10394 = vrot.slane %v8326, 4
        %v10395 = vor.u32 %v10393, %v10394
        %v10396 = vsel %vm2665, %v10387, %v10395
        %v10398 = vshrl.u32 %v10331, 16
        %v10400 = vrot.slane %v10398, 3
        %v10401 = vshll.u32 %v10331, 16
        %v10403 = vrot.slane %v10401, 4
        %v10404 = vor.u32 %v10400, %v10403
        %v10405 = vsel %vm2665, %v10391, %v10404
        %v10407 = vshrl.u32 %v10332, 16
        %v10409 = vrot.slane %v10407, 3
        %v10410 = vshll.u32 %v10332, 16
        %v10412 = vrot.slane %v10410, 4
        %v10413 = vor.u32 %v10409, %v10412
        %v10414 = vsel %vm2665, %v10395, %v10413
        %v10453 = vunpack.c.l.b16 %v10333
        %v10454 = vunpack.c.h.b16 %v10333
        %v10455 = vunpack.c.l.b16 %v10334
        %v10456 = vunpack.c.h.b16 %v10334
        %v10457 = vunpack.c.l.b16 %v10335
        %v10458 = vunpack.c.h.b16 %v10335
        %v10459 = vunpack.c.l.b16 %v10336
        %v10460 = vunpack.c.h.b16 %v10336
        %v10461 = vunpack.c.l.b16 %v10337
        %v10462 = vunpack.c.h.b16 %v10337
        %v10463 = vunpack.c.l.b16 %v10338
        %v10464 = vunpack.c.h.b16 %v10338
        %v10465 = vunpack.c.l.b16 %v10339
        %v10466 = vunpack.c.h.b16 %v10339
        %v10467 = vunpack.c.l.b16 %v10340
        %v10468 = vunpack.c.h.b16 %v10340
        %v10469 = vunpack.c.l.b16 %v10341
        %v10470 = vunpack.c.h.b16 %v10341
        %v10471 = vunpack.c.l.b16 %v10342
        %v10472 = vunpack.c.h.b16 %v10342
        %v10473 = vunpack.c.l.b16 %v10343
        %v10474 = vunpack.c.h.b16 %v10343
        %v10475 = vunpack.c.l.b16 %v10344
        %v10476 = vunpack.c.h.b16 %v10344
        %v10477 = vunpack.c.l.b16 %v10345
        %v10478 = vunpack.c.h.b16 %v10345
        %v10479 = vunpack.c.l.b16 %v10346
        %v10480 = vunpack.c.h.b16 %v10346
        %v10481 = vunpack.c.l.b16 %v10347
        %v10482 = vunpack.c.h.b16 %v10347
        %v10483 = vunpack.c.l.b16 %v10348
        %v10484 = vunpack.c.h.b16 %v10348
        %v10485 = vunpack.c.l.b16 %v10349
        %v10486 = vunpack.c.h.b16 %v10349
        %v10487 = vunpack.c.l.b16 %v10350
        %v10488 = vunpack.c.h.b16 %v10350
        %v10489 = vunpack.c.l.b16 %v10351
        %v10490 = vunpack.c.h.b16 %v10351
        %v10491 = vunpack.c.l.b16 %v10352
        %v10492 = vunpack.c.h.b16 %v10352
        %v10493 = vunpack.c.l.b16 %v10353
        %v10494 = vunpack.c.h.b16 %v10353
        %v10495 = vunpack.c.l.b16 %v10354
        %v10496 = vunpack.c.h.b16 %v10354
        %v10497 = vunpack.c.l.b16 %v10355
        %v10498 = vunpack.c.h.b16 %v10355
        %v10499 = vunpack.c.l.b16 %v10356
        %v10500 = vunpack.c.h.b16 %v10356
        %v10501 = vunpack.c.l.b16 %v10357
        %v10502 = vunpack.c.h.b16 %v10357
        %v10503 = vunpack.c.l.b16 %v10358
        %v10504 = vunpack.c.h.b16 %v10358
        %v10505 = vunpack.c.l.b16 %v10359
        %v10506 = vunpack.c.h.b16 %v10359
        %v10507 = vunpack.c.l.b16 %v10360
        %v10508 = vunpack.c.h.b16 %v10360
        %v10509 = vunpack.c.l.b16 %v10361
        %v10510 = vunpack.c.h.b16 %v10361
        %v10511 = vunpack.c.l.b16 %v10362
        %v10512 = vunpack.c.h.b16 %v10362
        %v10513 = vunpack.c.l.b16 %v10363
        %v10514 = vunpack.c.h.b16 %v10363
        %v10515 = vunpack.c.l.b16 %v10364
        %v10516 = vunpack.c.h.b16 %v10364
        %v10517 = vpack.c.b16 %v10455, %v10453
        %v10518 = vpack.c.b16 %v10456, %v10454
        %v10519 = vpack.c.b16 %v10459, %v10457
        %v10520 = vpack.c.b16 %v10460, %v10458
        %v10521 = vpack.c.b16 %v10463, %v10461
        %v10522 = vpack.c.b16 %v10464, %v10462
        %v10523 = vpack.c.b16 %v10467, %v10465
        %v10524 = vpack.c.b16 %v10468, %v10466
        %v10525 = vpack.c.b16 %v10471, %v10469
        %v10526 = vpack.c.b16 %v10472, %v10470
        %v10527 = vpack.c.b16 %v10475, %v10473
        %v10528 = vpack.c.b16 %v10476, %v10474
        %v10529 = vpack.c.b16 %v10479, %v10477
        %v10530 = vpack.c.b16 %v10480, %v10478
        %v10531 = vpack.c.b16 %v10483, %v10481
        %v10532 = vpack.c.b16 %v10484, %v10482
        %v10533 = vpack.c.b16 %v10487, %v10485
        %v10534 = vpack.c.b16 %v10488, %v10486
        %v10535 = vpack.c.b16 %v10491, %v10489
        %v10536 = vpack.c.b16 %v10492, %v10490
        %v10537 = vpack.c.b16 %v10495, %v10493
        %v10538 = vpack.c.b16 %v10496, %v10494
        %v10539 = vpack.c.b16 %v10499, %v10497
        %v10540 = vpack.c.b16 %v10500, %v10498
        %v10541 = vpack.c.b16 %v10503, %v10501
        %v10542 = vpack.c.b16 %v10504, %v10502
        %v10543 = vpack.c.b16 %v10507, %v10505
        %v10544 = vpack.c.b16 %v10508, %v10506
        %v10545 = vpack.c.b16 %v10511, %v10509
        %v10546 = vpack.c.b16 %v10512, %v10510
        %v10547 = vpack.c.b16 %v10515, %v10513
        %v10548 = vpack.c.b16 %v10516, %v10514
        %10581 = vmatprep.subr.bf16.mxu0 %v10518
        %10582 = vmatpush1.bf16.msra.mxu0 %v10517
        %10583 = vmatprep.subr.bf16.mxu0 %v10520
        %10584 = vmatpush1.bf16.msra.mxu0 %v10519
        %10585 = vmatprep.subr.bf16.mxu0 %v10522
        %10586 = vmatpush1.bf16.msra.mxu0 %v10521
        %10587 = vmatprep.subr.bf16.mxu0 %v10524
        %10588 = vmatpush1.bf16.msra.mxu0 %v10523
        %10589 = vmatprep.subr.bf16.mxu0 %v10526
        %10590 = vmatpush1.bf16.msra.mxu0 %v10525
        %10591 = vmatprep.subr.bf16.mxu0 %v10528
        %10592 = vmatpush1.bf16.msra.mxu0 %v10527
        %10593 = vmatprep.subr.bf16.mxu0 %v10530
        %10594 = vmatpush1.bf16.msra.mxu0 %v10529
        %10595 = vmatprep.subr.bf16.mxu0 %v10532
        %10596 = vmatpush1.bf16.msra.mxu0 %v10531
        %10597 = vmatprep.subr.bf16.mxu0 %v10534
        %10598 = vmatpush1.bf16.msra.mxu0 %v10533
        %10599 = vmatprep.subr.bf16.mxu0 %v10536
        %10600 = vmatpush1.bf16.msra.mxu0 %v10535
        %10601 = vmatprep.subr.bf16.mxu0 %v10538
        %10602 = vmatpush1.bf16.msra.mxu0 %v10537
        %10603 = vmatprep.subr.bf16.mxu0 %v10540
        %10604 = vmatpush1.bf16.msra.mxu0 %v10539
        %10605 = vmatprep.subr.bf16.mxu0 %v10542
        %10606 = vmatpush1.bf16.msra.mxu0 %v10541
        %10607 = vmatprep.subr.bf16.mxu0 %v10544
        %10608 = vmatpush1.bf16.msra.mxu0 %v10543
        %10609 = vmatprep.subr.bf16.mxu0 %v10546
        %10610 = vmatpush1.bf16.msra.mxu0 %v10545
        %10611 = vmatprep.subr.bf16.mxu0 %v10548
        %10612 = vmatpush1.bf16.msra.mxu0 %v10547
        %10613 = vmatprep.mubr.bf16.mxu0 %v10388
        %10614 = vmatmul.mubr.bf16.gmra.mrb[0].mxu0 %v10376
        %v10615 = vpop.f32.mrb[0].mxu0
        %v10616 = vadd.f32 0.0, %v10615
        %v10617 = vpop.f32.mrb[0].mxu0
        %v10618 = vadd.f32 0.0, %v10617
        %v10619 = vpop.f32.mrb[0].mxu0
        %v10620 = vadd.f32 0.0, %v10619
        %v10621 = vpop.f32.mrb[0].mxu0
        %v10622 = vadd.f32 0.0, %v10621
        %10623 = vmatprep.mubr.bf16.mxu0 %v10396
        %10624 = vmatmul.mubr.bf16.gmra.mrb[0].mxu0 %v10392
        %v10625 = vpop.f32.mrb[0].mxu0
        %v10626 = vadd.f32 0.0, %v10625
        %v10627 = vpop.f32.mrb[0].mxu0
        %v10628 = vadd.f32 0.0, %v10627
        %v10629 = vpop.f32.mrb[0].mxu0
        %v10630 = vadd.f32 0.0, %v10629
        %v10631 = vpop.f32.mrb[0].mxu0
        %v10632 = vadd.f32 0.0, %v10631
        %10633 = vmatprep.mubr.bf16.mxu0 %v10414
        %10634 = vmatmul.mubr.bf16.gmra.mrb[0].mxu0 %v10405
        %v10635 = vpop.f32.mrb[0].mxu0
        %v10636 = vadd.f32 0.0, %v10635
        %v10637 = vpop.f32.mrb[0].mxu0
        %v10638 = vadd.f32 0.0, %v10637
        %v10639 = vpop.f32.mrb[0].mxu0
        %v10640 = vadd.f32 0.0, %v10639
        %v10641 = vpop.f32.mrb[0].mxu0
        %v10642 = vadd.f32 0.0, %v10641
        %10643 = vdwg.mxu0
        %v10644 = vadd.f32 %v10319, %v10616
        %v10645 = vadd.f32 %v10320, %v10618
        %v10646 = vadd.f32 %v10321, %v10620
        %v10647 = vadd.f32 %v10322, %v10622
        %v10648 = vadd.f32 %v10323, %v10626
        %v10649 = vadd.f32 %v10324, %v10628
        %v10650 = vadd.f32 %v10325, %v10630
        %v10651 = vadd.f32 %v10326, %v10632
        %v10652 = vadd.f32 %v10327, %v10636
        %v10653 = vadd.f32 %v10328, %v10638
        %v10654 = vadd.f32 %v10329, %v10640
        %v10655 = vadd.f32 %v10330, %v10642
        %v10656 = vld [vmem:[#allocation5] sm:$0xf0]
        %v10657 = vld [vmem:[#allocation5 + $0x8] sm:$0xf0]
        %v10658 = vld [vmem:[#allocation18 + $0x800] sm:$0xff]
        %v10659 = vld [vmem:[#allocation18 + $0x808] sm:$0xff]
        %v10660 = vld [vmem:[#allocation18 + $0x810] sm:$0xff]
        %v10661 = vld [vmem:[#allocation18 + $0x818] sm:$0xff]
        %v10662 = vld [vmem:[#allocation18 + $0x820] sm:$0xff]
        %v10663 = vld [vmem:[#allocation18 + $0x828] sm:$0xff]
        %v10664 = vld [vmem:[#allocation18 + $0x830] sm:$0xff]
        %v10665 = vld [vmem:[#allocation18 + $0x838] sm:$0xff]
        %v10666 = vld [vmem:[#allocation18 + $0x840] sm:$0xff]
        %v10667 = vld [vmem:[#allocation18 + $0x848] sm:$0xff]
        %v10668 = vld [vmem:[#allocation18 + $0x850] sm:$0xff]
        %v10669 = vld [vmem:[#allocation18 + $0x858] sm:$0xff]
        %v10670 = vld [vmem:[#allocation18 + $0x860] sm:$0xff]
        %v10671 = vld [vmem:[#allocation18 + $0x868] sm:$0xff]
        %v10672 = vld [vmem:[#allocation18 + $0x870] sm:$0xff]
        %v10673 = vld [vmem:[#allocation18 + $0x878] sm:$0xff]
        %v10674 = vld [vmem:[#allocation18 + $0x880] sm:$0xff]
        %v10675 = vld [vmem:[#allocation18 + $0x888] sm:$0xff]
        %v10676 = vld [vmem:[#allocation18 + $0x890] sm:$0xff]
        %v10677 = vld [vmem:[#allocation18 + $0x898] sm:$0xff]
        %v10678 = vld [vmem:[#allocation18 + $0x8a0] sm:$0xff]
        %v10679 = vld [vmem:[#allocation18 + $0x8a8] sm:$0xff]
        %v10680 = vld [vmem:[#allocation18 + $0x8b0] sm:$0xff]
        %v10681 = vld [vmem:[#allocation18 + $0x8b8] sm:$0xff]
        %v10682 = vld [vmem:[#allocation18 + $0x8c0] sm:$0xff]
        %v10683 = vld [vmem:[#allocation18 + $0x8c8] sm:$0xff]
        %v10684 = vld [vmem:[#allocation18 + $0x8d0] sm:$0xff]
        %v10685 = vld [vmem:[#allocation18 + $0x8d8] sm:$0xff]
        %v10686 = vld [vmem:[#allocation18 + $0x8e0] sm:$0xff]
        %v10687 = vld [vmem:[#allocation18 + $0x8e8] sm:$0xff]
        %v10688 = vld [vmem:[#allocation18 + $0x8f0] sm:$0xff]
        %v10689 = vld [vmem:[#allocation18 + $0x8f8] sm:$0xff]
        %v10694 = vrot.slane %v10656, 4
        %v10695 = vrot.slane %v8252, 4
        %v10696 = vsel %vm2944, %v10694, %v10695
        %v10697 = vrot.slane %v10657, 4
        %v10698 = vrot.slane %v8253, 4
        %v10699 = vsel %vm2944, %v10697, %v10698
        %v10700 = vrot.slane %v8254, 4
        %v10701 = vsel %vm2944, %v10695, %v10700
        %v10702 = vrot.slane %v8255, 4
        %v10703 = vsel %vm2944, %v10698, %v10702
        %v10704 = vrot.slane %v10331, 4
        %v10705 = vsel %vm2944, %v10700, %v10704
        %v10706 = vrot.slane %v10332, 4
        %v10707 = vsel %vm2944, %v10702, %v10706
        %v10746 = vunpack.c.l.b16 %v10658
        %v10747 = vunpack.c.h.b16 %v10658
        %v10748 = vunpack.c.l.b16 %v10659
        %v10749 = vunpack.c.h.b16 %v10659
        %v10750 = vunpack.c.l.b16 %v10660
        %v10751 = vunpack.c.h.b16 %v10660
        %v10752 = vunpack.c.l.b16 %v10661
        %v10753 = vunpack.c.h.b16 %v10661
        %v10754 = vunpack.c.l.b16 %v10662
        %v10755 = vunpack.c.h.b16 %v10662
        %v10756 = vunpack.c.l.b16 %v10663
        %v10757 = vunpack.c.h.b16 %v10663
        %v10758 = vunpack.c.l.b16 %v10664
        %v10759 = vunpack.c.h.b16 %v10664
        %v10760 = vunpack.c.l.b16 %v10665
        %v10761 = vunpack.c.h.b16 %v10665
        %v10762 = vunpack.c.l.b16 %v10666
        %v10763 = vunpack.c.h.b16 %v10666
        %v10764 = vunpack.c.l.b16 %v10667
        %v10765 = vunpack.c.h.b16 %v10667
        %v10766 = vunpack.c.l.b16 %v10668
        %v10767 = vunpack.c.h.b16 %v10668
        %v10768 = vunpack.c.l.b16 %v10669
        %v10769 = vunpack.c.h.b16 %v10669
        %v10770 = vunpack.c.l.b16 %v10670
        %v10771 = vunpack.c.h.b16 %v10670
        %v10772 = vunpack.c.l.b16 %v10671
        %v10773 = vunpack.c.h.b16 %v10671
        %v10774 = vunpack.c.l.b16 %v10672
        %v10775 = vunpack.c.h.b16 %v10672
        %v10776 = vunpack.c.l.b16 %v10673
        %v10777 = vunpack.c.h.b16 %v10673
        %v10778 = vunpack.c.l.b16 %v10674
        %v10779 = vunpack.c.h.b16 %v10674
        %v10780 = vunpack.c.l.b16 %v10675
        %v10781 = vunpack.c.h.b16 %v10675
        %v10782 = vunpack.c.l.b16 %v10676
        %v10783 = vunpack.c.h.b16 %v10676
        %v10784 = vunpack.c.l.b16 %v10677
        %v10785 = vunpack.c.h.b16 %v10677
        %v10786 = vunpack.c.l.b16 %v10678
        %v10787 = vunpack.c.h.b16 %v10678
        %v10788 = vunpack.c.l.b16 %v10679
        %v10789 = vunpack.c.h.b16 %v10679
        %v10790 = vunpack.c.l.b16 %v10680
        %v10791 = vunpack.c.h.b16 %v10680
        %v10792 = vunpack.c.l.b16 %v10681
        %v10793 = vunpack.c.h.b16 %v10681
        %v10794 = vunpack.c.l.b16 %v10682
        %v10795 = vunpack.c.h.b16 %v10682
        %v10796 = vunpack.c.l.b16 %v10683
        %v10797 = vunpack.c.h.b16 %v10683
        %v10798 = vunpack.c.l.b16 %v10684
        %v10799 = vunpack.c.h.b16 %v10684
        %v10800 = vunpack.c.l.b16 %v10685
        %v10801 = vunpack.c.h.b16 %v10685
        %v10802 = vunpack.c.l.b16 %v10686
        %v10803 = vunpack.c.h.b16 %v10686
        %v10804 = vunpack.c.l.b16 %v10687
        %v10805 = vunpack.c.h.b16 %v10687
        %v10806 = vunpack.c.l.b16 %v10688
        %v10807 = vunpack.c.h.b16 %v10688
        %v10808 = vunpack.c.l.b16 %v10689
        %v10809 = vunpack.c.h.b16 %v10689
        %v10810 = vpack.c.b16 %v10748, %v10746
        %v10811 = vpack.c.b16 %v10749, %v10747
        %v10812 = vpack.c.b16 %v10752, %v10750
        %v10813 = vpack.c.b16 %v10753, %v10751
        %v10814 = vpack.c.b16 %v10756, %v10754
        %v10815 = vpack.c.b16 %v10757, %v10755
        %v10816 = vpack.c.b16 %v10760, %v10758
        %v10817 = vpack.c.b16 %v10761, %v10759
        %v10818 = vpack.c.b16 %v10764, %v10762
        %v10819 = vpack.c.b16 %v10765, %v10763
        %v10820 = vpack.c.b16 %v10768, %v10766
        %v10821 = vpack.c.b16 %v10769, %v10767
        %v10822 = vpack.c.b16 %v10772, %v10770
        %v10823 = vpack.c.b16 %v10773, %v10771
        %v10824 = vpack.c.b16 %v10776, %v10774
        %v10825 = vpack.c.b16 %v10777, %v10775
        %v10826 = vpack.c.b16 %v10780, %v10778
        %v10827 = vpack.c.b16 %v10781, %v10779
        %v10828 = vpack.c.b16 %v10784, %v10782
        %v10829 = vpack.c.b16 %v10785, %v10783
        %v10830 = vpack.c.b16 %v10788, %v10786
        %v10831 = vpack.c.b16 %v10789, %v10787
        %v10832 = vpack.c.b16 %v10792, %v10790
        %v10833 = vpack.c.b16 %v10793, %v10791
        %v10834 = vpack.c.b16 %v10796, %v10794
        %v10835 = vpack.c.b16 %v10797, %v10795
        %v10836 = vpack.c.b16 %v10800, %v10798
        %v10837 = vpack.c.b16 %v10801, %v10799
        %v10838 = vpack.c.b16 %v10804, %v10802
        %v10839 = vpack.c.b16 %v10805, %v10803
        %v10840 = vpack.c.b16 %v10808, %v10806
        %v10841 = vpack.c.b16 %v10809, %v10807
        %10874 = vmatprep.subr.bf16.mxu0 %v10811
        %10875 = vmatpush1.bf16.msra.mxu0 %v10810
        %10876 = vmatprep.subr.bf16.mxu0 %v10813
        %10877 = vmatpush1.bf16.msra.mxu0 %v10812
        %10878 = vmatprep.subr.bf16.mxu0 %v10815
        %10879 = vmatpush1.bf16.msra.mxu0 %v10814
        %10880 = vmatprep.subr.bf16.mxu0 %v10817
        %10881 = vmatpush1.bf16.msra.mxu0 %v10816
        %10882 = vmatprep.subr.bf16.mxu0 %v10819
        %10883 = vmatpush1.bf16.msra.mxu0 %v10818
        %10884 = vmatprep.subr.bf16.mxu0 %v10821
        %10885 = vmatpush1.bf16.msra.mxu0 %v10820
        %10886 = vmatprep.subr.bf16.mxu0 %v10823
        %10887 = vmatpush1.bf16.msra.mxu0 %v10822
        %10888 = vmatprep.subr.bf16.mxu0 %v10825
        %10889 = vmatpush1.bf16.msra.mxu0 %v10824
        %10890 = vmatprep.subr.bf16.mxu0 %v10827
        %10891 = vmatpush1.bf16.msra.mxu0 %v10826
        %10892 = vmatprep.subr.bf16.mxu0 %v10829
        %10893 = vmatpush1.bf16.msra.mxu0 %v10828
        %10894 = vmatprep.subr.bf16.mxu0 %v10831
        %10895 = vmatpush1.bf16.msra.mxu0 %v10830
        %10896 = vmatprep.subr.bf16.mxu0 %v10833
        %10897 = vmatpush1.bf16.msra.mxu0 %v10832
        %10898 = vmatprep.subr.bf16.mxu0 %v10835
        %10899 = vmatpush1.bf16.msra.mxu0 %v10834
        %10900 = vmatprep.subr.bf16.mxu0 %v10837
        %10901 = vmatpush1.bf16.msra.mxu0 %v10836
        %10902 = vmatprep.subr.bf16.mxu0 %v10839
        %10903 = vmatpush1.bf16.msra.mxu0 %v10838
        %10904 = vmatprep.subr.bf16.mxu0 %v10841
        %10905 = vmatpush1.bf16.msra.mxu0 %v10840
        %10906 = vmatprep.mubr.bf16.mxu0 %v10699
        %10907 = vmatmul.mubr.bf16.gmra.mrb[0].mxu0 %v10696
        %v10908 = vpop.f32.mrb[0].mxu0
        %v10909 = vadd.f32 0.0, %v10908
        %v10910 = vpop.f32.mrb[0].mxu0
        %v10911 = vadd.f32 0.0, %v10910
        %v10912 = vpop.f32.mrb[0].mxu0
        %v10913 = vadd.f32 0.0, %v10912
        %v10914 = vpop.f32.mrb[0].mxu0
        %v10915 = vadd.f32 0.0, %v10914
        %10916 = vmatprep.mubr.bf16.mxu0 %v10703
        %10917 = vmatmul.mubr.bf16.gmra.mrb[0].mxu0 %v10701
        %v10918 = vpop.f32.mrb[0].mxu0
        %v10919 = vadd.f32 0.0, %v10918
        %v10920 = vpop.f32.mrb[0].mxu0
        %v10921 = vadd.f32 0.0, %v10920
        %v10922 = vpop.f32.mrb[0].mxu0
        %v10923 = vadd.f32 0.0, %v10922
        %v10924 = vpop.f32.mrb[0].mxu0
        %v10925 = vadd.f32 0.0, %v10924
        %10926 = vmatprep.mubr.bf16.mxu0 %v10707
        %10927 = vmatmul.mubr.bf16.gmra.mrb[0].mxu0 %v10705
        %v10928 = vpop.f32.mrb[0].mxu0
        %v10929 = vadd.f32 0.0, %v10928
        %v10930 = vpop.f32.mrb[0].mxu0
        %v10931 = vadd.f32 0.0, %v10930
        %v10932 = vpop.f32.mrb[0].mxu0
        %v10933 = vadd.f32 0.0, %v10932
        %v10934 = vpop.f32.mrb[0].mxu0
        %v10935 = vadd.f32 0.0, %v10934
        %10936 = vdwg.mxu0
        %v10937 = vadd.f32 %v10644, %v10909
        %v10938 = vadd.f32 %v10645, %v10911
        %v10939 = vadd.f32 %v10646, %v10913
        %v10940 = vadd.f32 %v10647, %v10915
        %v10941 = vadd.f32 %v10648, %v10919
        %v10942 = vadd.f32 %v10649, %v10921
        %v10943 = vadd.f32 %v10650, %v10923
        %v10944 = vadd.f32 %v10651, %v10925
        %v10945 = vadd.f32 %v10652, %v10929
        %v10946 = vadd.f32 %v10653, %v10931
        %v10947 = vadd.f32 %v10654, %v10933
        %v10948 = vadd.f32 %v10655, %v10935
        %v10949 = vld [vmem:[#allocation5 + $0x30] sm:$0x1f]
        %v10950 = vld [vmem:[#allocation5 + $0x38] sm:$0x1f]
        %v10951 = vld [vmem:[#allocation18 + $0x900] sm:$0xff]
        %v10952 = vld [vmem:[#allocation18 + $0x908] sm:$0xff]
        %v10953 = vld [vmem:[#allocation18 + $0x910] sm:$0xff]
        %v10954 = vld [vmem:[#allocation18 + $0x918] sm:$0xff]
        %v10955 = vld [vmem:[#allocation18 + $0x920] sm:$0xff]
        %v10956 = vld [vmem:[#allocation18 + $0x928] sm:$0xff]
        %v10957 = vld [vmem:[#allocation18 + $0x930] sm:$0xff]
        %v10958 = vld [vmem:[#allocation18 + $0x938] sm:$0xff]
        %v10959 = vld [vmem:[#allocation18 + $0x940] sm:$0xff]
        %v10960 = vld [vmem:[#allocation18 + $0x948] sm:$0xff]
        %v10961 = vld [vmem:[#allocation18 + $0x950] sm:$0xff]
        %v10962 = vld [vmem:[#allocation18 + $0x958] sm:$0xff]
        %v10963 = vld [vmem:[#allocation18 + $0x960] sm:$0xff]
        %v10964 = vld [vmem:[#allocation18 + $0x968] sm:$0xff]
        %v10965 = vld [vmem:[#allocation18 + $0x970] sm:$0xff]
        %v10966 = vld [vmem:[#allocation18 + $0x978] sm:$0xff]
        %v10967 = vld [vmem:[#allocation18 + $0x980] sm:$0xff]
        %v10968 = vld [vmem:[#allocation18 + $0x988] sm:$0xff]
        %v10969 = vld [vmem:[#allocation18 + $0x990] sm:$0xff]
        %v10970 = vld [vmem:[#allocation18 + $0x998] sm:$0xff]
        %v10971 = vld [vmem:[#allocation18 + $0x9a0] sm:$0xff]
        %v10972 = vld [vmem:[#allocation18 + $0x9a8] sm:$0xff]
        %v10973 = vld [vmem:[#allocation18 + $0x9b0] sm:$0xff]
        %v10974 = vld [vmem:[#allocation18 + $0x9b8] sm:$0xff]
        %v10975 = vld [vmem:[#allocation18 + $0x9c0] sm:$0xff]
        %v10976 = vld [vmem:[#allocation18 + $0x9c8] sm:$0xff]
        %v10977 = vld [vmem:[#allocation18 + $0x9d0] sm:$0xff]
        %v10978 = vld [vmem:[#allocation18 + $0x9d8] sm:$0xff]
        %v10979 = vld [vmem:[#allocation18 + $0x9e0] sm:$0xff]
        %v10980 = vld [vmem:[#allocation18 + $0x9e8] sm:$0xff]
        %v10981 = vld [vmem:[#allocation18 + $0x9f0] sm:$0xff]
        %v10982 = vld [vmem:[#allocation18 + $0x9f8] sm:$0xff]
        %v10984 = vshrl.u32 %v10656, 16
        %v10986 = vrot.slane %v10984, 4
        %v10987 = vshll.u32 %v10656, 16
        %v10989 = vrot.slane %v10987, 5
        %v10990 = vor.u32 %v10986, %v10989
        %v10991 = vrot.slane %v8314, 4
        %v10992 = vrot.slane %v8298, 5
        %v10993 = vor.u32 %v10991, %v10992
        %v10994 = vsel %vm3187, %v10990, %v10993
        %v10996 = vshrl.u32 %v10657, 16
        %v10998 = vrot.slane %v10996, 4
        %v10999 = vshll.u32 %v10657, 16
        %v11001 = vrot.slane %v10999, 5
        %v11002 = vor.u32 %v10998, %v11001
        %v11003 = vrot.slane %v8322, 4
        %v11004 = vrot.slane %v8310, 5
        %v11005 = vor.u32 %v11003, %v11004
        %v11006 = vsel %vm3187, %v11002, %v11005
        %v11007 = vrot.slane %v8330, 4
        %v11008 = vrot.slane %v8318, 5
        %v11009 = vor.u32 %v11007, %v11008
        %v11010 = vsel %vm3187, %v10993, %v11009
        %v11011 = vrot.slane %v8338, 4
        %v11012 = vrot.slane %v8326, 5
        %v11013 = vor.u32 %v11011, %v11012
        %v11014 = vsel %vm3187, %v11005, %v11013
        %v11016 = vshrl.u32 %v10949, 16
        %v11018 = vrot.slane %v11016, 4
        %v11019 = vshll.u32 %v10949, 16
        %v11021 = vrot.slane %v11019, 5
        %v11022 = vor.u32 %v11018, %v11021
        %v11023 = vsel %vm3187, %v11009, %v11022
        %v11025 = vshrl.u32 %v10950, 16
        %v11027 = vrot.slane %v11025, 4
        %v11028 = vshll.u32 %v10950, 16
        %v11030 = vrot.slane %v11028, 5
        %v11031 = vor.u32 %v11027, %v11030
        %v11032 = vsel %vm3187, %v11013, %v11031
        %v11071 = vunpack.c.l.b16 %v10951
        %v11072 = vunpack.c.h.b16 %v10951
        %v11073 = vunpack.c.l.b16 %v10952
        %v11074 = vunpack.c.h.b16 %v10952
        %v11075 = vunpack.c.l.b16 %v10953
        %v11076 = vunpack.c.h.b16 %v10953
        %v11077 = vunpack.c.l.b16 %v10954
        %v11078 = vunpack.c.h.b16 %v10954
        %v11079 = vunpack.c.l.b16 %v10955
        %v11080 = vunpack.c.h.b16 %v10955
        %v11081 = vunpack.c.l.b16 %v10956
        %v11082 = vunpack.c.h.b16 %v10956
        %v11083 = vunpack.c.l.b16 %v10957
        %v11084 = vunpack.c.h.b16 %v10957
        %v11085 = vunpack.c.l.b16 %v10958
        %v11086 = vunpack.c.h.b16 %v10958
        %v11087 = vunpack.c.l.b16 %v10959
        %v11088 = vunpack.c.h.b16 %v10959
        %v11089 = vunpack.c.l.b16 %v10960
        %v11090 = vunpack.c.h.b16 %v10960
        %v11091 = vunpack.c.l.b16 %v10961
        %v11092 = vunpack.c.h.b16 %v10961
        %v11093 = vunpack.c.l.b16 %v10962
        %v11094 = vunpack.c.h.b16 %v10962
        %v11095 = vunpack.c.l.b16 %v10963
        %v11096 = vunpack.c.h.b16 %v10963
        %v11097 = vunpack.c.l.b16 %v10964
        %v11098 = vunpack.c.h.b16 %v10964
        %v11099 = vunpack.c.l.b16 %v10965
        %v11100 = vunpack.c.h.b16 %v10965
        %v11101 = vunpack.c.l.b16 %v10966
        %v11102 = vunpack.c.h.b16 %v10966
        %v11103 = vunpack.c.l.b16 %v10967
        %v11104 = vunpack.c.h.b16 %v10967
        %v11105 = vunpack.c.l.b16 %v10968
        %v11106 = vunpack.c.h.b16 %v10968
        %v11107 = vunpack.c.l.b16 %v10969
        %v11108 = vunpack.c.h.b16 %v10969
        %v11109 = vunpack.c.l.b16 %v10970
        %v11110 = vunpack.c.h.b16 %v10970
        %v11111 = vunpack.c.l.b16 %v10971
        %v11112 = vunpack.c.h.b16 %v10971
        %v11113 = vunpack.c.l.b16 %v10972
        %v11114 = vunpack.c.h.b16 %v10972
        %v11115 = vunpack.c.l.b16 %v10973
        %v11116 = vunpack.c.h.b16 %v10973
        %v11117 = vunpack.c.l.b16 %v10974
        %v11118 = vunpack.c.h.b16 %v10974
        %v11119 = vunpack.c.l.b16 %v10975
        %v11120 = vunpack.c.h.b16 %v10975
        %v11121 = vunpack.c.l.b16 %v10976
        %v11122 = vunpack.c.h.b16 %v10976
        %v11123 = vunpack.c.l.b16 %v10977
        %v11124 = vunpack.c.h.b16 %v10977
        %v11125 = vunpack.c.l.b16 %v10978
        %v11126 = vunpack.c.h.b16 %v10978
        %v11127 = vunpack.c.l.b16 %v10979
        %v11128 = vunpack.c.h.b16 %v10979
        %v11129 = vunpack.c.l.b16 %v10980
        %v11130 = vunpack.c.h.b16 %v10980
        %v11131 = vunpack.c.l.b16 %v10981
        %v11132 = vunpack.c.h.b16 %v10981
        %v11133 = vunpack.c.l.b16 %v10982
        %v11134 = vunpack.c.h.b16 %v10982
        %v11135 = vpack.c.b16 %v11073, %v11071
        %v11136 = vpack.c.b16 %v11074, %v11072
        %v11137 = vpack.c.b16 %v11077, %v11075
        %v11138 = vpack.c.b16 %v11078, %v11076
        %v11139 = vpack.c.b16 %v11081, %v11079
        %v11140 = vpack.c.b16 %v11082, %v11080
        %v11141 = vpack.c.b16 %v11085, %v11083
        %v11142 = vpack.c.b16 %v11086, %v11084
        %v11143 = vpack.c.b16 %v11089, %v11087
        %v11144 = vpack.c.b16 %v11090, %v11088
        %v11145 = vpack.c.b16 %v11093, %v11091
        %v11146 = vpack.c.b16 %v11094, %v11092
        %v11147 = vpack.c.b16 %v11097, %v11095
        %v11148 = vpack.c.b16 %v11098, %v11096
        %v11149 = vpack.c.b16 %v11101, %v11099
        %v11150 = vpack.c.b16 %v11102, %v11100
        %v11151 = vpack.c.b16 %v11105, %v11103
        %v11152 = vpack.c.b16 %v11106, %v11104
        %v11153 = vpack.c.b16 %v11109, %v11107
        %v11154 = vpack.c.b16 %v11110, %v11108
        %v11155 = vpack.c.b16 %v11113, %v11111
        %v11156 = vpack.c.b16 %v11114, %v11112
        %v11157 = vpack.c.b16 %v11117, %v11115
        %v11158 = vpack.c.b16 %v11118, %v11116
        %v11159 = vpack.c.b16 %v11121, %v11119
        %v11160 = vpack.c.b16 %v11122, %v11120
        %v11161 = vpack.c.b16 %v11125, %v11123
        %v11162 = vpack.c.b16 %v11126, %v11124
        %v11163 = vpack.c.b16 %v11129, %v11127
        %v11164 = vpack.c.b16 %v11130, %v11128
        %v11165 = vpack.c.b16 %v11133, %v11131
        %v11166 = vpack.c.b16 %v11134, %v11132
        %11199 = vmatprep.subr.bf16.mxu0 %v11136
        %11200 = vmatpush1.bf16.msra.mxu0 %v11135
        %11201 = vmatprep.subr.bf16.mxu0 %v11138
        %11202 = vmatpush1.bf16.msra.mxu0 %v11137
        %11203 = vmatprep.subr.bf16.mxu0 %v11140
        %11204 = vmatpush1.bf16.msra.mxu0 %v11139
        %11205 = vmatprep.subr.bf16.mxu0 %v11142
        %11206 = vmatpush1.bf16.msra.mxu0 %v11141
        %11207 = vmatprep.subr.bf16.mxu0 %v11144
        %11208 = vmatpush1.bf16.msra.mxu0 %v11143
        %11209 = vmatprep.subr.bf16.mxu0 %v11146
        %11210 = vmatpush1.bf16.msra.mxu0 %v11145
        %11211 = vmatprep.subr.bf16.mxu0 %v11148
        %11212 = vmatpush1.bf16.msra.mxu0 %v11147
        %11213 = vmatprep.subr.bf16.mxu0 %v11150
        %11214 = vmatpush1.bf16.msra.mxu0 %v11149
        %11215 = vmatprep.subr.bf16.mxu0 %v11152
        %11216 = vmatpush1.bf16.msra.mxu0 %v11151
        %11217 = vmatprep.subr.bf16.mxu0 %v11154
        %11218 = vmatpush1.bf16.msra.mxu0 %v11153
        %11219 = vmatprep.subr.bf16.mxu0 %v11156
        %11220 = vmatpush1.bf16.msra.mxu0 %v11155
        %11221 = vmatprep.subr.bf16.mxu0 %v11158
        %11222 = vmatpush1.bf16.msra.mxu0 %v11157
        %11223 = vmatprep.subr.bf16.mxu0 %v11160
        %11224 = vmatpush1.bf16.msra.mxu0 %v11159
        %11225 = vmatprep.subr.bf16.mxu0 %v11162
        %11226 = vmatpush1.bf16.msra.mxu0 %v11161
        %11227 = vmatprep.subr.bf16.mxu0 %v11164
        %11228 = vmatpush1.bf16.msra.mxu0 %v11163
        %11229 = vmatprep.subr.bf16.mxu0 %v11166
        %11230 = vmatpush1.bf16.msra.mxu0 %v11165
        %11231 = vmatprep.mubr.bf16.mxu0 %v11006
        %11232 = vmatmul.mubr.bf16.gmra.mrb[0].mxu0 %v10994
        %v11233 = vpop.f32.mrb[0].mxu0
        %v11234 = vadd.f32 0.0, %v11233
        %v11235 = vpop.f32.mrb[0].mxu0
        %v11236 = vadd.f32 0.0, %v11235
        %v11237 = vpop.f32.mrb[0].mxu0
        %v11238 = vadd.f32 0.0, %v11237
        %v11239 = vpop.f32.mrb[0].mxu0
        %v11240 = vadd.f32 0.0, %v11239
        %11241 = vmatprep.mubr.bf16.mxu0 %v11014
        %11242 = vmatmul.mubr.bf16.gmra.mrb[0].mxu0 %v11010
        %v11243 = vpop.f32.mrb[0].mxu0
        %v11244 = vadd.f32 0.0, %v11243
        %v11245 = vpop.f32.mrb[0].mxu0
        %v11246 = vadd.f32 0.0, %v11245
        %v11247 = vpop.f32.mrb[0].mxu0
        %v11248 = vadd.f32 0.0, %v11247
        %v11249 = vpop.f32.mrb[0].mxu0
        %v11250 = vadd.f32 0.0, %v11249
        %11251 = vmatprep.mubr.bf16.mxu0 %v11032
        %11252 = vmatmul.mubr.bf16.gmra.mrb[0].mxu0 %v11023
        %v11253 = vpop.f32.mrb[0].mxu0
        %v11254 = vadd.f32 0.0, %v11253
        %v11255 = vpop.f32.mrb[0].mxu0
        %v11256 = vadd.f32 0.0, %v11255
        %v11257 = vpop.f32.mrb[0].mxu0
        %v11258 = vadd.f32 0.0, %v11257
        %v11259 = vpop.f32.mrb[0].mxu0
        %v11260 = vadd.f32 0.0, %v11259
        %11261 = vdwg.mxu0
        %v11262 = vadd.f32 %v10937, %v11234
        %v11263 = vadd.f32 %v10938, %v11236
        %v11264 = vadd.f32 %v10939, %v11238
        %v11265 = vadd.f32 %v10940, %v11240
        %v11266 = vadd.f32 %v10941, %v11244
        %v11267 = vadd.f32 %v10942, %v11246
        %v11268 = vadd.f32 %v10943, %v11248
        %v11269 = vadd.f32 %v10944, %v11250
        %v11270 = vadd.f32 %v10945, %v11254
        %v11271 = vadd.f32 %v10946, %v11256
        %v11272 = vadd.f32 %v10947, %v11258
        %v11273 = vadd.f32 %v10948, %v11260
        %v11274 = vld [vmem:[#allocation19] sm:$0x3]
        %v11276 = vlaneseq
        %v11277 = vshrl.u32 %v11276, 7
        %v11278 = vsub.s32 0, %v11277
        %v11279 = vrot.slane %v11274, %v11278
        %v11280 = vlaneseq
        %v11281 = vshrl.u32 %v11280, 7
        %v11282 = vsub.s32 1, %v11281
        %v11283 = vrot.slane %v11274, %v11282
        %v11286 = vadd.f32 %v11262, %v11279
        %v11287 = vadd.f32 %v11263, %v11283
        %v11288 = vadd.f32 %v11264, %v11279
        %v11289 = vadd.f32 %v11265, %v11283
        %v11290 = vadd.f32 %v11266, %v11279
        %v11291 = vadd.f32 %v11267, %v11283
        %v11292 = vadd.f32 %v11268, %v11279
        %v11293 = vadd.f32 %v11269, %v11283
        %v11294 = vadd.f32 %v11270, %v11279
        %v11295 = vadd.f32 %v11271, %v11283
        %v11296 = vadd.f32 %v11272, %v11279
        %v11297 = vadd.f32 %v11273, %v11283
        %v11298 = vmax.f32 %v11286, 0.0
        %v11299 = vmax.f32 %v11287, 0.0
        %v11300 = vmax.f32 %v11288, 0.0
        %v11301 = vmax.f32 %v11289, 0.0
        %v11302 = vmax.f32 %v11290, 0.0
        %v11303 = vmax.f32 %v11291, 0.0
        %v11304 = vmax.f32 %v11292, 0.0
        %v11305 = vmax.f32 %v11293, 0.0
        %v11306 = vmax.f32 %v11294, 0.0
        %v11307 = vmax.f32 %v11295, 0.0
        %v11308 = vmax.f32 %v11296, 0.0
        %v11309 = vmax.f32 %v11297, 0.0
        %v11310 = vsel %vm8206, %v11298, 0.0
        %v11311 = vsel %vm8206, %v11299, 0.0
        %v11312 = vsel %vm8207, %v11300, 0.0
        %v11313 = vsel %vm8207, %v11301, 0.0
        %v11314 = vsel %vm8208, %v11302, 0.0
        %v11315 = vsel %vm8208, %v11303, 0.0
        %v11316 = vsel %vm8209, %v11304, 0.0
        %v11317 = vsel %vm8209, %v11305, 0.0
        %v11318 = vsel %vm8210, %v11306, 0.0
        %v11319 = vsel %vm8210, %v11307, 0.0
        %v11320 = vsel %vm8211, %v11308, 0.0
        %v11321 = vsel %vm8211, %v11309, 0.0
        %11322 = vst [vmem:[#allocation6] sm:$0xff] %v11310
        %11323 = vst [vmem:[#allocation6 + $0x8] sm:$0xff] %v11311
        %11324 = vst [vmem:[#allocation6 + $0x10] sm:$0xff] %v11312
        %11325 = vst [vmem:[#allocation6 + $0x18] sm:$0xff] %v11313
        %11326 = vst [vmem:[#allocation6 + $0x20] sm:$0xff] %v11314
        %11327 = vst [vmem:[#allocation6 + $0x28] sm:$0xff] %v11315
        %11328 = vst [vmem:[#allocation6 + $0x30] sm:$0xff] %v11316
        %11329 = vst [vmem:[#allocation6 + $0x38] sm:$0xff] %v11317
        %11330 = vst [vmem:[#allocation6 + $0x40] sm:$0xff] %v11318
        %11331 = vst [vmem:[#allocation6 + $0x48] sm:$0xff] %v11319
        %11332 = vst [vmem:[#allocation6 + $0x50] sm:$0xff] %v11320
        %11333 = vst [vmem:[#allocation6 + $0x58] sm:$0xff] %v11321
        %v11334 = vld [vmem:[#allocation6] sm:$0xff]
        %v11335 = vld [vmem:[#allocation6 + $0x8] sm:$0xff]
        %v11336 = vld [vmem:[#allocation6 + $0x10] sm:$0xff]
        %v11337 = vld [vmem:[#allocation6 + $0x18] sm:$0xff]
        %v11338 = vld [vmem:[#allocation6 + $0x20] sm:$0xff]
        %v11339 = vld [vmem:[#allocation6 + $0x28] sm:$0xff]
        %v11340 = vld [vmem:[#allocation6 + $0x30] sm:$0xff]
        %v11341 = vld [vmem:[#allocation6 + $0x38] sm:$0xff]
        %v11342 = vld [vmem:[#allocation6 + $0x40] sm:$0xff]
        %v11343 = vld [vmem:[#allocation6 + $0x48] sm:$0xff]
        %v11344 = vld [vmem:[#allocation6 + $0x50] sm:$0xff]
        %v11345 = vld [vmem:[#allocation6 + $0x58] sm:$0xff]
        %v11346 = vadd.f32 %v11334, %v11336
        %v11347 = vadd.f32 %v11346, %v11338
        %v11348 = vrot.slane %v11347, 4
        %v11349 = vadd.f32 %v11347, %v11348
        %v11350 = vrot.slane %v11349, 2
        %v11351 = vadd.f32 %v11349, %v11350
        %v11352 = vrot.slane %v11351, 1
        %v11353 = vadd.f32 %v11351, %v11352
        %v11354 = vadd.f32 %v11335, %v11337
        %v11355 = vadd.f32 %v11354, %v11339
        %v11356 = vrot.slane %v11355, 4
        %v11357 = vadd.f32 %v11355, %v11356
        %v11358 = vrot.slane %v11357, 2
        %v11359 = vadd.f32 %v11357, %v11358
        %v11360 = vrot.slane %v11359, 1
        %v11361 = vadd.f32 %v11359, %v11360
        %v11362 = vadd.f32 %v11340, %v11342
        %v11363 = vadd.f32 %v11362, %v11344
        %v11364 = vrot.slane %v11363, 4
        %v11365 = vadd.f32 %v11363, %v11364
        %v11366 = vrot.slane %v11365, 2
        %v11367 = vadd.f32 %v11365, %v11366
        %v11368 = vrot.slane %v11367, 1
        %v11369 = vadd.f32 %v11367, %v11368
        %v11370 = vadd.f32 %v11341, %v11343
        %v11371 = vadd.f32 %v11370, %v11345
        %v11372 = vrot.slane %v11371, 4
        %v11373 = vadd.f32 %v11371, %v11372
        %v11374 = vrot.slane %v11373, 2
        %v11375 = vadd.f32 %v11373, %v11374
        %v11376 = vrot.slane %v11375, 1
        %v11377 = vadd.f32 %v11375, %v11376
        %v11378 = vmul.f32 %v11353, 0.16666667
        %v11379 = vmul.f32 %v11361, 0.16666667
        %v11380 = vmul.f32 %v11369, 0.16666667
        %v11381 = vmul.f32 %v11377, 0.16666667
        %11382 = vst [vmem:[#allocation7] sm:$0xff] 0.0
        %11383 = vst [vmem:[#allocation7 + $0x8] sm:$0xff] 0.0
        %v11388 = vsel %vm4801, %v11380, %v11378
        %v11389 = vsel %vm4801, %v11381, %v11379
        %11392 = vst [vmem:[#allocation7] sm:$0x3] %v11388
        %11393 = vst [vmem:[#allocation7 + $0x8] sm:$0x3] %v11389
        %v11394 = vld [vmem:[#allocation7] sm:$0xff]
        %v11395 = vld [vmem:[#allocation7 + $0x8] sm:$0xff]
        %v11396 = vpack.c.bf16 %v11394, %v11394
        %v11397 = vpack.c.bf16 %v11395, %v11395
        %v11398 = vld [vmem:[#allocation21] sm:$0xf]
        %v11399 = vld [vmem:[#allocation21 + $0x4] sm:$0xf]
        %v11400 = vld [vmem:[#allocation21 + $0x8] sm:$0xf]
        %v11401 = vld [vmem:[#allocation21 + $0xc] sm:$0xf]
        %v11402 = vld [vmem:[#allocation21 + $0x10] sm:$0xf]
        %v11403 = vld [vmem:[#allocation21 + $0x14] sm:$0xf]
        %v11404 = vld [vmem:[#allocation21 + $0x18] sm:$0xf]
        %v11405 = vld [vmem:[#allocation21 + $0x1c] sm:$0xf]
        %v11406 = vld [vmem:[#allocation21 + $0x20] sm:$0xf]
        %v11407 = vld [vmem:[#allocation21 + $0x24] sm:$0xf]
        %v11408 = vld [vmem:[#allocation21 + $0x28] sm:$0xf]
        %v11409 = vld [vmem:[#allocation21 + $0x2c] sm:$0xf]
        %v11410 = vld [vmem:[#allocation21 + $0x30] sm:$0xf]
        %v11411 = vld [vmem:[#allocation21 + $0x34] sm:$0xf]
        %v11412 = vld [vmem:[#allocation21 + $0x38] sm:$0xf]
        %v11413 = vld [vmem:[#allocation21 + $0x3c] sm:$0xf]
        %v11414 = vld [vmem:[#allocation21 + $0x40] sm:$0xf]
        %v11415 = vld [vmem:[#allocation21 + $0x44] sm:$0xf]
        %v11416 = vld [vmem:[#allocation21 + $0x48] sm:$0xf]
        %v11417 = vld [vmem:[#allocation21 + $0x4c] sm:$0xf]
        %v11418 = vld [vmem:[#allocation21 + $0x50] sm:$0xf]
        %v11419 = vld [vmem:[#allocation21 + $0x54] sm:$0xf]
        %v11420 = vld [vmem:[#allocation21 + $0x58] sm:$0xf]
        %v11421 = vld [vmem:[#allocation21 + $0x5c] sm:$0xf]
        %v11422 = vld [vmem:[#allocation21 + $0x60] sm:$0xf]
        %v11423 = vld [vmem:[#allocation21 + $0x64] sm:$0xf]
        %v11424 = vld [vmem:[#allocation21 + $0x68] sm:$0xf]
        %v11425 = vld [vmem:[#allocation21 + $0x6c] sm:$0xf]
        %v11426 = vld [vmem:[#allocation21 + $0x70] sm:$0xf]
        %v11427 = vld [vmem:[#allocation21 + $0x74] sm:$0xf]
        %v11428 = vld [vmem:[#allocation21 + $0x78] sm:$0xf]
        %v11429 = vld [vmem:[#allocation21 + $0x7c] sm:$0xf]
        %v11430 = vld [vmem:[#allocation22] sm:$0x1]
        %v11432 = vlaneseq
        %v11433 = vshrl.u32 %v11432, 7
        %v11434 = vsub.s32 0, %v11433
        %v11435 = vrot.slane %v11430, %v11434
        %v11469 = vunpack.c.l.b16 %v11398
        %v11470 = vunpack.c.l.b16 %v11399
        %v11471 = vunpack.c.l.b16 %v11400
        %v11472 = vunpack.c.l.b16 %v11401
        %v11473 = vunpack.c.l.b16 %v11402
        %v11474 = vunpack.c.l.b16 %v11403
        %v11475 = vunpack.c.l.b16 %v11404
        %v11476 = vunpack.c.l.b16 %v11405
        %v11477 = vunpack.c.l.b16 %v11406
        %v11478 = vunpack.c.l.b16 %v11407
        %v11479 = vunpack.c.l.b16 %v11408
        %v11480 = vunpack.c.l.b16 %v11409
        %v11481 = vunpack.c.l.b16 %v11410
        %v11482 = vunpack.c.l.b16 %v11411
        %v11483 = vunpack.c.l.b16 %v11412
        %v11484 = vunpack.c.l.b16 %v11413
        %v11485 = vunpack.c.l.b16 %v11414
        %v11486 = vunpack.c.l.b16 %v11415
        %v11487 = vunpack.c.l.b16 %v11416
        %v11488 = vunpack.c.l.b16 %v11417
        %v11489 = vunpack.c.l.b16 %v11418
        %v11490 = vunpack.c.l.b16 %v11419
        %v11491 = vunpack.c.l.b16 %v11420
        %v11492 = vunpack.c.l.b16 %v11421
        %v11493 = vunpack.c.l.b16 %v11422
        %v11494 = vunpack.c.l.b16 %v11423
        %v11495 = vunpack.c.l.b16 %v11424
        %v11496 = vunpack.c.l.b16 %v11425
        %v11497 = vunpack.c.l.b16 %v11426
        %v11498 = vunpack.c.l.b16 %v11427
        %v11499 = vunpack.c.l.b16 %v11428
        %v11500 = vunpack.c.l.b16 %v11429
        %v11501 = vpack.c.b16 %v11470, %v11469
        %v11502 = vpack.c.b16 %v11472, %v11471
        %v11503 = vpack.c.b16 %v11474, %v11473
        %v11504 = vpack.c.b16 %v11476, %v11475
        %v11505 = vpack.c.b16 %v11478, %v11477
        %v11506 = vpack.c.b16 %v11480, %v11479
        %v11507 = vpack.c.b16 %v11482, %v11481
        %v11508 = vpack.c.b16 %v11484, %v11483
        %v11509 = vpack.c.b16 %v11486, %v11485
        %v11510 = vpack.c.b16 %v11488, %v11487
        %v11511 = vpack.c.b16 %v11490, %v11489
        %v11512 = vpack.c.b16 %v11492, %v11491
        %v11513 = vpack.c.b16 %v11494, %v11493
        %v11514 = vpack.c.b16 %v11496, %v11495
        %v11515 = vpack.c.b16 %v11498, %v11497
        %v11516 = vpack.c.b16 %v11500, %v11499
        %11533 = vmatprep.subr.bf16.mxu0 0
        %11534 = vmatpush1.bf16.msra.mxu0 %v11501
        %11535 = vmatprep.subr.bf16.mxu0 0
        %11536 = vmatpush1.bf16.msra.mxu0 %v11502
        %11537 = vmatprep.subr.bf16.mxu0 0
        %11538 = vmatpush1.bf16.msra.mxu0 %v11503
        %11539 = vmatprep.subr.bf16.mxu0 0
        %11540 = vmatpush1.bf16.msra.mxu0 %v11504
        %11541 = vmatprep.subr.bf16.mxu0 0
        %11542 = vmatpush1.bf16.msra.mxu0 %v11505
        %11543 = vmatprep.subr.bf16.mxu0 0
        %11544 = vmatpush1.bf16.msra.mxu0 %v11506
        %11545 = vmatprep.subr.bf16.mxu0 0
        %11546 = vmatpush1.bf16.msra.mxu0 %v11507
        %11547 = vmatprep.subr.bf16.mxu0 0
        %11548 = vmatpush1.bf16.msra.mxu0 %v11508
        %11549 = vmatprep.subr.bf16.mxu0 0
        %11550 = vmatpush1.bf16.msra.mxu0 %v11509
        %11551 = vmatprep.subr.bf16.mxu0 0
        %11552 = vmatpush1.bf16.msra.mxu0 %v11510
        %11553 = vmatprep.subr.bf16.mxu0 0
        %11554 = vmatpush1.bf16.msra.mxu0 %v11511
        %11555 = vmatprep.subr.bf16.mxu0 0
        %11556 = vmatpush1.bf16.msra.mxu0 %v11512
        %11557 = vmatprep.subr.bf16.mxu0 0
        %11558 = vmatpush1.bf16.msra.mxu0 %v11513
        %11559 = vmatprep.subr.bf16.mxu0 0
        %11560 = vmatpush1.bf16.msra.mxu0 %v11514
        %11561 = vmatprep.subr.bf16.mxu0 0
        %11562 = vmatpush1.bf16.msra.mxu0 %v11515
        %11563 = vmatprep.subr.bf16.mxu0 0
        %11564 = vmatpush1.bf16.msra.mxu0 %v11516
        %11565 = vmatprep.mubr.bf16.mxu0 %v11397
        %11566 = vmatmul.mubr.bf16.gmra.mrb[0].mxu0 %v11396
        %v11567 = vpop.f32.mrb[0].mxu0
        %v11568 = vadd.f32 %v11435, %v11567
        %v11569 = vpop.f32.mrb[0].mxu0
        %v11570 = vpop.f32.mrb[0].mxu0
        %v11571 = vpop.f32.mrb[0].mxu0
        %11572 = vdwg.mxu0
        %v11573 = vlaneseq
        %v11574 = vand.u32 %v11573, 127
        %vm11575 = vcmp.lt.s32.totalorder %v11574, 6
        %v11576 = vsel %vm11575, %v11568, -1e+30
        %11577 = vmax.xlane.f32.xlu0 %v11576
        %v11578 = vpop.xlane.xlu0 %11577
        %v11579 = vsub.f32 %v11576, %v11578
        %v11580 = vmul.f32 %v11579, 1.442695
        %v11581 = vpow.pop %v11580
        %11582 = vadd.xlane.f32.xlu0 %v11581
        %v11583 = vpop.xlane.xlu0 %11582
        %v11584 = vlog2.pop %v11583
        %v11585 = vmul.f32 %v11584, 0.6931472
        %v11586 = vsub.f32 %v11579, %v11585
        %11587 = vst [vmem:[%s522] sm:$0xff] %v11586
        %p11588 = scmp.lt.s32.totalorder %s28, 1
        %s11589 = scalar_select %p11588, %s28, 1
        %s11590 = smul.addr %s11589, 8
        %s11591 = scalar_lea.vmem %s11, %s11590
        // Predicated region
        $region105: #{cnn_forward.1} parent=63 // pred_check
          %p11592 = pneg %p282
        $region106: #{cnn_forward.1} parent=63 // pred_check_branch
          %11594 = sbr.rel (%p11592) target = $region108
        $region107: #{cnn_forward.1} parent=63 // pred_region
          _
        $region108: #{cnn_forward.1} parent=63 // pred_fallthru
          _
      $region64: #{cnn_forward.1} parent=5 // pred_fallthru
        _
      %p11595 = scmp.le.s32.totalorder 2, %s23
      // Predicated region
      $region109: #{cnn_forward.1} parent=5 // pred_check
        %p11596 = pneg %p11595
      $region110: #{cnn_forward.1} parent=5 // pred_check_branch
        %11598 = sbr.rel (%p11596) target = $region112
      $region111: #{cnn_forward.1} parent=5 // pred_region
        %s11599 = ssub.s32 %s23, 2
        // Predicated region
        $region113: #{cnn_forward.1} parent=111 // pred_check
          %p11600 = pneg %p288
        $region114: #{cnn_forward.1} parent=111 // pred_check_branch
          %11602 = sbr.rel (%p11600) target = $region116
        $region115: #{cnn_forward.1} parent=111 // pred_region
          %p11603 = scmp.lt.s32.totalorder %s29, 1
          %s11604 = scalar_select %p11603, %s29, 1
          %s11605 = smul.addr %s11604, 8
          %s11606 = scalar_lea.vmem %s11, %s11605
        $region116: #{cnn_forward.1} parent=111 // pred_fallthru
          _
      $region112: #{cnn_forward.1} parent=5 // pred_fallthru
        _
    $region6: #{cnn_forward.1} parent=1 // loop_footer
      %s27 = sadd.s32 1, %s23
    $region7: #{cnn_forward.1} parent=1 // loop_footer_branch
      %22 = sbr.rel target = $region3
    $region8: #{cnn_forward.1} parent=1 // loop_exit
      _
    %11607 = vsyncpa [#allocation9], 1
    %s11608 = scalar_lea.sflag [#allocation9], 1
    %11609 = vsyncpa %s11608, 1
    %11610 = vsyncpa [#allocation11], 1
    %11611 = vsyncpa [#allocation14], 1
    %11612 = vsyncpa [#allocation17], 1
    %11613 = vsyncpa [#allocation20], 1
    %11614 = vsyncpa [#allocation23], 1

</llo_original>
